<compile_context>
chip_gen: v5e
topology: v5e:2x2
jax: 0.10.0
libtpu: 0.0.40
codegen_flags: <defaults>
</compile_context>

<pallas_src>
import functools

import jax
import jax.numpy as jnp
from jax.experimental import pallas as pl
from jax.experimental.pallas import tpu as pltpu


def mlp_kernel(x_ref,
               w0_ref, b0_ref,
               w1_ref, b1_ref,
               w2h_ref, w2x_ref, b2_ref,
               w3_ref, b3_ref,
               w4t_ref, b4_ref,
               o_ref):
    x = x_ref[...]                      # (tile_n, D) f32 — stays f32 on the VPU path
    d_in = x.shape[1]
    n_out = o_ref.shape[1]

    # ---- Layer 0 (D -> H0) on the VPU in f32: K=D is tiny, MXU would pad it. ----
    h0 = x[:, 0:1] * w0_ref[0:1, :]
    for k in range(1, d_in):
        h0 = h0 + x[:, k:k + 1] * w0_ref[k:k + 1, :]
    h0 = jnp.maximum(h0 + b0_ref[...], 0.0)          # f32
    h0_bf = h0.astype(jnp.bfloat16)

    # ---- Layer 1 (H0 -> H1): MXU, bf16 operands, f32 accumulation. ----
    h1 = jnp.dot(h0_bf, w1_ref[...], preferred_element_type=jnp.float32) + b1_ref[...]
    h1 = jnp.maximum(h1, 0.0)
    h1_bf = h1.astype(jnp.bfloat16)

    # ---- Layer 2: cat([h1, x]) @ W2 = h1 @ W2h (MXU) + x @ W2x (VPU, K=D). ----
    z = jnp.dot(h1_bf, w2h_ref[...], preferred_element_type=jnp.float32)
    for k in range(d_in):
        z = z + x[:, k:k + 1] * w2x_ref[k:k + 1, :]
    z = jnp.maximum(z + b2_ref[...], 0.0)
    z_bf = z.astype(jnp.bfloat16)

    # ---- Layer 3 (H2 -> H3): MXU. ----
    z3 = jnp.dot(z_bf, w3_ref[...], preferred_element_type=jnp.float32) + b3_ref[...]
    z3 = jnp.maximum(z3, 0.0)                         # f32 (tile_n, H3)

    # ---- Final layer (H3 -> n_out) on VPU + XLU: out width 4 would waste an MXU pass. ----
    for j in range(n_out):
        col = jnp.sum(z3 * w4t_ref[j:j + 1, :], axis=-1, keepdims=True) + b4_ref[:, j:j + 1]
        o_ref[:, j:j + 1] = col.astype(o_ref.dtype)


def prepare_params(params):
    """One-time weight preprocessing (hoisted out of the per-call wrapper)."""
    (w0, b0, w1, b1, w2, b2, w3, b3, w4, b4) = params
    bf = jnp.bfloat16
    f32 = jnp.float32
    h1 = w1.shape[1]
    return dict(
        w0=w0.astype(f32),                 # (D, H0)   f32  — VPU path
        b0=b0.astype(f32),
        w1=w1.astype(bf), b1=b1.astype(f32),
        w2h=w2[:h1, :].astype(bf),         # (H1, H2)  bf16 — MXU (rows multiplying h)
        w2x=w2[h1:, :].astype(f32),        # (D,  H2)  f32  — VPU (rows multiplying x)
        b2=b2.astype(f32),
        w3=w3.astype(bf), b3=b3.astype(f32),
        w4t=jnp.transpose(w4).astype(f32),  # (out, H3) f32  — VPU/XLU final layer
        b4=b4.astype(f32),
    )


def mlp_pallas(x, p, *, tile_n=512):
    N, D = x.shape
    H0 = p["w0"].shape[1]
    H1 = p["w1"].shape[1]
    H2 = p["w2h"].shape[1]
    H3 = p["w3"].shape[1]
    out_dim = p["w4t"].shape[0]

    # Pad the batch to a multiple of tile_n (no divisibility assert).
    n_blocks = pl.cdiv(N, tile_n)
    n_pad = n_blocks * tile_n
    if n_pad != N:
        x = jnp.pad(x, ((0, n_pad - N), (0, 0)))

    # Constant-index specs: fetched once, VMEM-resident across all batch tiles.
    def full_spec(a):
        nd = a.ndim
        return pl.BlockSpec(a.shape, lambda i, nd=nd: (0,) * nd)

    operands = (x,
                p["w0"], p["b0"],
                p["w1"], p["b1"],
                p["w2h"], p["w2x"], p["b2"],
                p["w3"], p["b3"],
                p["w4t"], p["b4"])

    flops = 2 * n_pad * (D * H0 + H0 * H1 + H1 * H2 + D * H2 + H2 * H3 + H3 * out_dim)
    weight_bytes = sum(int(a.size) * a.dtype.itemsize for a in operands[1:])
    bytes_accessed = (weight_bytes
                      + int(x.size) * x.dtype.itemsize
                      + n_pad * out_dim * 4)
    cost = pl.CostEstimate(flops=int(flops), transcendentals=0,
                           bytes_accessed=int(bytes_accessed))

    in_specs = [pl.BlockSpec((tile_n, D), lambda i: (i, 0))]
    in_specs += [full_spec(a) for a in operands[1:]]

    out = pl.pallas_call(
        mlp_kernel,
        out_shape=jax.ShapeDtypeStruct((n_pad, out_dim), jnp.float32),
        grid_spec=pltpu.PrefetchScalarGridSpec(
            num_scalar_prefetch=0,
            grid=(n_blocks,),
            in_specs=in_specs,
            out_specs=pl.BlockSpec((tile_n, out_dim), lambda i: (i, 0)),
        ),
        compiler_params=pltpu.CompilerParams(
            dimension_semantics=("parallel",),
            vmem_limit_bytes=32 * 1024 * 1024,
        ),
        cost_estimate=cost,
    )(*operands)

    return out[:N]


def init_params(key, input_dimension, output_dimension=4,
                hidden_dimensions=(256, 256, 256, 256)):
    """Deterministic nn.Linear-style init. Weights stored (in, out); biases (1, out)."""
    dims = [(input_dimension, hidden_dimensions[0]),
            (hidden_dimensions[0], hidden_dimensions[1])]
    cat_dim = input_dimension + hidden_dimensions[1]
    dims += [(cat_dim, hidden_dimensions[2]),
             (hidden_dimensions[2], hidden_dimensions[3]),
             (hidden_dimensions[3], output_dimension)]

    params = []
    for (fan_in, fan_out) in dims:
        key, kw, kb = jax.random.split(key, 3)
        bound = 1.0 / jnp.sqrt(fan_in)
        w = jax.random.uniform(kw, (fan_in, fan_out), jnp.float32, -bound, bound)
        b = jax.random.uniform(kb, (1, fan_out), jnp.float32, -bound, bound)
        params.extend([w, b])
    return tuple(params)


def mlp_reference_f32(x, params):
    (w0, b0, w1, b1, w2, b2, w3, b3, w4, b4) = params
    h = jnp.maximum(x @ w0 + b0, 0.0)
    h = jnp.maximum(h @ w1 + b1, 0.0)
    z = jnp.concatenate([h, x], axis=1)
    z = jnp.maximum(z @ w2 + b2, 0.0)
    z = jnp.maximum(z @ w3 + b3, 0.0)
    return z @ w4 + b4


def mlp_reference_matched(x, params):
    """Mirrors the kernel's mixed precision: f32 VPU paths, bf16 MXU matmuls with f32 acc."""
    (w0, b0, w1, b1, w2, b2, w3, b3, w4, b4) = params
    bf = jnp.bfloat16
    H1 = w1.shape[1]
    h0 = jnp.maximum(x @ w0 + b0, 0.0)
    h1 = jnp.maximum(jnp.dot(h0.astype(bf), w1.astype(bf),
                             preferred_element_type=jnp.float32) + b1, 0.0)
    z = (jnp.dot(h1.astype(bf), w2[:H1].astype(bf),
                 preferred_element_type=jnp.float32) + x @ w2[H1:] + b2)
    z = jnp.maximum(z, 0.0)
    z3 = jnp.maximum(jnp.dot(z.astype(bf), w3.astype(bf),
                             preferred_element_type=jnp.float32) + b3, 0.0)
    return z3 @ w4 + b4


if __name__ == "__main__":
    key = jax.random.PRNGKey(0)
    k_x, k_p = jax.random.split(key)

    N = 1024               # 2 tiles of 512 -> multi-step "parallel" grid (both v7x TCs busy)
    INPUT_DIM = 3          # 3D position input for the implicit representation
    OUTPUT_DIM = 4
    HIDDEN = (256, 256, 256, 256)

    x = jax.random.normal(k_x, (N, INPUT_DIM), jnp.float32)
    params = init_params(k_p, INPUT_DIM, OUTPUT_DIM, HIDDEN)
    prepared = prepare_params(params)   # hoisted one-time casts/splits/transpose

    forward = jax.jit(functools.partial(mlp_pallas, tile_n=512))
    out = jax.block_until_ready(forward(x, prepared))
    assert out.shape == (N, OUTPUT_DIM)

    # Primary check: numerics-matched reference (same bf16 placement / f32 accumulation).
    ref_matched = mlp_reference_matched(x, params)
    assert jnp.allclose(out, ref_matched, atol=1e-2, rtol=1e-2)

    # Sanity check against the full-f32 PyTorch-equivalent forward (bf16 only in fat matmuls).
    ref_f32 = mlp_reference_f32(x, params)
    assert jnp.allclose(out, ref_f32, atol=1e-1, rtol=1e-1)

    print("KERNEL_OK")
</pallas_src>

<mosaic_0001>
module attributes {stable_mosaic.version = 11 : i64} {
  func.func @mlp_kernel(%arg0: i32, %arg1: memref<512x3xf32, #tpu.memory_space<vmem>>, %arg2: memref<3x256xf32, #tpu.memory_space<vmem>>, %arg3: memref<1x256xf32, #tpu.memory_space<vmem>>, %arg4: memref<256x256xbf16, #tpu.memory_space<vmem>>, %arg5: memref<1x256xf32, #tpu.memory_space<vmem>>, %arg6: memref<256x256xbf16, #tpu.memory_space<vmem>>, %arg7: memref<3x256xf32, #tpu.memory_space<vmem>>, %arg8: memref<1x256xf32, #tpu.memory_space<vmem>>, %arg9: memref<256x256xbf16, #tpu.memory_space<vmem>>, %arg10: memref<1x256xf32, #tpu.memory_space<vmem>>, %arg11: memref<4x256xf32, #tpu.memory_space<vmem>>, %arg12: memref<1x4xf32, #tpu.memory_space<vmem>>, %arg13: memref<512x4xf32, #tpu.memory_space<vmem>>) attributes {dimension_semantics = [#tpu.dimension_semantics<parallel>], iteration_bounds = array<i64: 2>, scalar_prefetch = 0 : i64, scratch_operands = 0 : i64, tpu.core_type = #tpu.core_type<tc>, window_params = [{transform_indices = @transform_0, window_bounds = array<i64: 512, 3>}, {pipeline_mode = #tpu.pipeline_mode<synchronous>, transform_indices = @transform_1, window_bounds = array<i64: 3, 256>}, {pipeline_mode = #tpu.pipeline_mode<synchronous>, transform_indices = @transform_2, window_bounds = array<i64: 1, 256>}, {pipeline_mode = #tpu.pipeline_mode<synchronous>, transform_indices = @transform_3, window_bounds = array<i64: 256, 256>}, {pipeline_mode = #tpu.pipeline_mode<synchronous>, transform_indices = @transform_4, window_bounds = array<i64: 1, 256>}, {pipeline_mode = #tpu.pipeline_mode<synchronous>, transform_indices = @transform_5, window_bounds = array<i64: 256, 256>}, {pipeline_mode = #tpu.pipeline_mode<synchronous>, transform_indices = @transform_6, window_bounds = array<i64: 3, 256>}, {pipeline_mode = #tpu.pipeline_mode<synchronous>, transform_indices = @transform_7, window_bounds = array<i64: 1, 256>}, {pipeline_mode = #tpu.pipeline_mode<synchronous>, transform_indices = @transform_8, window_bounds = array<i64: 256, 256>}, {pipeline_mode = #tpu.pipeline_mode<synchronous>, transform_indices = @transform_9, window_bounds = array<i64: 1, 256>}, {pipeline_mode = #tpu.pipeline_mode<synchronous>, transform_indices = @transform_10, window_bounds = array<i64: 4, 256>}, {pipeline_mode = #tpu.pipeline_mode<synchronous>, transform_indices = @transform_11, window_bounds = array<i64: 1, 4>}, {transform_indices = @transform_12, window_bounds = array<i64: 512, 4>}]} {
    %c0 = arith.constant 0 : index
    %c0_0 = arith.constant 0 : index
    %0 = vector.load %arg1[%c0, %c0_0] : memref<512x3xf32, #tpu.memory_space<vmem>>, vector<512x3xf32>
    %1 = vector.extract_strided_slice %0 {offsets = [0, 0], sizes = [512, 1], strides = [1, 1]} : vector<512x3xf32> to vector<512x1xf32>
    %c0_1 = arith.constant 0 : index
    %c0_2 = arith.constant 0 : index
    %2 = vector.load %arg2[%c0_1, %c0_2] : memref<3x256xf32, #tpu.memory_space<vmem>>, vector<1x256xf32>
    %3 = vector.broadcast %1 : vector<512x1xf32> to vector<512x256xf32>
    %4 = vector.broadcast %2 : vector<1x256xf32> to vector<512x256xf32>
    %5 = arith.mulf %3, %4 : vector<512x256xf32>
    %6 = vector.extract_strided_slice %0 {offsets = [0, 1], sizes = [512, 1], strides = [1, 1]} : vector<512x3xf32> to vector<512x1xf32>
    %c1 = arith.constant 1 : index
    %c0_3 = arith.constant 0 : index
    %7 = vector.load %arg2[%c1, %c0_3] : memref<3x256xf32, #tpu.memory_space<vmem>>, vector<1x256xf32>
    %8 = vector.broadcast %6 : vector<512x1xf32> to vector<512x256xf32>
    %9 = vector.broadcast %7 : vector<1x256xf32> to vector<512x256xf32>
    %10 = arith.mulf %8, %9 : vector<512x256xf32>
    %11 = arith.addf %5, %10 : vector<512x256xf32>
    %12 = vector.extract_strided_slice %0 {offsets = [0, 2], sizes = [512, 1], strides = [1, 1]} : vector<512x3xf32> to vector<512x1xf32>
    %c2 = arith.constant 2 : index
    %c0_4 = arith.constant 0 : index
    %13 = vector.load %arg2[%c2, %c0_4] : memref<3x256xf32, #tpu.memory_space<vmem>>, vector<1x256xf32>
    %14 = vector.broadcast %12 : vector<512x1xf32> to vector<512x256xf32>
    %15 = vector.broadcast %13 : vector<1x256xf32> to vector<512x256xf32>
    %16 = arith.mulf %14, %15 : vector<512x256xf32>
    %17 = arith.addf %11, %16 : vector<512x256xf32>
    %c0_5 = arith.constant 0 : index
    %c0_6 = arith.constant 0 : index
    %18 = vector.load %arg3[%c0_5, %c0_6] : memref<1x256xf32, #tpu.memory_space<vmem>>, vector<1x256xf32>
    %19 = vector.broadcast %18 : vector<1x256xf32> to vector<512x256xf32>
    %20 = arith.addf %17, %19 : vector<512x256xf32>
    %cst = arith.constant 0.000000e+00 : f32
    %21 = vector.broadcast %cst : f32 to vector<512x256xf32>
    %22 = arith.maximumf %20, %21 : vector<512x256xf32>
    %23 = arith.truncf %22 : vector<512x256xf32> to vector<512x256xbf16>
    %c0_7 = arith.constant 0 : index
    %c0_8 = arith.constant 0 : index
    %24 = vector.load %arg4[%c0_7, %c0_8] : memref<256x256xbf16, #tpu.memory_space<vmem>>, vector<256x256xbf16>
    %cst_9 = arith.constant dense<0.000000e+00> : vector<512x256xf32>
    %25 = tpu.matmul %23, %24, %cst_9 {dimension_numbers = #tpu.dot_dimension_numbers<[1], [0], [0], [1], [0, 0, 1, 1], [], []>} : vector<512x256xbf16>, vector<256x256xbf16>, vector<512x256xf32> -> vector<512x256xf32>
    %c0_10 = arith.constant 0 : index
    %c0_11 = arith.constant 0 : index
    %26 = vector.load %arg5[%c0_10, %c0_11] : memref<1x256xf32, #tpu.memory_space<vmem>>, vector<1x256xf32>
    %27 = vector.broadcast %26 : vector<1x256xf32> to vector<512x256xf32>
    %28 = arith.addf %25, %27 : vector<512x256xf32>
    %cst_12 = arith.constant 0.000000e+00 : f32
    %29 = vector.broadcast %cst_12 : f32 to vector<512x256xf32>
    %30 = arith.maximumf %28, %29 : vector<512x256xf32>
    %31 = arith.truncf %30 : vector<512x256xf32> to vector<512x256xbf16>
    %c0_13 = arith.constant 0 : index
    %c0_14 = arith.constant 0 : index
    %32 = vector.load %arg6[%c0_13, %c0_14] : memref<256x256xbf16, #tpu.memory_space<vmem>>, vector<256x256xbf16>
    %cst_15 = arith.constant dense<0.000000e+00> : vector<512x256xf32>
    %33 = tpu.matmul %31, %32, %cst_15 {dimension_numbers = #tpu.dot_dimension_numbers<[1], [0], [0], [1], [0, 0, 1, 1], [], []>} : vector<512x256xbf16>, vector<256x256xbf16>, vector<512x256xf32> -> vector<512x256xf32>
    %34 = vector.extract_strided_slice %0 {offsets = [0, 0], sizes = [512, 1], strides = [1, 1]} : vector<512x3xf32> to vector<512x1xf32>
    %c0_16 = arith.constant 0 : index
    %c0_17 = arith.constant 0 : index
    %35 = vector.load %arg7[%c0_16, %c0_17] : memref<3x256xf32, #tpu.memory_space<vmem>>, vector<1x256xf32>
    %36 = vector.broadcast %34 : vector<512x1xf32> to vector<512x256xf32>
    %37 = vector.broadcast %35 : vector<1x256xf32> to vector<512x256xf32>
    %38 = arith.mulf %36, %37 : vector<512x256xf32>
    %39 = arith.addf %33, %38 : vector<512x256xf32>
    %40 = vector.extract_strided_slice %0 {offsets = [0, 1], sizes = [512, 1], strides = [1, 1]} : vector<512x3xf32> to vector<512x1xf32>
    %c1_18 = arith.constant 1 : index
    %c0_19 = arith.constant 0 : index
    %41 = vector.load %arg7[%c1_18, %c0_19] : memref<3x256xf32, #tpu.memory_space<vmem>>, vector<1x256xf32>
    %42 = vector.broadcast %40 : vector<512x1xf32> to vector<512x256xf32>
    %43 = vector.broadcast %41 : vector<1x256xf32> to vector<512x256xf32>
    %44 = arith.mulf %42, %43 : vector<512x256xf32>
    %45 = arith.addf %39, %44 : vector<512x256xf32>
    %46 = vector.extract_strided_slice %0 {offsets = [0, 2], sizes = [512, 1], strides = [1, 1]} : vector<512x3xf32> to vector<512x1xf32>
    %c2_20 = arith.constant 2 : index
    %c0_21 = arith.constant 0 : index
    %47 = vector.load %arg7[%c2_20, %c0_21] : memref<3x256xf32, #tpu.memory_space<vmem>>, vector<1x256xf32>
    %48 = vector.broadcast %46 : vector<512x1xf32> to vector<512x256xf32>
    %49 = vector.broadcast %47 : vector<1x256xf32> to vector<512x256xf32>
    %50 = arith.mulf %48, %49 : vector<512x256xf32>
    %51 = arith.addf %45, %50 : vector<512x256xf32>
    %c0_22 = arith.constant 0 : index
    %c0_23 = arith.constant 0 : index
    %52 = vector.load %arg8[%c0_22, %c0_23] : memref<1x256xf32, #tpu.memory_space<vmem>>, vector<1x256xf32>
    %53 = vector.broadcast %52 : vector<1x256xf32> to vector<512x256xf32>
    %54 = arith.addf %51, %53 : vector<512x256xf32>
    %cst_24 = arith.constant 0.000000e+00 : f32
    %55 = vector.broadcast %cst_24 : f32 to vector<512x256xf32>
    %56 = arith.maximumf %54, %55 : vector<512x256xf32>
    %57 = arith.truncf %56 : vector<512x256xf32> to vector<512x256xbf16>
    %c0_25 = arith.constant 0 : index
    %c0_26 = arith.constant 0 : index
    %58 = vector.load %arg9[%c0_25, %c0_26] : memref<256x256xbf16, #tpu.memory_space<vmem>>, vector<256x256xbf16>
    %cst_27 = arith.constant dense<0.000000e+00> : vector<512x256xf32>
    %59 = tpu.matmul %57, %58, %cst_27 {dimension_numbers = #tpu.dot_dimension_numbers<[1], [0], [0], [1], [0, 0, 1, 1], [], []>} : vector<512x256xbf16>, vector<256x256xbf16>, vector<512x256xf32> -> vector<512x256xf32>
    %c0_28 = arith.constant 0 : index
    %c0_29 = arith.constant 0 : index
    %60 = vector.load %arg10[%c0_28, %c0_29] : memref<1x256xf32, #tpu.memory_space<vmem>>, vector<1x256xf32>
    %61 = vector.broadcast %60 : vector<1x256xf32> to vector<512x256xf32>
    %62 = arith.addf %59, %61 : vector<512x256xf32>
    %cst_30 = arith.constant 0.000000e+00 : f32
    %63 = vector.broadcast %cst_30 : f32 to vector<512x256xf32>
    %64 = arith.maximumf %62, %63 : vector<512x256xf32>
    %c0_31 = arith.constant 0 : index
    %c0_32 = arith.constant 0 : index
    %65 = vector.load %arg11[%c0_31, %c0_32] : memref<4x256xf32, #tpu.memory_space<vmem>>, vector<1x256xf32>
    %66 = vector.broadcast %65 : vector<1x256xf32> to vector<512x256xf32>
    %67 = arith.mulf %64, %66 : vector<512x256xf32>
    %cst_33 = arith.constant dense<0.000000e+00> : vector<512xf32>
    %68 = vector.multi_reduction <add>, %67, %cst_33 [1] : vector<512x256xf32> to vector<512xf32>
    %69 = vector.shape_cast %68 : vector<512xf32> to vector<512x1xf32>
    %c0_34 = arith.constant 0 : index
    %c0_35 = arith.constant 0 : index
    %70 = vector.load %arg12[%c0_34, %c0_35] : memref<1x4xf32, #tpu.memory_space<vmem>>, vector<1x1xf32>
    %71 = vector.broadcast %70 : vector<1x1xf32> to vector<512x1xf32>
    %72 = arith.addf %69, %71 : vector<512x1xf32>
    %c0_36 = arith.constant 0 : index
    %c0_37 = arith.constant 0 : index
    %73 = vector.load %arg13[%c0_36, %c0_37] : memref<512x4xf32, #tpu.memory_space<vmem>>, vector<512x1xf32>
    tpu.vector_store %arg13[%c0_36, %c0_37], %72 {strides = array<i32>} : memref<512x4xf32, #tpu.memory_space<vmem>>, vector<512x1xf32>,
    %c1_38 = arith.constant 1 : index
    %c0_39 = arith.constant 0 : index
    %74 = vector.load %arg11[%c1_38, %c0_39] : memref<4x256xf32, #tpu.memory_space<vmem>>, vector<1x256xf32>
    %75 = vector.broadcast %74 : vector<1x256xf32> to vector<512x256xf32>
    %76 = arith.mulf %64, %75 : vector<512x256xf32>
    %cst_40 = arith.constant dense<0.000000e+00> : vector<512xf32>
    %77 = vector.multi_reduction <add>, %76, %cst_40 [1] : vector<512x256xf32> to vector<512xf32>
    %78 = vector.shape_cast %77 : vector<512xf32> to vector<512x1xf32>
    %c0_41 = arith.constant 0 : index
    %c1_42 = arith.constant 1 : index
    %79 = vector.load %arg12[%c0_41, %c1_42] : memref<1x4xf32, #tpu.memory_space<vmem>>, vector<1x1xf32>
    %80 = vector.broadcast %79 : vector<1x1xf32> to vector<512x1xf32>
    %81 = arith.addf %78, %80 : vector<512x1xf32>
    %c0_43 = arith.constant 0 : index
    %c1_44 = arith.constant 1 : index
    %82 = vector.load %arg13[%c0_43, %c1_44] : memref<512x4xf32, #tpu.memory_space<vmem>>, vector<512x1xf32>
    tpu.vector_store %arg13[%c0_43, %c1_44], %81 {strides = array<i32>} : memref<512x4xf32, #tpu.memory_space<vmem>>, vector<512x1xf32>,
    %c2_45 = arith.constant 2 : index
    %c0_46 = arith.constant 0 : index
    %83 = vector.load %arg11[%c2_45, %c0_46] : memref<4x256xf32, #tpu.memory_space<vmem>>, vector<1x256xf32>
    %84 = vector.broadcast %83 : vector<1x256xf32> to vector<512x256xf32>
    %85 = arith.mulf %64, %84 : vector<512x256xf32>
    %cst_47 = arith.constant dense<0.000000e+00> : vector<512xf32>
    %86 = vector.multi_reduction <add>, %85, %cst_47 [1] : vector<512x256xf32> to vector<512xf32>
    %87 = vector.shape_cast %86 : vector<512xf32> to vector<512x1xf32>
    %c0_48 = arith.constant 0 : index
    %c2_49 = arith.constant 2 : index
    %88 = vector.load %arg12[%c0_48, %c2_49] : memref<1x4xf32, #tpu.memory_space<vmem>>, vector<1x1xf32>
    %89 = vector.broadcast %88 : vector<1x1xf32> to vector<512x1xf32>
    %90 = arith.addf %87, %89 : vector<512x1xf32>
    %c0_50 = arith.constant 0 : index
    %c2_51 = arith.constant 2 : index
    %91 = vector.load %arg13[%c0_50, %c2_51] : memref<512x4xf32, #tpu.memory_space<vmem>>, vector<512x1xf32>
    tpu.vector_store %arg13[%c0_50, %c2_51], %90 {strides = array<i32>} : memref<512x4xf32, #tpu.memory_space<vmem>>, vector<512x1xf32>,
    %c3 = arith.constant 3 : index
    %c0_52 = arith.constant 0 : index
    %92 = vector.load %arg11[%c3, %c0_52] : memref<4x256xf32, #tpu.memory_space<vmem>>, vector<1x256xf32>
    %93 = vector.broadcast %92 : vector<1x256xf32> to vector<512x256xf32>
    %94 = arith.mulf %64, %93 : vector<512x256xf32>
    %cst_53 = arith.constant dense<0.000000e+00> : vector<512xf32>
    %95 = vector.multi_reduction <add>, %94, %cst_53 [1] : vector<512x256xf32> to vector<512xf32>
    %96 = vector.shape_cast %95 : vector<512xf32> to vector<512x1xf32>
    %c0_54 = arith.constant 0 : index
    %c3_55 = arith.constant 3 : index
    %97 = vector.load %arg12[%c0_54, %c3_55] : memref<1x4xf32, #tpu.memory_space<vmem>>, vector<1x1xf32>
    %98 = vector.broadcast %97 : vector<1x1xf32> to vector<512x1xf32>
    %99 = arith.addf %96, %98 : vector<512x1xf32>
    %c0_56 = arith.constant 0 : index
    %c3_57 = arith.constant 3 : index
    %100 = vector.load %arg13[%c0_56, %c3_57] : memref<512x4xf32, #tpu.memory_space<vmem>>, vector<512x1xf32>
    tpu.vector_store %arg13[%c0_56, %c3_57], %99 {strides = array<i32>} : memref<512x4xf32, #tpu.memory_space<vmem>>, vector<512x1xf32>,
    return
  }
  func.func @transform_0(%arg0: i32) -> (i32, i32) {
    %c0_i32 = arith.constant 0 : i32
    %c0_i32_0 = arith.constant 0 : i32
    return %arg0, %c0_i32 : i32, i32
  }
  func.func @transform_1(%arg0: i32) -> (i32, i32) {
    %c0_i32 = arith.constant 0 : i32
    %c0_i32_0 = arith.constant 0 : i32
    %c0_i32_1 = arith.constant 0 : i32
    return %c0_i32, %c0_i32_0 : i32, i32
  }
  func.func @transform_2(%arg0: i32) -> (i32, i32) {
    %c0_i32 = arith.constant 0 : i32
    %c0_i32_0 = arith.constant 0 : i32
    %c0_i32_1 = arith.constant 0 : i32
    return %c0_i32, %c0_i32_0 : i32, i32
  }
  func.func @transform_3(%arg0: i32) -> (i32, i32) {
    %c0_i32 = arith.constant 0 : i32
    %c0_i32_0 = arith.constant 0 : i32
    %c0_i32_1 = arith.constant 0 : i32
    return %c0_i32, %c0_i32_0 : i32, i32
  }
  func.func @transform_4(%arg0: i32) -> (i32, i32) {
    %c0_i32 = arith.constant 0 : i32
    %c0_i32_0 = arith.constant 0 : i32
    %c0_i32_1 = arith.constant 0 : i32
    return %c0_i32, %c0_i32_0 : i32, i32
  }
  func.func @transform_5(%arg0: i32) -> (i32, i32) {
    %c0_i32 = arith.constant 0 : i32
    %c0_i32_0 = arith.constant 0 : i32
    %c0_i32_1 = arith.constant 0 : i32
    return %c0_i32, %c0_i32_0 : i32, i32
  }
  func.func @transform_6(%arg0: i32) -> (i32, i32) {
    %c0_i32 = arith.constant 0 : i32
    %c0_i32_0 = arith.constant 0 : i32
    %c0_i32_1 = arith.constant 0 : i32
    return %c0_i32, %c0_i32_0 : i32, i32
  }
  func.func @transform_7(%arg0: i32) -> (i32, i32) {
    %c0_i32 = arith.constant 0 : i32
    %c0_i32_0 = arith.constant 0 : i32
    %c0_i32_1 = arith.constant 0 : i32
    return %c0_i32, %c0_i32_0 : i32, i32
  }
  func.func @transform_8(%arg0: i32) -> (i32, i32) {
    %c0_i32 = arith.constant 0 : i32
    %c0_i32_0 = arith.constant 0 : i32
    %c0_i32_1 = arith.constant 0 : i32
    return %c0_i32, %c0_i32_0 : i32, i32
  }
  func.func @transform_9(%arg0: i32) -> (i32, i32) {
    %c0_i32 = arith.constant 0 : i32
    %c0_i32_0 = arith.constant 0 : i32
    %c0_i32_1 = arith.constant 0 : i32
    return %c0_i32, %c0_i32_0 : i32, i32
  }
  func.func @transform_10(%arg0: i32) -> (i32, i32) {
    %c0_i32 = arith.constant 0 : i32
    %c0_i32_0 = arith.constant 0 : i32
    %c0_i32_1 = arith.constant 0 : i32
    return %c0_i32, %c0_i32_0 : i32, i32
  }
  func.func @transform_11(%arg0: i32) -> (i32, i32) {
    %c0_i32 = arith.constant 0 : i32
    %c0_i32_0 = arith.constant 0 : i32
    %c0_i32_1 = arith.constant 0 : i32
    return %c0_i32, %c0_i32_0 : i32, i32
  }
  func.func @transform_12(%arg0: i32) -> (i32, i32) {
    %c0_i32 = arith.constant 0 : i32
    %c0_i32_0 = arith.constant 0 : i32
    return %arg0, %c0_i32 : i32, i32
  }
}

</mosaic_0001>

<llo_original>
// kernel: mlp_pallas.1
$region0: #{mlp_pallas.1}
  #allocation0 [shape = 'u32[]', space=smem, size = 0x4, offset = 0x4, fixed_abs, tag = 'smem constant byte address 0x4 - core index']
  #allocation1 [shape = 'u32[72,128]{1,0:T(1,128)}', space=vmem, size = 0x9000, scoped, tag = 'internal scratch']
  %s0 = inlined_call_operand.vmem [shape: f32[1024,3], index: 0, kind: input, shape index: {}]
  %s1 = inlined_call_operand.vmem [shape: f32[3,256], index: 1, kind: input, shape index: {}]
  %s2 = inlined_call_operand.vmem [shape: f32[1,256], index: 2, kind: input, shape index: {}]
  %s3 = inlined_call_operand.vmem [shape: bf16[256,256], index: 3, kind: input, shape index: {}]
  %s4 = inlined_call_operand.vmem [shape: f32[1,256], index: 4, kind: input, shape index: {}]
  %s5 = inlined_call_operand.vmem [shape: bf16[256,256], index: 5, kind: input, shape index: {}]
  %s6 = inlined_call_operand.vmem [shape: f32[3,256], index: 6, kind: input, shape index: {}]
  %s7 = inlined_call_operand.vmem [shape: f32[1,256], index: 7, kind: input, shape index: {}]
  %s8 = inlined_call_operand.vmem [shape: bf16[256,256], index: 8, kind: input, shape index: {}]
  %s9 = inlined_call_operand.vmem [shape: f32[1,256], index: 9, kind: input, shape index: {}]
  %s10 = inlined_call_operand.vmem [shape: f32[4,256], index: 10, kind: input, shape index: {}]
  %s11 = inlined_call_operand.vmem [shape: f32[1,4], index: 11, kind: input, shape index: {}]
  %s12 = inlined_call_operand.vmem [shape: f32[1024,4], index: 12, kind: output, shape index: {}]
  %s13 = sld [smem:[#allocation0]]
  $region81: #{mlp_pallas.1} parent=0
    _
  %s15 = ssub.s32 1, %s13
  %s16 = scalar_select 0, %s15, %s13
  loop: start=0, step=1, limit=4
  $region2: #{mlp_pallas.1} parent=0 // loop_pre_header
    _
  $region3: #{mlp_pallas.1} parent=0 // loop_header
    %s18 = sphi 0, %s22
    %p19 = scmp.ge.s32.totalorder %s18, 4
    %s28 = sphi 0, %s30
    %s31 = sphi 0, %s28
    %s32 = sphi 0, %s31
    %s48 = sphi 0, %s32
    %s52 = sphi 0, %s52
    %s54 = sphi 0, %s52
    %s55 = sphi 0, %s54
    %s69 = sphi 0, %s55
    %s73 = sphi 0, %s73
    %s75 = sphi 0, %s73
    %s76 = sphi 0, %s75
    %s90 = sphi 0, %s76
    %s94 = sphi 0, %s94
    %s96 = sphi 0, %s94
    %s97 = sphi 0, %s96
    %s111 = sphi 0, %s97
    %s115 = sphi 0, %s115
    %s117 = sphi 0, %s115
    %s118 = sphi 0, %s117
    %s132 = sphi 0, %s118
    %s136 = sphi 0, %s136
    %s138 = sphi 0, %s136
    %s139 = sphi 0, %s138
    %s153 = sphi 0, %s139
    %s157 = sphi 0, %s157
    %s159 = sphi 0, %s157
    %s160 = sphi 0, %s159
    %s174 = sphi 0, %s160
    %s178 = sphi 0, %s178
    %s180 = sphi 0, %s178
    %s181 = sphi 0, %s180
    %s195 = sphi 0, %s181
    %s199 = sphi 0, %s199
    %s201 = sphi 0, %s199
    %s202 = sphi 0, %s201
    %s216 = sphi 0, %s202
    %s220 = sphi 0, %s220
    %s222 = sphi 0, %s220
    %s223 = sphi 0, %s222
    %s237 = sphi 0, %s223
    %s241 = sphi 0, %s241
    %s243 = sphi 0, %s241
    %s244 = sphi 0, %s243
    %s258 = sphi 0, %s244
    %s262 = sphi 0, %s262
    %s264 = sphi 0, %s262
    %s265 = sphi 0, %s264
    %s279 = sphi 0, %s265
    %s285 = sphi 0, %s287
    %s288 = sphi 0, %s285
    %s289 = sphi 0, %s288
    %s305 = sphi 0, %s289
  $region4: #{mlp_pallas.1} parent=0 // loop_header_branch
    %21 = sbr.rel (%p19) target = $region8
  $region5: #{mlp_pallas.1} parent=0 // loop_body
    %s23 = ssub.s32 %s18, 1
    %s24 = ssub.s32 %s18, 2
    %s25 = sadd.s32 %s18, 1
    %s26 = ssub.s32 %s18, %s25
    %p27 = scmp.eq.s32.totalorder %s26, 0
    %s29 = sadd.s32 %s28, 1
    %s30 = scalar_select %p27, %s28, %s29
    %p33 = pneg %p27
    %p34 = scmp.eq.s32.totalorder %s18, 1
    %p35 = por %p33, %p34
    %p36 = scmp.ne.s32.totalorder %s28, %s31
    %p37 = scmp.eq.s32.totalorder %s18, 0
    %p38 = por %p36, %p37
    %p39 = scmp.ne.s32.totalorder %s28, %s31
    %p40 = scmp.eq.s32.totalorder %s23, 1
    %p41 = por %p39, %p40
    %p42 = scmp.ne.s32.totalorder %s31, %s32
    %p43 = scmp.eq.s32.totalorder %s23, 0
    %p44 = por %p42, %p43
    %p45 = scmp.ne.s32.totalorder %s31, %s32
    %p46 = scmp.eq.s32.totalorder %s24, 1
    %p47 = por %p45, %p46
    %p49 = scmp.ne.s32.totalorder %s32, %s48
    %p50 = scmp.eq.s32.totalorder %s24, 0
    %p51 = por %p49, %p50
    %s53 = sadd.s32 %s52, 1
    %p56 = scmp.eq.s32.totalorder %s18, 1
    %p57 = scmp.ne.s32.totalorder %s52, %s54
    %p58 = scmp.eq.s32.totalorder %s18, 0
    %p59 = por %p57, %p58
    %p60 = scmp.ne.s32.totalorder %s52, %s54
    %p61 = scmp.eq.s32.totalorder %s23, 1
    %p62 = por %p60, %p61
    %p63 = scmp.ne.s32.totalorder %s54, %s55
    %p64 = scmp.eq.s32.totalorder %s23, 0
    %p65 = por %p63, %p64
    %p66 = scmp.ne.s32.totalorder %s54, %s55
    %p67 = scmp.eq.s32.totalorder %s24, 1
    %p68 = por %p66, %p67
    %p70 = scmp.ne.s32.totalorder %s55, %s69
    %p71 = scmp.eq.s32.totalorder %s24, 0
    %p72 = por %p70, %p71
    %s74 = sadd.s32 %s73, 1
    %p77 = scmp.eq.s32.totalorder %s18, 1
    %p78 = scmp.ne.s32.totalorder %s73, %s75
    %p79 = scmp.eq.s32.totalorder %s18, 0
    %p80 = por %p78, %p79
    %p81 = scmp.ne.s32.totalorder %s73, %s75
    %p82 = scmp.eq.s32.totalorder %s23, 1
    %p83 = por %p81, %p82
    %p84 = scmp.ne.s32.totalorder %s75, %s76
    %p85 = scmp.eq.s32.totalorder %s23, 0
    %p86 = por %p84, %p85
    %p87 = scmp.ne.s32.totalorder %s75, %s76
    %p88 = scmp.eq.s32.totalorder %s24, 1
    %p89 = por %p87, %p88
    %p91 = scmp.ne.s32.totalorder %s76, %s90
    %p92 = scmp.eq.s32.totalorder %s24, 0
    %p93 = por %p91, %p92
    %s95 = sadd.s32 %s94, 1
    %p98 = scmp.eq.s32.totalorder %s18, 1
    %p99 = scmp.ne.s32.totalorder %s94, %s96
    %p100 = scmp.eq.s32.totalorder %s18, 0
    %p101 = por %p99, %p100
    %p102 = scmp.ne.s32.totalorder %s94, %s96
    %p103 = scmp.eq.s32.totalorder %s23, 1
    %p104 = por %p102, %p103
    %p105 = scmp.ne.s32.totalorder %s96, %s97
    %p106 = scmp.eq.s32.totalorder %s23, 0
    %p107 = por %p105, %p106
    %p108 = scmp.ne.s32.totalorder %s96, %s97
    %p109 = scmp.eq.s32.totalorder %s24, 1
    %p110 = por %p108, %p109
    %p112 = scmp.ne.s32.totalorder %s97, %s111
    %p113 = scmp.eq.s32.totalorder %s24, 0
    %p114 = por %p112, %p113
    %s116 = sadd.s32 %s115, 1
    %p119 = scmp.eq.s32.totalorder %s18, 1
    %p120 = scmp.ne.s32.totalorder %s115, %s117
    %p121 = scmp.eq.s32.totalorder %s18, 0
    %p122 = por %p120, %p121
    %p123 = scmp.ne.s32.totalorder %s115, %s117
    %p124 = scmp.eq.s32.totalorder %s23, 1
    %p125 = por %p123, %p124
    %p126 = scmp.ne.s32.totalorder %s117, %s118
    %p127 = scmp.eq.s32.totalorder %s23, 0
    %p128 = por %p126, %p127
    %p129 = scmp.ne.s32.totalorder %s117, %s118
    %p130 = scmp.eq.s32.totalorder %s24, 1
    %p131 = por %p129, %p130
    %p133 = scmp.ne.s32.totalorder %s118, %s132
    %p134 = scmp.eq.s32.totalorder %s24, 0
    %p135 = por %p133, %p134
    %s137 = sadd.s32 %s136, 1
    %p140 = scmp.eq.s32.totalorder %s18, 1
    %p141 = scmp.ne.s32.totalorder %s136, %s138
    %p142 = scmp.eq.s32.totalorder %s18, 0
    %p143 = por %p141, %p142
    %p144 = scmp.ne.s32.totalorder %s136, %s138
    %p145 = scmp.eq.s32.totalorder %s23, 1
    %p146 = por %p144, %p145
    %p147 = scmp.ne.s32.totalorder %s138, %s139
    %p148 = scmp.eq.s32.totalorder %s23, 0
    %p149 = por %p147, %p148
    %p150 = scmp.ne.s32.totalorder %s138, %s139
    %p151 = scmp.eq.s32.totalorder %s24, 1
    %p152 = por %p150, %p151
    %p154 = scmp.ne.s32.totalorder %s139, %s153
    %p155 = scmp.eq.s32.totalorder %s24, 0
    %p156 = por %p154, %p155
    %s158 = sadd.s32 %s157, 1
    %p161 = scmp.eq.s32.totalorder %s18, 1
    %p162 = scmp.ne.s32.totalorder %s157, %s159
    %p163 = scmp.eq.s32.totalorder %s18, 0
    %p164 = por %p162, %p163
    %p165 = scmp.ne.s32.totalorder %s157, %s159
    %p166 = scmp.eq.s32.totalorder %s23, 1
    %p167 = por %p165, %p166
    %p168 = scmp.ne.s32.totalorder %s159, %s160
    %p169 = scmp.eq.s32.totalorder %s23, 0
    %p170 = por %p168, %p169
    %p171 = scmp.ne.s32.totalorder %s159, %s160
    %p172 = scmp.eq.s32.totalorder %s24, 1
    %p173 = por %p171, %p172
    %p175 = scmp.ne.s32.totalorder %s160, %s174
    %p176 = scmp.eq.s32.totalorder %s24, 0
    %p177 = por %p175, %p176
    %s179 = sadd.s32 %s178, 1
    %p182 = scmp.eq.s32.totalorder %s18, 1
    %p183 = scmp.ne.s32.totalorder %s178, %s180
    %p184 = scmp.eq.s32.totalorder %s18, 0
    %p185 = por %p183, %p184
    %p186 = scmp.ne.s32.totalorder %s178, %s180
    %p187 = scmp.eq.s32.totalorder %s23, 1
    %p188 = por %p186, %p187
    %p189 = scmp.ne.s32.totalorder %s180, %s181
    %p190 = scmp.eq.s32.totalorder %s23, 0
    %p191 = por %p189, %p190
    %p192 = scmp.ne.s32.totalorder %s180, %s181
    %p193 = scmp.eq.s32.totalorder %s24, 1
    %p194 = por %p192, %p193
    %p196 = scmp.ne.s32.totalorder %s181, %s195
    %p197 = scmp.eq.s32.totalorder %s24, 0
    %p198 = por %p196, %p197
    %s200 = sadd.s32 %s199, 1
    %p203 = scmp.eq.s32.totalorder %s18, 1
    %p204 = scmp.ne.s32.totalorder %s199, %s201
    %p205 = scmp.eq.s32.totalorder %s18, 0
    %p206 = por %p204, %p205
    %p207 = scmp.ne.s32.totalorder %s199, %s201
    %p208 = scmp.eq.s32.totalorder %s23, 1
    %p209 = por %p207, %p208
    %p210 = scmp.ne.s32.totalorder %s201, %s202
    %p211 = scmp.eq.s32.totalorder %s23, 0
    %p212 = por %p210, %p211
    %p213 = scmp.ne.s32.totalorder %s201, %s202
    %p214 = scmp.eq.s32.totalorder %s24, 1
    %p215 = por %p213, %p214
    %p217 = scmp.ne.s32.totalorder %s202, %s216
    %p218 = scmp.eq.s32.totalorder %s24, 0
    %p219 = por %p217, %p218
    %s221 = sadd.s32 %s220, 1
    %p224 = scmp.eq.s32.totalorder %s18, 1
    %p225 = scmp.ne.s32.totalorder %s220, %s222
    %p226 = scmp.eq.s32.totalorder %s18, 0
    %p227 = por %p225, %p226
    %p228 = scmp.ne.s32.totalorder %s220, %s222
    %p229 = scmp.eq.s32.totalorder %s23, 1
    %p230 = por %p228, %p229
    %p231 = scmp.ne.s32.totalorder %s222, %s223
    %p232 = scmp.eq.s32.totalorder %s23, 0
    %p233 = por %p231, %p232
    %p234 = scmp.ne.s32.totalorder %s222, %s223
    %p235 = scmp.eq.s32.totalorder %s24, 1
    %p236 = por %p234, %p235
    %p238 = scmp.ne.s32.totalorder %s223, %s237
    %p239 = scmp.eq.s32.totalorder %s24, 0
    %p240 = por %p238, %p239
    %s242 = sadd.s32 %s241, 1
    %p245 = scmp.eq.s32.totalorder %s18, 1
    %p246 = scmp.ne.s32.totalorder %s241, %s243
    %p247 = scmp.eq.s32.totalorder %s18, 0
    %p248 = por %p246, %p247
    %p249 = scmp.ne.s32.totalorder %s241, %s243
    %p250 = scmp.eq.s32.totalorder %s23, 1
    %p251 = por %p249, %p250
    %p252 = scmp.ne.s32.totalorder %s243, %s244
    %p253 = scmp.eq.s32.totalorder %s23, 0
    %p254 = por %p252, %p253
    %p255 = scmp.ne.s32.totalorder %s243, %s244
    %p256 = scmp.eq.s32.totalorder %s24, 1
    %p257 = por %p255, %p256
    %p259 = scmp.ne.s32.totalorder %s244, %s258
    %p260 = scmp.eq.s32.totalorder %s24, 0
    %p261 = por %p259, %p260
    %s263 = sadd.s32 %s262, 1
    %p266 = scmp.eq.s32.totalorder %s18, 1
    %p267 = scmp.ne.s32.totalorder %s262, %s264
    %p268 = scmp.eq.s32.totalorder %s18, 0
    %p269 = por %p267, %p268
    %p270 = scmp.ne.s32.totalorder %s262, %s264
    %p271 = scmp.eq.s32.totalorder %s23, 1
    %p272 = por %p270, %p271
    %p273 = scmp.ne.s32.totalorder %s264, %s265
    %p274 = scmp.eq.s32.totalorder %s23, 0
    %p275 = por %p273, %p274
    %p276 = scmp.ne.s32.totalorder %s264, %s265
    %p277 = scmp.eq.s32.totalorder %s24, 1
    %p278 = por %p276, %p277
    %p280 = scmp.ne.s32.totalorder %s265, %s279
    %p281 = scmp.eq.s32.totalorder %s24, 0
    %p282 = por %p280, %p281
    %s283 = ssub.s32 %s18, %s25
    %p284 = scmp.eq.s32.totalorder %s283, 0
    %s286 = sadd.s32 %s285, 1
    %s287 = scalar_select %p284, %s285, %s286
    %p290 = pneg %p284
    %p291 = scmp.eq.s32.totalorder %s18, 1
    %p292 = por %p290, %p291
    %p293 = scmp.ne.s32.totalorder %s285, %s288
    %p294 = scmp.eq.s32.totalorder %s18, 0
    %p295 = por %p293, %p294
    %p296 = scmp.ne.s32.totalorder %s285, %s288
    %p297 = scmp.eq.s32.totalorder %s23, 1
    %p298 = por %p296, %p297
    %p299 = scmp.ne.s32.totalorder %s288, %s289
    %p300 = scmp.eq.s32.totalorder %s23, 0
    %p301 = por %p299, %p300
    %p302 = scmp.ne.s32.totalorder %s288, %s289
    %p303 = scmp.eq.s32.totalorder %s24, 1
    %p304 = por %p302, %p303
    %p306 = scmp.ne.s32.totalorder %s289, %s305
    %p307 = scmp.eq.s32.totalorder %s24, 0
    %p308 = por %p306, %p307
    %p309 = scmp.le.s32.totalorder 1, %s18
    %p310 = scmp.lt.s32.totalorder %s18, 3
    %p311 = pnand %p309, %p310
    %p312 = pneg %p311
    // Predicated region
    $region9: #{mlp_pallas.1} parent=5 // pred_check
      _
    $region10: #{mlp_pallas.1} parent=5 // pred_check_branch
      %314 = sbr.rel (%p311) target = $region12
    $region11: #{mlp_pallas.1} parent=5 // pred_region
      %s315 = ssub.s32 %s18, 1
      // Predicated region
      $region13: #{mlp_pallas.1} parent=11 // pred_check
        %p316 = pneg %p65
      $region14: #{mlp_pallas.1} parent=11 // pred_check_branch
        %318 = sbr.rel (%p316) target = $region16
      $region15: #{mlp_pallas.1} parent=11 // pred_region
        _
      $region16: #{mlp_pallas.1} parent=11 // pred_fallthru
        _
      // Predicated region
      $region17: #{mlp_pallas.1} parent=11 // pred_check
        %p319 = pneg %p86
      $region18: #{mlp_pallas.1} parent=11 // pred_check_branch
        %321 = sbr.rel (%p319) target = $region20
      $region19: #{mlp_pallas.1} parent=11 // pred_region
        _
      $region20: #{mlp_pallas.1} parent=11 // pred_fallthru
        _
      // Predicated region
      $region21: #{mlp_pallas.1} parent=11 // pred_check
        %p322 = pneg %p107
      $region22: #{mlp_pallas.1} parent=11 // pred_check_branch
        %324 = sbr.rel (%p322) target = $region24
      $region23: #{mlp_pallas.1} parent=11 // pred_region
        _
      $region24: #{mlp_pallas.1} parent=11 // pred_fallthru
        _
      // Predicated region
      $region25: #{mlp_pallas.1} parent=11 // pred_check
        %p325 = pneg %p128
      $region26: #{mlp_pallas.1} parent=11 // pred_check_branch
        %327 = sbr.rel (%p325) target = $region28
      $region27: #{mlp_pallas.1} parent=11 // pred_region
        _
      $region28: #{mlp_pallas.1} parent=11 // pred_fallthru
        _
      // Predicated region
      $region29: #{mlp_pallas.1} parent=11 // pred_check
        %p328 = pneg %p149
      $region30: #{mlp_pallas.1} parent=11 // pred_check_branch
        %330 = sbr.rel (%p328) target = $region32
      $region31: #{mlp_pallas.1} parent=11 // pred_region
        _
      $region32: #{mlp_pallas.1} parent=11 // pred_fallthru
        _
      // Predicated region
      $region33: #{mlp_pallas.1} parent=11 // pred_check
        %p331 = pneg %p170
      $region34: #{mlp_pallas.1} parent=11 // pred_check_branch
        %333 = sbr.rel (%p331) target = $region36
      $region35: #{mlp_pallas.1} parent=11 // pred_region
        _
      $region36: #{mlp_pallas.1} parent=11 // pred_fallthru
        _
      // Predicated region
      $region37: #{mlp_pallas.1} parent=11 // pred_check
        %p334 = pneg %p191
      $region38: #{mlp_pallas.1} parent=11 // pred_check_branch
        %336 = sbr.rel (%p334) target = $region40
      $region39: #{mlp_pallas.1} parent=11 // pred_region
        _
      $region40: #{mlp_pallas.1} parent=11 // pred_fallthru
        _
      // Predicated region
      $region41: #{mlp_pallas.1} parent=11 // pred_check
        %p337 = pneg %p212
      $region42: #{mlp_pallas.1} parent=11 // pred_check_branch
        %339 = sbr.rel (%p337) target = $region44
      $region43: #{mlp_pallas.1} parent=11 // pred_region
        _
      $region44: #{mlp_pallas.1} parent=11 // pred_fallthru
        _
      // Predicated region
      $region45: #{mlp_pallas.1} parent=11 // pred_check
        %p340 = pneg %p233
      $region46: #{mlp_pallas.1} parent=11 // pred_check_branch
        %342 = sbr.rel (%p340) target = $region48
      $region47: #{mlp_pallas.1} parent=11 // pred_region
        _
      $region48: #{mlp_pallas.1} parent=11 // pred_fallthru
        _
      // Predicated region
      $region49: #{mlp_pallas.1} parent=11 // pred_check
        %p343 = pneg %p254
      $region50: #{mlp_pallas.1} parent=11 // pred_check_branch
        %345 = sbr.rel (%p343) target = $region52
      $region51: #{mlp_pallas.1} parent=11 // pred_region
        _
      $region52: #{mlp_pallas.1} parent=11 // pred_fallthru
        _
      // Predicated region
      $region53: #{mlp_pallas.1} parent=11 // pred_check
        %p346 = pneg %p275
      $region54: #{mlp_pallas.1} parent=11 // pred_check_branch
        %348 = sbr.rel (%p346) target = $region56
      $region55: #{mlp_pallas.1} parent=11 // pred_region
        _
      $region56: #{mlp_pallas.1} parent=11 // pred_fallthru
        _
    $region12: #{mlp_pallas.1} parent=5 // pred_fallthru
      _
    %p349 = scmp.lt.s32.totalorder %s18, 2
    // Predicated region
    $region57: #{mlp_pallas.1} parent=5 // pred_check
      %p350 = pneg %p349
    $region58: #{mlp_pallas.1} parent=5 // pred_check_branch
      %352 = sbr.rel (%p350) target = $region60
    $region59: #{mlp_pallas.1} parent=5 // pred_region
      // Predicated region
      $region61: #{mlp_pallas.1} parent=59 // pred_check
        %p353 = pneg %p38
      $region62: #{mlp_pallas.1} parent=59 // pred_check_branch
        %355 = sbr.rel (%p353) target = $region64
      $region63: #{mlp_pallas.1} parent=59 // pred_region
        %s356 = smul.u32 64, %s18
        %p357 = scmp.lt.s32.totalorder %s356, 127
        %s358 = scalar_select %p357, %s356, 127
        %s359 = smul.addr %s358, 8
        %s360 = scalar_lea.vmem %s0, %s359
        %s361 = smul.u32 64, %s18
      $region64: #{mlp_pallas.1} parent=59 // pred_fallthru
        _
    $region60: #{mlp_pallas.1} parent=5 // pred_fallthru
      _
    %p362 = scmp.le.s32.totalorder 1, %s18
    %p363 = scmp.lt.s32.totalorder %s18, 3
    %p364 = pnand %p362, %p363
    %p365 = pneg %p364
    // Predicated region
    $region65: #{mlp_pallas.1} parent=5 // pred_check
      _
    $region66: #{mlp_pallas.1} parent=5 // pred_check_branch
      %367 = sbr.rel (%p364) target = $region68
    $region67: #{mlp_pallas.1} parent=5 // pred_region
      %s368 = ssub.s32 %s18, 1
      %s369 = smul.u32 64, %s23
      %p370 = scmp.lt.s32.totalorder %s369, 127
      %s371 = scalar_select %p370, %s369, 127
      %s372 = smul.addr %s371, 8
      %s373 = scalar_lea.vmem %s0, %s372
      %p374 = pneg %p44
      %p375 = pneg %p41
      %p376 = pneg %p65
      %p377 = pneg %p62
      %p378 = pneg %p86
      %p379 = pneg %p83
      %p380 = pneg %p107
      %p381 = pneg %p104
      %p382 = pneg %p128
      %p383 = pneg %p125
      %p384 = pneg %p149
      %p385 = pneg %p146
      %p386 = pneg %p170
      %p387 = pneg %p167
      %p388 = pneg %p191
      %p389 = pneg %p188
      %p390 = pneg %p212
      %p391 = pneg %p209
      %p392 = pneg %p233
      %p393 = pneg %p230
      %p394 = pneg %p254
      %p395 = pneg %p251
      %p396 = pneg %p275
      %p397 = pneg %p272
      %p398 = pneg %p301
      %p399 = pneg %p298
      %s400 = smul.u32 64, %s23
      %p401 = scmp.lt.s32.totalorder %s400, 127
      %s402 = scalar_select %p401, %s400, 127
      %s403 = smul.addr %s402, 8
      %s404 = scalar_lea.vmem %s12, %s403
      %s405 = smul.u32 64, %s23
      %p406 = scmp.lt.s32.totalorder %s405, 127
      %s407 = scalar_select %p406, %s405, 127
      %s408 = smul.addr %s407, 8
      %s409 = scalar_lea.vmem %s0, %s408
      %s410 = smul.u32 64, %s23
      %s411 = smul.u32 64, %s23
      %p412 = scmp.lt.s32.totalorder %s411, 127
      %s413 = scalar_select %p412, %s411, 127
      %s414 = smul.addr %s413, 8
      %s415 = scalar_lea.vmem %s12, %s414
      %s416 = smul.u32 64, %s23
      %v417 = vld [vmem:[%s409] sm:$0xff]
      %v418 = vld [vmem:[%s409 + $0x8] sm:$0xff]
      %v419 = vld [vmem:[%s409 + $0x10] sm:$0xff]
      %v420 = vld [vmem:[%s409 + $0x18] sm:$0xff]
      %v421 = vld [vmem:[%s409 + $0x20] sm:$0xff]
      %v422 = vld [vmem:[%s409 + $0x28] sm:$0xff]
      %v423 = vld [vmem:[%s409 + $0x30] sm:$0xff]
      %v424 = vld [vmem:[%s409 + $0x38] sm:$0xff]
      %v425 = vld [vmem:[%s409 + $0x40] sm:$0xff]
      %v426 = vld [vmem:[%s409 + $0x48] sm:$0xff]
      %v427 = vld [vmem:[%s409 + $0x50] sm:$0xff]
      %v428 = vld [vmem:[%s409 + $0x58] sm:$0xff]
      %v429 = vld [vmem:[%s409 + $0x60] sm:$0xff]
      %v430 = vld [vmem:[%s409 + $0x68] sm:$0xff]
      %v431 = vld [vmem:[%s409 + $0x70] sm:$0xff]
      %v432 = vld [vmem:[%s409 + $0x78] sm:$0xff]
      %v433 = vld [vmem:[%s409 + $0x80] sm:$0xff]
      %v434 = vld [vmem:[%s409 + $0x88] sm:$0xff]
      %v435 = vld [vmem:[%s409 + $0x90] sm:$0xff]
      %v436 = vld [vmem:[%s409 + $0x98] sm:$0xff]
      %v437 = vld [vmem:[%s409 + $0xa0] sm:$0xff]
      %v438 = vld [vmem:[%s409 + $0xa8] sm:$0xff]
      %v439 = vld [vmem:[%s409 + $0xb0] sm:$0xff]
      %v440 = vld [vmem:[%s409 + $0xb8] sm:$0xff]
      %v441 = vld [vmem:[%s409 + $0xc0] sm:$0xff]
      %v442 = vld [vmem:[%s409 + $0xc8] sm:$0xff]
      %v443 = vld [vmem:[%s409 + $0xd0] sm:$0xff]
      %v444 = vld [vmem:[%s409 + $0xd8] sm:$0xff]
      %v445 = vld [vmem:[%s409 + $0xe0] sm:$0xff]
      %v446 = vld [vmem:[%s409 + $0xe8] sm:$0xff]
      %v447 = vld [vmem:[%s409 + $0xf0] sm:$0xff]
      %v448 = vld [vmem:[%s409 + $0xf8] sm:$0xff]
      %v449 = vld [vmem:[%s409 + $0x100] sm:$0xff]
      %v450 = vld [vmem:[%s409 + $0x108] sm:$0xff]
      %v451 = vld [vmem:[%s409 + $0x110] sm:$0xff]
      %v452 = vld [vmem:[%s409 + $0x118] sm:$0xff]
      %v453 = vld [vmem:[%s409 + $0x120] sm:$0xff]
      %v454 = vld [vmem:[%s409 + $0x128] sm:$0xff]
      %v455 = vld [vmem:[%s409 + $0x130] sm:$0xff]
      %v456 = vld [vmem:[%s409 + $0x138] sm:$0xff]
      %v457 = vld [vmem:[%s409 + $0x140] sm:$0xff]
      %v458 = vld [vmem:[%s409 + $0x148] sm:$0xff]
      %v459 = vld [vmem:[%s409 + $0x150] sm:$0xff]
      %v460 = vld [vmem:[%s409 + $0x158] sm:$0xff]
      %v461 = vld [vmem:[%s409 + $0x160] sm:$0xff]
      %v462 = vld [vmem:[%s409 + $0x168] sm:$0xff]
      %v463 = vld [vmem:[%s409 + $0x170] sm:$0xff]
      %v464 = vld [vmem:[%s409 + $0x178] sm:$0xff]
      %v465 = vld [vmem:[%s409 + $0x180] sm:$0xff]
      %v466 = vld [vmem:[%s409 + $0x188] sm:$0xff]
      %v467 = vld [vmem:[%s409 + $0x190] sm:$0xff]
      %v468 = vld [vmem:[%s409 + $0x198] sm:$0xff]
      %v469 = vld [vmem:[%s409 + $0x1a0] sm:$0xff]
      %v470 = vld [vmem:[%s409 + $0x1a8] sm:$0xff]
      %v471 = vld [vmem:[%s409 + $0x1b0] sm:$0xff]
      %v472 = vld [vmem:[%s409 + $0x1b8] sm:$0xff]
      %v473 = vld [vmem:[%s409 + $0x1c0] sm:$0xff]
      %v474 = vld [vmem:[%s409 + $0x1c8] sm:$0xff]
      %v475 = vld [vmem:[%s409 + $0x1d0] sm:$0xff]
      %v476 = vld [vmem:[%s409 + $0x1d8] sm:$0xff]
      %v477 = vld [vmem:[%s409 + $0x1e0] sm:$0xff]
      %v478 = vld [vmem:[%s409 + $0x1e8] sm:$0xff]
      %v479 = vld [vmem:[%s409 + $0x1f0] sm:$0xff]
      %v480 = vld [vmem:[%s409 + $0x1f8] sm:$0xff]
      %v481 = vld [vmem:[%s1] ss:$4 sm:$0x3]
      %483 = vset.pattern.permute.xlu0 0
      %484 = vperm.xlu0 %483, %v417
      %v485 = vpop.permute.xlu0 %484
      %488 = vset.pattern.permute.xlu0 0
      %489 = vperm.xlu0 %488, %v418
      %v490 = vpop.permute.xlu0 %489
      %493 = vset.pattern.permute.xlu0 0
      %494 = vperm.xlu0 %493, %v419
      %v495 = vpop.permute.xlu0 %494
      %498 = vset.pattern.permute.xlu0 0
      %499 = vperm.xlu0 %498, %v420
      %v500 = vpop.permute.xlu0 %499
      %503 = vset.pattern.permute.xlu0 0
      %504 = vperm.xlu0 %503, %v421
      %v505 = vpop.permute.xlu0 %504
      %508 = vset.pattern.permute.xlu0 0
      %509 = vperm.xlu0 %508, %v422
      %v510 = vpop.permute.xlu0 %509
      %513 = vset.pattern.permute.xlu0 0
      %514 = vperm.xlu0 %513, %v423
      %v515 = vpop.permute.xlu0 %514
      %518 = vset.pattern.permute.xlu0 0
      %519 = vperm.xlu0 %518, %v424
      %v520 = vpop.permute.xlu0 %519
      %523 = vset.pattern.permute.xlu0 0
      %524 = vperm.xlu0 %523, %v425
      %v525 = vpop.permute.xlu0 %524
      %528 = vset.pattern.permute.xlu0 0
      %529 = vperm.xlu0 %528, %v426
      %v530 = vpop.permute.xlu0 %529
      %533 = vset.pattern.permute.xlu0 0
      %534 = vperm.xlu0 %533, %v427
      %v535 = vpop.permute.xlu0 %534
      %538 = vset.pattern.permute.xlu0 0
      %539 = vperm.xlu0 %538, %v428
      %v540 = vpop.permute.xlu0 %539
      %543 = vset.pattern.permute.xlu0 0
      %544 = vperm.xlu0 %543, %v429
      %v545 = vpop.permute.xlu0 %544
      %548 = vset.pattern.permute.xlu0 0
      %549 = vperm.xlu0 %548, %v430
      %v550 = vpop.permute.xlu0 %549
      %553 = vset.pattern.permute.xlu0 0
      %554 = vperm.xlu0 %553, %v431
      %v555 = vpop.permute.xlu0 %554
      %558 = vset.pattern.permute.xlu0 0
      %559 = vperm.xlu0 %558, %v432
      %v560 = vpop.permute.xlu0 %559
      %563 = vset.pattern.permute.xlu0 0
      %564 = vperm.xlu0 %563, %v433
      %v565 = vpop.permute.xlu0 %564
      %568 = vset.pattern.permute.xlu0 0
      %569 = vperm.xlu0 %568, %v434
      %v570 = vpop.permute.xlu0 %569
      %573 = vset.pattern.permute.xlu0 0
      %574 = vperm.xlu0 %573, %v435
      %v575 = vpop.permute.xlu0 %574
      %578 = vset.pattern.permute.xlu0 0
      %579 = vperm.xlu0 %578, %v436
      %v580 = vpop.permute.xlu0 %579
      %583 = vset.pattern.permute.xlu0 0
      %584 = vperm.xlu0 %583, %v437
      %v585 = vpop.permute.xlu0 %584
      %588 = vset.pattern.permute.xlu0 0
      %589 = vperm.xlu0 %588, %v438
      %v590 = vpop.permute.xlu0 %589
      %593 = vset.pattern.permute.xlu0 0
      %594 = vperm.xlu0 %593, %v439
      %v595 = vpop.permute.xlu0 %594
      %598 = vset.pattern.permute.xlu0 0
      %599 = vperm.xlu0 %598, %v440
      %v600 = vpop.permute.xlu0 %599
      %603 = vset.pattern.permute.xlu0 0
      %604 = vperm.xlu0 %603, %v441
      %v605 = vpop.permute.xlu0 %604
      %608 = vset.pattern.permute.xlu0 0
      %609 = vperm.xlu0 %608, %v442
      %v610 = vpop.permute.xlu0 %609
      %613 = vset.pattern.permute.xlu0 0
      %614 = vperm.xlu0 %613, %v443
      %v615 = vpop.permute.xlu0 %614
      %618 = vset.pattern.permute.xlu0 0
      %619 = vperm.xlu0 %618, %v444
      %v620 = vpop.permute.xlu0 %619
      %623 = vset.pattern.permute.xlu0 0
      %624 = vperm.xlu0 %623, %v445
      %v625 = vpop.permute.xlu0 %624
      %628 = vset.pattern.permute.xlu0 0
      %629 = vperm.xlu0 %628, %v446
      %v630 = vpop.permute.xlu0 %629
      %633 = vset.pattern.permute.xlu0 0
      %634 = vperm.xlu0 %633, %v447
      %v635 = vpop.permute.xlu0 %634
      %638 = vset.pattern.permute.xlu0 0
      %639 = vperm.xlu0 %638, %v448
      %v640 = vpop.permute.xlu0 %639
      %643 = vset.pattern.permute.xlu0 0
      %644 = vperm.xlu0 %643, %v449
      %v645 = vpop.permute.xlu0 %644
      %648 = vset.pattern.permute.xlu0 0
      %649 = vperm.xlu0 %648, %v450
      %v650 = vpop.permute.xlu0 %649
      %653 = vset.pattern.permute.xlu0 0
      %654 = vperm.xlu0 %653, %v451
      %v655 = vpop.permute.xlu0 %654
      %658 = vset.pattern.permute.xlu0 0
      %659 = vperm.xlu0 %658, %v452
      %v660 = vpop.permute.xlu0 %659
      %663 = vset.pattern.permute.xlu0 0
      %664 = vperm.xlu0 %663, %v453
      %v665 = vpop.permute.xlu0 %664
      %668 = vset.pattern.permute.xlu0 0
      %669 = vperm.xlu0 %668, %v454
      %v670 = vpop.permute.xlu0 %669
      %673 = vset.pattern.permute.xlu0 0
      %674 = vperm.xlu0 %673, %v455
      %v675 = vpop.permute.xlu0 %674
      %678 = vset.pattern.permute.xlu0 0
      %679 = vperm.xlu0 %678, %v456
      %v680 = vpop.permute.xlu0 %679
      %683 = vset.pattern.permute.xlu0 0
      %684 = vperm.xlu0 %683, %v457
      %v685 = vpop.permute.xlu0 %684
      %688 = vset.pattern.permute.xlu0 0
      %689 = vperm.xlu0 %688, %v458
      %v690 = vpop.permute.xlu0 %689
      %693 = vset.pattern.permute.xlu0 0
      %694 = vperm.xlu0 %693, %v459
      %v695 = vpop.permute.xlu0 %694
      %698 = vset.pattern.permute.xlu0 0
      %699 = vperm.xlu0 %698, %v460
      %v700 = vpop.permute.xlu0 %699
      %703 = vset.pattern.permute.xlu0 0
      %704 = vperm.xlu0 %703, %v461
      %v705 = vpop.permute.xlu0 %704
      %708 = vset.pattern.permute.xlu0 0
      %709 = vperm.xlu0 %708, %v462
      %v710 = vpop.permute.xlu0 %709
      %713 = vset.pattern.permute.xlu0 0
      %714 = vperm.xlu0 %713, %v463
      %v715 = vpop.permute.xlu0 %714
      %718 = vset.pattern.permute.xlu0 0
      %719 = vperm.xlu0 %718, %v464
      %v720 = vpop.permute.xlu0 %719
      %723 = vset.pattern.permute.xlu0 0
      %724 = vperm.xlu0 %723, %v465
      %v725 = vpop.permute.xlu0 %724
      %728 = vset.pattern.permute.xlu0 0
      %729 = vperm.xlu0 %728, %v466
      %v730 = vpop.permute.xlu0 %729
      %733 = vset.pattern.permute.xlu0 0
      %734 = vperm.xlu0 %733, %v467
      %v735 = vpop.permute.xlu0 %734
      %738 = vset.pattern.permute.xlu0 0
      %739 = vperm.xlu0 %738, %v468
      %v740 = vpop.permute.xlu0 %739
      %743 = vset.pattern.permute.xlu0 0
      %744 = vperm.xlu0 %743, %v469
      %v745 = vpop.permute.xlu0 %744
      %748 = vset.pattern.permute.xlu0 0
      %749 = vperm.xlu0 %748, %v470
      %v750 = vpop.permute.xlu0 %749
      %753 = vset.pattern.permute.xlu0 0
      %754 = vperm.xlu0 %753, %v471
      %v755 = vpop.permute.xlu0 %754
      %758 = vset.pattern.permute.xlu0 0
      %759 = vperm.xlu0 %758, %v472
      %v760 = vpop.permute.xlu0 %759
      %763 = vset.pattern.permute.xlu0 0
      %764 = vperm.xlu0 %763, %v473
      %v765 = vpop.permute.xlu0 %764
      %768 = vset.pattern.permute.xlu0 0
      %769 = vperm.xlu0 %768, %v474
      %v770 = vpop.permute.xlu0 %769
      %773 = vset.pattern.permute.xlu0 0
      %774 = vperm.xlu0 %773, %v475
      %v775 = vpop.permute.xlu0 %774
      %778 = vset.pattern.permute.xlu0 0
      %779 = vperm.xlu0 %778, %v476
      %v780 = vpop.permute.xlu0 %779
      %783 = vset.pattern.permute.xlu0 0
      %784 = vperm.xlu0 %783, %v477
      %v785 = vpop.permute.xlu0 %784
      %788 = vset.pattern.permute.xlu0 0
      %789 = vperm.xlu0 %788, %v478
      %v790 = vpop.permute.xlu0 %789
      %793 = vset.pattern.permute.xlu0 0
      %794 = vperm.xlu0 %793, %v479
      %v795 = vpop.permute.xlu0 %794
      %798 = vset.pattern.permute.xlu0 0
      %799 = vperm.xlu0 %798, %v480
      %v800 = vpop.permute.xlu0 %799
      %v803 = vperm.slane %v481, 0
      %v804 = vperm.slane %v481, 1
      %v807 = vmul.f32 %v485, %v803
      %v808 = vmul.f32 %v485, %v804
      %v809 = vmul.f32 %v490, %v803
      %v810 = vmul.f32 %v490, %v804
      %v811 = vmul.f32 %v495, %v803
      %v812 = vmul.f32 %v495, %v804
      %v813 = vmul.f32 %v500, %v803
      %v814 = vmul.f32 %v500, %v804
      %v815 = vmul.f32 %v505, %v803
      %v816 = vmul.f32 %v505, %v804
      %v817 = vmul.f32 %v510, %v803
      %v818 = vmul.f32 %v510, %v804
      %v819 = vmul.f32 %v515, %v803
      %v820 = vmul.f32 %v515, %v804
      %v821 = vmul.f32 %v520, %v803
      %v822 = vmul.f32 %v520, %v804
      %v823 = vmul.f32 %v525, %v803
      %v824 = vmul.f32 %v525, %v804
      %v825 = vmul.f32 %v530, %v803
      %v826 = vmul.f32 %v530, %v804
      %v827 = vmul.f32 %v535, %v803
      %v828 = vmul.f32 %v535, %v804
      %v829 = vmul.f32 %v540, %v803
      %v830 = vmul.f32 %v540, %v804
      %v831 = vmul.f32 %v545, %v803
      %v832 = vmul.f32 %v545, %v804
      %v833 = vmul.f32 %v550, %v803
      %v834 = vmul.f32 %v550, %v804
      %v835 = vmul.f32 %v555, %v803
      %v836 = vmul.f32 %v555, %v804
      %v837 = vmul.f32 %v560, %v803
      %v838 = vmul.f32 %v560, %v804
      %v839 = vmul.f32 %v565, %v803
      %v840 = vmul.f32 %v565, %v804
      %v841 = vmul.f32 %v570, %v803
      %v842 = vmul.f32 %v570, %v804
      %v843 = vmul.f32 %v575, %v803
      %v844 = vmul.f32 %v575, %v804
      %v845 = vmul.f32 %v580, %v803
      %v846 = vmul.f32 %v580, %v804
      %v847 = vmul.f32 %v585, %v803
      %v848 = vmul.f32 %v585, %v804
      %v849 = vmul.f32 %v590, %v803
      %v850 = vmul.f32 %v590, %v804
      %v851 = vmul.f32 %v595, %v803
      %v852 = vmul.f32 %v595, %v804
      %v853 = vmul.f32 %v600, %v803
      %v854 = vmul.f32 %v600, %v804
      %v855 = vmul.f32 %v605, %v803
      %v856 = vmul.f32 %v605, %v804
      %v857 = vmul.f32 %v610, %v803
      %v858 = vmul.f32 %v610, %v804
      %v859 = vmul.f32 %v615, %v803
      %v860 = vmul.f32 %v615, %v804
      %v861 = vmul.f32 %v620, %v803
      %v862 = vmul.f32 %v620, %v804
      %v863 = vmul.f32 %v625, %v803
      %v864 = vmul.f32 %v625, %v804
      %v865 = vmul.f32 %v630, %v803
      %v866 = vmul.f32 %v630, %v804
      %v867 = vmul.f32 %v635, %v803
      %v868 = vmul.f32 %v635, %v804
      %v869 = vmul.f32 %v640, %v803
      %v870 = vmul.f32 %v640, %v804
      %v871 = vmul.f32 %v645, %v803
      %v872 = vmul.f32 %v645, %v804
      %v873 = vmul.f32 %v650, %v803
      %v874 = vmul.f32 %v650, %v804
      %v875 = vmul.f32 %v655, %v803
      %v876 = vmul.f32 %v655, %v804
      %v877 = vmul.f32 %v660, %v803
      %v878 = vmul.f32 %v660, %v804
      %v879 = vmul.f32 %v665, %v803
      %v880 = vmul.f32 %v665, %v804
      %v881 = vmul.f32 %v670, %v803
      %v882 = vmul.f32 %v670, %v804
      %v883 = vmul.f32 %v675, %v803
      %v884 = vmul.f32 %v675, %v804
      %v885 = vmul.f32 %v680, %v803
      %v886 = vmul.f32 %v680, %v804
      %v887 = vmul.f32 %v685, %v803
      %v888 = vmul.f32 %v685, %v804
      %v889 = vmul.f32 %v690, %v803
      %v890 = vmul.f32 %v690, %v804
      %v891 = vmul.f32 %v695, %v803
      %v892 = vmul.f32 %v695, %v804
      %v893 = vmul.f32 %v700, %v803
      %v894 = vmul.f32 %v700, %v804
      %v895 = vmul.f32 %v705, %v803
      %v896 = vmul.f32 %v705, %v804
      %v897 = vmul.f32 %v710, %v803
      %v898 = vmul.f32 %v710, %v804
      %v899 = vmul.f32 %v715, %v803
      %v900 = vmul.f32 %v715, %v804
      %v901 = vmul.f32 %v720, %v803
      %v902 = vmul.f32 %v720, %v804
      %v903 = vmul.f32 %v725, %v803
      %v904 = vmul.f32 %v725, %v804
      %v905 = vmul.f32 %v730, %v803
      %v906 = vmul.f32 %v730, %v804
      %v907 = vmul.f32 %v735, %v803
      %v908 = vmul.f32 %v735, %v804
      %v909 = vmul.f32 %v740, %v803
      %v910 = vmul.f32 %v740, %v804
      %v911 = vmul.f32 %v745, %v803
      %v912 = vmul.f32 %v745, %v804
      %v913 = vmul.f32 %v750, %v803
      %v914 = vmul.f32 %v750, %v804
      %v915 = vmul.f32 %v755, %v803
      %v916 = vmul.f32 %v755, %v804
      %v917 = vmul.f32 %v760, %v803
      %v918 = vmul.f32 %v760, %v804
      %v919 = vmul.f32 %v765, %v803
      %v920 = vmul.f32 %v765, %v804
      %v921 = vmul.f32 %v770, %v803
      %v922 = vmul.f32 %v770, %v804
      %v923 = vmul.f32 %v775, %v803
      %v924 = vmul.f32 %v775, %v804
      %v925 = vmul.f32 %v780, %v803
      %v926 = vmul.f32 %v780, %v804
      %v927 = vmul.f32 %v785, %v803
      %v928 = vmul.f32 %v785, %v804
      %v929 = vmul.f32 %v790, %v803
      %v930 = vmul.f32 %v790, %v804
      %v931 = vmul.f32 %v795, %v803
      %v932 = vmul.f32 %v795, %v804
      %v933 = vmul.f32 %v800, %v803
      %v934 = vmul.f32 %v800, %v804
      %s935 = scalar_lea.vmem %s1, 1
      %v936 = vld [vmem:[%s935] ss:$4 sm:$0x3]
      %937 = vset.pattern.permute.xlu0 1
      %938 = vperm.xlu0 %937, %v417
      %v939 = vpop.permute.xlu0 %938
      %941 = vset.pattern.permute.xlu0 1
      %942 = vperm.xlu0 %941, %v418
      %v943 = vpop.permute.xlu0 %942
      %945 = vset.pattern.permute.xlu0 1
      %946 = vperm.xlu0 %945, %v419
      %v947 = vpop.permute.xlu0 %946
      %949 = vset.pattern.permute.xlu0 1
      %950 = vperm.xlu0 %949, %v420
      %v951 = vpop.permute.xlu0 %950
      %953 = vset.pattern.permute.xlu0 1
      %954 = vperm.xlu0 %953, %v421
      %v955 = vpop.permute.xlu0 %954
      %957 = vset.pattern.permute.xlu0 1
      %958 = vperm.xlu0 %957, %v422
      %v959 = vpop.permute.xlu0 %958
      %961 = vset.pattern.permute.xlu0 1
      %962 = vperm.xlu0 %961, %v423
      %v963 = vpop.permute.xlu0 %962
      %965 = vset.pattern.permute.xlu0 1
      %966 = vperm.xlu0 %965, %v424
      %v967 = vpop.permute.xlu0 %966
      %969 = vset.pattern.permute.xlu0 1
      %970 = vperm.xlu0 %969, %v425
      %v971 = vpop.permute.xlu0 %970
      %973 = vset.pattern.permute.xlu0 1
      %974 = vperm.xlu0 %973, %v426
      %v975 = vpop.permute.xlu0 %974
      %977 = vset.pattern.permute.xlu0 1
      %978 = vperm.xlu0 %977, %v427
      %v979 = vpop.permute.xlu0 %978
      %981 = vset.pattern.permute.xlu0 1
      %982 = vperm.xlu0 %981, %v428
      %v983 = vpop.permute.xlu0 %982
      %985 = vset.pattern.permute.xlu0 1
      %986 = vperm.xlu0 %985, %v429
      %v987 = vpop.permute.xlu0 %986
      %989 = vset.pattern.permute.xlu0 1
      %990 = vperm.xlu0 %989, %v430
      %v991 = vpop.permute.xlu0 %990
      %993 = vset.pattern.permute.xlu0 1
      %994 = vperm.xlu0 %993, %v431
      %v995 = vpop.permute.xlu0 %994
      %997 = vset.pattern.permute.xlu0 1
      %998 = vperm.xlu0 %997, %v432
      %v999 = vpop.permute.xlu0 %998
      %1001 = vset.pattern.permute.xlu0 1
      %1002 = vperm.xlu0 %1001, %v433
      %v1003 = vpop.permute.xlu0 %1002
      %1005 = vset.pattern.permute.xlu0 1
      %1006 = vperm.xlu0 %1005, %v434
      %v1007 = vpop.permute.xlu0 %1006
      %1009 = vset.pattern.permute.xlu0 1
      %1010 = vperm.xlu0 %1009, %v435
      %v1011 = vpop.permute.xlu0 %1010
      %1013 = vset.pattern.permute.xlu0 1
      %1014 = vperm.xlu0 %1013, %v436
      %v1015 = vpop.permute.xlu0 %1014
      %1017 = vset.pattern.permute.xlu0 1
      %1018 = vperm.xlu0 %1017, %v437
      %v1019 = vpop.permute.xlu0 %1018
      %1021 = vset.pattern.permute.xlu0 1
      %1022 = vperm.xlu0 %1021, %v438
      %v1023 = vpop.permute.xlu0 %1022
      %1025 = vset.pattern.permute.xlu0 1
      %1026 = vperm.xlu0 %1025, %v439
      %v1027 = vpop.permute.xlu0 %1026
      %1029 = vset.pattern.permute.xlu0 1
      %1030 = vperm.xlu0 %1029, %v440
      %v1031 = vpop.permute.xlu0 %1030
      %1033 = vset.pattern.permute.xlu0 1
      %1034 = vperm.xlu0 %1033, %v441
      %v1035 = vpop.permute.xlu0 %1034
      %1037 = vset.pattern.permute.xlu0 1
      %1038 = vperm.xlu0 %1037, %v442
      %v1039 = vpop.permute.xlu0 %1038
      %1041 = vset.pattern.permute.xlu0 1
      %1042 = vperm.xlu0 %1041, %v443
      %v1043 = vpop.permute.xlu0 %1042
      %1045 = vset.pattern.permute.xlu0 1
      %1046 = vperm.xlu0 %1045, %v444
      %v1047 = vpop.permute.xlu0 %1046
      %1049 = vset.pattern.permute.xlu0 1
      %1050 = vperm.xlu0 %1049, %v445
      %v1051 = vpop.permute.xlu0 %1050
      %1053 = vset.pattern.permute.xlu0 1
      %1054 = vperm.xlu0 %1053, %v446
      %v1055 = vpop.permute.xlu0 %1054
      %1057 = vset.pattern.permute.xlu0 1
      %1058 = vperm.xlu0 %1057, %v447
      %v1059 = vpop.permute.xlu0 %1058
      %1061 = vset.pattern.permute.xlu0 1
      %1062 = vperm.xlu0 %1061, %v448
      %v1063 = vpop.permute.xlu0 %1062
      %1065 = vset.pattern.permute.xlu0 1
      %1066 = vperm.xlu0 %1065, %v449
      %v1067 = vpop.permute.xlu0 %1066
      %1069 = vset.pattern.permute.xlu0 1
      %1070 = vperm.xlu0 %1069, %v450
      %v1071 = vpop.permute.xlu0 %1070
      %1073 = vset.pattern.permute.xlu0 1
      %1074 = vperm.xlu0 %1073, %v451
      %v1075 = vpop.permute.xlu0 %1074
      %1077 = vset.pattern.permute.xlu0 1
      %1078 = vperm.xlu0 %1077, %v452
      %v1079 = vpop.permute.xlu0 %1078
      %1081 = vset.pattern.permute.xlu0 1
      %1082 = vperm.xlu0 %1081, %v453
      %v1083 = vpop.permute.xlu0 %1082
      %1085 = vset.pattern.permute.xlu0 1
      %1086 = vperm.xlu0 %1085, %v454
      %v1087 = vpop.permute.xlu0 %1086
      %1089 = vset.pattern.permute.xlu0 1
      %1090 = vperm.xlu0 %1089, %v455
      %v1091 = vpop.permute.xlu0 %1090
      %1093 = vset.pattern.permute.xlu0 1
      %1094 = vperm.xlu0 %1093, %v456
      %v1095 = vpop.permute.xlu0 %1094
      %1097 = vset.pattern.permute.xlu0 1
      %1098 = vperm.xlu0 %1097, %v457
      %v1099 = vpop.permute.xlu0 %1098
      %1101 = vset.pattern.permute.xlu0 1
      %1102 = vperm.xlu0 %1101, %v458
      %v1103 = vpop.permute.xlu0 %1102
      %1105 = vset.pattern.permute.xlu0 1
      %1106 = vperm.xlu0 %1105, %v459
      %v1107 = vpop.permute.xlu0 %1106
      %1109 = vset.pattern.permute.xlu0 1
      %1110 = vperm.xlu0 %1109, %v460
      %v1111 = vpop.permute.xlu0 %1110
      %1113 = vset.pattern.permute.xlu0 1
      %1114 = vperm.xlu0 %1113, %v461
      %v1115 = vpop.permute.xlu0 %1114
      %1117 = vset.pattern.permute.xlu0 1
      %1118 = vperm.xlu0 %1117, %v462
      %v1119 = vpop.permute.xlu0 %1118
      %1121 = vset.pattern.permute.xlu0 1
      %1122 = vperm.xlu0 %1121, %v463
      %v1123 = vpop.permute.xlu0 %1122
      %1125 = vset.pattern.permute.xlu0 1
      %1126 = vperm.xlu0 %1125, %v464
      %v1127 = vpop.permute.xlu0 %1126
      %1129 = vset.pattern.permute.xlu0 1
      %1130 = vperm.xlu0 %1129, %v465
      %v1131 = vpop.permute.xlu0 %1130
      %1133 = vset.pattern.permute.xlu0 1
      %1134 = vperm.xlu0 %1133, %v466
      %v1135 = vpop.permute.xlu0 %1134
      %1137 = vset.pattern.permute.xlu0 1
      %1138 = vperm.xlu0 %1137, %v467
      %v1139 = vpop.permute.xlu0 %1138
      %1141 = vset.pattern.permute.xlu0 1
      %1142 = vperm.xlu0 %1141, %v468
      %v1143 = vpop.permute.xlu0 %1142
      %1145 = vset.pattern.permute.xlu0 1
      %1146 = vperm.xlu0 %1145, %v469
      %v1147 = vpop.permute.xlu0 %1146
      %1149 = vset.pattern.permute.xlu0 1
      %1150 = vperm.xlu0 %1149, %v470
      %v1151 = vpop.permute.xlu0 %1150
      %1153 = vset.pattern.permute.xlu0 1
      %1154 = vperm.xlu0 %1153, %v471
      %v1155 = vpop.permute.xlu0 %1154
      %1157 = vset.pattern.permute.xlu0 1
      %1158 = vperm.xlu0 %1157, %v472
      %v1159 = vpop.permute.xlu0 %1158
      %1161 = vset.pattern.permute.xlu0 1
      %1162 = vperm.xlu0 %1161, %v473
      %v1163 = vpop.permute.xlu0 %1162
      %1165 = vset.pattern.permute.xlu0 1
      %1166 = vperm.xlu0 %1165, %v474
      %v1167 = vpop.permute.xlu0 %1166
      %1169 = vset.pattern.permute.xlu0 1
      %1170 = vperm.xlu0 %1169, %v475
      %v1171 = vpop.permute.xlu0 %1170
      %1173 = vset.pattern.permute.xlu0 1
      %1174 = vperm.xlu0 %1173, %v476
      %v1175 = vpop.permute.xlu0 %1174
      %1177 = vset.pattern.permute.xlu0 1
      %1178 = vperm.xlu0 %1177, %v477
      %v1179 = vpop.permute.xlu0 %1178
      %1181 = vset.pattern.permute.xlu0 1
      %1182 = vperm.xlu0 %1181, %v478
      %v1183 = vpop.permute.xlu0 %1182
      %1185 = vset.pattern.permute.xlu0 1
      %1186 = vperm.xlu0 %1185, %v479
      %v1187 = vpop.permute.xlu0 %1186
      %1189 = vset.pattern.permute.xlu0 1
      %1190 = vperm.xlu0 %1189, %v480
      %v1191 = vpop.permute.xlu0 %1190
      %v1194 = vperm.slane %v936, 0
      %v1195 = vperm.slane %v936, 1
      %v1198 = vmul.f32 %v939, %v1194
      %v1199 = vmul.f32 %v939, %v1195
      %v1200 = vmul.f32 %v943, %v1194
      %v1201 = vmul.f32 %v943, %v1195
      %v1202 = vmul.f32 %v947, %v1194
      %v1203 = vmul.f32 %v947, %v1195
      %v1204 = vmul.f32 %v951, %v1194
      %v1205 = vmul.f32 %v951, %v1195
      %v1206 = vmul.f32 %v955, %v1194
      %v1207 = vmul.f32 %v955, %v1195
      %v1208 = vmul.f32 %v959, %v1194
      %v1209 = vmul.f32 %v959, %v1195
      %v1210 = vmul.f32 %v963, %v1194
      %v1211 = vmul.f32 %v963, %v1195
      %v1212 = vmul.f32 %v967, %v1194
      %v1213 = vmul.f32 %v967, %v1195
      %v1214 = vmul.f32 %v971, %v1194
      %v1215 = vmul.f32 %v971, %v1195
      %v1216 = vmul.f32 %v975, %v1194
      %v1217 = vmul.f32 %v975, %v1195
      %v1218 = vmul.f32 %v979, %v1194
      %v1219 = vmul.f32 %v979, %v1195
      %v1220 = vmul.f32 %v983, %v1194
      %v1221 = vmul.f32 %v983, %v1195
      %v1222 = vmul.f32 %v987, %v1194
      %v1223 = vmul.f32 %v987, %v1195
      %v1224 = vmul.f32 %v991, %v1194
      %v1225 = vmul.f32 %v991, %v1195
      %v1226 = vmul.f32 %v995, %v1194
      %v1227 = vmul.f32 %v995, %v1195
      %v1228 = vmul.f32 %v999, %v1194
      %v1229 = vmul.f32 %v999, %v1195
      %v1230 = vmul.f32 %v1003, %v1194
      %v1231 = vmul.f32 %v1003, %v1195
      %v1232 = vmul.f32 %v1007, %v1194
      %v1233 = vmul.f32 %v1007, %v1195
      %v1234 = vmul.f32 %v1011, %v1194
      %v1235 = vmul.f32 %v1011, %v1195
      %v1236 = vmul.f32 %v1015, %v1194
      %v1237 = vmul.f32 %v1015, %v1195
      %v1238 = vmul.f32 %v1019, %v1194
      %v1239 = vmul.f32 %v1019, %v1195
      %v1240 = vmul.f32 %v1023, %v1194
      %v1241 = vmul.f32 %v1023, %v1195
      %v1242 = vmul.f32 %v1027, %v1194
      %v1243 = vmul.f32 %v1027, %v1195
      %v1244 = vmul.f32 %v1031, %v1194
      %v1245 = vmul.f32 %v1031, %v1195
      %v1246 = vmul.f32 %v1035, %v1194
      %v1247 = vmul.f32 %v1035, %v1195
      %v1248 = vmul.f32 %v1039, %v1194
      %v1249 = vmul.f32 %v1039, %v1195
      %v1250 = vmul.f32 %v1043, %v1194
      %v1251 = vmul.f32 %v1043, %v1195
      %v1252 = vmul.f32 %v1047, %v1194
      %v1253 = vmul.f32 %v1047, %v1195
      %v1254 = vmul.f32 %v1051, %v1194
      %v1255 = vmul.f32 %v1051, %v1195
      %v1256 = vmul.f32 %v1055, %v1194
      %v1257 = vmul.f32 %v1055, %v1195
      %v1258 = vmul.f32 %v1059, %v1194
      %v1259 = vmul.f32 %v1059, %v1195
      %v1260 = vmul.f32 %v1063, %v1194
      %v1261 = vmul.f32 %v1063, %v1195
      %v1262 = vmul.f32 %v1067, %v1194
      %v1263 = vmul.f32 %v1067, %v1195
      %v1264 = vmul.f32 %v1071, %v1194
      %v1265 = vmul.f32 %v1071, %v1195
      %v1266 = vmul.f32 %v1075, %v1194
      %v1267 = vmul.f32 %v1075, %v1195
      %v1268 = vmul.f32 %v1079, %v1194
      %v1269 = vmul.f32 %v1079, %v1195
      %v1270 = vmul.f32 %v1083, %v1194
      %v1271 = vmul.f32 %v1083, %v1195
      %v1272 = vmul.f32 %v1087, %v1194
      %v1273 = vmul.f32 %v1087, %v1195
      %v1274 = vmul.f32 %v1091, %v1194
      %v1275 = vmul.f32 %v1091, %v1195
      %v1276 = vmul.f32 %v1095, %v1194
      %v1277 = vmul.f32 %v1095, %v1195
      %v1278 = vmul.f32 %v1099, %v1194
      %v1279 = vmul.f32 %v1099, %v1195
      %v1280 = vmul.f32 %v1103, %v1194
      %v1281 = vmul.f32 %v1103, %v1195
      %v1282 = vmul.f32 %v1107, %v1194
      %v1283 = vmul.f32 %v1107, %v1195
      %v1284 = vmul.f32 %v1111, %v1194
      %v1285 = vmul.f32 %v1111, %v1195
      %v1286 = vmul.f32 %v1115, %v1194
      %v1287 = vmul.f32 %v1115, %v1195
      %v1288 = vmul.f32 %v1119, %v1194
      %v1289 = vmul.f32 %v1119, %v1195
      %v1290 = vmul.f32 %v1123, %v1194
      %v1291 = vmul.f32 %v1123, %v1195
      %v1292 = vmul.f32 %v1127, %v1194
      %v1293 = vmul.f32 %v1127, %v1195
      %v1294 = vmul.f32 %v1131, %v1194
      %v1295 = vmul.f32 %v1131, %v1195
      %v1296 = vmul.f32 %v1135, %v1194
      %v1297 = vmul.f32 %v1135, %v1195
      %v1298 = vmul.f32 %v1139, %v1194
      %v1299 = vmul.f32 %v1139, %v1195
      %v1300 = vmul.f32 %v1143, %v1194
      %v1301 = vmul.f32 %v1143, %v1195
      %v1302 = vmul.f32 %v1147, %v1194
      %v1303 = vmul.f32 %v1147, %v1195
      %v1304 = vmul.f32 %v1151, %v1194
      %v1305 = vmul.f32 %v1151, %v1195
      %v1306 = vmul.f32 %v1155, %v1194
      %v1307 = vmul.f32 %v1155, %v1195
      %v1308 = vmul.f32 %v1159, %v1194
      %v1309 = vmul.f32 %v1159, %v1195
      %v1310 = vmul.f32 %v1163, %v1194
      %v1311 = vmul.f32 %v1163, %v1195
      %v1312 = vmul.f32 %v1167, %v1194
      %v1313 = vmul.f32 %v1167, %v1195
      %v1314 = vmul.f32 %v1171, %v1194
      %v1315 = vmul.f32 %v1171, %v1195
      %v1316 = vmul.f32 %v1175, %v1194
      %v1317 = vmul.f32 %v1175, %v1195
      %v1318 = vmul.f32 %v1179, %v1194
      %v1319 = vmul.f32 %v1179, %v1195
      %v1320 = vmul.f32 %v1183, %v1194
      %v1321 = vmul.f32 %v1183, %v1195
      %v1322 = vmul.f32 %v1187, %v1194
      %v1323 = vmul.f32 %v1187, %v1195
      %v1324 = vmul.f32 %v1191, %v1194
      %v1325 = vmul.f32 %v1191, %v1195
      %v1326 = vadd.f32 %v807, %v1198
      %v1327 = vadd.f32 %v808, %v1199
      %v1328 = vadd.f32 %v809, %v1200
      %v1329 = vadd.f32 %v810, %v1201
      %v1330 = vadd.f32 %v811, %v1202
      %v1331 = vadd.f32 %v812, %v1203
      %v1332 = vadd.f32 %v813, %v1204
      %v1333 = vadd.f32 %v814, %v1205
      %v1334 = vadd.f32 %v815, %v1206
      %v1335 = vadd.f32 %v816, %v1207
      %v1336 = vadd.f32 %v817, %v1208
      %v1337 = vadd.f32 %v818, %v1209
      %v1338 = vadd.f32 %v819, %v1210
      %v1339 = vadd.f32 %v820, %v1211
      %v1340 = vadd.f32 %v821, %v1212
      %v1341 = vadd.f32 %v822, %v1213
      %v1342 = vadd.f32 %v823, %v1214
      %v1343 = vadd.f32 %v824, %v1215
      %v1344 = vadd.f32 %v825, %v1216
      %v1345 = vadd.f32 %v826, %v1217
      %v1346 = vadd.f32 %v827, %v1218
      %v1347 = vadd.f32 %v828, %v1219
      %v1348 = vadd.f32 %v829, %v1220
      %v1349 = vadd.f32 %v830, %v1221
      %v1350 = vadd.f32 %v831, %v1222
      %v1351 = vadd.f32 %v832, %v1223
      %v1352 = vadd.f32 %v833, %v1224
      %v1353 = vadd.f32 %v834, %v1225
      %v1354 = vadd.f32 %v835, %v1226
      %v1355 = vadd.f32 %v836, %v1227
      %v1356 = vadd.f32 %v837, %v1228
      %v1357 = vadd.f32 %v838, %v1229
      %v1358 = vadd.f32 %v839, %v1230
      %v1359 = vadd.f32 %v840, %v1231
      %v1360 = vadd.f32 %v841, %v1232
      %v1361 = vadd.f32 %v842, %v1233
      %v1362 = vadd.f32 %v843, %v1234
      %v1363 = vadd.f32 %v844, %v1235
      %v1364 = vadd.f32 %v845, %v1236
      %v1365 = vadd.f32 %v846, %v1237
      %v1366 = vadd.f32 %v847, %v1238
      %v1367 = vadd.f32 %v848, %v1239
      %v1368 = vadd.f32 %v849, %v1240
      %v1369 = vadd.f32 %v850, %v1241
      %v1370 = vadd.f32 %v851, %v1242
      %v1371 = vadd.f32 %v852, %v1243
      %v1372 = vadd.f32 %v853, %v1244
      %v1373 = vadd.f32 %v854, %v1245
      %v1374 = vadd.f32 %v855, %v1246
      %v1375 = vadd.f32 %v856, %v1247
      %v1376 = vadd.f32 %v857, %v1248
      %v1377 = vadd.f32 %v858, %v1249
      %v1378 = vadd.f32 %v859, %v1250
      %v1379 = vadd.f32 %v860, %v1251
      %v1380 = vadd.f32 %v861, %v1252
      %v1381 = vadd.f32 %v862, %v1253
      %v1382 = vadd.f32 %v863, %v1254
      %v1383 = vadd.f32 %v864, %v1255
      %v1384 = vadd.f32 %v865, %v1256
      %v1385 = vadd.f32 %v866, %v1257
      %v1386 = vadd.f32 %v867, %v1258
      %v1387 = vadd.f32 %v868, %v1259
      %v1388 = vadd.f32 %v869, %v1260
      %v1389 = vadd.f32 %v870, %v1261
      %v1390 = vadd.f32 %v871, %v1262
      %v1391 = vadd.f32 %v872, %v1263
      %v1392 = vadd.f32 %v873, %v1264
      %v1393 = vadd.f32 %v874, %v1265
      %v1394 = vadd.f32 %v875, %v1266
      %v1395 = vadd.f32 %v876, %v1267
      %v1396 = vadd.f32 %v877, %v1268
      %v1397 = vadd.f32 %v878, %v1269
      %v1398 = vadd.f32 %v879, %v1270
      %v1399 = vadd.f32 %v880, %v1271
      %v1400 = vadd.f32 %v881, %v1272
      %v1401 = vadd.f32 %v882, %v1273
      %v1402 = vadd.f32 %v883, %v1274
      %v1403 = vadd.f32 %v884, %v1275
      %v1404 = vadd.f32 %v885, %v1276
      %v1405 = vadd.f32 %v886, %v1277
      %v1406 = vadd.f32 %v887, %v1278
      %v1407 = vadd.f32 %v888, %v1279
      %v1408 = vadd.f32 %v889, %v1280
      %v1409 = vadd.f32 %v890, %v1281
      %v1410 = vadd.f32 %v891, %v1282
      %v1411 = vadd.f32 %v892, %v1283
      %v1412 = vadd.f32 %v893, %v1284
      %v1413 = vadd.f32 %v894, %v1285
      %v1414 = vadd.f32 %v895, %v1286
      %v1415 = vadd.f32 %v896, %v1287
      %v1416 = vadd.f32 %v897, %v1288
      %v1417 = vadd.f32 %v898, %v1289
      %v1418 = vadd.f32 %v899, %v1290
      %v1419 = vadd.f32 %v900, %v1291
      %v1420 = vadd.f32 %v901, %v1292
      %v1421 = vadd.f32 %v902, %v1293
      %v1422 = vadd.f32 %v903, %v1294
      %v1423 = vadd.f32 %v904, %v1295
      %v1424 = vadd.f32 %v905, %v1296
      %v1425 = vadd.f32 %v906, %v1297
      %v1426 = vadd.f32 %v907, %v1298
      %v1427 = vadd.f32 %v908, %v1299
      %v1428 = vadd.f32 %v909, %v1300
      %v1429 = vadd.f32 %v910, %v1301
      %v1430 = vadd.f32 %v911, %v1302
      %v1431 = vadd.f32 %v912, %v1303
      %v1432 = vadd.f32 %v913, %v1304
      %v1433 = vadd.f32 %v914, %v1305
      %v1434 = vadd.f32 %v915, %v1306
      %v1435 = vadd.f32 %v916, %v1307
      %v1436 = vadd.f32 %v917, %v1308
      %v1437 = vadd.f32 %v918, %v1309
      %v1438 = vadd.f32 %v919, %v1310
      %v1439 = vadd.f32 %v920, %v1311
      %v1440 = vadd.f32 %v921, %v1312
      %v1441 = vadd.f32 %v922, %v1313
      %v1442 = vadd.f32 %v923, %v1314
      %v1443 = vadd.f32 %v924, %v1315
      %v1444 = vadd.f32 %v925, %v1316
      %v1445 = vadd.f32 %v926, %v1317
      %v1446 = vadd.f32 %v927, %v1318
      %v1447 = vadd.f32 %v928, %v1319
      %v1448 = vadd.f32 %v929, %v1320
      %v1449 = vadd.f32 %v930, %v1321
      %v1450 = vadd.f32 %v931, %v1322
      %v1451 = vadd.f32 %v932, %v1323
      %v1452 = vadd.f32 %v933, %v1324
      %v1453 = vadd.f32 %v934, %v1325
      %s1454 = scalar_lea.vmem %s1, 2
      %v1455 = vld [vmem:[%s1454] ss:$4 sm:$0x3]
      %1456 = vset.pattern.permute.xlu0 2
      %1457 = vperm.xlu0 %1456, %v417
      %v1458 = vpop.permute.xlu0 %1457
      %1460 = vset.pattern.permute.xlu0 2
      %1461 = vperm.xlu0 %1460, %v418
      %v1462 = vpop.permute.xlu0 %1461
      %1464 = vset.pattern.permute.xlu0 2
      %1465 = vperm.xlu0 %1464, %v419
      %v1466 = vpop.permute.xlu0 %1465
      %1468 = vset.pattern.permute.xlu0 2
      %1469 = vperm.xlu0 %1468, %v420
      %v1470 = vpop.permute.xlu0 %1469
      %1472 = vset.pattern.permute.xlu0 2
      %1473 = vperm.xlu0 %1472, %v421
      %v1474 = vpop.permute.xlu0 %1473
      %1476 = vset.pattern.permute.xlu0 2
      %1477 = vperm.xlu0 %1476, %v422
      %v1478 = vpop.permute.xlu0 %1477
      %1480 = vset.pattern.permute.xlu0 2
      %1481 = vperm.xlu0 %1480, %v423
      %v1482 = vpop.permute.xlu0 %1481
      %1484 = vset.pattern.permute.xlu0 2
      %1485 = vperm.xlu0 %1484, %v424
      %v1486 = vpop.permute.xlu0 %1485
      %1488 = vset.pattern.permute.xlu0 2
      %1489 = vperm.xlu0 %1488, %v425
      %v1490 = vpop.permute.xlu0 %1489
      %1492 = vset.pattern.permute.xlu0 2
      %1493 = vperm.xlu0 %1492, %v426
      %v1494 = vpop.permute.xlu0 %1493
      %1496 = vset.pattern.permute.xlu0 2
      %1497 = vperm.xlu0 %1496, %v427
      %v1498 = vpop.permute.xlu0 %1497
      %1500 = vset.pattern.permute.xlu0 2
      %1501 = vperm.xlu0 %1500, %v428
      %v1502 = vpop.permute.xlu0 %1501
      %1504 = vset.pattern.permute.xlu0 2
      %1505 = vperm.xlu0 %1504, %v429
      %v1506 = vpop.permute.xlu0 %1505
      %1508 = vset.pattern.permute.xlu0 2
      %1509 = vperm.xlu0 %1508, %v430
      %v1510 = vpop.permute.xlu0 %1509
      %1512 = vset.pattern.permute.xlu0 2
      %1513 = vperm.xlu0 %1512, %v431
      %v1514 = vpop.permute.xlu0 %1513
      %1516 = vset.pattern.permute.xlu0 2
      %1517 = vperm.xlu0 %1516, %v432
      %v1518 = vpop.permute.xlu0 %1517
      %1520 = vset.pattern.permute.xlu0 2
      %1521 = vperm.xlu0 %1520, %v433
      %v1522 = vpop.permute.xlu0 %1521
      %1524 = vset.pattern.permute.xlu0 2
      %1525 = vperm.xlu0 %1524, %v434
      %v1526 = vpop.permute.xlu0 %1525
      %1528 = vset.pattern.permute.xlu0 2
      %1529 = vperm.xlu0 %1528, %v435
      %v1530 = vpop.permute.xlu0 %1529
      %1532 = vset.pattern.permute.xlu0 2
      %1533 = vperm.xlu0 %1532, %v436
      %v1534 = vpop.permute.xlu0 %1533
      %1536 = vset.pattern.permute.xlu0 2
      %1537 = vperm.xlu0 %1536, %v437
      %v1538 = vpop.permute.xlu0 %1537
      %1540 = vset.pattern.permute.xlu0 2
      %1541 = vperm.xlu0 %1540, %v438
      %v1542 = vpop.permute.xlu0 %1541
      %1544 = vset.pattern.permute.xlu0 2
      %1545 = vperm.xlu0 %1544, %v439
      %v1546 = vpop.permute.xlu0 %1545
      %1548 = vset.pattern.permute.xlu0 2
      %1549 = vperm.xlu0 %1548, %v440
      %v1550 = vpop.permute.xlu0 %1549
      %1552 = vset.pattern.permute.xlu0 2
      %1553 = vperm.xlu0 %1552, %v441
      %v1554 = vpop.permute.xlu0 %1553
      %1556 = vset.pattern.permute.xlu0 2
      %1557 = vperm.xlu0 %1556, %v442
      %v1558 = vpop.permute.xlu0 %1557
      %1560 = vset.pattern.permute.xlu0 2
      %1561 = vperm.xlu0 %1560, %v443
      %v1562 = vpop.permute.xlu0 %1561
      %1564 = vset.pattern.permute.xlu0 2
      %1565 = vperm.xlu0 %1564, %v444
      %v1566 = vpop.permute.xlu0 %1565
      %1568 = vset.pattern.permute.xlu0 2
      %1569 = vperm.xlu0 %1568, %v445
      %v1570 = vpop.permute.xlu0 %1569
      %1572 = vset.pattern.permute.xlu0 2
      %1573 = vperm.xlu0 %1572, %v446
      %v1574 = vpop.permute.xlu0 %1573
      %1576 = vset.pattern.permute.xlu0 2
      %1577 = vperm.xlu0 %1576, %v447
      %v1578 = vpop.permute.xlu0 %1577
      %1580 = vset.pattern.permute.xlu0 2
      %1581 = vperm.xlu0 %1580, %v448
      %v1582 = vpop.permute.xlu0 %1581
      %1584 = vset.pattern.permute.xlu0 2
      %1585 = vperm.xlu0 %1584, %v449
      %v1586 = vpop.permute.xlu0 %1585
      %1588 = vset.pattern.permute.xlu0 2
      %1589 = vperm.xlu0 %1588, %v450
      %v1590 = vpop.permute.xlu0 %1589
      %1592 = vset.pattern.permute.xlu0 2
      %1593 = vperm.xlu0 %1592, %v451
      %v1594 = vpop.permute.xlu0 %1593
      %1596 = vset.pattern.permute.xlu0 2
      %1597 = vperm.xlu0 %1596, %v452
      %v1598 = vpop.permute.xlu0 %1597
      %1600 = vset.pattern.permute.xlu0 2
      %1601 = vperm.xlu0 %1600, %v453
      %v1602 = vpop.permute.xlu0 %1601
      %1604 = vset.pattern.permute.xlu0 2
      %1605 = vperm.xlu0 %1604, %v454
      %v1606 = vpop.permute.xlu0 %1605
      %1608 = vset.pattern.permute.xlu0 2
      %1609 = vperm.xlu0 %1608, %v455
      %v1610 = vpop.permute.xlu0 %1609
      %1612 = vset.pattern.permute.xlu0 2
      %1613 = vperm.xlu0 %1612, %v456
      %v1614 = vpop.permute.xlu0 %1613
      %1616 = vset.pattern.permute.xlu0 2
      %1617 = vperm.xlu0 %1616, %v457
      %v1618 = vpop.permute.xlu0 %1617
      %1620 = vset.pattern.permute.xlu0 2
      %1621 = vperm.xlu0 %1620, %v458
      %v1622 = vpop.permute.xlu0 %1621
      %1624 = vset.pattern.permute.xlu0 2
      %1625 = vperm.xlu0 %1624, %v459
      %v1626 = vpop.permute.xlu0 %1625
      %1628 = vset.pattern.permute.xlu0 2
      %1629 = vperm.xlu0 %1628, %v460
      %v1630 = vpop.permute.xlu0 %1629
      %1632 = vset.pattern.permute.xlu0 2
      %1633 = vperm.xlu0 %1632, %v461
      %v1634 = vpop.permute.xlu0 %1633
      %1636 = vset.pattern.permute.xlu0 2
      %1637 = vperm.xlu0 %1636, %v462
      %v1638 = vpop.permute.xlu0 %1637
      %1640 = vset.pattern.permute.xlu0 2
      %1641 = vperm.xlu0 %1640, %v463
      %v1642 = vpop.permute.xlu0 %1641
      %1644 = vset.pattern.permute.xlu0 2
      %1645 = vperm.xlu0 %1644, %v464
      %v1646 = vpop.permute.xlu0 %1645
      %1648 = vset.pattern.permute.xlu0 2
      %1649 = vperm.xlu0 %1648, %v465
      %v1650 = vpop.permute.xlu0 %1649
      %1652 = vset.pattern.permute.xlu0 2
      %1653 = vperm.xlu0 %1652, %v466
      %v1654 = vpop.permute.xlu0 %1653
      %1656 = vset.pattern.permute.xlu0 2
      %1657 = vperm.xlu0 %1656, %v467
      %v1658 = vpop.permute.xlu0 %1657
      %1660 = vset.pattern.permute.xlu0 2
      %1661 = vperm.xlu0 %1660, %v468
      %v1662 = vpop.permute.xlu0 %1661
      %1664 = vset.pattern.permute.xlu0 2
      %1665 = vperm.xlu0 %1664, %v469
      %v1666 = vpop.permute.xlu0 %1665
      %1668 = vset.pattern.permute.xlu0 2
      %1669 = vperm.xlu0 %1668, %v470
      %v1670 = vpop.permute.xlu0 %1669
      %1672 = vset.pattern.permute.xlu0 2
      %1673 = vperm.xlu0 %1672, %v471
      %v1674 = vpop.permute.xlu0 %1673
      %1676 = vset.pattern.permute.xlu0 2
      %1677 = vperm.xlu0 %1676, %v472
      %v1678 = vpop.permute.xlu0 %1677
      %1680 = vset.pattern.permute.xlu0 2
      %1681 = vperm.xlu0 %1680, %v473
      %v1682 = vpop.permute.xlu0 %1681
      %1684 = vset.pattern.permute.xlu0 2
      %1685 = vperm.xlu0 %1684, %v474
      %v1686 = vpop.permute.xlu0 %1685
      %1688 = vset.pattern.permute.xlu0 2
      %1689 = vperm.xlu0 %1688, %v475
      %v1690 = vpop.permute.xlu0 %1689
      %1692 = vset.pattern.permute.xlu0 2
      %1693 = vperm.xlu0 %1692, %v476
      %v1694 = vpop.permute.xlu0 %1693
      %1696 = vset.pattern.permute.xlu0 2
      %1697 = vperm.xlu0 %1696, %v477
      %v1698 = vpop.permute.xlu0 %1697
      %1700 = vset.pattern.permute.xlu0 2
      %1701 = vperm.xlu0 %1700, %v478
      %v1702 = vpop.permute.xlu0 %1701
      %1704 = vset.pattern.permute.xlu0 2
      %1705 = vperm.xlu0 %1704, %v479
      %v1706 = vpop.permute.xlu0 %1705
      %1708 = vset.pattern.permute.xlu0 2
      %1709 = vperm.xlu0 %1708, %v480
      %v1710 = vpop.permute.xlu0 %1709
      %v1713 = vperm.slane %v1455, 0
      %v1714 = vperm.slane %v1455, 1
      %v1717 = vmul.f32 %v1458, %v1713
      %v1718 = vmul.f32 %v1458, %v1714
      %v1719 = vmul.f32 %v1462, %v1713
      %v1720 = vmul.f32 %v1462, %v1714
      %v1721 = vmul.f32 %v1466, %v1713
      %v1722 = vmul.f32 %v1466, %v1714
      %v1723 = vmul.f32 %v1470, %v1713
      %v1724 = vmul.f32 %v1470, %v1714
      %v1725 = vmul.f32 %v1474, %v1713
      %v1726 = vmul.f32 %v1474, %v1714
      %v1727 = vmul.f32 %v1478, %v1713
      %v1728 = vmul.f32 %v1478, %v1714
      %v1729 = vmul.f32 %v1482, %v1713
      %v1730 = vmul.f32 %v1482, %v1714
      %v1731 = vmul.f32 %v1486, %v1713
      %v1732 = vmul.f32 %v1486, %v1714
      %v1733 = vmul.f32 %v1490, %v1713
      %v1734 = vmul.f32 %v1490, %v1714
      %v1735 = vmul.f32 %v1494, %v1713
      %v1736 = vmul.f32 %v1494, %v1714
      %v1737 = vmul.f32 %v1498, %v1713
      %v1738 = vmul.f32 %v1498, %v1714
      %v1739 = vmul.f32 %v1502, %v1713
      %v1740 = vmul.f32 %v1502, %v1714
      %v1741 = vmul.f32 %v1506, %v1713
      %v1742 = vmul.f32 %v1506, %v1714
      %v1743 = vmul.f32 %v1510, %v1713
      %v1744 = vmul.f32 %v1510, %v1714
      %v1745 = vmul.f32 %v1514, %v1713
      %v1746 = vmul.f32 %v1514, %v1714
      %v1747 = vmul.f32 %v1518, %v1713
      %v1748 = vmul.f32 %v1518, %v1714
      %v1749 = vmul.f32 %v1522, %v1713
      %v1750 = vmul.f32 %v1522, %v1714
      %v1751 = vmul.f32 %v1526, %v1713
      %v1752 = vmul.f32 %v1526, %v1714
      %v1753 = vmul.f32 %v1530, %v1713
      %v1754 = vmul.f32 %v1530, %v1714
      %v1755 = vmul.f32 %v1534, %v1713
      %v1756 = vmul.f32 %v1534, %v1714
      %v1757 = vmul.f32 %v1538, %v1713
      %v1758 = vmul.f32 %v1538, %v1714
      %v1759 = vmul.f32 %v1542, %v1713
      %v1760 = vmul.f32 %v1542, %v1714
      %v1761 = vmul.f32 %v1546, %v1713
      %v1762 = vmul.f32 %v1546, %v1714
      %v1763 = vmul.f32 %v1550, %v1713
      %v1764 = vmul.f32 %v1550, %v1714
      %v1765 = vmul.f32 %v1554, %v1713
      %v1766 = vmul.f32 %v1554, %v1714
      %v1767 = vmul.f32 %v1558, %v1713
      %v1768 = vmul.f32 %v1558, %v1714
      %v1769 = vmul.f32 %v1562, %v1713
      %v1770 = vmul.f32 %v1562, %v1714
      %v1771 = vmul.f32 %v1566, %v1713
      %v1772 = vmul.f32 %v1566, %v1714
      %v1773 = vmul.f32 %v1570, %v1713
      %v1774 = vmul.f32 %v1570, %v1714
      %v1775 = vmul.f32 %v1574, %v1713
      %v1776 = vmul.f32 %v1574, %v1714
      %v1777 = vmul.f32 %v1578, %v1713
      %v1778 = vmul.f32 %v1578, %v1714
      %v1779 = vmul.f32 %v1582, %v1713
      %v1780 = vmul.f32 %v1582, %v1714
      %v1781 = vmul.f32 %v1586, %v1713
      %v1782 = vmul.f32 %v1586, %v1714
      %v1783 = vmul.f32 %v1590, %v1713
      %v1784 = vmul.f32 %v1590, %v1714
      %v1785 = vmul.f32 %v1594, %v1713
      %v1786 = vmul.f32 %v1594, %v1714
      %v1787 = vmul.f32 %v1598, %v1713
      %v1788 = vmul.f32 %v1598, %v1714
      %v1789 = vmul.f32 %v1602, %v1713
      %v1790 = vmul.f32 %v1602, %v1714
      %v1791 = vmul.f32 %v1606, %v1713
      %v1792 = vmul.f32 %v1606, %v1714
      %v1793 = vmul.f32 %v1610, %v1713
      %v1794 = vmul.f32 %v1610, %v1714
      %v1795 = vmul.f32 %v1614, %v1713
      %v1796 = vmul.f32 %v1614, %v1714
      %v1797 = vmul.f32 %v1618, %v1713
      %v1798 = vmul.f32 %v1618, %v1714
      %v1799 = vmul.f32 %v1622, %v1713
      %v1800 = vmul.f32 %v1622, %v1714
      %v1801 = vmul.f32 %v1626, %v1713
      %v1802 = vmul.f32 %v1626, %v1714
      %v1803 = vmul.f32 %v1630, %v1713
      %v1804 = vmul.f32 %v1630, %v1714
      %v1805 = vmul.f32 %v1634, %v1713
      %v1806 = vmul.f32 %v1634, %v1714
      %v1807 = vmul.f32 %v1638, %v1713
      %v1808 = vmul.f32 %v1638, %v1714
      %v1809 = vmul.f32 %v1642, %v1713
      %v1810 = vmul.f32 %v1642, %v1714
      %v1811 = vmul.f32 %v1646, %v1713
      %v1812 = vmul.f32 %v1646, %v1714
      %v1813 = vmul.f32 %v1650, %v1713
      %v1814 = vmul.f32 %v1650, %v1714
      %v1815 = vmul.f32 %v1654, %v1713
      %v1816 = vmul.f32 %v1654, %v1714
      %v1817 = vmul.f32 %v1658, %v1713
      %v1818 = vmul.f32 %v1658, %v1714
      %v1819 = vmul.f32 %v1662, %v1713
      %v1820 = vmul.f32 %v1662, %v1714
      %v1821 = vmul.f32 %v1666, %v1713
      %v1822 = vmul.f32 %v1666, %v1714
      %v1823 = vmul.f32 %v1670, %v1713
      %v1824 = vmul.f32 %v1670, %v1714
      %v1825 = vmul.f32 %v1674, %v1713
      %v1826 = vmul.f32 %v1674, %v1714
      %v1827 = vmul.f32 %v1678, %v1713
      %v1828 = vmul.f32 %v1678, %v1714
      %v1829 = vmul.f32 %v1682, %v1713
      %v1830 = vmul.f32 %v1682, %v1714
      %v1831 = vmul.f32 %v1686, %v1713
      %v1832 = vmul.f32 %v1686, %v1714
      %v1833 = vmul.f32 %v1690, %v1713
      %v1834 = vmul.f32 %v1690, %v1714
      %v1835 = vmul.f32 %v1694, %v1713
      %v1836 = vmul.f32 %v1694, %v1714
      %v1837 = vmul.f32 %v1698, %v1713
      %v1838 = vmul.f32 %v1698, %v1714
      %v1839 = vmul.f32 %v1702, %v1713
      %v1840 = vmul.f32 %v1702, %v1714
      %v1841 = vmul.f32 %v1706, %v1713
      %v1842 = vmul.f32 %v1706, %v1714
      %v1843 = vmul.f32 %v1710, %v1713
      %v1844 = vmul.f32 %v1710, %v1714
      %v1845 = vadd.f32 %v1326, %v1717
      %v1846 = vadd.f32 %v1327, %v1718
      %v1847 = vadd.f32 %v1328, %v1719
      %v1848 = vadd.f32 %v1329, %v1720
      %v1849 = vadd.f32 %v1330, %v1721
      %v1850 = vadd.f32 %v1331, %v1722
      %v1851 = vadd.f32 %v1332, %v1723
      %v1852 = vadd.f32 %v1333, %v1724
      %v1853 = vadd.f32 %v1334, %v1725
      %v1854 = vadd.f32 %v1335, %v1726
      %v1855 = vadd.f32 %v1336, %v1727
      %v1856 = vadd.f32 %v1337, %v1728
      %v1857 = vadd.f32 %v1338, %v1729
      %v1858 = vadd.f32 %v1339, %v1730
      %v1859 = vadd.f32 %v1340, %v1731
      %v1860 = vadd.f32 %v1341, %v1732
      %v1861 = vadd.f32 %v1342, %v1733
      %v1862 = vadd.f32 %v1343, %v1734
      %v1863 = vadd.f32 %v1344, %v1735
      %v1864 = vadd.f32 %v1345, %v1736
      %v1865 = vadd.f32 %v1346, %v1737
      %v1866 = vadd.f32 %v1347, %v1738
      %v1867 = vadd.f32 %v1348, %v1739
      %v1868 = vadd.f32 %v1349, %v1740
      %v1869 = vadd.f32 %v1350, %v1741
      %v1870 = vadd.f32 %v1351, %v1742
      %v1871 = vadd.f32 %v1352, %v1743
      %v1872 = vadd.f32 %v1353, %v1744
      %v1873 = vadd.f32 %v1354, %v1745
      %v1874 = vadd.f32 %v1355, %v1746
      %v1875 = vadd.f32 %v1356, %v1747
      %v1876 = vadd.f32 %v1357, %v1748
      %v1877 = vadd.f32 %v1358, %v1749
      %v1878 = vadd.f32 %v1359, %v1750
      %v1879 = vadd.f32 %v1360, %v1751
      %v1880 = vadd.f32 %v1361, %v1752
      %v1881 = vadd.f32 %v1362, %v1753
      %v1882 = vadd.f32 %v1363, %v1754
      %v1883 = vadd.f32 %v1364, %v1755
      %v1884 = vadd.f32 %v1365, %v1756
      %v1885 = vadd.f32 %v1366, %v1757
      %v1886 = vadd.f32 %v1367, %v1758
      %v1887 = vadd.f32 %v1368, %v1759
      %v1888 = vadd.f32 %v1369, %v1760
      %v1889 = vadd.f32 %v1370, %v1761
      %v1890 = vadd.f32 %v1371, %v1762
      %v1891 = vadd.f32 %v1372, %v1763
      %v1892 = vadd.f32 %v1373, %v1764
      %v1893 = vadd.f32 %v1374, %v1765
      %v1894 = vadd.f32 %v1375, %v1766
      %v1895 = vadd.f32 %v1376, %v1767
      %v1896 = vadd.f32 %v1377, %v1768
      %v1897 = vadd.f32 %v1378, %v1769
      %v1898 = vadd.f32 %v1379, %v1770
      %v1899 = vadd.f32 %v1380, %v1771
      %v1900 = vadd.f32 %v1381, %v1772
      %v1901 = vadd.f32 %v1382, %v1773
      %v1902 = vadd.f32 %v1383, %v1774
      %v1903 = vadd.f32 %v1384, %v1775
      %v1904 = vadd.f32 %v1385, %v1776
      %v1905 = vadd.f32 %v1386, %v1777
      %v1906 = vadd.f32 %v1387, %v1778
      %v1907 = vadd.f32 %v1388, %v1779
      %v1908 = vadd.f32 %v1389, %v1780
      %v1909 = vadd.f32 %v1390, %v1781
      %v1910 = vadd.f32 %v1391, %v1782
      %v1911 = vadd.f32 %v1392, %v1783
      %v1912 = vadd.f32 %v1393, %v1784
      %v1913 = vadd.f32 %v1394, %v1785
      %v1914 = vadd.f32 %v1395, %v1786
      %v1915 = vadd.f32 %v1396, %v1787
      %v1916 = vadd.f32 %v1397, %v1788
      %v1917 = vadd.f32 %v1398, %v1789
      %v1918 = vadd.f32 %v1399, %v1790
      %v1919 = vadd.f32 %v1400, %v1791
      %v1920 = vadd.f32 %v1401, %v1792
      %v1921 = vadd.f32 %v1402, %v1793
      %v1922 = vadd.f32 %v1403, %v1794
      %v1923 = vadd.f32 %v1404, %v1795
      %v1924 = vadd.f32 %v1405, %v1796
      %v1925 = vadd.f32 %v1406, %v1797
      %v1926 = vadd.f32 %v1407, %v1798
      %v1927 = vadd.f32 %v1408, %v1799
      %v1928 = vadd.f32 %v1409, %v1800
      %v1929 = vadd.f32 %v1410, %v1801
      %v1930 = vadd.f32 %v1411, %v1802
      %v1931 = vadd.f32 %v1412, %v1803
      %v1932 = vadd.f32 %v1413, %v1804
      %v1933 = vadd.f32 %v1414, %v1805
      %v1934 = vadd.f32 %v1415, %v1806
      %v1935 = vadd.f32 %v1416, %v1807
      %v1936 = vadd.f32 %v1417, %v1808
      %v1937 = vadd.f32 %v1418, %v1809
      %v1938 = vadd.f32 %v1419, %v1810
      %v1939 = vadd.f32 %v1420, %v1811
      %v1940 = vadd.f32 %v1421, %v1812
      %v1941 = vadd.f32 %v1422, %v1813
      %v1942 = vadd.f32 %v1423, %v1814
      %v1943 = vadd.f32 %v1424, %v1815
      %v1944 = vadd.f32 %v1425, %v1816
      %v1945 = vadd.f32 %v1426, %v1817
      %v1946 = vadd.f32 %v1427, %v1818
      %v1947 = vadd.f32 %v1428, %v1819
      %v1948 = vadd.f32 %v1429, %v1820
      %v1949 = vadd.f32 %v1430, %v1821
      %v1950 = vadd.f32 %v1431, %v1822
      %v1951 = vadd.f32 %v1432, %v1823
      %v1952 = vadd.f32 %v1433, %v1824
      %v1953 = vadd.f32 %v1434, %v1825
      %v1954 = vadd.f32 %v1435, %v1826
      %v1955 = vadd.f32 %v1436, %v1827
      %v1956 = vadd.f32 %v1437, %v1828
      %v1957 = vadd.f32 %v1438, %v1829
      %v1958 = vadd.f32 %v1439, %v1830
      %v1959 = vadd.f32 %v1440, %v1831
      %v1960 = vadd.f32 %v1441, %v1832
      %v1961 = vadd.f32 %v1442, %v1833
      %v1962 = vadd.f32 %v1443, %v1834
      %v1963 = vadd.f32 %v1444, %v1835
      %v1964 = vadd.f32 %v1445, %v1836
      %v1965 = vadd.f32 %v1446, %v1837
      %v1966 = vadd.f32 %v1447, %v1838
      %v1967 = vadd.f32 %v1448, %v1839
      %v1968 = vadd.f32 %v1449, %v1840
      %v1969 = vadd.f32 %v1450, %v1841
      %v1970 = vadd.f32 %v1451, %v1842
      %v1971 = vadd.f32 %v1452, %v1843
      %v1972 = vadd.f32 %v1453, %v1844
      %v1973 = vld [vmem:[%s2] sm:$0x3]
      %v1975 = vperm.slane %v1973, 0
      %v1976 = vperm.slane %v1973, 1
      %v1979 = vadd.f32 %v1845, %v1975
      %v1980 = vadd.f32 %v1846, %v1976
      %v1981 = vadd.f32 %v1847, %v1975
      %v1982 = vadd.f32 %v1848, %v1976
      %v1983 = vadd.f32 %v1849, %v1975
      %v1984 = vadd.f32 %v1850, %v1976
      %v1985 = vadd.f32 %v1851, %v1975
      %v1986 = vadd.f32 %v1852, %v1976
      %v1987 = vadd.f32 %v1853, %v1975
      %v1988 = vadd.f32 %v1854, %v1976
      %v1989 = vadd.f32 %v1855, %v1975
      %v1990 = vadd.f32 %v1856, %v1976
      %v1991 = vadd.f32 %v1857, %v1975
      %v1992 = vadd.f32 %v1858, %v1976
      %v1993 = vadd.f32 %v1859, %v1975
      %v1994 = vadd.f32 %v1860, %v1976
      %v1995 = vadd.f32 %v1861, %v1975
      %v1996 = vadd.f32 %v1862, %v1976
      %v1997 = vadd.f32 %v1863, %v1975
      %v1998 = vadd.f32 %v1864, %v1976
      %v1999 = vadd.f32 %v1865, %v1975
      %v2000 = vadd.f32 %v1866, %v1976
      %v2001 = vadd.f32 %v1867, %v1975
      %v2002 = vadd.f32 %v1868, %v1976
      %v2003 = vadd.f32 %v1869, %v1975
      %v2004 = vadd.f32 %v1870, %v1976
      %v2005 = vadd.f32 %v1871, %v1975
      %v2006 = vadd.f32 %v1872, %v1976
      %v2007 = vadd.f32 %v1873, %v1975
      %v2008 = vadd.f32 %v1874, %v1976
      %v2009 = vadd.f32 %v1875, %v1975
      %v2010 = vadd.f32 %v1876, %v1976
      %v2011 = vadd.f32 %v1877, %v1975
      %v2012 = vadd.f32 %v1878, %v1976
      %v2013 = vadd.f32 %v1879, %v1975
      %v2014 = vadd.f32 %v1880, %v1976
      %v2015 = vadd.f32 %v1881, %v1975
      %v2016 = vadd.f32 %v1882, %v1976
      %v2017 = vadd.f32 %v1883, %v1975
      %v2018 = vadd.f32 %v1884, %v1976
      %v2019 = vadd.f32 %v1885, %v1975
      %v2020 = vadd.f32 %v1886, %v1976
      %v2021 = vadd.f32 %v1887, %v1975
      %v2022 = vadd.f32 %v1888, %v1976
      %v2023 = vadd.f32 %v1889, %v1975
      %v2024 = vadd.f32 %v1890, %v1976
      %v2025 = vadd.f32 %v1891, %v1975
      %v2026 = vadd.f32 %v1892, %v1976
      %v2027 = vadd.f32 %v1893, %v1975
      %v2028 = vadd.f32 %v1894, %v1976
      %v2029 = vadd.f32 %v1895, %v1975
      %v2030 = vadd.f32 %v1896, %v1976
      %v2031 = vadd.f32 %v1897, %v1975
      %v2032 = vadd.f32 %v1898, %v1976
      %v2033 = vadd.f32 %v1899, %v1975
      %v2034 = vadd.f32 %v1900, %v1976
      %v2035 = vadd.f32 %v1901, %v1975
      %v2036 = vadd.f32 %v1902, %v1976
      %v2037 = vadd.f32 %v1903, %v1975
      %v2038 = vadd.f32 %v1904, %v1976
      %v2039 = vadd.f32 %v1905, %v1975
      %v2040 = vadd.f32 %v1906, %v1976
      %v2041 = vadd.f32 %v1907, %v1975
      %v2042 = vadd.f32 %v1908, %v1976
      %v2043 = vadd.f32 %v1909, %v1975
      %v2044 = vadd.f32 %v1910, %v1976
      %v2045 = vadd.f32 %v1911, %v1975
      %v2046 = vadd.f32 %v1912, %v1976
      %v2047 = vadd.f32 %v1913, %v1975
      %v2048 = vadd.f32 %v1914, %v1976
      %v2049 = vadd.f32 %v1915, %v1975
      %v2050 = vadd.f32 %v1916, %v1976
      %v2051 = vadd.f32 %v1917, %v1975
      %v2052 = vadd.f32 %v1918, %v1976
      %v2053 = vadd.f32 %v1919, %v1975
      %v2054 = vadd.f32 %v1920, %v1976
      %v2055 = vadd.f32 %v1921, %v1975
      %v2056 = vadd.f32 %v1922, %v1976
      %v2057 = vadd.f32 %v1923, %v1975
      %v2058 = vadd.f32 %v1924, %v1976
      %v2059 = vadd.f32 %v1925, %v1975
      %v2060 = vadd.f32 %v1926, %v1976
      %v2061 = vadd.f32 %v1927, %v1975
      %v2062 = vadd.f32 %v1928, %v1976
      %v2063 = vadd.f32 %v1929, %v1975
      %v2064 = vadd.f32 %v1930, %v1976
      %v2065 = vadd.f32 %v1931, %v1975
      %v2066 = vadd.f32 %v1932, %v1976
      %v2067 = vadd.f32 %v1933, %v1975
      %v2068 = vadd.f32 %v1934, %v1976
      %v2069 = vadd.f32 %v1935, %v1975
      %v2070 = vadd.f32 %v1936, %v1976
      %v2071 = vadd.f32 %v1937, %v1975
      %v2072 = vadd.f32 %v1938, %v1976
      %v2073 = vadd.f32 %v1939, %v1975
      %v2074 = vadd.f32 %v1940, %v1976
      %v2075 = vadd.f32 %v1941, %v1975
      %v2076 = vadd.f32 %v1942, %v1976
      %v2077 = vadd.f32 %v1943, %v1975
      %v2078 = vadd.f32 %v1944, %v1976
      %v2079 = vadd.f32 %v1945, %v1975
      %v2080 = vadd.f32 %v1946, %v1976
      %v2081 = vadd.f32 %v1947, %v1975
      %v2082 = vadd.f32 %v1948, %v1976
      %v2083 = vadd.f32 %v1949, %v1975
      %v2084 = vadd.f32 %v1950, %v1976
      %v2085 = vadd.f32 %v1951, %v1975
      %v2086 = vadd.f32 %v1952, %v1976
      %v2087 = vadd.f32 %v1953, %v1975
      %v2088 = vadd.f32 %v1954, %v1976
      %v2089 = vadd.f32 %v1955, %v1975
      %v2090 = vadd.f32 %v1956, %v1976
      %v2091 = vadd.f32 %v1957, %v1975
      %v2092 = vadd.f32 %v1958, %v1976
      %v2093 = vadd.f32 %v1959, %v1975
      %v2094 = vadd.f32 %v1960, %v1976
      %v2095 = vadd.f32 %v1961, %v1975
      %v2096 = vadd.f32 %v1962, %v1976
      %v2097 = vadd.f32 %v1963, %v1975
      %v2098 = vadd.f32 %v1964, %v1976
      %v2099 = vadd.f32 %v1965, %v1975
      %v2100 = vadd.f32 %v1966, %v1976
      %v2101 = vadd.f32 %v1967, %v1975
      %v2102 = vadd.f32 %v1968, %v1976
      %v2103 = vadd.f32 %v1969, %v1975
      %v2104 = vadd.f32 %v1970, %v1976
      %v2105 = vadd.f32 %v1971, %v1975
      %v2106 = vadd.f32 %v1972, %v1976
      %v2107 = vmax.f32 %v1979, 0.0
      %v2108 = vmax.f32 %v1980, 0.0
      %v2109 = vmax.f32 %v1981, 0.0
      %v2110 = vmax.f32 %v1982, 0.0
      %v2111 = vmax.f32 %v1983, 0.0
      %v2112 = vmax.f32 %v1984, 0.0
      %v2113 = vmax.f32 %v1985, 0.0
      %v2114 = vmax.f32 %v1986, 0.0
      %v2115 = vmax.f32 %v1987, 0.0
      %v2116 = vmax.f32 %v1988, 0.0
      %v2117 = vmax.f32 %v1989, 0.0
      %v2118 = vmax.f32 %v1990, 0.0
      %v2119 = vmax.f32 %v1991, 0.0
      %v2120 = vmax.f32 %v1992, 0.0
      %v2121 = vmax.f32 %v1993, 0.0
      %v2122 = vmax.f32 %v1994, 0.0
      %v2123 = vmax.f32 %v1995, 0.0
      %v2124 = vmax.f32 %v1996, 0.0
      %v2125 = vmax.f32 %v1997, 0.0
      %v2126 = vmax.f32 %v1998, 0.0
      %v2127 = vmax.f32 %v1999, 0.0
      %v2128 = vmax.f32 %v2000, 0.0
      %v2129 = vmax.f32 %v2001, 0.0
      %v2130 = vmax.f32 %v2002, 0.0
      %v2131 = vmax.f32 %v2003, 0.0
      %v2132 = vmax.f32 %v2004, 0.0
      %v2133 = vmax.f32 %v2005, 0.0
      %v2134 = vmax.f32 %v2006, 0.0
      %v2135 = vmax.f32 %v2007, 0.0
      %v2136 = vmax.f32 %v2008, 0.0
      %v2137 = vmax.f32 %v2009, 0.0
      %v2138 = vmax.f32 %v2010, 0.0
      %v2139 = vmax.f32 %v2011, 0.0
      %v2140 = vmax.f32 %v2012, 0.0
      %v2141 = vmax.f32 %v2013, 0.0
      %v2142 = vmax.f32 %v2014, 0.0
      %v2143 = vmax.f32 %v2015, 0.0
      %v2144 = vmax.f32 %v2016, 0.0
      %v2145 = vmax.f32 %v2017, 0.0
      %v2146 = vmax.f32 %v2018, 0.0
      %v2147 = vmax.f32 %v2019, 0.0
      %v2148 = vmax.f32 %v2020, 0.0
      %v2149 = vmax.f32 %v2021, 0.0
      %v2150 = vmax.f32 %v2022, 0.0
      %v2151 = vmax.f32 %v2023, 0.0
      %v2152 = vmax.f32 %v2024, 0.0
      %v2153 = vmax.f32 %v2025, 0.0
      %v2154 = vmax.f32 %v2026, 0.0
      %v2155 = vmax.f32 %v2027, 0.0
      %v2156 = vmax.f32 %v2028, 0.0
      %v2157 = vmax.f32 %v2029, 0.0
      %v2158 = vmax.f32 %v2030, 0.0
      %v2159 = vmax.f32 %v2031, 0.0
      %v2160 = vmax.f32 %v2032, 0.0
      %v2161 = vmax.f32 %v2033, 0.0
      %v2162 = vmax.f32 %v2034, 0.0
      %v2163 = vmax.f32 %v2035, 0.0
      %v2164 = vmax.f32 %v2036, 0.0
      %v2165 = vmax.f32 %v2037, 0.0
      %v2166 = vmax.f32 %v2038, 0.0
      %v2167 = vmax.f32 %v2039, 0.0
      %v2168 = vmax.f32 %v2040, 0.0
      %v2169 = vmax.f32 %v2041, 0.0
      %v2170 = vmax.f32 %v2042, 0.0
      %v2171 = vmax.f32 %v2043, 0.0
      %v2172 = vmax.f32 %v2044, 0.0
      %v2173 = vmax.f32 %v2045, 0.0
      %v2174 = vmax.f32 %v2046, 0.0
      %v2175 = vmax.f32 %v2047, 0.0
      %v2176 = vmax.f32 %v2048, 0.0
      %v2177 = vmax.f32 %v2049, 0.0
      %v2178 = vmax.f32 %v2050, 0.0
      %v2179 = vmax.f32 %v2051, 0.0
      %v2180 = vmax.f32 %v2052, 0.0
      %v2181 = vmax.f32 %v2053, 0.0
      %v2182 = vmax.f32 %v2054, 0.0
      %v2183 = vmax.f32 %v2055, 0.0
      %v2184 = vmax.f32 %v2056, 0.0
      %v2185 = vmax.f32 %v2057, 0.0
      %v2186 = vmax.f32 %v2058, 0.0
      %v2187 = vmax.f32 %v2059, 0.0
      %v2188 = vmax.f32 %v2060, 0.0
      %v2189 = vmax.f32 %v2061, 0.0
      %v2190 = vmax.f32 %v2062, 0.0
      %v2191 = vmax.f32 %v2063, 0.0
      %v2192 = vmax.f32 %v2064, 0.0
      %v2193 = vmax.f32 %v2065, 0.0
      %v2194 = vmax.f32 %v2066, 0.0
      %v2195 = vmax.f32 %v2067, 0.0
      %v2196 = vmax.f32 %v2068, 0.0
      %v2197 = vmax.f32 %v2069, 0.0
      %v2198 = vmax.f32 %v2070, 0.0
      %v2199 = vmax.f32 %v2071, 0.0
      %v2200 = vmax.f32 %v2072, 0.0
      %v2201 = vmax.f32 %v2073, 0.0
      %v2202 = vmax.f32 %v2074, 0.0
      %v2203 = vmax.f32 %v2075, 0.0
      %v2204 = vmax.f32 %v2076, 0.0
      %v2205 = vmax.f32 %v2077, 0.0
      %v2206 = vmax.f32 %v2078, 0.0
      %v2207 = vmax.f32 %v2079, 0.0
      %v2208 = vmax.f32 %v2080, 0.0
      %v2209 = vmax.f32 %v2081, 0.0
      %v2210 = vmax.f32 %v2082, 0.0
      %v2211 = vmax.f32 %v2083, 0.0
      %v2212 = vmax.f32 %v2084, 0.0
      %v2213 = vmax.f32 %v2085, 0.0
      %v2214 = vmax.f32 %v2086, 0.0
      %v2215 = vmax.f32 %v2087, 0.0
      %v2216 = vmax.f32 %v2088, 0.0
      %v2217 = vmax.f32 %v2089, 0.0
      %v2218 = vmax.f32 %v2090, 0.0
      %v2219 = vmax.f32 %v2091, 0.0
      %v2220 = vmax.f32 %v2092, 0.0
      %v2221 = vmax.f32 %v2093, 0.0
      %v2222 = vmax.f32 %v2094, 0.0
      %v2223 = vmax.f32 %v2095, 0.0
      %v2224 = vmax.f32 %v2096, 0.0
      %v2225 = vmax.f32 %v2097, 0.0
      %v2226 = vmax.f32 %v2098, 0.0
      %v2227 = vmax.f32 %v2099, 0.0
      %v2228 = vmax.f32 %v2100, 0.0
      %v2229 = vmax.f32 %v2101, 0.0
      %v2230 = vmax.f32 %v2102, 0.0
      %v2231 = vmax.f32 %v2103, 0.0
      %v2232 = vmax.f32 %v2104, 0.0
      %v2233 = vmax.f32 %v2105, 0.0
      %v2234 = vmax.f32 %v2106, 0.0
      %v2235 = vpack.c.bf16 %v2109, %v2107
      %v2236 = vpack.c.bf16 %v2110, %v2108
      %v2237 = vpack.c.bf16 %v2113, %v2111
      %v2238 = vpack.c.bf16 %v2114, %v2112
      %v2239 = vpack.c.bf16 %v2117, %v2115
      %v2240 = vpack.c.bf16 %v2118, %v2116
      %v2241 = vpack.c.bf16 %v2121, %v2119
      %v2242 = vpack.c.bf16 %v2122, %v2120
      %v2243 = vpack.c.bf16 %v2125, %v2123
      %v2244 = vpack.c.bf16 %v2126, %v2124
      %v2245 = vpack.c.bf16 %v2129, %v2127
      %v2246 = vpack.c.bf16 %v2130, %v2128
      %v2247 = vpack.c.bf16 %v2133, %v2131
      %v2248 = vpack.c.bf16 %v2134, %v2132
      %v2249 = vpack.c.bf16 %v2137, %v2135
      %v2250 = vpack.c.bf16 %v2138, %v2136
      %v2251 = vpack.c.bf16 %v2141, %v2139
      %v2252 = vpack.c.bf16 %v2142, %v2140
      %v2253 = vpack.c.bf16 %v2145, %v2143
      %v2254 = vpack.c.bf16 %v2146, %v2144
      %v2255 = vpack.c.bf16 %v2149, %v2147
      %v2256 = vpack.c.bf16 %v2150, %v2148
      %v2257 = vpack.c.bf16 %v2153, %v2151
      %v2258 = vpack.c.bf16 %v2154, %v2152
      %v2259 = vpack.c.bf16 %v2157, %v2155
      %v2260 = vpack.c.bf16 %v2158, %v2156
      %v2261 = vpack.c.bf16 %v2161, %v2159
      %v2262 = vpack.c.bf16 %v2162, %v2160
      %v2263 = vpack.c.bf16 %v2165, %v2163
      %v2264 = vpack.c.bf16 %v2166, %v2164
      %v2265 = vpack.c.bf16 %v2169, %v2167
      %v2266 = vpack.c.bf16 %v2170, %v2168
      %v2267 = vpack.c.bf16 %v2173, %v2171
      %v2268 = vpack.c.bf16 %v2174, %v2172
      %v2269 = vpack.c.bf16 %v2177, %v2175
      %v2270 = vpack.c.bf16 %v2178, %v2176
      %v2271 = vpack.c.bf16 %v2181, %v2179
      %v2272 = vpack.c.bf16 %v2182, %v2180
      %v2273 = vpack.c.bf16 %v2185, %v2183
      %v2274 = vpack.c.bf16 %v2186, %v2184
      %v2275 = vpack.c.bf16 %v2189, %v2187
      %v2276 = vpack.c.bf16 %v2190, %v2188
      %v2277 = vpack.c.bf16 %v2193, %v2191
      %v2278 = vpack.c.bf16 %v2194, %v2192
      %v2279 = vpack.c.bf16 %v2197, %v2195
      %v2280 = vpack.c.bf16 %v2198, %v2196
      %v2281 = vpack.c.bf16 %v2201, %v2199
      %v2282 = vpack.c.bf16 %v2202, %v2200
      %v2283 = vpack.c.bf16 %v2205, %v2203
      %v2284 = vpack.c.bf16 %v2206, %v2204
      %v2285 = vpack.c.bf16 %v2209, %v2207
      %v2286 = vpack.c.bf16 %v2210, %v2208
      %v2287 = vpack.c.bf16 %v2213, %v2211
      %v2288 = vpack.c.bf16 %v2214, %v2212
      %v2289 = vpack.c.bf16 %v2217, %v2215
      %v2290 = vpack.c.bf16 %v2218, %v2216
      %v2291 = vpack.c.bf16 %v2221, %v2219
      %v2292 = vpack.c.bf16 %v2222, %v2220
      %v2293 = vpack.c.bf16 %v2225, %v2223
      %v2294 = vpack.c.bf16 %v2226, %v2224
      %v2295 = vpack.c.bf16 %v2229, %v2227
      %v2296 = vpack.c.bf16 %v2230, %v2228
      %v2297 = vpack.c.bf16 %v2233, %v2231
      %v2298 = vpack.c.bf16 %v2234, %v2232
      %v2299 = vld [vmem:[%s3] sm:$0xff]
      %v2300 = vld [vmem:[%s3 + $0x8] sm:$0xff]
      %v2301 = vld [vmem:[%s3 + $0x10] sm:$0xff]
      %v2302 = vld [vmem:[%s3 + $0x18] sm:$0xff]
      %v2303 = vld [vmem:[%s3 + $0x20] sm:$0xff]
      %v2304 = vld [vmem:[%s3 + $0x28] sm:$0xff]
      %v2305 = vld [vmem:[%s3 + $0x30] sm:$0xff]
      %v2306 = vld [vmem:[%s3 + $0x38] sm:$0xff]
      %v2307 = vld [vmem:[%s3 + $0x40] sm:$0xff]
      %v2308 = vld [vmem:[%s3 + $0x48] sm:$0xff]
      %v2309 = vld [vmem:[%s3 + $0x50] sm:$0xff]
      %v2310 = vld [vmem:[%s3 + $0x58] sm:$0xff]
      %v2311 = vld [vmem:[%s3 + $0x60] sm:$0xff]
      %v2312 = vld [vmem:[%s3 + $0x68] sm:$0xff]
      %v2313 = vld [vmem:[%s3 + $0x70] sm:$0xff]
      %v2314 = vld [vmem:[%s3 + $0x78] sm:$0xff]
      %v2315 = vld [vmem:[%s3 + $0x80] sm:$0xff]
      %v2316 = vld [vmem:[%s3 + $0x88] sm:$0xff]
      %v2317 = vld [vmem:[%s3 + $0x90] sm:$0xff]
      %v2318 = vld [vmem:[%s3 + $0x98] sm:$0xff]
      %v2319 = vld [vmem:[%s3 + $0xa0] sm:$0xff]
      %v2320 = vld [vmem:[%s3 + $0xa8] sm:$0xff]
      %v2321 = vld [vmem:[%s3 + $0xb0] sm:$0xff]
      %v2322 = vld [vmem:[%s3 + $0xb8] sm:$0xff]
      %v2323 = vld [vmem:[%s3 + $0xc0] sm:$0xff]
      %v2324 = vld [vmem:[%s3 + $0xc8] sm:$0xff]
      %v2325 = vld [vmem:[%s3 + $0xd0] sm:$0xff]
      %v2326 = vld [vmem:[%s3 + $0xd8] sm:$0xff]
      %v2327 = vld [vmem:[%s3 + $0xe0] sm:$0xff]
      %v2328 = vld [vmem:[%s3 + $0xe8] sm:$0xff]
      %v2329 = vld [vmem:[%s3 + $0xf0] sm:$0xff]
      %v2330 = vld [vmem:[%s3 + $0xf8] sm:$0xff]
      %v2331 = vld [vmem:[%s4] sm:$0x3]
      %v2333 = vperm.slane %v2331, 0
      %v2334 = vperm.slane %v2331, 1
      %v2369 = vunpack.c.l.b16 %v2299
      %v2370 = vunpack.c.h.b16 %v2299
      %v2371 = vunpack.c.l.b16 %v2300
      %v2372 = vunpack.c.h.b16 %v2300
      %v2373 = vunpack.c.l.b16 %v2301
      %v2374 = vunpack.c.h.b16 %v2301
      %v2375 = vunpack.c.l.b16 %v2302
      %v2376 = vunpack.c.h.b16 %v2302
      %v2377 = vunpack.c.l.b16 %v2303
      %v2378 = vunpack.c.h.b16 %v2303
      %v2379 = vunpack.c.l.b16 %v2304
      %v2380 = vunpack.c.h.b16 %v2304
      %v2381 = vunpack.c.l.b16 %v2305
      %v2382 = vunpack.c.h.b16 %v2305
      %v2383 = vunpack.c.l.b16 %v2306
      %v2384 = vunpack.c.h.b16 %v2306
      %v2385 = vunpack.c.l.b16 %v2307
      %v2386 = vunpack.c.h.b16 %v2307
      %v2387 = vunpack.c.l.b16 %v2308
      %v2388 = vunpack.c.h.b16 %v2308
      %v2389 = vunpack.c.l.b16 %v2309
      %v2390 = vunpack.c.h.b16 %v2309
      %v2391 = vunpack.c.l.b16 %v2310
      %v2392 = vunpack.c.h.b16 %v2310
      %v2393 = vunpack.c.l.b16 %v2311
      %v2394 = vunpack.c.h.b16 %v2311
      %v2395 = vunpack.c.l.b16 %v2312
      %v2396 = vunpack.c.h.b16 %v2312
      %v2397 = vunpack.c.l.b16 %v2313
      %v2398 = vunpack.c.h.b16 %v2313
      %v2399 = vunpack.c.l.b16 %v2314
      %v2400 = vunpack.c.h.b16 %v2314
      %v2401 = vunpack.c.l.b16 %v2315
      %v2402 = vunpack.c.h.b16 %v2315
      %v2403 = vunpack.c.l.b16 %v2316
      %v2404 = vunpack.c.h.b16 %v2316
      %v2405 = vunpack.c.l.b16 %v2317
      %v2406 = vunpack.c.h.b16 %v2317
      %v2407 = vunpack.c.l.b16 %v2318
      %v2408 = vunpack.c.h.b16 %v2318
      %v2409 = vunpack.c.l.b16 %v2319
      %v2410 = vunpack.c.h.b16 %v2319
      %v2411 = vunpack.c.l.b16 %v2320
      %v2412 = vunpack.c.h.b16 %v2320
      %v2413 = vunpack.c.l.b16 %v2321
      %v2414 = vunpack.c.h.b16 %v2321
      %v2415 = vunpack.c.l.b16 %v2322
      %v2416 = vunpack.c.h.b16 %v2322
      %v2417 = vunpack.c.l.b16 %v2323
      %v2418 = vunpack.c.h.b16 %v2323
      %v2419 = vunpack.c.l.b16 %v2324
      %v2420 = vunpack.c.h.b16 %v2324
      %v2421 = vunpack.c.l.b16 %v2325
      %v2422 = vunpack.c.h.b16 %v2325
      %v2423 = vunpack.c.l.b16 %v2326
      %v2424 = vunpack.c.h.b16 %v2326
      %v2425 = vunpack.c.l.b16 %v2327
      %v2426 = vunpack.c.h.b16 %v2327
      %v2427 = vunpack.c.l.b16 %v2328
      %v2428 = vunpack.c.h.b16 %v2328
      %v2429 = vunpack.c.l.b16 %v2329
      %v2430 = vunpack.c.h.b16 %v2329
      %v2431 = vunpack.c.l.b16 %v2330
      %v2432 = vunpack.c.h.b16 %v2330
      %v2433 = vpack.c.b16 %v2371, %v2369
      %v2434 = vpack.c.b16 %v2372, %v2370
      %v2435 = vpack.c.b16 %v2375, %v2373
      %v2436 = vpack.c.b16 %v2376, %v2374
      %v2437 = vpack.c.b16 %v2379, %v2377
      %v2438 = vpack.c.b16 %v2380, %v2378
      %v2439 = vpack.c.b16 %v2383, %v2381
      %v2440 = vpack.c.b16 %v2384, %v2382
      %v2441 = vpack.c.b16 %v2387, %v2385
      %v2442 = vpack.c.b16 %v2388, %v2386
      %v2443 = vpack.c.b16 %v2391, %v2389
      %v2444 = vpack.c.b16 %v2392, %v2390
      %v2445 = vpack.c.b16 %v2395, %v2393
      %v2446 = vpack.c.b16 %v2396, %v2394
      %v2447 = vpack.c.b16 %v2399, %v2397
      %v2448 = vpack.c.b16 %v2400, %v2398
      %v2449 = vpack.c.b16 %v2403, %v2401
      %v2450 = vpack.c.b16 %v2404, %v2402
      %v2451 = vpack.c.b16 %v2407, %v2405
      %v2452 = vpack.c.b16 %v2408, %v2406
      %v2453 = vpack.c.b16 %v2411, %v2409
      %v2454 = vpack.c.b16 %v2412, %v2410
      %v2455 = vpack.c.b16 %v2415, %v2413
      %v2456 = vpack.c.b16 %v2416, %v2414
      %v2457 = vpack.c.b16 %v2419, %v2417
      %v2458 = vpack.c.b16 %v2420, %v2418
      %v2459 = vpack.c.b16 %v2423, %v2421
      %v2460 = vpack.c.b16 %v2424, %v2422
      %v2461 = vpack.c.b16 %v2427, %v2425
      %v2462 = vpack.c.b16 %v2428, %v2426
      %v2463 = vpack.c.b16 %v2431, %v2429
      %v2464 = vpack.c.b16 %v2432, %v2430
      %2497 = vmatpush.bf16.msra.mxu0 %v2447
      %2498 = vmatpush.bf16.msra.mxu0 %v2445
      %2499 = vmatpush.bf16.msra.mxu0 %v2443
      %2500 = vmatpush.bf16.msra.mxu0 %v2441
      %2501 = vmatpush.bf16.msra.mxu0 %v2439
      %2502 = vmatpush.bf16.msra.mxu0 %v2437
      %2503 = vmatpush.bf16.msra.mxu0 %v2435
      %2504 = vmatpush.bf16.msra.mxu0 %v2433
      %2505 = vmatmul.bf16.gmra.mxu0 %v2235
      %v2506 = vpop.f32.mrf.mxu0
      %v2507 = vadd.f32 %v2333, %v2506
      %v2508 = vpop.f32.mrf.mxu0
      %v2509 = vadd.f32 %v2333, %v2508
      %2510 = vmatmul.bf16.gmra.mxu0 %v2237
      %v2511 = vpop.f32.mrf.mxu0
      %v2512 = vadd.f32 %v2333, %v2511
      %v2513 = vpop.f32.mrf.mxu0
      %v2514 = vadd.f32 %v2333, %v2513
      %2515 = vmatmul.bf16.gmra.mxu0 %v2239
      %v2516 = vpop.f32.mrf.mxu0
      %v2517 = vadd.f32 %v2333, %v2516
      %v2518 = vpop.f32.mrf.mxu0
      %v2519 = vadd.f32 %v2333, %v2518
      %2520 = vmatmul.bf16.gmra.mxu0 %v2241
      %v2521 = vpop.f32.mrf.mxu0
      %v2522 = vadd.f32 %v2333, %v2521
      %v2523 = vpop.f32.mrf.mxu0
      %v2524 = vadd.f32 %v2333, %v2523
      %2525 = vmatmul.bf16.gmra.mxu0 %v2243
      %v2526 = vpop.f32.mrf.mxu0
      %v2527 = vadd.f32 %v2333, %v2526
      %v2528 = vpop.f32.mrf.mxu0
      %v2529 = vadd.f32 %v2333, %v2528
      %2530 = vmatmul.bf16.gmra.mxu0 %v2245
      %v2531 = vpop.f32.mrf.mxu0
      %v2532 = vadd.f32 %v2333, %v2531
      %v2533 = vpop.f32.mrf.mxu0
      %v2534 = vadd.f32 %v2333, %v2533
      %2535 = vmatmul.bf16.gmra.mxu0 %v2247
      %v2536 = vpop.f32.mrf.mxu0
      %v2537 = vadd.f32 %v2333, %v2536
      %v2538 = vpop.f32.mrf.mxu0
      %v2539 = vadd.f32 %v2333, %v2538
      %2540 = vmatmul.bf16.gmra.mxu0 %v2249
      %v2541 = vpop.f32.mrf.mxu0
      %v2542 = vadd.f32 %v2333, %v2541
      %v2543 = vpop.f32.mrf.mxu0
      %v2544 = vadd.f32 %v2333, %v2543
      %2545 = vmatmul.bf16.gmra.mxu0 %v2251
      %v2546 = vpop.f32.mrf.mxu0
      %v2547 = vadd.f32 %v2333, %v2546
      %v2548 = vpop.f32.mrf.mxu0
      %v2549 = vadd.f32 %v2333, %v2548
      %2550 = vmatmul.bf16.gmra.mxu0 %v2253
      %v2551 = vpop.f32.mrf.mxu0
      %v2552 = vadd.f32 %v2333, %v2551
      %v2553 = vpop.f32.mrf.mxu0
      %v2554 = vadd.f32 %v2333, %v2553
      %2555 = vmatmul.bf16.gmra.mxu0 %v2255
      %v2556 = vpop.f32.mrf.mxu0
      %v2557 = vadd.f32 %v2333, %v2556
      %v2558 = vpop.f32.mrf.mxu0
      %v2559 = vadd.f32 %v2333, %v2558
      %2560 = vmatmul.bf16.gmra.mxu0 %v2257
      %v2561 = vpop.f32.mrf.mxu0
      %v2562 = vadd.f32 %v2333, %v2561
      %v2563 = vpop.f32.mrf.mxu0
      %v2564 = vadd.f32 %v2333, %v2563
      %2565 = vmatmul.bf16.gmra.mxu0 %v2259
      %v2566 = vpop.f32.mrf.mxu0
      %v2567 = vadd.f32 %v2333, %v2566
      %v2568 = vpop.f32.mrf.mxu0
      %v2569 = vadd.f32 %v2333, %v2568
      %2570 = vmatmul.bf16.gmra.mxu0 %v2261
      %v2571 = vpop.f32.mrf.mxu0
      %v2572 = vadd.f32 %v2333, %v2571
      %v2573 = vpop.f32.mrf.mxu0
      %v2574 = vadd.f32 %v2333, %v2573
      %2575 = vmatmul.bf16.gmra.mxu0 %v2263
      %v2576 = vpop.f32.mrf.mxu0
      %v2577 = vadd.f32 %v2333, %v2576
      %v2578 = vpop.f32.mrf.mxu0
      %v2579 = vadd.f32 %v2333, %v2578
      %2580 = vmatmul.bf16.gmra.mxu0 %v2265
      %v2581 = vpop.f32.mrf.mxu0
      %v2582 = vadd.f32 %v2333, %v2581
      %v2583 = vpop.f32.mrf.mxu0
      %v2584 = vadd.f32 %v2333, %v2583
      %2585 = vmatmul.bf16.gmra.mxu0 %v2267
      %v2586 = vpop.f32.mrf.mxu0
      %v2587 = vadd.f32 %v2333, %v2586
      %v2588 = vpop.f32.mrf.mxu0
      %v2589 = vadd.f32 %v2333, %v2588
      %2590 = vmatmul.bf16.gmra.mxu0 %v2269
      %v2591 = vpop.f32.mrf.mxu0
      %v2592 = vadd.f32 %v2333, %v2591
      %v2593 = vpop.f32.mrf.mxu0
      %v2594 = vadd.f32 %v2333, %v2593
      %2595 = vmatmul.bf16.gmra.mxu0 %v2271
      %v2596 = vpop.f32.mrf.mxu0
      %v2597 = vadd.f32 %v2333, %v2596
      %v2598 = vpop.f32.mrf.mxu0
      %v2599 = vadd.f32 %v2333, %v2598
      %2600 = vmatmul.bf16.gmra.mxu0 %v2273
      %v2601 = vpop.f32.mrf.mxu0
      %v2602 = vadd.f32 %v2333, %v2601
      %v2603 = vpop.f32.mrf.mxu0
      %v2604 = vadd.f32 %v2333, %v2603
      %2605 = vmatmul.bf16.gmra.mxu0 %v2275
      %v2606 = vpop.f32.mrf.mxu0
      %v2607 = vadd.f32 %v2333, %v2606
      %v2608 = vpop.f32.mrf.mxu0
      %v2609 = vadd.f32 %v2333, %v2608
      %2610 = vmatmul.bf16.gmra.mxu0 %v2277
      %v2611 = vpop.f32.mrf.mxu0
      %v2612 = vadd.f32 %v2333, %v2611
      %v2613 = vpop.f32.mrf.mxu0
      %v2614 = vadd.f32 %v2333, %v2613
      %2615 = vmatmul.bf16.gmra.mxu0 %v2279
      %v2616 = vpop.f32.mrf.mxu0
      %v2617 = vadd.f32 %v2333, %v2616
      %v2618 = vpop.f32.mrf.mxu0
      %v2619 = vadd.f32 %v2333, %v2618
      %2620 = vmatmul.bf16.gmra.mxu0 %v2281
      %v2621 = vpop.f32.mrf.mxu0
      %v2622 = vadd.f32 %v2333, %v2621
      %v2623 = vpop.f32.mrf.mxu0
      %v2624 = vadd.f32 %v2333, %v2623
      %2625 = vmatmul.bf16.gmra.mxu0 %v2283
      %v2626 = vpop.f32.mrf.mxu0
      %v2627 = vadd.f32 %v2333, %v2626
      %v2628 = vpop.f32.mrf.mxu0
      %v2629 = vadd.f32 %v2333, %v2628
      %2630 = vmatmul.bf16.gmra.mxu0 %v2285
      %v2631 = vpop.f32.mrf.mxu0
      %v2632 = vadd.f32 %v2333, %v2631
      %v2633 = vpop.f32.mrf.mxu0
      %v2634 = vadd.f32 %v2333, %v2633
      %2635 = vmatmul.bf16.gmra.mxu0 %v2287
      %v2636 = vpop.f32.mrf.mxu0
      %v2637 = vadd.f32 %v2333, %v2636
      %v2638 = vpop.f32.mrf.mxu0
      %v2639 = vadd.f32 %v2333, %v2638
      %2640 = vmatmul.bf16.gmra.mxu0 %v2289
      %v2641 = vpop.f32.mrf.mxu0
      %v2642 = vadd.f32 %v2333, %v2641
      %v2643 = vpop.f32.mrf.mxu0
      %v2644 = vadd.f32 %v2333, %v2643
      %2645 = vmatmul.bf16.gmra.mxu0 %v2291
      %v2646 = vpop.f32.mrf.mxu0
      %v2647 = vadd.f32 %v2333, %v2646
      %v2648 = vpop.f32.mrf.mxu0
      %v2649 = vadd.f32 %v2333, %v2648
      %2650 = vmatmul.bf16.gmra.mxu0 %v2293
      %v2651 = vpop.f32.mrf.mxu0
      %v2652 = vadd.f32 %v2333, %v2651
      %v2653 = vpop.f32.mrf.mxu0
      %v2654 = vadd.f32 %v2333, %v2653
      %2655 = vmatmul.bf16.gmra.mxu0 %v2295
      %v2656 = vpop.f32.mrf.mxu0
      %v2657 = vadd.f32 %v2333, %v2656
      %v2658 = vpop.f32.mrf.mxu0
      %v2659 = vadd.f32 %v2333, %v2658
      %2660 = vmatmul.bf16.gmra.mxu0 %v2297
      %v2661 = vpop.f32.mrf.mxu0
      %v2662 = vadd.f32 %v2333, %v2661
      %v2663 = vpop.f32.mrf.mxu0
      %v2664 = vadd.f32 %v2333, %v2663
      %2665 = vdwg.mxu0
      %2666 = vmatpush.bf16.msra.mxu0 %v2463
      %2667 = vmatpush.bf16.msra.mxu0 %v2461
      %2668 = vmatpush.bf16.msra.mxu0 %v2459
      %2669 = vmatpush.bf16.msra.mxu0 %v2457
      %2670 = vmatpush.bf16.msra.mxu0 %v2455
      %2671 = vmatpush.bf16.msra.mxu0 %v2453
      %2672 = vmatpush.bf16.msra.mxu0 %v2451
      %2673 = vmatpush.bf16.msra.mxu0 %v2449
      %2674 = vmatmul.bf16.gmra.mxu0 %v2236
      %v2675 = vpop.f32.mrf.mxu0
      %v2676 = vadd.f32 %v2507, %v2675
      %v2677 = vpop.f32.mrf.mxu0
      %v2678 = vadd.f32 %v2509, %v2677
      %2679 = vmatmul.bf16.gmra.mxu0 %v2238
      %v2680 = vpop.f32.mrf.mxu0
      %v2681 = vadd.f32 %v2512, %v2680
      %v2682 = vpop.f32.mrf.mxu0
      %v2683 = vadd.f32 %v2514, %v2682
      %2684 = vmatmul.bf16.gmra.mxu0 %v2240
      %v2685 = vpop.f32.mrf.mxu0
      %v2686 = vadd.f32 %v2517, %v2685
      %v2687 = vpop.f32.mrf.mxu0
      %v2688 = vadd.f32 %v2519, %v2687
      %2689 = vmatmul.bf16.gmra.mxu0 %v2242
      %v2690 = vpop.f32.mrf.mxu0
      %v2691 = vadd.f32 %v2522, %v2690
      %v2692 = vpop.f32.mrf.mxu0
      %v2693 = vadd.f32 %v2524, %v2692
      %2694 = vmatmul.bf16.gmra.mxu0 %v2244
      %v2695 = vpop.f32.mrf.mxu0
      %v2696 = vadd.f32 %v2527, %v2695
      %v2697 = vpop.f32.mrf.mxu0
      %v2698 = vadd.f32 %v2529, %v2697
      %2699 = vmatmul.bf16.gmra.mxu0 %v2246
      %v2700 = vpop.f32.mrf.mxu0
      %v2701 = vadd.f32 %v2532, %v2700
      %v2702 = vpop.f32.mrf.mxu0
      %v2703 = vadd.f32 %v2534, %v2702
      %2704 = vmatmul.bf16.gmra.mxu0 %v2248
      %v2705 = vpop.f32.mrf.mxu0
      %v2706 = vadd.f32 %v2537, %v2705
      %v2707 = vpop.f32.mrf.mxu0
      %v2708 = vadd.f32 %v2539, %v2707
      %2709 = vmatmul.bf16.gmra.mxu0 %v2250
      %v2710 = vpop.f32.mrf.mxu0
      %v2711 = vadd.f32 %v2542, %v2710
      %v2712 = vpop.f32.mrf.mxu0
      %v2713 = vadd.f32 %v2544, %v2712
      %2714 = vmatmul.bf16.gmra.mxu0 %v2252
      %v2715 = vpop.f32.mrf.mxu0
      %v2716 = vadd.f32 %v2547, %v2715
      %v2717 = vpop.f32.mrf.mxu0
      %v2718 = vadd.f32 %v2549, %v2717
      %2719 = vmatmul.bf16.gmra.mxu0 %v2254
      %v2720 = vpop.f32.mrf.mxu0
      %v2721 = vadd.f32 %v2552, %v2720
      %v2722 = vpop.f32.mrf.mxu0
      %v2723 = vadd.f32 %v2554, %v2722
      %2724 = vmatmul.bf16.gmra.mxu0 %v2256
      %v2725 = vpop.f32.mrf.mxu0
      %v2726 = vadd.f32 %v2557, %v2725
      %v2727 = vpop.f32.mrf.mxu0
      %v2728 = vadd.f32 %v2559, %v2727
      %2729 = vmatmul.bf16.gmra.mxu0 %v2258
      %v2730 = vpop.f32.mrf.mxu0
      %v2731 = vadd.f32 %v2562, %v2730
      %v2732 = vpop.f32.mrf.mxu0
      %v2733 = vadd.f32 %v2564, %v2732
      %2734 = vmatmul.bf16.gmra.mxu0 %v2260
      %v2735 = vpop.f32.mrf.mxu0
      %v2736 = vadd.f32 %v2567, %v2735
      %v2737 = vpop.f32.mrf.mxu0
      %v2738 = vadd.f32 %v2569, %v2737
      %2739 = vmatmul.bf16.gmra.mxu0 %v2262
      %v2740 = vpop.f32.mrf.mxu0
      %v2741 = vadd.f32 %v2572, %v2740
      %v2742 = vpop.f32.mrf.mxu0
      %v2743 = vadd.f32 %v2574, %v2742
      %2744 = vmatmul.bf16.gmra.mxu0 %v2264
      %v2745 = vpop.f32.mrf.mxu0
      %v2746 = vadd.f32 %v2577, %v2745
      %v2747 = vpop.f32.mrf.mxu0
      %v2748 = vadd.f32 %v2579, %v2747
      %2749 = vmatmul.bf16.gmra.mxu0 %v2266
      %v2750 = vpop.f32.mrf.mxu0
      %v2751 = vadd.f32 %v2582, %v2750
      %v2752 = vpop.f32.mrf.mxu0
      %v2753 = vadd.f32 %v2584, %v2752
      %2754 = vmatmul.bf16.gmra.mxu0 %v2268
      %v2755 = vpop.f32.mrf.mxu0
      %v2756 = vadd.f32 %v2587, %v2755
      %v2757 = vpop.f32.mrf.mxu0
      %v2758 = vadd.f32 %v2589, %v2757
      %2759 = vmatmul.bf16.gmra.mxu0 %v2270
      %v2760 = vpop.f32.mrf.mxu0
      %v2761 = vadd.f32 %v2592, %v2760
      %v2762 = vpop.f32.mrf.mxu0
      %v2763 = vadd.f32 %v2594, %v2762
      %2764 = vmatmul.bf16.gmra.mxu0 %v2272
      %v2765 = vpop.f32.mrf.mxu0
      %v2766 = vadd.f32 %v2597, %v2765
      %v2767 = vpop.f32.mrf.mxu0
      %v2768 = vadd.f32 %v2599, %v2767
      %2769 = vmatmul.bf16.gmra.mxu0 %v2274
      %v2770 = vpop.f32.mrf.mxu0
      %v2771 = vadd.f32 %v2602, %v2770
      %v2772 = vpop.f32.mrf.mxu0
      %v2773 = vadd.f32 %v2604, %v2772
      %2774 = vmatmul.bf16.gmra.mxu0 %v2276
      %v2775 = vpop.f32.mrf.mxu0
      %v2776 = vadd.f32 %v2607, %v2775
      %v2777 = vpop.f32.mrf.mxu0
      %v2778 = vadd.f32 %v2609, %v2777
      %2779 = vmatmul.bf16.gmra.mxu0 %v2278
      %v2780 = vpop.f32.mrf.mxu0
      %v2781 = vadd.f32 %v2612, %v2780
      %v2782 = vpop.f32.mrf.mxu0
      %v2783 = vadd.f32 %v2614, %v2782
      %2784 = vmatmul.bf16.gmra.mxu0 %v2280
      %v2785 = vpop.f32.mrf.mxu0
      %v2786 = vadd.f32 %v2617, %v2785
      %v2787 = vpop.f32.mrf.mxu0
      %v2788 = vadd.f32 %v2619, %v2787
      %2789 = vmatmul.bf16.gmra.mxu0 %v2282
      %v2790 = vpop.f32.mrf.mxu0
      %v2791 = vadd.f32 %v2622, %v2790
      %v2792 = vpop.f32.mrf.mxu0
      %v2793 = vadd.f32 %v2624, %v2792
      %2794 = vmatmul.bf16.gmra.mxu0 %v2284
      %v2795 = vpop.f32.mrf.mxu0
      %v2796 = vadd.f32 %v2627, %v2795
      %v2797 = vpop.f32.mrf.mxu0
      %v2798 = vadd.f32 %v2629, %v2797
      %2799 = vmatmul.bf16.gmra.mxu0 %v2286
      %v2800 = vpop.f32.mrf.mxu0
      %v2801 = vadd.f32 %v2632, %v2800
      %v2802 = vpop.f32.mrf.mxu0
      %v2803 = vadd.f32 %v2634, %v2802
      %2804 = vmatmul.bf16.gmra.mxu0 %v2288
      %v2805 = vpop.f32.mrf.mxu0
      %v2806 = vadd.f32 %v2637, %v2805
      %v2807 = vpop.f32.mrf.mxu0
      %v2808 = vadd.f32 %v2639, %v2807
      %2809 = vmatmul.bf16.gmra.mxu0 %v2290
      %v2810 = vpop.f32.mrf.mxu0
      %v2811 = vadd.f32 %v2642, %v2810
      %v2812 = vpop.f32.mrf.mxu0
      %v2813 = vadd.f32 %v2644, %v2812
      %2814 = vmatmul.bf16.gmra.mxu0 %v2292
      %v2815 = vpop.f32.mrf.mxu0
      %v2816 = vadd.f32 %v2647, %v2815
      %v2817 = vpop.f32.mrf.mxu0
      %v2818 = vadd.f32 %v2649, %v2817
      %2819 = vmatmul.bf16.gmra.mxu0 %v2294
      %v2820 = vpop.f32.mrf.mxu0
      %v2821 = vadd.f32 %v2652, %v2820
      %v2822 = vpop.f32.mrf.mxu0
      %v2823 = vadd.f32 %v2654, %v2822
      %2824 = vmatmul.bf16.gmra.mxu0 %v2296
      %v2825 = vpop.f32.mrf.mxu0
      %v2826 = vadd.f32 %v2657, %v2825
      %v2827 = vpop.f32.mrf.mxu0
      %v2828 = vadd.f32 %v2659, %v2827
      %2829 = vmatmul.bf16.gmra.mxu0 %v2298
      %v2830 = vpop.f32.mrf.mxu0
      %v2831 = vadd.f32 %v2662, %v2830
      %v2832 = vpop.f32.mrf.mxu0
      %v2833 = vadd.f32 %v2664, %v2832
      %2834 = vdwg.mxu0
      %2835 = vmatpush.bf16.msra.mxu0 %v2448
      %2836 = vmatpush.bf16.msra.mxu0 %v2446
      %2837 = vmatpush.bf16.msra.mxu0 %v2444
      %2838 = vmatpush.bf16.msra.mxu0 %v2442
      %2839 = vmatpush.bf16.msra.mxu0 %v2440
      %2840 = vmatpush.bf16.msra.mxu0 %v2438
      %2841 = vmatpush.bf16.msra.mxu0 %v2436
      %2842 = vmatpush.bf16.msra.mxu0 %v2434
      %2843 = vmatmul.bf16.gmra.mxu0 %v2235
      %v2844 = vpop.f32.mrf.mxu0
      %v2845 = vadd.f32 %v2334, %v2844
      %v2846 = vpop.f32.mrf.mxu0
      %v2847 = vadd.f32 %v2334, %v2846
      %2848 = vmatmul.bf16.gmra.mxu0 %v2237
      %v2849 = vpop.f32.mrf.mxu0
      %v2850 = vadd.f32 %v2334, %v2849
      %v2851 = vpop.f32.mrf.mxu0
      %v2852 = vadd.f32 %v2334, %v2851
      %2853 = vmatmul.bf16.gmra.mxu0 %v2239
      %v2854 = vpop.f32.mrf.mxu0
      %v2855 = vadd.f32 %v2334, %v2854
      %v2856 = vpop.f32.mrf.mxu0
      %v2857 = vadd.f32 %v2334, %v2856
      %2858 = vmatmul.bf16.gmra.mxu0 %v2241
      %v2859 = vpop.f32.mrf.mxu0
      %v2860 = vadd.f32 %v2334, %v2859
      %v2861 = vpop.f32.mrf.mxu0
      %v2862 = vadd.f32 %v2334, %v2861
      %2863 = vmatmul.bf16.gmra.mxu0 %v2243
      %v2864 = vpop.f32.mrf.mxu0
      %v2865 = vadd.f32 %v2334, %v2864
      %v2866 = vpop.f32.mrf.mxu0
      %v2867 = vadd.f32 %v2334, %v2866
      %2868 = vmatmul.bf16.gmra.mxu0 %v2245
      %v2869 = vpop.f32.mrf.mxu0
      %v2870 = vadd.f32 %v2334, %v2869
      %v2871 = vpop.f32.mrf.mxu0
      %v2872 = vadd.f32 %v2334, %v2871
      %2873 = vmatmul.bf16.gmra.mxu0 %v2247
      %v2874 = vpop.f32.mrf.mxu0
      %v2875 = vadd.f32 %v2334, %v2874
      %v2876 = vpop.f32.mrf.mxu0
      %v2877 = vadd.f32 %v2334, %v2876
      %2878 = vmatmul.bf16.gmra.mxu0 %v2249
      %v2879 = vpop.f32.mrf.mxu0
      %v2880 = vadd.f32 %v2334, %v2879
      %v2881 = vpop.f32.mrf.mxu0
      %v2882 = vadd.f32 %v2334, %v2881
      %2883 = vmatmul.bf16.gmra.mxu0 %v2251
      %v2884 = vpop.f32.mrf.mxu0
      %v2885 = vadd.f32 %v2334, %v2884
      %v2886 = vpop.f32.mrf.mxu0
      %v2887 = vadd.f32 %v2334, %v2886
      %2888 = vmatmul.bf16.gmra.mxu0 %v2253
      %v2889 = vpop.f32.mrf.mxu0
      %v2890 = vadd.f32 %v2334, %v2889
      %v2891 = vpop.f32.mrf.mxu0
      %v2892 = vadd.f32 %v2334, %v2891
      %2893 = vmatmul.bf16.gmra.mxu0 %v2255
      %v2894 = vpop.f32.mrf.mxu0
      %v2895 = vadd.f32 %v2334, %v2894
      %v2896 = vpop.f32.mrf.mxu0
      %v2897 = vadd.f32 %v2334, %v2896
      %2898 = vmatmul.bf16.gmra.mxu0 %v2257
      %v2899 = vpop.f32.mrf.mxu0
      %v2900 = vadd.f32 %v2334, %v2899
      %v2901 = vpop.f32.mrf.mxu0
      %v2902 = vadd.f32 %v2334, %v2901
      %2903 = vmatmul.bf16.gmra.mxu0 %v2259
      %v2904 = vpop.f32.mrf.mxu0
      %v2905 = vadd.f32 %v2334, %v2904
      %v2906 = vpop.f32.mrf.mxu0
      %v2907 = vadd.f32 %v2334, %v2906
      %2908 = vmatmul.bf16.gmra.mxu0 %v2261
      %v2909 = vpop.f32.mrf.mxu0
      %v2910 = vadd.f32 %v2334, %v2909
      %v2911 = vpop.f32.mrf.mxu0
      %v2912 = vadd.f32 %v2334, %v2911
      %2913 = vmatmul.bf16.gmra.mxu0 %v2263
      %v2914 = vpop.f32.mrf.mxu0
      %v2915 = vadd.f32 %v2334, %v2914
      %v2916 = vpop.f32.mrf.mxu0
      %v2917 = vadd.f32 %v2334, %v2916
      %2918 = vmatmul.bf16.gmra.mxu0 %v2265
      %v2919 = vpop.f32.mrf.mxu0
      %v2920 = vadd.f32 %v2334, %v2919
      %v2921 = vpop.f32.mrf.mxu0
      %v2922 = vadd.f32 %v2334, %v2921
      %2923 = vmatmul.bf16.gmra.mxu0 %v2267
      %v2924 = vpop.f32.mrf.mxu0
      %v2925 = vadd.f32 %v2334, %v2924
      %v2926 = vpop.f32.mrf.mxu0
      %v2927 = vadd.f32 %v2334, %v2926
      %2928 = vmatmul.bf16.gmra.mxu0 %v2269
      %v2929 = vpop.f32.mrf.mxu0
      %v2930 = vadd.f32 %v2334, %v2929
      %v2931 = vpop.f32.mrf.mxu0
      %v2932 = vadd.f32 %v2334, %v2931
      %2933 = vmatmul.bf16.gmra.mxu0 %v2271
      %v2934 = vpop.f32.mrf.mxu0
      %v2935 = vadd.f32 %v2334, %v2934
      %v2936 = vpop.f32.mrf.mxu0
      %v2937 = vadd.f32 %v2334, %v2936
      %2938 = vmatmul.bf16.gmra.mxu0 %v2273
      %v2939 = vpop.f32.mrf.mxu0
      %v2940 = vadd.f32 %v2334, %v2939
      %v2941 = vpop.f32.mrf.mxu0
      %v2942 = vadd.f32 %v2334, %v2941
      %2943 = vmatmul.bf16.gmra.mxu0 %v2275
      %v2944 = vpop.f32.mrf.mxu0
      %v2945 = vadd.f32 %v2334, %v2944
      %v2946 = vpop.f32.mrf.mxu0
      %v2947 = vadd.f32 %v2334, %v2946
      %2948 = vmatmul.bf16.gmra.mxu0 %v2277
      %v2949 = vpop.f32.mrf.mxu0
      %v2950 = vadd.f32 %v2334, %v2949
      %v2951 = vpop.f32.mrf.mxu0
      %v2952 = vadd.f32 %v2334, %v2951
      %2953 = vmatmul.bf16.gmra.mxu0 %v2279
      %v2954 = vpop.f32.mrf.mxu0
      %v2955 = vadd.f32 %v2334, %v2954
      %v2956 = vpop.f32.mrf.mxu0
      %v2957 = vadd.f32 %v2334, %v2956
      %2958 = vmatmul.bf16.gmra.mxu0 %v2281
      %v2959 = vpop.f32.mrf.mxu0
      %v2960 = vadd.f32 %v2334, %v2959
      %v2961 = vpop.f32.mrf.mxu0
      %v2962 = vadd.f32 %v2334, %v2961
      %2963 = vmatmul.bf16.gmra.mxu0 %v2283
      %v2964 = vpop.f32.mrf.mxu0
      %v2965 = vadd.f32 %v2334, %v2964
      %v2966 = vpop.f32.mrf.mxu0
      %v2967 = vadd.f32 %v2334, %v2966
      %2968 = vmatmul.bf16.gmra.mxu0 %v2285
      %v2969 = vpop.f32.mrf.mxu0
      %v2970 = vadd.f32 %v2334, %v2969
      %v2971 = vpop.f32.mrf.mxu0
      %v2972 = vadd.f32 %v2334, %v2971
      %2973 = vmatmul.bf16.gmra.mxu0 %v2287
      %v2974 = vpop.f32.mrf.mxu0
      %v2975 = vadd.f32 %v2334, %v2974
      %v2976 = vpop.f32.mrf.mxu0
      %v2977 = vadd.f32 %v2334, %v2976
      %2978 = vmatmul.bf16.gmra.mxu0 %v2289
      %v2979 = vpop.f32.mrf.mxu0
      %v2980 = vadd.f32 %v2334, %v2979
      %v2981 = vpop.f32.mrf.mxu0
      %v2982 = vadd.f32 %v2334, %v2981
      %2983 = vmatmul.bf16.gmra.mxu0 %v2291
      %v2984 = vpop.f32.mrf.mxu0
      %v2985 = vadd.f32 %v2334, %v2984
      %v2986 = vpop.f32.mrf.mxu0
      %v2987 = vadd.f32 %v2334, %v2986
      %2988 = vmatmul.bf16.gmra.mxu0 %v2293
      %v2989 = vpop.f32.mrf.mxu0
      %v2990 = vadd.f32 %v2334, %v2989
      %v2991 = vpop.f32.mrf.mxu0
      %v2992 = vadd.f32 %v2334, %v2991
      %2993 = vmatmul.bf16.gmra.mxu0 %v2295
      %v2994 = vpop.f32.mrf.mxu0
      %v2995 = vadd.f32 %v2334, %v2994
      %v2996 = vpop.f32.mrf.mxu0
      %v2997 = vadd.f32 %v2334, %v2996
      %2998 = vmatmul.bf16.gmra.mxu0 %v2297
      %v2999 = vpop.f32.mrf.mxu0
      %v3000 = vadd.f32 %v2334, %v2999
      %v3001 = vpop.f32.mrf.mxu0
      %v3002 = vadd.f32 %v2334, %v3001
      %3003 = vdwg.mxu0
      %3004 = vmatpush.bf16.msra.mxu0 %v2464
      %3005 = vmatpush.bf16.msra.mxu0 %v2462
      %3006 = vmatpush.bf16.msra.mxu0 %v2460
      %3007 = vmatpush.bf16.msra.mxu0 %v2458
      %3008 = vmatpush.bf16.msra.mxu0 %v2456
      %3009 = vmatpush.bf16.msra.mxu0 %v2454
      %3010 = vmatpush.bf16.msra.mxu0 %v2452
      %3011 = vmatpush.bf16.msra.mxu0 %v2450
      %3012 = vmatmul.bf16.gmra.mxu0 %v2236
      %v3013 = vpop.f32.mrf.mxu0
      %v3014 = vadd.f32 %v2845, %v3013
      %v3015 = vpop.f32.mrf.mxu0
      %v3016 = vadd.f32 %v2847, %v3015
      %3017 = vmatmul.bf16.gmra.mxu0 %v2238
      %v3018 = vpop.f32.mrf.mxu0
      %v3019 = vadd.f32 %v2850, %v3018
      %v3020 = vpop.f32.mrf.mxu0
      %v3021 = vadd.f32 %v2852, %v3020
      %3022 = vmatmul.bf16.gmra.mxu0 %v2240
      %v3023 = vpop.f32.mrf.mxu0
      %v3024 = vadd.f32 %v2855, %v3023
      %v3025 = vpop.f32.mrf.mxu0
      %v3026 = vadd.f32 %v2857, %v3025
      %3027 = vmatmul.bf16.gmra.mxu0 %v2242
      %v3028 = vpop.f32.mrf.mxu0
      %v3029 = vadd.f32 %v2860, %v3028
      %v3030 = vpop.f32.mrf.mxu0
      %v3031 = vadd.f32 %v2862, %v3030
      %3032 = vmatmul.bf16.gmra.mxu0 %v2244
      %v3033 = vpop.f32.mrf.mxu0
      %v3034 = vadd.f32 %v2865, %v3033
      %v3035 = vpop.f32.mrf.mxu0
      %v3036 = vadd.f32 %v2867, %v3035
      %3037 = vmatmul.bf16.gmra.mxu0 %v2246
      %v3038 = vpop.f32.mrf.mxu0
      %v3039 = vadd.f32 %v2870, %v3038
      %v3040 = vpop.f32.mrf.mxu0
      %v3041 = vadd.f32 %v2872, %v3040
      %3042 = vmatmul.bf16.gmra.mxu0 %v2248
      %v3043 = vpop.f32.mrf.mxu0
      %v3044 = vadd.f32 %v2875, %v3043
      %v3045 = vpop.f32.mrf.mxu0
      %v3046 = vadd.f32 %v2877, %v3045
      %3047 = vmatmul.bf16.gmra.mxu0 %v2250
      %v3048 = vpop.f32.mrf.mxu0
      %v3049 = vadd.f32 %v2880, %v3048
      %v3050 = vpop.f32.mrf.mxu0
      %v3051 = vadd.f32 %v2882, %v3050
      %3052 = vmatmul.bf16.gmra.mxu0 %v2252
      %v3053 = vpop.f32.mrf.mxu0
      %v3054 = vadd.f32 %v2885, %v3053
      %v3055 = vpop.f32.mrf.mxu0
      %v3056 = vadd.f32 %v2887, %v3055
      %3057 = vmatmul.bf16.gmra.mxu0 %v2254
      %v3058 = vpop.f32.mrf.mxu0
      %v3059 = vadd.f32 %v2890, %v3058
      %v3060 = vpop.f32.mrf.mxu0
      %v3061 = vadd.f32 %v2892, %v3060
      %3062 = vmatmul.bf16.gmra.mxu0 %v2256
      %v3063 = vpop.f32.mrf.mxu0
      %v3064 = vadd.f32 %v2895, %v3063
      %v3065 = vpop.f32.mrf.mxu0
      %v3066 = vadd.f32 %v2897, %v3065
      %3067 = vmatmul.bf16.gmra.mxu0 %v2258
      %v3068 = vpop.f32.mrf.mxu0
      %v3069 = vadd.f32 %v2900, %v3068
      %v3070 = vpop.f32.mrf.mxu0
      %v3071 = vadd.f32 %v2902, %v3070
      %3072 = vmatmul.bf16.gmra.mxu0 %v2260
      %v3073 = vpop.f32.mrf.mxu0
      %v3074 = vadd.f32 %v2905, %v3073
      %v3075 = vpop.f32.mrf.mxu0
      %v3076 = vadd.f32 %v2907, %v3075
      %3077 = vmatmul.bf16.gmra.mxu0 %v2262
      %v3078 = vpop.f32.mrf.mxu0
      %v3079 = vadd.f32 %v2910, %v3078
      %v3080 = vpop.f32.mrf.mxu0
      %v3081 = vadd.f32 %v2912, %v3080
      %3082 = vmatmul.bf16.gmra.mxu0 %v2264
      %v3083 = vpop.f32.mrf.mxu0
      %v3084 = vadd.f32 %v2915, %v3083
      %v3085 = vpop.f32.mrf.mxu0
      %v3086 = vadd.f32 %v2917, %v3085
      %3087 = vmatmul.bf16.gmra.mxu0 %v2266
      %v3088 = vpop.f32.mrf.mxu0
      %v3089 = vadd.f32 %v2920, %v3088
      %v3090 = vpop.f32.mrf.mxu0
      %v3091 = vadd.f32 %v2922, %v3090
      %3092 = vmatmul.bf16.gmra.mxu0 %v2268
      %v3093 = vpop.f32.mrf.mxu0
      %v3094 = vadd.f32 %v2925, %v3093
      %v3095 = vpop.f32.mrf.mxu0
      %v3096 = vadd.f32 %v2927, %v3095
      %3097 = vmatmul.bf16.gmra.mxu0 %v2270
      %v3098 = vpop.f32.mrf.mxu0
      %v3099 = vadd.f32 %v2930, %v3098
      %v3100 = vpop.f32.mrf.mxu0
      %v3101 = vadd.f32 %v2932, %v3100
      %3102 = vmatmul.bf16.gmra.mxu0 %v2272
      %v3103 = vpop.f32.mrf.mxu0
      %v3104 = vadd.f32 %v2935, %v3103
      %v3105 = vpop.f32.mrf.mxu0
      %v3106 = vadd.f32 %v2937, %v3105
      %3107 = vmatmul.bf16.gmra.mxu0 %v2274
      %v3108 = vpop.f32.mrf.mxu0
      %v3109 = vadd.f32 %v2940, %v3108
      %v3110 = vpop.f32.mrf.mxu0
      %v3111 = vadd.f32 %v2942, %v3110
      %3112 = vmatmul.bf16.gmra.mxu0 %v2276
      %v3113 = vpop.f32.mrf.mxu0
      %v3114 = vadd.f32 %v2945, %v3113
      %v3115 = vpop.f32.mrf.mxu0
      %v3116 = vadd.f32 %v2947, %v3115
      %3117 = vmatmul.bf16.gmra.mxu0 %v2278
      %v3118 = vpop.f32.mrf.mxu0
      %v3119 = vadd.f32 %v2950, %v3118
      %v3120 = vpop.f32.mrf.mxu0
      %v3121 = vadd.f32 %v2952, %v3120
      %3122 = vmatmul.bf16.gmra.mxu0 %v2280
      %v3123 = vpop.f32.mrf.mxu0
      %v3124 = vadd.f32 %v2955, %v3123
      %v3125 = vpop.f32.mrf.mxu0
      %v3126 = vadd.f32 %v2957, %v3125
      %3127 = vmatmul.bf16.gmra.mxu0 %v2282
      %v3128 = vpop.f32.mrf.mxu0
      %v3129 = vadd.f32 %v2960, %v3128
      %v3130 = vpop.f32.mrf.mxu0
      %v3131 = vadd.f32 %v2962, %v3130
      %3132 = vmatmul.bf16.gmra.mxu0 %v2284
      %v3133 = vpop.f32.mrf.mxu0
      %v3134 = vadd.f32 %v2965, %v3133
      %v3135 = vpop.f32.mrf.mxu0
      %v3136 = vadd.f32 %v2967, %v3135
      %3137 = vmatmul.bf16.gmra.mxu0 %v2286
      %v3138 = vpop.f32.mrf.mxu0
      %v3139 = vadd.f32 %v2970, %v3138
      %v3140 = vpop.f32.mrf.mxu0
      %v3141 = vadd.f32 %v2972, %v3140
      %3142 = vmatmul.bf16.gmra.mxu0 %v2288
      %v3143 = vpop.f32.mrf.mxu0
      %v3144 = vadd.f32 %v2975, %v3143
      %v3145 = vpop.f32.mrf.mxu0
      %v3146 = vadd.f32 %v2977, %v3145
      %3147 = vmatmul.bf16.gmra.mxu0 %v2290
      %v3148 = vpop.f32.mrf.mxu0
      %v3149 = vadd.f32 %v2980, %v3148
      %v3150 = vpop.f32.mrf.mxu0
      %v3151 = vadd.f32 %v2982, %v3150
      %3152 = vmatmul.bf16.gmra.mxu0 %v2292
      %v3153 = vpop.f32.mrf.mxu0
      %v3154 = vadd.f32 %v2985, %v3153
      %v3155 = vpop.f32.mrf.mxu0
      %v3156 = vadd.f32 %v2987, %v3155
      %3157 = vmatmul.bf16.gmra.mxu0 %v2294
      %v3158 = vpop.f32.mrf.mxu0
      %v3159 = vadd.f32 %v2990, %v3158
      %v3160 = vpop.f32.mrf.mxu0
      %v3161 = vadd.f32 %v2992, %v3160
      %3162 = vmatmul.bf16.gmra.mxu0 %v2296
      %v3163 = vpop.f32.mrf.mxu0
      %v3164 = vadd.f32 %v2995, %v3163
      %v3165 = vpop.f32.mrf.mxu0
      %v3166 = vadd.f32 %v2997, %v3165
      %3167 = vmatmul.bf16.gmra.mxu0 %v2298
      %v3168 = vpop.f32.mrf.mxu0
      %v3169 = vadd.f32 %v3000, %v3168
      %v3170 = vpop.f32.mrf.mxu0
      %v3171 = vadd.f32 %v3002, %v3170
      %3172 = vdwg.mxu0
      %v3173 = vmax.f32 %v2676, 0.0
      %v3174 = vmax.f32 %v3014, 0.0
      %v3175 = vmax.f32 %v2678, 0.0
      %v3176 = vmax.f32 %v3016, 0.0
      %v3177 = vmax.f32 %v2681, 0.0
      %v3178 = vmax.f32 %v3019, 0.0
      %v3179 = vmax.f32 %v2683, 0.0
      %v3180 = vmax.f32 %v3021, 0.0
      %v3181 = vmax.f32 %v2686, 0.0
      %v3182 = vmax.f32 %v3024, 0.0
      %v3183 = vmax.f32 %v2688, 0.0
      %v3184 = vmax.f32 %v3026, 0.0
      %v3185 = vmax.f32 %v2691, 0.0
      %v3186 = vmax.f32 %v3029, 0.0
      %v3187 = vmax.f32 %v2693, 0.0
      %v3188 = vmax.f32 %v3031, 0.0
      %v3189 = vmax.f32 %v2696, 0.0
      %v3190 = vmax.f32 %v3034, 0.0
      %v3191 = vmax.f32 %v2698, 0.0
      %v3192 = vmax.f32 %v3036, 0.0
      %v3193 = vmax.f32 %v2701, 0.0
      %v3194 = vmax.f32 %v3039, 0.0
      %v3195 = vmax.f32 %v2703, 0.0
      %v3196 = vmax.f32 %v3041, 0.0
      %v3197 = vmax.f32 %v2706, 0.0
      %v3198 = vmax.f32 %v3044, 0.0
      %v3199 = vmax.f32 %v2708, 0.0
      %v3200 = vmax.f32 %v3046, 0.0
      %v3201 = vmax.f32 %v2711, 0.0
      %v3202 = vmax.f32 %v3049, 0.0
      %v3203 = vmax.f32 %v2713, 0.0
      %v3204 = vmax.f32 %v3051, 0.0
      %v3205 = vmax.f32 %v2716, 0.0
      %v3206 = vmax.f32 %v3054, 0.0
      %v3207 = vmax.f32 %v2718, 0.0
      %v3208 = vmax.f32 %v3056, 0.0
      %v3209 = vmax.f32 %v2721, 0.0
      %v3210 = vmax.f32 %v3059, 0.0
      %v3211 = vmax.f32 %v2723, 0.0
      %v3212 = vmax.f32 %v3061, 0.0
      %v3213 = vmax.f32 %v2726, 0.0
      %v3214 = vmax.f32 %v3064, 0.0
      %v3215 = vmax.f32 %v2728, 0.0
      %v3216 = vmax.f32 %v3066, 0.0
      %v3217 = vmax.f32 %v2731, 0.0
      %v3218 = vmax.f32 %v3069, 0.0
      %v3219 = vmax.f32 %v2733, 0.0
      %v3220 = vmax.f32 %v3071, 0.0
      %v3221 = vmax.f32 %v2736, 0.0
      %v3222 = vmax.f32 %v3074, 0.0
      %v3223 = vmax.f32 %v2738, 0.0
      %v3224 = vmax.f32 %v3076, 0.0
      %v3225 = vmax.f32 %v2741, 0.0
      %v3226 = vmax.f32 %v3079, 0.0
      %v3227 = vmax.f32 %v2743, 0.0
      %v3228 = vmax.f32 %v3081, 0.0
      %v3229 = vmax.f32 %v2746, 0.0
      %v3230 = vmax.f32 %v3084, 0.0
      %v3231 = vmax.f32 %v2748, 0.0
      %v3232 = vmax.f32 %v3086, 0.0
      %v3233 = vmax.f32 %v2751, 0.0
      %v3234 = vmax.f32 %v3089, 0.0
      %v3235 = vmax.f32 %v2753, 0.0
      %v3236 = vmax.f32 %v3091, 0.0
      %v3237 = vmax.f32 %v2756, 0.0
      %v3238 = vmax.f32 %v3094, 0.0
      %v3239 = vmax.f32 %v2758, 0.0
      %v3240 = vmax.f32 %v3096, 0.0
      %v3241 = vmax.f32 %v2761, 0.0
      %v3242 = vmax.f32 %v3099, 0.0
      %v3243 = vmax.f32 %v2763, 0.0
      %v3244 = vmax.f32 %v3101, 0.0
      %v3245 = vmax.f32 %v2766, 0.0
      %v3246 = vmax.f32 %v3104, 0.0
      %v3247 = vmax.f32 %v2768, 0.0
      %v3248 = vmax.f32 %v3106, 0.0
      %v3249 = vmax.f32 %v2771, 0.0
      %v3250 = vmax.f32 %v3109, 0.0
      %v3251 = vmax.f32 %v2773, 0.0
      %v3252 = vmax.f32 %v3111, 0.0
      %v3253 = vmax.f32 %v2776, 0.0
      %v3254 = vmax.f32 %v3114, 0.0
      %v3255 = vmax.f32 %v2778, 0.0
      %v3256 = vmax.f32 %v3116, 0.0
      %v3257 = vmax.f32 %v2781, 0.0
      %v3258 = vmax.f32 %v3119, 0.0
      %v3259 = vmax.f32 %v2783, 0.0
      %v3260 = vmax.f32 %v3121, 0.0
      %v3261 = vmax.f32 %v2786, 0.0
      %v3262 = vmax.f32 %v3124, 0.0
      %v3263 = vmax.f32 %v2788, 0.0
      %v3264 = vmax.f32 %v3126, 0.0
      %v3265 = vmax.f32 %v2791, 0.0
      %v3266 = vmax.f32 %v3129, 0.0
      %v3267 = vmax.f32 %v2793, 0.0
      %v3268 = vmax.f32 %v3131, 0.0
      %v3269 = vmax.f32 %v2796, 0.0
      %v3270 = vmax.f32 %v3134, 0.0
      %v3271 = vmax.f32 %v2798, 0.0
      %v3272 = vmax.f32 %v3136, 0.0
      %v3273 = vmax.f32 %v2801, 0.0
      %v3274 = vmax.f32 %v3139, 0.0
      %v3275 = vmax.f32 %v2803, 0.0
      %v3276 = vmax.f32 %v3141, 0.0
      %v3277 = vmax.f32 %v2806, 0.0
      %v3278 = vmax.f32 %v3144, 0.0
      %v3279 = vmax.f32 %v2808, 0.0
      %v3280 = vmax.f32 %v3146, 0.0
      %v3281 = vmax.f32 %v2811, 0.0
      %v3282 = vmax.f32 %v3149, 0.0
      %v3283 = vmax.f32 %v2813, 0.0
      %v3284 = vmax.f32 %v3151, 0.0
      %v3285 = vmax.f32 %v2816, 0.0
      %v3286 = vmax.f32 %v3154, 0.0
      %v3287 = vmax.f32 %v2818, 0.0
      %v3288 = vmax.f32 %v3156, 0.0
      %v3289 = vmax.f32 %v2821, 0.0
      %v3290 = vmax.f32 %v3159, 0.0
      %v3291 = vmax.f32 %v2823, 0.0
      %v3292 = vmax.f32 %v3161, 0.0
      %v3293 = vmax.f32 %v2826, 0.0
      %v3294 = vmax.f32 %v3164, 0.0
      %v3295 = vmax.f32 %v2828, 0.0
      %v3296 = vmax.f32 %v3166, 0.0
      %v3297 = vmax.f32 %v2831, 0.0
      %v3298 = vmax.f32 %v3169, 0.0
      %v3299 = vmax.f32 %v2833, 0.0
      %v3300 = vmax.f32 %v3171, 0.0
      %v3301 = vpack.c.bf16 %v3175, %v3173
      %v3302 = vpack.c.bf16 %v3176, %v3174
      %v3303 = vpack.c.bf16 %v3179, %v3177
      %v3304 = vpack.c.bf16 %v3180, %v3178
      %v3305 = vpack.c.bf16 %v3183, %v3181
      %v3306 = vpack.c.bf16 %v3184, %v3182
      %v3307 = vpack.c.bf16 %v3187, %v3185
      %v3308 = vpack.c.bf16 %v3188, %v3186
      %v3309 = vpack.c.bf16 %v3191, %v3189
      %v3310 = vpack.c.bf16 %v3192, %v3190
      %v3311 = vpack.c.bf16 %v3195, %v3193
      %v3312 = vpack.c.bf16 %v3196, %v3194
      %v3313 = vpack.c.bf16 %v3199, %v3197
      %v3314 = vpack.c.bf16 %v3200, %v3198
      %v3315 = vpack.c.bf16 %v3203, %v3201
      %v3316 = vpack.c.bf16 %v3204, %v3202
      %v3317 = vpack.c.bf16 %v3207, %v3205
      %v3318 = vpack.c.bf16 %v3208, %v3206
      %v3319 = vpack.c.bf16 %v3211, %v3209
      %v3320 = vpack.c.bf16 %v3212, %v3210
      %v3321 = vpack.c.bf16 %v3215, %v3213
      %v3322 = vpack.c.bf16 %v3216, %v3214
      %v3323 = vpack.c.bf16 %v3219, %v3217
      %v3324 = vpack.c.bf16 %v3220, %v3218
      %v3325 = vpack.c.bf16 %v3223, %v3221
      %v3326 = vpack.c.bf16 %v3224, %v3222
      %v3327 = vpack.c.bf16 %v3227, %v3225
      %v3328 = vpack.c.bf16 %v3228, %v3226
      %v3329 = vpack.c.bf16 %v3231, %v3229
      %v3330 = vpack.c.bf16 %v3232, %v3230
      %v3331 = vpack.c.bf16 %v3235, %v3233
      %v3332 = vpack.c.bf16 %v3236, %v3234
      %v3333 = vpack.c.bf16 %v3239, %v3237
      %v3334 = vpack.c.bf16 %v3240, %v3238
      %v3335 = vpack.c.bf16 %v3243, %v3241
      %v3336 = vpack.c.bf16 %v3244, %v3242
      %v3337 = vpack.c.bf16 %v3247, %v3245
      %v3338 = vpack.c.bf16 %v3248, %v3246
      %v3339 = vpack.c.bf16 %v3251, %v3249
      %v3340 = vpack.c.bf16 %v3252, %v3250
      %v3341 = vpack.c.bf16 %v3255, %v3253
      %v3342 = vpack.c.bf16 %v3256, %v3254
      %v3343 = vpack.c.bf16 %v3259, %v3257
      %v3344 = vpack.c.bf16 %v3260, %v3258
      %v3345 = vpack.c.bf16 %v3263, %v3261
      %v3346 = vpack.c.bf16 %v3264, %v3262
      %v3347 = vpack.c.bf16 %v3267, %v3265
      %v3348 = vpack.c.bf16 %v3268, %v3266
      %v3349 = vpack.c.bf16 %v3271, %v3269
      %v3350 = vpack.c.bf16 %v3272, %v3270
      %v3351 = vpack.c.bf16 %v3275, %v3273
      %v3352 = vpack.c.bf16 %v3276, %v3274
      %v3353 = vpack.c.bf16 %v3279, %v3277
      %v3354 = vpack.c.bf16 %v3280, %v3278
      %v3355 = vpack.c.bf16 %v3283, %v3281
      %v3356 = vpack.c.bf16 %v3284, %v3282
      %v3357 = vpack.c.bf16 %v3287, %v3285
      %v3358 = vpack.c.bf16 %v3288, %v3286
      %v3359 = vpack.c.bf16 %v3291, %v3289
      %v3360 = vpack.c.bf16 %v3292, %v3290
      %v3361 = vpack.c.bf16 %v3295, %v3293
      %v3362 = vpack.c.bf16 %v3296, %v3294
      %v3363 = vpack.c.bf16 %v3299, %v3297
      %v3364 = vpack.c.bf16 %v3300, %v3298
      %v3365 = vld [vmem:[%s5] sm:$0xff]
      %v3366 = vld [vmem:[%s5 + $0x8] sm:$0xff]
      %v3367 = vld [vmem:[%s5 + $0x10] sm:$0xff]
      %v3368 = vld [vmem:[%s5 + $0x18] sm:$0xff]
      %v3369 = vld [vmem:[%s5 + $0x20] sm:$0xff]
      %v3370 = vld [vmem:[%s5 + $0x28] sm:$0xff]
      %v3371 = vld [vmem:[%s5 + $0x30] sm:$0xff]
      %v3372 = vld [vmem:[%s5 + $0x38] sm:$0xff]
      %v3373 = vld [vmem:[%s5 + $0x40] sm:$0xff]
      %v3374 = vld [vmem:[%s5 + $0x48] sm:$0xff]
      %v3375 = vld [vmem:[%s5 + $0x50] sm:$0xff]
      %v3376 = vld [vmem:[%s5 + $0x58] sm:$0xff]
      %v3377 = vld [vmem:[%s5 + $0x60] sm:$0xff]
      %v3378 = vld [vmem:[%s5 + $0x68] sm:$0xff]
      %v3379 = vld [vmem:[%s5 + $0x70] sm:$0xff]
      %v3380 = vld [vmem:[%s5 + $0x78] sm:$0xff]
      %v3381 = vld [vmem:[%s5 + $0x80] sm:$0xff]
      %v3382 = vld [vmem:[%s5 + $0x88] sm:$0xff]
      %v3383 = vld [vmem:[%s5 + $0x90] sm:$0xff]
      %v3384 = vld [vmem:[%s5 + $0x98] sm:$0xff]
      %v3385 = vld [vmem:[%s5 + $0xa0] sm:$0xff]
      %v3386 = vld [vmem:[%s5 + $0xa8] sm:$0xff]
      %v3387 = vld [vmem:[%s5 + $0xb0] sm:$0xff]
      %v3388 = vld [vmem:[%s5 + $0xb8] sm:$0xff]
      %v3389 = vld [vmem:[%s5 + $0xc0] sm:$0xff]
      %v3390 = vld [vmem:[%s5 + $0xc8] sm:$0xff]
      %v3391 = vld [vmem:[%s5 + $0xd0] sm:$0xff]
      %v3392 = vld [vmem:[%s5 + $0xd8] sm:$0xff]
      %v3393 = vld [vmem:[%s5 + $0xe0] sm:$0xff]
      %v3394 = vld [vmem:[%s5 + $0xe8] sm:$0xff]
      %v3395 = vld [vmem:[%s5 + $0xf0] sm:$0xff]
      %v3396 = vld [vmem:[%s5 + $0xf8] sm:$0xff]
      %v3397 = vld [vmem:[%s6] ss:$4 sm:$0x3]
      %v3399 = vperm.slane %v3397, 0
      %v3400 = vperm.slane %v3397, 1
      %v3403 = vmul.f32 %v485, %v3399
      %v3404 = vmul.f32 %v485, %v3400
      %v3405 = vmul.f32 %v490, %v3399
      %v3406 = vmul.f32 %v490, %v3400
      %v3407 = vmul.f32 %v495, %v3399
      %v3408 = vmul.f32 %v495, %v3400
      %v3409 = vmul.f32 %v500, %v3399
      %v3410 = vmul.f32 %v500, %v3400
      %v3411 = vmul.f32 %v505, %v3399
      %v3412 = vmul.f32 %v505, %v3400
      %v3413 = vmul.f32 %v510, %v3399
      %v3414 = vmul.f32 %v510, %v3400
      %v3415 = vmul.f32 %v515, %v3399
      %v3416 = vmul.f32 %v515, %v3400
      %v3417 = vmul.f32 %v520, %v3399
      %v3418 = vmul.f32 %v520, %v3400
      %v3419 = vmul.f32 %v525, %v3399
      %v3420 = vmul.f32 %v525, %v3400
      %v3421 = vmul.f32 %v530, %v3399
      %v3422 = vmul.f32 %v530, %v3400
      %v3423 = vmul.f32 %v535, %v3399
      %v3424 = vmul.f32 %v535, %v3400
      %v3425 = vmul.f32 %v540, %v3399
      %v3426 = vmul.f32 %v540, %v3400
      %v3427 = vmul.f32 %v545, %v3399
      %v3428 = vmul.f32 %v545, %v3400
      %v3429 = vmul.f32 %v550, %v3399
      %v3430 = vmul.f32 %v550, %v3400
      %v3431 = vmul.f32 %v555, %v3399
      %v3432 = vmul.f32 %v555, %v3400
      %v3433 = vmul.f32 %v560, %v3399
      %v3434 = vmul.f32 %v560, %v3400
      %v3435 = vmul.f32 %v565, %v3399
      %v3436 = vmul.f32 %v565, %v3400
      %v3437 = vmul.f32 %v570, %v3399
      %v3438 = vmul.f32 %v570, %v3400
      %v3439 = vmul.f32 %v575, %v3399
      %v3440 = vmul.f32 %v575, %v3400
      %v3441 = vmul.f32 %v580, %v3399
      %v3442 = vmul.f32 %v580, %v3400
      %v3443 = vmul.f32 %v585, %v3399
      %v3444 = vmul.f32 %v585, %v3400
      %v3445 = vmul.f32 %v590, %v3399
      %v3446 = vmul.f32 %v590, %v3400
      %v3447 = vmul.f32 %v595, %v3399
      %v3448 = vmul.f32 %v595, %v3400
      %v3449 = vmul.f32 %v600, %v3399
      %v3450 = vmul.f32 %v600, %v3400
      %v3451 = vmul.f32 %v605, %v3399
      %v3452 = vmul.f32 %v605, %v3400
      %v3453 = vmul.f32 %v610, %v3399
      %v3454 = vmul.f32 %v610, %v3400
      %v3455 = vmul.f32 %v615, %v3399
      %v3456 = vmul.f32 %v615, %v3400
      %v3457 = vmul.f32 %v620, %v3399
      %v3458 = vmul.f32 %v620, %v3400
      %v3459 = vmul.f32 %v625, %v3399
      %v3460 = vmul.f32 %v625, %v3400
      %v3461 = vmul.f32 %v630, %v3399
      %v3462 = vmul.f32 %v630, %v3400
      %v3463 = vmul.f32 %v635, %v3399
      %v3464 = vmul.f32 %v635, %v3400
      %v3465 = vmul.f32 %v640, %v3399
      %v3466 = vmul.f32 %v640, %v3400
      %v3467 = vmul.f32 %v645, %v3399
      %v3468 = vmul.f32 %v645, %v3400
      %v3469 = vmul.f32 %v650, %v3399
      %v3470 = vmul.f32 %v650, %v3400
      %v3471 = vmul.f32 %v655, %v3399
      %v3472 = vmul.f32 %v655, %v3400
      %v3473 = vmul.f32 %v660, %v3399
      %v3474 = vmul.f32 %v660, %v3400
      %v3475 = vmul.f32 %v665, %v3399
      %v3476 = vmul.f32 %v665, %v3400
      %v3477 = vmul.f32 %v670, %v3399
      %v3478 = vmul.f32 %v670, %v3400
      %v3479 = vmul.f32 %v675, %v3399
      %v3480 = vmul.f32 %v675, %v3400
      %v3481 = vmul.f32 %v680, %v3399
      %v3482 = vmul.f32 %v680, %v3400
      %v3483 = vmul.f32 %v685, %v3399
      %v3484 = vmul.f32 %v685, %v3400
      %v3485 = vmul.f32 %v690, %v3399
      %v3486 = vmul.f32 %v690, %v3400
      %v3487 = vmul.f32 %v695, %v3399
      %v3488 = vmul.f32 %v695, %v3400
      %v3489 = vmul.f32 %v700, %v3399
      %v3490 = vmul.f32 %v700, %v3400
      %v3491 = vmul.f32 %v705, %v3399
      %v3492 = vmul.f32 %v705, %v3400
      %v3493 = vmul.f32 %v710, %v3399
      %v3494 = vmul.f32 %v710, %v3400
      %v3495 = vmul.f32 %v715, %v3399
      %v3496 = vmul.f32 %v715, %v3400
      %v3497 = vmul.f32 %v720, %v3399
      %v3498 = vmul.f32 %v720, %v3400
      %v3499 = vmul.f32 %v725, %v3399
      %v3500 = vmul.f32 %v725, %v3400
      %v3501 = vmul.f32 %v730, %v3399
      %v3502 = vmul.f32 %v730, %v3400
      %v3503 = vmul.f32 %v735, %v3399
      %v3504 = vmul.f32 %v735, %v3400
      %v3505 = vmul.f32 %v740, %v3399
      %v3506 = vmul.f32 %v740, %v3400
      %v3507 = vmul.f32 %v745, %v3399
      %v3508 = vmul.f32 %v745, %v3400
      %v3509 = vmul.f32 %v750, %v3399
      %v3510 = vmul.f32 %v750, %v3400
      %v3511 = vmul.f32 %v755, %v3399
      %v3512 = vmul.f32 %v755, %v3400
      %v3513 = vmul.f32 %v760, %v3399
      %v3514 = vmul.f32 %v760, %v3400
      %v3515 = vmul.f32 %v765, %v3399
      %v3516 = vmul.f32 %v765, %v3400
      %v3517 = vmul.f32 %v770, %v3399
      %v3518 = vmul.f32 %v770, %v3400
      %v3519 = vmul.f32 %v775, %v3399
      %v3520 = vmul.f32 %v775, %v3400
      %v3521 = vmul.f32 %v780, %v3399
      %v3522 = vmul.f32 %v780, %v3400
      %v3523 = vmul.f32 %v785, %v3399
      %v3524 = vmul.f32 %v785, %v3400
      %v3525 = vmul.f32 %v790, %v3399
      %v3526 = vmul.f32 %v790, %v3400
      %v3527 = vmul.f32 %v795, %v3399
      %v3528 = vmul.f32 %v795, %v3400
      %v3529 = vmul.f32 %v800, %v3399
      %v3530 = vmul.f32 %v800, %v3400
      %v3563 = vunpack.c.l.b16 %v3365
      %v3564 = vunpack.c.h.b16 %v3365
      %v3565 = vunpack.c.l.b16 %v3366
      %v3566 = vunpack.c.h.b16 %v3366
      %v3567 = vunpack.c.l.b16 %v3367
      %v3568 = vunpack.c.h.b16 %v3367
      %v3569 = vunpack.c.l.b16 %v3368
      %v3570 = vunpack.c.h.b16 %v3368
      %v3571 = vunpack.c.l.b16 %v3369
      %v3572 = vunpack.c.h.b16 %v3369
      %v3573 = vunpack.c.l.b16 %v3370
      %v3574 = vunpack.c.h.b16 %v3370
      %v3575 = vunpack.c.l.b16 %v3371
      %v3576 = vunpack.c.h.b16 %v3371
      %v3577 = vunpack.c.l.b16 %v3372
      %v3578 = vunpack.c.h.b16 %v3372
      %v3579 = vunpack.c.l.b16 %v3373
      %v3580 = vunpack.c.h.b16 %v3373
      %v3581 = vunpack.c.l.b16 %v3374
      %v3582 = vunpack.c.h.b16 %v3374
      %v3583 = vunpack.c.l.b16 %v3375
      %v3584 = vunpack.c.h.b16 %v3375
      %v3585 = vunpack.c.l.b16 %v3376
      %v3586 = vunpack.c.h.b16 %v3376
      %v3587 = vunpack.c.l.b16 %v3377
      %v3588 = vunpack.c.h.b16 %v3377
      %v3589 = vunpack.c.l.b16 %v3378
      %v3590 = vunpack.c.h.b16 %v3378
      %v3591 = vunpack.c.l.b16 %v3379
      %v3592 = vunpack.c.h.b16 %v3379
      %v3593 = vunpack.c.l.b16 %v3380
      %v3594 = vunpack.c.h.b16 %v3380
      %v3595 = vunpack.c.l.b16 %v3381
      %v3596 = vunpack.c.h.b16 %v3381
      %v3597 = vunpack.c.l.b16 %v3382
      %v3598 = vunpack.c.h.b16 %v3382
      %v3599 = vunpack.c.l.b16 %v3383
      %v3600 = vunpack.c.h.b16 %v3383
      %v3601 = vunpack.c.l.b16 %v3384
      %v3602 = vunpack.c.h.b16 %v3384
      %v3603 = vunpack.c.l.b16 %v3385
      %v3604 = vunpack.c.h.b16 %v3385
      %v3605 = vunpack.c.l.b16 %v3386
      %v3606 = vunpack.c.h.b16 %v3386
      %v3607 = vunpack.c.l.b16 %v3387
      %v3608 = vunpack.c.h.b16 %v3387
      %v3609 = vunpack.c.l.b16 %v3388
      %v3610 = vunpack.c.h.b16 %v3388
      %v3611 = vunpack.c.l.b16 %v3389
      %v3612 = vunpack.c.h.b16 %v3389
      %v3613 = vunpack.c.l.b16 %v3390
      %v3614 = vunpack.c.h.b16 %v3390
      %v3615 = vunpack.c.l.b16 %v3391
      %v3616 = vunpack.c.h.b16 %v3391
      %v3617 = vunpack.c.l.b16 %v3392
      %v3618 = vunpack.c.h.b16 %v3392
      %v3619 = vunpack.c.l.b16 %v3393
      %v3620 = vunpack.c.h.b16 %v3393
      %v3621 = vunpack.c.l.b16 %v3394
      %v3622 = vunpack.c.h.b16 %v3394
      %v3623 = vunpack.c.l.b16 %v3395
      %v3624 = vunpack.c.h.b16 %v3395
      %v3625 = vunpack.c.l.b16 %v3396
      %v3626 = vunpack.c.h.b16 %v3396
      %v3627 = vpack.c.b16 %v3565, %v3563
      %v3628 = vpack.c.b16 %v3566, %v3564
      %v3629 = vpack.c.b16 %v3569, %v3567
      %v3630 = vpack.c.b16 %v3570, %v3568
      %v3631 = vpack.c.b16 %v3573, %v3571
      %v3632 = vpack.c.b16 %v3574, %v3572
      %v3633 = vpack.c.b16 %v3577, %v3575
      %v3634 = vpack.c.b16 %v3578, %v3576
      %v3635 = vpack.c.b16 %v3581, %v3579
      %v3636 = vpack.c.b16 %v3582, %v3580
      %v3637 = vpack.c.b16 %v3585, %v3583
      %v3638 = vpack.c.b16 %v3586, %v3584
      %v3639 = vpack.c.b16 %v3589, %v3587
      %v3640 = vpack.c.b16 %v3590, %v3588
      %v3641 = vpack.c.b16 %v3593, %v3591
      %v3642 = vpack.c.b16 %v3594, %v3592
      %v3643 = vpack.c.b16 %v3597, %v3595
      %v3644 = vpack.c.b16 %v3598, %v3596
      %v3645 = vpack.c.b16 %v3601, %v3599
      %v3646 = vpack.c.b16 %v3602, %v3600
      %v3647 = vpack.c.b16 %v3605, %v3603
      %v3648 = vpack.c.b16 %v3606, %v3604
      %v3649 = vpack.c.b16 %v3609, %v3607
      %v3650 = vpack.c.b16 %v3610, %v3608
      %v3651 = vpack.c.b16 %v3613, %v3611
      %v3652 = vpack.c.b16 %v3614, %v3612
      %v3653 = vpack.c.b16 %v3617, %v3615
      %v3654 = vpack.c.b16 %v3618, %v3616
      %v3655 = vpack.c.b16 %v3621, %v3619
      %v3656 = vpack.c.b16 %v3622, %v3620
      %v3657 = vpack.c.b16 %v3625, %v3623
      %v3658 = vpack.c.b16 %v3626, %v3624
      %3691 = vmatpush.bf16.msra.mxu0 %v3641
      %3692 = vmatpush.bf16.msra.mxu0 %v3639
      %3693 = vmatpush.bf16.msra.mxu0 %v3637
      %3694 = vmatpush.bf16.msra.mxu0 %v3635
      %3695 = vmatpush.bf16.msra.mxu0 %v3633
      %3696 = vmatpush.bf16.msra.mxu0 %v3631
      %3697 = vmatpush.bf16.msra.mxu0 %v3629
      %3698 = vmatpush.bf16.msra.mxu0 %v3627
      %3699 = vmatmul.bf16.gmra.mxu0 %v3301
      %v3700 = vpop.f32.mrf.mxu0
      %v3701 = vadd.f32 %v3403, %v3700
      %v3702 = vpop.f32.mrf.mxu0
      %v3703 = vadd.f32 %v3405, %v3702
      %3704 = vmatmul.bf16.gmra.mxu0 %v3303
      %v3705 = vpop.f32.mrf.mxu0
      %v3706 = vadd.f32 %v3407, %v3705
      %v3707 = vpop.f32.mrf.mxu0
      %v3708 = vadd.f32 %v3409, %v3707
      %3709 = vmatmul.bf16.gmra.mxu0 %v3305
      %v3710 = vpop.f32.mrf.mxu0
      %v3711 = vadd.f32 %v3411, %v3710
      %v3712 = vpop.f32.mrf.mxu0
      %v3713 = vadd.f32 %v3413, %v3712
      %3714 = vmatmul.bf16.gmra.mxu0 %v3307
      %v3715 = vpop.f32.mrf.mxu0
      %v3716 = vadd.f32 %v3415, %v3715
      %v3717 = vpop.f32.mrf.mxu0
      %v3718 = vadd.f32 %v3417, %v3717
      %3719 = vmatmul.bf16.gmra.mxu0 %v3309
      %v3720 = vpop.f32.mrf.mxu0
      %v3721 = vadd.f32 %v3419, %v3720
      %v3722 = vpop.f32.mrf.mxu0
      %v3723 = vadd.f32 %v3421, %v3722
      %3724 = vmatmul.bf16.gmra.mxu0 %v3311
      %v3725 = vpop.f32.mrf.mxu0
      %v3726 = vadd.f32 %v3423, %v3725
      %v3727 = vpop.f32.mrf.mxu0
      %v3728 = vadd.f32 %v3425, %v3727
      %3729 = vmatmul.bf16.gmra.mxu0 %v3313
      %v3730 = vpop.f32.mrf.mxu0
      %v3731 = vadd.f32 %v3427, %v3730
      %v3732 = vpop.f32.mrf.mxu0
      %v3733 = vadd.f32 %v3429, %v3732
      %3734 = vmatmul.bf16.gmra.mxu0 %v3315
      %v3735 = vpop.f32.mrf.mxu0
      %v3736 = vadd.f32 %v3431, %v3735
      %v3737 = vpop.f32.mrf.mxu0
      %v3738 = vadd.f32 %v3433, %v3737
      %3739 = vmatmul.bf16.gmra.mxu0 %v3317
      %v3740 = vpop.f32.mrf.mxu0
      %v3741 = vadd.f32 %v3435, %v3740
      %v3742 = vpop.f32.mrf.mxu0
      %v3743 = vadd.f32 %v3437, %v3742
      %3744 = vmatmul.bf16.gmra.mxu0 %v3319
      %v3745 = vpop.f32.mrf.mxu0
      %v3746 = vadd.f32 %v3439, %v3745
      %v3747 = vpop.f32.mrf.mxu0
      %v3748 = vadd.f32 %v3441, %v3747
      %3749 = vmatmul.bf16.gmra.mxu0 %v3321
      %v3750 = vpop.f32.mrf.mxu0
      %v3751 = vadd.f32 %v3443, %v3750
      %v3752 = vpop.f32.mrf.mxu0
      %v3753 = vadd.f32 %v3445, %v3752
      %3754 = vmatmul.bf16.gmra.mxu0 %v3323
      %v3755 = vpop.f32.mrf.mxu0
      %v3756 = vadd.f32 %v3447, %v3755
      %v3757 = vpop.f32.mrf.mxu0
      %v3758 = vadd.f32 %v3449, %v3757
      %3759 = vmatmul.bf16.gmra.mxu0 %v3325
      %v3760 = vpop.f32.mrf.mxu0
      %v3761 = vadd.f32 %v3451, %v3760
      %v3762 = vpop.f32.mrf.mxu0
      %v3763 = vadd.f32 %v3453, %v3762
      %3764 = vmatmul.bf16.gmra.mxu0 %v3327
      %v3765 = vpop.f32.mrf.mxu0
      %v3766 = vadd.f32 %v3455, %v3765
      %v3767 = vpop.f32.mrf.mxu0
      %v3768 = vadd.f32 %v3457, %v3767
      %3769 = vmatmul.bf16.gmra.mxu0 %v3329
      %v3770 = vpop.f32.mrf.mxu0
      %v3771 = vadd.f32 %v3459, %v3770
      %v3772 = vpop.f32.mrf.mxu0
      %v3773 = vadd.f32 %v3461, %v3772
      %3774 = vmatmul.bf16.gmra.mxu0 %v3331
      %v3775 = vpop.f32.mrf.mxu0
      %v3776 = vadd.f32 %v3463, %v3775
      %v3777 = vpop.f32.mrf.mxu0
      %v3778 = vadd.f32 %v3465, %v3777
      %3779 = vmatmul.bf16.gmra.mxu0 %v3333
      %v3780 = vpop.f32.mrf.mxu0
      %v3781 = vadd.f32 %v3467, %v3780
      %v3782 = vpop.f32.mrf.mxu0
      %v3783 = vadd.f32 %v3469, %v3782
      %3784 = vmatmul.bf16.gmra.mxu0 %v3335
      %v3785 = vpop.f32.mrf.mxu0
      %v3786 = vadd.f32 %v3471, %v3785
      %v3787 = vpop.f32.mrf.mxu0
      %v3788 = vadd.f32 %v3473, %v3787
      %3789 = vmatmul.bf16.gmra.mxu0 %v3337
      %v3790 = vpop.f32.mrf.mxu0
      %v3791 = vadd.f32 %v3475, %v3790
      %v3792 = vpop.f32.mrf.mxu0
      %v3793 = vadd.f32 %v3477, %v3792
      %3794 = vmatmul.bf16.gmra.mxu0 %v3339
      %v3795 = vpop.f32.mrf.mxu0
      %v3796 = vadd.f32 %v3479, %v3795
      %v3797 = vpop.f32.mrf.mxu0
      %v3798 = vadd.f32 %v3481, %v3797
      %3799 = vmatmul.bf16.gmra.mxu0 %v3341
      %v3800 = vpop.f32.mrf.mxu0
      %v3801 = vadd.f32 %v3483, %v3800
      %v3802 = vpop.f32.mrf.mxu0
      %v3803 = vadd.f32 %v3485, %v3802
      %3804 = vmatmul.bf16.gmra.mxu0 %v3343
      %v3805 = vpop.f32.mrf.mxu0
      %v3806 = vadd.f32 %v3487, %v3805
      %v3807 = vpop.f32.mrf.mxu0
      %v3808 = vadd.f32 %v3489, %v3807
      %3809 = vmatmul.bf16.gmra.mxu0 %v3345
      %v3810 = vpop.f32.mrf.mxu0
      %v3811 = vadd.f32 %v3491, %v3810
      %v3812 = vpop.f32.mrf.mxu0
      %v3813 = vadd.f32 %v3493, %v3812
      %3814 = vmatmul.bf16.gmra.mxu0 %v3347
      %v3815 = vpop.f32.mrf.mxu0
      %v3816 = vadd.f32 %v3495, %v3815
      %v3817 = vpop.f32.mrf.mxu0
      %v3818 = vadd.f32 %v3497, %v3817
      %3819 = vmatmul.bf16.gmra.mxu0 %v3349
      %v3820 = vpop.f32.mrf.mxu0
      %v3821 = vadd.f32 %v3499, %v3820
      %v3822 = vpop.f32.mrf.mxu0
      %v3823 = vadd.f32 %v3501, %v3822
      %3824 = vmatmul.bf16.gmra.mxu0 %v3351
      %v3825 = vpop.f32.mrf.mxu0
      %v3826 = vadd.f32 %v3503, %v3825
      %v3827 = vpop.f32.mrf.mxu0
      %v3828 = vadd.f32 %v3505, %v3827
      %3829 = vmatmul.bf16.gmra.mxu0 %v3353
      %v3830 = vpop.f32.mrf.mxu0
      %v3831 = vadd.f32 %v3507, %v3830
      %v3832 = vpop.f32.mrf.mxu0
      %v3833 = vadd.f32 %v3509, %v3832
      %3834 = vmatmul.bf16.gmra.mxu0 %v3355
      %v3835 = vpop.f32.mrf.mxu0
      %v3836 = vadd.f32 %v3511, %v3835
      %v3837 = vpop.f32.mrf.mxu0
      %v3838 = vadd.f32 %v3513, %v3837
      %3839 = vmatmul.bf16.gmra.mxu0 %v3357
      %v3840 = vpop.f32.mrf.mxu0
      %v3841 = vadd.f32 %v3515, %v3840
      %v3842 = vpop.f32.mrf.mxu0
      %v3843 = vadd.f32 %v3517, %v3842
      %3844 = vmatmul.bf16.gmra.mxu0 %v3359
      %v3845 = vpop.f32.mrf.mxu0
      %v3846 = vadd.f32 %v3519, %v3845
      %v3847 = vpop.f32.mrf.mxu0
      %v3848 = vadd.f32 %v3521, %v3847
      %3849 = vmatmul.bf16.gmra.mxu0 %v3361
      %v3850 = vpop.f32.mrf.mxu0
      %v3851 = vadd.f32 %v3523, %v3850
      %v3852 = vpop.f32.mrf.mxu0
      %v3853 = vadd.f32 %v3525, %v3852
      %3854 = vmatmul.bf16.gmra.mxu0 %v3363
      %v3855 = vpop.f32.mrf.mxu0
      %v3856 = vadd.f32 %v3527, %v3855
      %v3857 = vpop.f32.mrf.mxu0
      %v3858 = vadd.f32 %v3529, %v3857
      %3859 = vdwg.mxu0
      %3860 = vmatpush.bf16.msra.mxu0 %v3657
      %3861 = vmatpush.bf16.msra.mxu0 %v3655
      %3862 = vmatpush.bf16.msra.mxu0 %v3653
      %3863 = vmatpush.bf16.msra.mxu0 %v3651
      %3864 = vmatpush.bf16.msra.mxu0 %v3649
      %3865 = vmatpush.bf16.msra.mxu0 %v3647
      %3866 = vmatpush.bf16.msra.mxu0 %v3645
      %3867 = vmatpush.bf16.msra.mxu0 %v3643
      %3868 = vmatmul.bf16.gmra.mxu0 %v3302
      %v3869 = vpop.f32.mrf.mxu0
      %v3870 = vadd.f32 %v3701, %v3869
      %v3871 = vpop.f32.mrf.mxu0
      %v3872 = vadd.f32 %v3703, %v3871
      %3873 = vmatmul.bf16.gmra.mxu0 %v3304
      %v3874 = vpop.f32.mrf.mxu0
      %v3875 = vadd.f32 %v3706, %v3874
      %v3876 = vpop.f32.mrf.mxu0
      %v3877 = vadd.f32 %v3708, %v3876
      %3878 = vmatmul.bf16.gmra.mxu0 %v3306
      %v3879 = vpop.f32.mrf.mxu0
      %v3880 = vadd.f32 %v3711, %v3879
      %v3881 = vpop.f32.mrf.mxu0
      %v3882 = vadd.f32 %v3713, %v3881
      %3883 = vmatmul.bf16.gmra.mxu0 %v3308
      %v3884 = vpop.f32.mrf.mxu0
      %v3885 = vadd.f32 %v3716, %v3884
      %v3886 = vpop.f32.mrf.mxu0
      %v3887 = vadd.f32 %v3718, %v3886
      %3888 = vmatmul.bf16.gmra.mxu0 %v3310
      %v3889 = vpop.f32.mrf.mxu0
      %v3890 = vadd.f32 %v3721, %v3889
      %v3891 = vpop.f32.mrf.mxu0
      %v3892 = vadd.f32 %v3723, %v3891
      %3893 = vmatmul.bf16.gmra.mxu0 %v3312
      %v3894 = vpop.f32.mrf.mxu0
      %v3895 = vadd.f32 %v3726, %v3894
      %v3896 = vpop.f32.mrf.mxu0
      %v3897 = vadd.f32 %v3728, %v3896
      %3898 = vmatmul.bf16.gmra.mxu0 %v3314
      %v3899 = vpop.f32.mrf.mxu0
      %v3900 = vadd.f32 %v3731, %v3899
      %v3901 = vpop.f32.mrf.mxu0
      %v3902 = vadd.f32 %v3733, %v3901
      %3903 = vmatmul.bf16.gmra.mxu0 %v3316
      %v3904 = vpop.f32.mrf.mxu0
      %v3905 = vadd.f32 %v3736, %v3904
      %v3906 = vpop.f32.mrf.mxu0
      %v3907 = vadd.f32 %v3738, %v3906
      %3908 = vmatmul.bf16.gmra.mxu0 %v3318
      %v3909 = vpop.f32.mrf.mxu0
      %v3910 = vadd.f32 %v3741, %v3909
      %v3911 = vpop.f32.mrf.mxu0
      %v3912 = vadd.f32 %v3743, %v3911
      %3913 = vmatmul.bf16.gmra.mxu0 %v3320
      %v3914 = vpop.f32.mrf.mxu0
      %v3915 = vadd.f32 %v3746, %v3914
      %v3916 = vpop.f32.mrf.mxu0
      %v3917 = vadd.f32 %v3748, %v3916
      %3918 = vmatmul.bf16.gmra.mxu0 %v3322
      %v3919 = vpop.f32.mrf.mxu0
      %v3920 = vadd.f32 %v3751, %v3919
      %v3921 = vpop.f32.mrf.mxu0
      %v3922 = vadd.f32 %v3753, %v3921
      %3923 = vmatmul.bf16.gmra.mxu0 %v3324
      %v3924 = vpop.f32.mrf.mxu0
      %v3925 = vadd.f32 %v3756, %v3924
      %v3926 = vpop.f32.mrf.mxu0
      %v3927 = vadd.f32 %v3758, %v3926
      %3928 = vmatmul.bf16.gmra.mxu0 %v3326
      %v3929 = vpop.f32.mrf.mxu0
      %v3930 = vadd.f32 %v3761, %v3929
      %v3931 = vpop.f32.mrf.mxu0
      %v3932 = vadd.f32 %v3763, %v3931
      %3933 = vmatmul.bf16.gmra.mxu0 %v3328
      %v3934 = vpop.f32.mrf.mxu0
      %v3935 = vadd.f32 %v3766, %v3934
      %v3936 = vpop.f32.mrf.mxu0
      %v3937 = vadd.f32 %v3768, %v3936
      %3938 = vmatmul.bf16.gmra.mxu0 %v3330
      %v3939 = vpop.f32.mrf.mxu0
      %v3940 = vadd.f32 %v3771, %v3939
      %v3941 = vpop.f32.mrf.mxu0
      %v3942 = vadd.f32 %v3773, %v3941
      %3943 = vmatmul.bf16.gmra.mxu0 %v3332
      %v3944 = vpop.f32.mrf.mxu0
      %v3945 = vadd.f32 %v3776, %v3944
      %v3946 = vpop.f32.mrf.mxu0
      %v3947 = vadd.f32 %v3778, %v3946
      %3948 = vmatmul.bf16.gmra.mxu0 %v3334
      %v3949 = vpop.f32.mrf.mxu0
      %v3950 = vadd.f32 %v3781, %v3949
      %v3951 = vpop.f32.mrf.mxu0
      %v3952 = vadd.f32 %v3783, %v3951
      %3953 = vmatmul.bf16.gmra.mxu0 %v3336
      %v3954 = vpop.f32.mrf.mxu0
      %v3955 = vadd.f32 %v3786, %v3954
      %v3956 = vpop.f32.mrf.mxu0
      %v3957 = vadd.f32 %v3788, %v3956
      %3958 = vmatmul.bf16.gmra.mxu0 %v3338
      %v3959 = vpop.f32.mrf.mxu0
      %v3960 = vadd.f32 %v3791, %v3959
      %v3961 = vpop.f32.mrf.mxu0
      %v3962 = vadd.f32 %v3793, %v3961
      %3963 = vmatmul.bf16.gmra.mxu0 %v3340
      %v3964 = vpop.f32.mrf.mxu0
      %v3965 = vadd.f32 %v3796, %v3964
      %v3966 = vpop.f32.mrf.mxu0
      %v3967 = vadd.f32 %v3798, %v3966
      %3968 = vmatmul.bf16.gmra.mxu0 %v3342
      %v3969 = vpop.f32.mrf.mxu0
      %v3970 = vadd.f32 %v3801, %v3969
      %v3971 = vpop.f32.mrf.mxu0
      %v3972 = vadd.f32 %v3803, %v3971
      %3973 = vmatmul.bf16.gmra.mxu0 %v3344
      %v3974 = vpop.f32.mrf.mxu0
      %v3975 = vadd.f32 %v3806, %v3974
      %v3976 = vpop.f32.mrf.mxu0
      %v3977 = vadd.f32 %v3808, %v3976
      %3978 = vmatmul.bf16.gmra.mxu0 %v3346
      %v3979 = vpop.f32.mrf.mxu0
      %v3980 = vadd.f32 %v3811, %v3979
      %v3981 = vpop.f32.mrf.mxu0
      %v3982 = vadd.f32 %v3813, %v3981
      %3983 = vmatmul.bf16.gmra.mxu0 %v3348
      %v3984 = vpop.f32.mrf.mxu0
      %v3985 = vadd.f32 %v3816, %v3984
      %v3986 = vpop.f32.mrf.mxu0
      %v3987 = vadd.f32 %v3818, %v3986
      %3988 = vmatmul.bf16.gmra.mxu0 %v3350
      %v3989 = vpop.f32.mrf.mxu0
      %v3990 = vadd.f32 %v3821, %v3989
      %v3991 = vpop.f32.mrf.mxu0
      %v3992 = vadd.f32 %v3823, %v3991
      %3993 = vmatmul.bf16.gmra.mxu0 %v3352
      %v3994 = vpop.f32.mrf.mxu0
      %v3995 = vadd.f32 %v3826, %v3994
      %v3996 = vpop.f32.mrf.mxu0
      %v3997 = vadd.f32 %v3828, %v3996
      %3998 = vmatmul.bf16.gmra.mxu0 %v3354
      %v3999 = vpop.f32.mrf.mxu0
      %v4000 = vadd.f32 %v3831, %v3999
      %v4001 = vpop.f32.mrf.mxu0
      %v4002 = vadd.f32 %v3833, %v4001
      %4003 = vmatmul.bf16.gmra.mxu0 %v3356
      %v4004 = vpop.f32.mrf.mxu0
      %v4005 = vadd.f32 %v3836, %v4004
      %v4006 = vpop.f32.mrf.mxu0
      %v4007 = vadd.f32 %v3838, %v4006
      %4008 = vmatmul.bf16.gmra.mxu0 %v3358
      %v4009 = vpop.f32.mrf.mxu0
      %v4010 = vadd.f32 %v3841, %v4009
      %v4011 = vpop.f32.mrf.mxu0
      %v4012 = vadd.f32 %v3843, %v4011
      %4013 = vmatmul.bf16.gmra.mxu0 %v3360
      %v4014 = vpop.f32.mrf.mxu0
      %v4015 = vadd.f32 %v3846, %v4014
      %v4016 = vpop.f32.mrf.mxu0
      %v4017 = vadd.f32 %v3848, %v4016
      %4018 = vmatmul.bf16.gmra.mxu0 %v3362
      %v4019 = vpop.f32.mrf.mxu0
      %v4020 = vadd.f32 %v3851, %v4019
      %v4021 = vpop.f32.mrf.mxu0
      %v4022 = vadd.f32 %v3853, %v4021
      %4023 = vmatmul.bf16.gmra.mxu0 %v3364
      %v4024 = vpop.f32.mrf.mxu0
      %v4025 = vadd.f32 %v3856, %v4024
      %v4026 = vpop.f32.mrf.mxu0
      %v4027 = vadd.f32 %v3858, %v4026
      %4028 = vdwg.mxu0
      %4029 = vmatpush.bf16.msra.mxu0 %v3642
      %4030 = vmatpush.bf16.msra.mxu0 %v3640
      %4031 = vmatpush.bf16.msra.mxu0 %v3638
      %4032 = vmatpush.bf16.msra.mxu0 %v3636
      %4033 = vmatpush.bf16.msra.mxu0 %v3634
      %4034 = vmatpush.bf16.msra.mxu0 %v3632
      %4035 = vmatpush.bf16.msra.mxu0 %v3630
      %4036 = vmatpush.bf16.msra.mxu0 %v3628
      %4037 = vmatmul.bf16.gmra.mxu0 %v3301
      %v4038 = vpop.f32.mrf.mxu0
      %v4039 = vadd.f32 %v3404, %v4038
      %v4040 = vpop.f32.mrf.mxu0
      %v4041 = vadd.f32 %v3406, %v4040
      %4042 = vmatmul.bf16.gmra.mxu0 %v3303
      %v4043 = vpop.f32.mrf.mxu0
      %v4044 = vadd.f32 %v3408, %v4043
      %v4045 = vpop.f32.mrf.mxu0
      %v4046 = vadd.f32 %v3410, %v4045
      %4047 = vmatmul.bf16.gmra.mxu0 %v3305
      %v4048 = vpop.f32.mrf.mxu0
      %v4049 = vadd.f32 %v3412, %v4048
      %v4050 = vpop.f32.mrf.mxu0
      %v4051 = vadd.f32 %v3414, %v4050
      %4052 = vmatmul.bf16.gmra.mxu0 %v3307
      %v4053 = vpop.f32.mrf.mxu0
      %v4054 = vadd.f32 %v3416, %v4053
      %v4055 = vpop.f32.mrf.mxu0
      %v4056 = vadd.f32 %v3418, %v4055
      %4057 = vmatmul.bf16.gmra.mxu0 %v3309
      %v4058 = vpop.f32.mrf.mxu0
      %v4059 = vadd.f32 %v3420, %v4058
      %v4060 = vpop.f32.mrf.mxu0
      %v4061 = vadd.f32 %v3422, %v4060
      %4062 = vmatmul.bf16.gmra.mxu0 %v3311
      %v4063 = vpop.f32.mrf.mxu0
      %v4064 = vadd.f32 %v3424, %v4063
      %v4065 = vpop.f32.mrf.mxu0
      %v4066 = vadd.f32 %v3426, %v4065
      %4067 = vmatmul.bf16.gmra.mxu0 %v3313
      %v4068 = vpop.f32.mrf.mxu0
      %v4069 = vadd.f32 %v3428, %v4068
      %v4070 = vpop.f32.mrf.mxu0
      %v4071 = vadd.f32 %v3430, %v4070
      %4072 = vmatmul.bf16.gmra.mxu0 %v3315
      %v4073 = vpop.f32.mrf.mxu0
      %v4074 = vadd.f32 %v3432, %v4073
      %v4075 = vpop.f32.mrf.mxu0
      %v4076 = vadd.f32 %v3434, %v4075
      %4077 = vmatmul.bf16.gmra.mxu0 %v3317
      %v4078 = vpop.f32.mrf.mxu0
      %v4079 = vadd.f32 %v3436, %v4078
      %v4080 = vpop.f32.mrf.mxu0
      %v4081 = vadd.f32 %v3438, %v4080
      %4082 = vmatmul.bf16.gmra.mxu0 %v3319
      %v4083 = vpop.f32.mrf.mxu0
      %v4084 = vadd.f32 %v3440, %v4083
      %v4085 = vpop.f32.mrf.mxu0
      %v4086 = vadd.f32 %v3442, %v4085
      %4087 = vmatmul.bf16.gmra.mxu0 %v3321
      %v4088 = vpop.f32.mrf.mxu0
      %v4089 = vadd.f32 %v3444, %v4088
      %v4090 = vpop.f32.mrf.mxu0
      %v4091 = vadd.f32 %v3446, %v4090
      %4092 = vmatmul.bf16.gmra.mxu0 %v3323
      %v4093 = vpop.f32.mrf.mxu0
      %v4094 = vadd.f32 %v3448, %v4093
      %v4095 = vpop.f32.mrf.mxu0
      %v4096 = vadd.f32 %v3450, %v4095
      %4097 = vmatmul.bf16.gmra.mxu0 %v3325
      %v4098 = vpop.f32.mrf.mxu0
      %v4099 = vadd.f32 %v3452, %v4098
      %v4100 = vpop.f32.mrf.mxu0
      %v4101 = vadd.f32 %v3454, %v4100
      %4102 = vmatmul.bf16.gmra.mxu0 %v3327
      %v4103 = vpop.f32.mrf.mxu0
      %v4104 = vadd.f32 %v3456, %v4103
      %v4105 = vpop.f32.mrf.mxu0
      %v4106 = vadd.f32 %v3458, %v4105
      %4107 = vmatmul.bf16.gmra.mxu0 %v3329
      %v4108 = vpop.f32.mrf.mxu0
      %v4109 = vadd.f32 %v3460, %v4108
      %v4110 = vpop.f32.mrf.mxu0
      %v4111 = vadd.f32 %v3462, %v4110
      %4112 = vmatmul.bf16.gmra.mxu0 %v3331
      %v4113 = vpop.f32.mrf.mxu0
      %v4114 = vadd.f32 %v3464, %v4113
      %v4115 = vpop.f32.mrf.mxu0
      %v4116 = vadd.f32 %v3466, %v4115
      %4117 = vmatmul.bf16.gmra.mxu0 %v3333
      %v4118 = vpop.f32.mrf.mxu0
      %v4119 = vadd.f32 %v3468, %v4118
      %v4120 = vpop.f32.mrf.mxu0
      %v4121 = vadd.f32 %v3470, %v4120
      %4122 = vmatmul.bf16.gmra.mxu0 %v3335
      %v4123 = vpop.f32.mrf.mxu0
      %v4124 = vadd.f32 %v3472, %v4123
      %v4125 = vpop.f32.mrf.mxu0
      %v4126 = vadd.f32 %v3474, %v4125
      %4127 = vmatmul.bf16.gmra.mxu0 %v3337
      %v4128 = vpop.f32.mrf.mxu0
      %v4129 = vadd.f32 %v3476, %v4128
      %v4130 = vpop.f32.mrf.mxu0
      %v4131 = vadd.f32 %v3478, %v4130
      %4132 = vmatmul.bf16.gmra.mxu0 %v3339
      %v4133 = vpop.f32.mrf.mxu0
      %v4134 = vadd.f32 %v3480, %v4133
      %v4135 = vpop.f32.mrf.mxu0
      %v4136 = vadd.f32 %v3482, %v4135
      %4137 = vmatmul.bf16.gmra.mxu0 %v3341
      %v4138 = vpop.f32.mrf.mxu0
      %v4139 = vadd.f32 %v3484, %v4138
      %v4140 = vpop.f32.mrf.mxu0
      %v4141 = vadd.f32 %v3486, %v4140
      %4142 = vmatmul.bf16.gmra.mxu0 %v3343
      %v4143 = vpop.f32.mrf.mxu0
      %v4144 = vadd.f32 %v3488, %v4143
      %v4145 = vpop.f32.mrf.mxu0
      %v4146 = vadd.f32 %v3490, %v4145
      %4147 = vmatmul.bf16.gmra.mxu0 %v3345
      %v4148 = vpop.f32.mrf.mxu0
      %v4149 = vadd.f32 %v3492, %v4148
      %v4150 = vpop.f32.mrf.mxu0
      %v4151 = vadd.f32 %v3494, %v4150
      %4152 = vmatmul.bf16.gmra.mxu0 %v3347
      %v4153 = vpop.f32.mrf.mxu0
      %v4154 = vadd.f32 %v3496, %v4153
      %v4155 = vpop.f32.mrf.mxu0
      %v4156 = vadd.f32 %v3498, %v4155
      %4157 = vmatmul.bf16.gmra.mxu0 %v3349
      %v4158 = vpop.f32.mrf.mxu0
      %v4159 = vadd.f32 %v3500, %v4158
      %v4160 = vpop.f32.mrf.mxu0
      %v4161 = vadd.f32 %v3502, %v4160
      %4162 = vmatmul.bf16.gmra.mxu0 %v3351
      %v4163 = vpop.f32.mrf.mxu0
      %v4164 = vadd.f32 %v3504, %v4163
      %v4165 = vpop.f32.mrf.mxu0
      %v4166 = vadd.f32 %v3506, %v4165
      %4167 = vmatmul.bf16.gmra.mxu0 %v3353
      %v4168 = vpop.f32.mrf.mxu0
      %v4169 = vadd.f32 %v3508, %v4168
      %v4170 = vpop.f32.mrf.mxu0
      %v4171 = vadd.f32 %v3510, %v4170
      %4172 = vmatmul.bf16.gmra.mxu0 %v3355
      %v4173 = vpop.f32.mrf.mxu0
      %v4174 = vadd.f32 %v3512, %v4173
      %v4175 = vpop.f32.mrf.mxu0
      %v4176 = vadd.f32 %v3514, %v4175
      %4177 = vmatmul.bf16.gmra.mxu0 %v3357
      %v4178 = vpop.f32.mrf.mxu0
      %v4179 = vadd.f32 %v3516, %v4178
      %v4180 = vpop.f32.mrf.mxu0
      %v4181 = vadd.f32 %v3518, %v4180
      %4182 = vmatmul.bf16.gmra.mxu0 %v3359
      %v4183 = vpop.f32.mrf.mxu0
      %v4184 = vadd.f32 %v3520, %v4183
      %v4185 = vpop.f32.mrf.mxu0
      %v4186 = vadd.f32 %v3522, %v4185
      %4187 = vmatmul.bf16.gmra.mxu0 %v3361
      %v4188 = vpop.f32.mrf.mxu0
      %v4189 = vadd.f32 %v3524, %v4188
      %v4190 = vpop.f32.mrf.mxu0
      %v4191 = vadd.f32 %v3526, %v4190
      %4192 = vmatmul.bf16.gmra.mxu0 %v3363
      %v4193 = vpop.f32.mrf.mxu0
      %v4194 = vadd.f32 %v3528, %v4193
      %v4195 = vpop.f32.mrf.mxu0
      %v4196 = vadd.f32 %v3530, %v4195
      %4197 = vdwg.mxu0
      %4198 = vmatpush.bf16.msra.mxu0 %v3658
      %4199 = vmatpush.bf16.msra.mxu0 %v3656
      %4200 = vmatpush.bf16.msra.mxu0 %v3654
      %4201 = vmatpush.bf16.msra.mxu0 %v3652
      %4202 = vmatpush.bf16.msra.mxu0 %v3650
      %4203 = vmatpush.bf16.msra.mxu0 %v3648
      %4204 = vmatpush.bf16.msra.mxu0 %v3646
      %4205 = vmatpush.bf16.msra.mxu0 %v3644
      %4206 = vmatmul.bf16.gmra.mxu0 %v3302
      %v4207 = vpop.f32.mrf.mxu0
      %v4208 = vadd.f32 %v4039, %v4207
      %v4209 = vpop.f32.mrf.mxu0
      %v4210 = vadd.f32 %v4041, %v4209
      %4211 = vmatmul.bf16.gmra.mxu0 %v3304
      %v4212 = vpop.f32.mrf.mxu0
      %v4213 = vadd.f32 %v4044, %v4212
      %v4214 = vpop.f32.mrf.mxu0
      %v4215 = vadd.f32 %v4046, %v4214
      %4216 = vmatmul.bf16.gmra.mxu0 %v3306
      %v4217 = vpop.f32.mrf.mxu0
      %v4218 = vadd.f32 %v4049, %v4217
      %v4219 = vpop.f32.mrf.mxu0
      %v4220 = vadd.f32 %v4051, %v4219
      %4221 = vmatmul.bf16.gmra.mxu0 %v3308
      %v4222 = vpop.f32.mrf.mxu0
      %v4223 = vadd.f32 %v4054, %v4222
      %v4224 = vpop.f32.mrf.mxu0
      %v4225 = vadd.f32 %v4056, %v4224
      %4226 = vmatmul.bf16.gmra.mxu0 %v3310
      %v4227 = vpop.f32.mrf.mxu0
      %v4228 = vadd.f32 %v4059, %v4227
      %v4229 = vpop.f32.mrf.mxu0
      %v4230 = vadd.f32 %v4061, %v4229
      %4231 = vmatmul.bf16.gmra.mxu0 %v3312
      %v4232 = vpop.f32.mrf.mxu0
      %v4233 = vadd.f32 %v4064, %v4232
      %v4234 = vpop.f32.mrf.mxu0
      %v4235 = vadd.f32 %v4066, %v4234
      %4236 = vmatmul.bf16.gmra.mxu0 %v3314
      %v4237 = vpop.f32.mrf.mxu0
      %v4238 = vadd.f32 %v4069, %v4237
      %v4239 = vpop.f32.mrf.mxu0
      %v4240 = vadd.f32 %v4071, %v4239
      %4241 = vmatmul.bf16.gmra.mxu0 %v3316
      %v4242 = vpop.f32.mrf.mxu0
      %v4243 = vadd.f32 %v4074, %v4242
      %v4244 = vpop.f32.mrf.mxu0
      %v4245 = vadd.f32 %v4076, %v4244
      %4246 = vmatmul.bf16.gmra.mxu0 %v3318
      %v4247 = vpop.f32.mrf.mxu0
      %v4248 = vadd.f32 %v4079, %v4247
      %v4249 = vpop.f32.mrf.mxu0
      %v4250 = vadd.f32 %v4081, %v4249
      %4251 = vmatmul.bf16.gmra.mxu0 %v3320
      %v4252 = vpop.f32.mrf.mxu0
      %v4253 = vadd.f32 %v4084, %v4252
      %v4254 = vpop.f32.mrf.mxu0
      %v4255 = vadd.f32 %v4086, %v4254
      %4256 = vmatmul.bf16.gmra.mxu0 %v3322
      %v4257 = vpop.f32.mrf.mxu0
      %v4258 = vadd.f32 %v4089, %v4257
      %v4259 = vpop.f32.mrf.mxu0
      %v4260 = vadd.f32 %v4091, %v4259
      %4261 = vmatmul.bf16.gmra.mxu0 %v3324
      %v4262 = vpop.f32.mrf.mxu0
      %v4263 = vadd.f32 %v4094, %v4262
      %v4264 = vpop.f32.mrf.mxu0
      %v4265 = vadd.f32 %v4096, %v4264
      %4266 = vmatmul.bf16.gmra.mxu0 %v3326
      %v4267 = vpop.f32.mrf.mxu0
      %v4268 = vadd.f32 %v4099, %v4267
      %v4269 = vpop.f32.mrf.mxu0
      %v4270 = vadd.f32 %v4101, %v4269
      %4271 = vmatmul.bf16.gmra.mxu0 %v3328
      %v4272 = vpop.f32.mrf.mxu0
      %v4273 = vadd.f32 %v4104, %v4272
      %v4274 = vpop.f32.mrf.mxu0
      %v4275 = vadd.f32 %v4106, %v4274
      %4276 = vmatmul.bf16.gmra.mxu0 %v3330
      %v4277 = vpop.f32.mrf.mxu0
      %v4278 = vadd.f32 %v4109, %v4277
      %v4279 = vpop.f32.mrf.mxu0
      %v4280 = vadd.f32 %v4111, %v4279
      %4281 = vmatmul.bf16.gmra.mxu0 %v3332
      %v4282 = vpop.f32.mrf.mxu0
      %v4283 = vadd.f32 %v4114, %v4282
      %v4284 = vpop.f32.mrf.mxu0
      %v4285 = vadd.f32 %v4116, %v4284
      %4286 = vmatmul.bf16.gmra.mxu0 %v3334
      %v4287 = vpop.f32.mrf.mxu0
      %v4288 = vadd.f32 %v4119, %v4287
      %v4289 = vpop.f32.mrf.mxu0
      %v4290 = vadd.f32 %v4121, %v4289
      %4291 = vmatmul.bf16.gmra.mxu0 %v3336
      %v4292 = vpop.f32.mrf.mxu0
      %v4293 = vadd.f32 %v4124, %v4292
      %v4294 = vpop.f32.mrf.mxu0
      %v4295 = vadd.f32 %v4126, %v4294
      %4296 = vmatmul.bf16.gmra.mxu0 %v3338
      %v4297 = vpop.f32.mrf.mxu0
      %v4298 = vadd.f32 %v4129, %v4297
      %v4299 = vpop.f32.mrf.mxu0
      %v4300 = vadd.f32 %v4131, %v4299
      %4301 = vmatmul.bf16.gmra.mxu0 %v3340
      %v4302 = vpop.f32.mrf.mxu0
      %v4303 = vadd.f32 %v4134, %v4302
      %v4304 = vpop.f32.mrf.mxu0
      %v4305 = vadd.f32 %v4136, %v4304
      %4306 = vmatmul.bf16.gmra.mxu0 %v3342
      %v4307 = vpop.f32.mrf.mxu0
      %v4308 = vadd.f32 %v4139, %v4307
      %v4309 = vpop.f32.mrf.mxu0
      %v4310 = vadd.f32 %v4141, %v4309
      %4311 = vmatmul.bf16.gmra.mxu0 %v3344
      %v4312 = vpop.f32.mrf.mxu0
      %v4313 = vadd.f32 %v4144, %v4312
      %v4314 = vpop.f32.mrf.mxu0
      %v4315 = vadd.f32 %v4146, %v4314
      %4316 = vmatmul.bf16.gmra.mxu0 %v3346
      %v4317 = vpop.f32.mrf.mxu0
      %v4318 = vadd.f32 %v4149, %v4317
      %v4319 = vpop.f32.mrf.mxu0
      %v4320 = vadd.f32 %v4151, %v4319
      %4321 = vmatmul.bf16.gmra.mxu0 %v3348
      %v4322 = vpop.f32.mrf.mxu0
      %v4323 = vadd.f32 %v4154, %v4322
      %v4324 = vpop.f32.mrf.mxu0
      %v4325 = vadd.f32 %v4156, %v4324
      %4326 = vmatmul.bf16.gmra.mxu0 %v3350
      %v4327 = vpop.f32.mrf.mxu0
      %v4328 = vadd.f32 %v4159, %v4327
      %v4329 = vpop.f32.mrf.mxu0
      %v4330 = vadd.f32 %v4161, %v4329
      %4331 = vmatmul.bf16.gmra.mxu0 %v3352
      %v4332 = vpop.f32.mrf.mxu0
      %v4333 = vadd.f32 %v4164, %v4332
      %v4334 = vpop.f32.mrf.mxu0
      %v4335 = vadd.f32 %v4166, %v4334
      %4336 = vmatmul.bf16.gmra.mxu0 %v3354
      %v4337 = vpop.f32.mrf.mxu0
      %v4338 = vadd.f32 %v4169, %v4337
      %v4339 = vpop.f32.mrf.mxu0
      %v4340 = vadd.f32 %v4171, %v4339
      %4341 = vmatmul.bf16.gmra.mxu0 %v3356
      %v4342 = vpop.f32.mrf.mxu0
      %v4343 = vadd.f32 %v4174, %v4342
      %v4344 = vpop.f32.mrf.mxu0
      %v4345 = vadd.f32 %v4176, %v4344
      %4346 = vmatmul.bf16.gmra.mxu0 %v3358
      %v4347 = vpop.f32.mrf.mxu0
      %v4348 = vadd.f32 %v4179, %v4347
      %v4349 = vpop.f32.mrf.mxu0
      %v4350 = vadd.f32 %v4181, %v4349
      %4351 = vmatmul.bf16.gmra.mxu0 %v3360
      %v4352 = vpop.f32.mrf.mxu0
      %v4353 = vadd.f32 %v4184, %v4352
      %v4354 = vpop.f32.mrf.mxu0
      %v4355 = vadd.f32 %v4186, %v4354
      %4356 = vmatmul.bf16.gmra.mxu0 %v3362
      %v4357 = vpop.f32.mrf.mxu0
      %v4358 = vadd.f32 %v4189, %v4357
      %v4359 = vpop.f32.mrf.mxu0
      %v4360 = vadd.f32 %v4191, %v4359
      %4361 = vmatmul.bf16.gmra.mxu0 %v3364
      %v4362 = vpop.f32.mrf.mxu0
      %v4363 = vadd.f32 %v4194, %v4362
      %v4364 = vpop.f32.mrf.mxu0
      %v4365 = vadd.f32 %v4196, %v4364
      %4366 = vdwg.mxu0
      %s4367 = scalar_lea.vmem %s6, 1
      %v4368 = vld [vmem:[%s4367] ss:$4 sm:$0x3]
      %v4370 = vperm.slane %v4368, 0
      %v4371 = vperm.slane %v4368, 1
      %v4374 = vmul.f32 %v939, %v4370
      %v4375 = vmul.f32 %v939, %v4371
      %v4376 = vmul.f32 %v943, %v4370
      %v4377 = vmul.f32 %v943, %v4371
      %v4378 = vmul.f32 %v947, %v4370
      %v4379 = vmul.f32 %v947, %v4371
      %v4380 = vmul.f32 %v951, %v4370
      %v4381 = vmul.f32 %v951, %v4371
      %v4382 = vmul.f32 %v955, %v4370
      %v4383 = vmul.f32 %v955, %v4371
      %v4384 = vmul.f32 %v959, %v4370
      %v4385 = vmul.f32 %v959, %v4371
      %v4386 = vmul.f32 %v963, %v4370
      %v4387 = vmul.f32 %v963, %v4371
      %v4388 = vmul.f32 %v967, %v4370
      %v4389 = vmul.f32 %v967, %v4371
      %v4390 = vmul.f32 %v971, %v4370
      %v4391 = vmul.f32 %v971, %v4371
      %v4392 = vmul.f32 %v975, %v4370
      %v4393 = vmul.f32 %v975, %v4371
      %v4394 = vmul.f32 %v979, %v4370
      %v4395 = vmul.f32 %v979, %v4371
      %v4396 = vmul.f32 %v983, %v4370
      %v4397 = vmul.f32 %v983, %v4371
      %v4398 = vmul.f32 %v987, %v4370
      %v4399 = vmul.f32 %v987, %v4371
      %v4400 = vmul.f32 %v991, %v4370
      %v4401 = vmul.f32 %v991, %v4371
      %v4402 = vmul.f32 %v995, %v4370
      %v4403 = vmul.f32 %v995, %v4371
      %v4404 = vmul.f32 %v999, %v4370
      %v4405 = vmul.f32 %v999, %v4371
      %v4406 = vmul.f32 %v1003, %v4370
      %v4407 = vmul.f32 %v1003, %v4371
      %v4408 = vmul.f32 %v1007, %v4370
      %v4409 = vmul.f32 %v1007, %v4371
      %v4410 = vmul.f32 %v1011, %v4370
      %v4411 = vmul.f32 %v1011, %v4371
      %v4412 = vmul.f32 %v1015, %v4370
      %v4413 = vmul.f32 %v1015, %v4371
      %v4414 = vmul.f32 %v1019, %v4370
      %v4415 = vmul.f32 %v1019, %v4371
      %v4416 = vmul.f32 %v1023, %v4370
      %v4417 = vmul.f32 %v1023, %v4371
      %v4418 = vmul.f32 %v1027, %v4370
      %v4419 = vmul.f32 %v1027, %v4371
      %v4420 = vmul.f32 %v1031, %v4370
      %v4421 = vmul.f32 %v1031, %v4371
      %v4422 = vmul.f32 %v1035, %v4370
      %v4423 = vmul.f32 %v1035, %v4371
      %v4424 = vmul.f32 %v1039, %v4370
      %v4425 = vmul.f32 %v1039, %v4371
      %v4426 = vmul.f32 %v1043, %v4370
      %v4427 = vmul.f32 %v1043, %v4371
      %v4428 = vmul.f32 %v1047, %v4370
      %v4429 = vmul.f32 %v1047, %v4371
      %v4430 = vmul.f32 %v1051, %v4370
      %v4431 = vmul.f32 %v1051, %v4371
      %v4432 = vmul.f32 %v1055, %v4370
      %v4433 = vmul.f32 %v1055, %v4371
      %v4434 = vmul.f32 %v1059, %v4370
      %v4435 = vmul.f32 %v1059, %v4371
      %v4436 = vmul.f32 %v1063, %v4370
      %v4437 = vmul.f32 %v1063, %v4371
      %v4438 = vmul.f32 %v1067, %v4370
      %v4439 = vmul.f32 %v1067, %v4371
      %v4440 = vmul.f32 %v1071, %v4370
      %v4441 = vmul.f32 %v1071, %v4371
      %v4442 = vmul.f32 %v1075, %v4370
      %v4443 = vmul.f32 %v1075, %v4371
      %v4444 = vmul.f32 %v1079, %v4370
      %v4445 = vmul.f32 %v1079, %v4371
      %v4446 = vmul.f32 %v1083, %v4370
      %v4447 = vmul.f32 %v1083, %v4371
      %v4448 = vmul.f32 %v1087, %v4370
      %v4449 = vmul.f32 %v1087, %v4371
      %v4450 = vmul.f32 %v1091, %v4370
      %v4451 = vmul.f32 %v1091, %v4371
      %v4452 = vmul.f32 %v1095, %v4370
      %v4453 = vmul.f32 %v1095, %v4371
      %v4454 = vmul.f32 %v1099, %v4370
      %v4455 = vmul.f32 %v1099, %v4371
      %v4456 = vmul.f32 %v1103, %v4370
      %v4457 = vmul.f32 %v1103, %v4371
      %v4458 = vmul.f32 %v1107, %v4370
      %v4459 = vmul.f32 %v1107, %v4371
      %v4460 = vmul.f32 %v1111, %v4370
      %v4461 = vmul.f32 %v1111, %v4371
      %v4462 = vmul.f32 %v1115, %v4370
      %v4463 = vmul.f32 %v1115, %v4371
      %v4464 = vmul.f32 %v1119, %v4370
      %v4465 = vmul.f32 %v1119, %v4371
      %v4466 = vmul.f32 %v1123, %v4370
      %v4467 = vmul.f32 %v1123, %v4371
      %v4468 = vmul.f32 %v1127, %v4370
      %v4469 = vmul.f32 %v1127, %v4371
      %v4470 = vmul.f32 %v1131, %v4370
      %v4471 = vmul.f32 %v1131, %v4371
      %v4472 = vmul.f32 %v1135, %v4370
      %v4473 = vmul.f32 %v1135, %v4371
      %v4474 = vmul.f32 %v1139, %v4370
      %v4475 = vmul.f32 %v1139, %v4371
      %v4476 = vmul.f32 %v1143, %v4370
      %v4477 = vmul.f32 %v1143, %v4371
      %v4478 = vmul.f32 %v1147, %v4370
      %v4479 = vmul.f32 %v1147, %v4371
      %v4480 = vmul.f32 %v1151, %v4370
      %v4481 = vmul.f32 %v1151, %v4371
      %v4482 = vmul.f32 %v1155, %v4370
      %v4483 = vmul.f32 %v1155, %v4371
      %v4484 = vmul.f32 %v1159, %v4370
      %v4485 = vmul.f32 %v1159, %v4371
      %v4486 = vmul.f32 %v1163, %v4370
      %v4487 = vmul.f32 %v1163, %v4371
      %v4488 = vmul.f32 %v1167, %v4370
      %v4489 = vmul.f32 %v1167, %v4371
      %v4490 = vmul.f32 %v1171, %v4370
      %v4491 = vmul.f32 %v1171, %v4371
      %v4492 = vmul.f32 %v1175, %v4370
      %v4493 = vmul.f32 %v1175, %v4371
      %v4494 = vmul.f32 %v1179, %v4370
      %v4495 = vmul.f32 %v1179, %v4371
      %v4496 = vmul.f32 %v1183, %v4370
      %v4497 = vmul.f32 %v1183, %v4371
      %v4498 = vmul.f32 %v1187, %v4370
      %v4499 = vmul.f32 %v1187, %v4371
      %v4500 = vmul.f32 %v1191, %v4370
      %v4501 = vmul.f32 %v1191, %v4371
      %v4502 = vadd.f32 %v3870, %v4374
      %v4503 = vadd.f32 %v4208, %v4375
      %v4504 = vadd.f32 %v3872, %v4376
      %v4505 = vadd.f32 %v4210, %v4377
      %v4506 = vadd.f32 %v3875, %v4378
      %v4507 = vadd.f32 %v4213, %v4379
      %v4508 = vadd.f32 %v3877, %v4380
      %v4509 = vadd.f32 %v4215, %v4381
      %v4510 = vadd.f32 %v3880, %v4382
      %v4511 = vadd.f32 %v4218, %v4383
      %v4512 = vadd.f32 %v3882, %v4384
      %v4513 = vadd.f32 %v4220, %v4385
      %v4514 = vadd.f32 %v3885, %v4386
      %v4515 = vadd.f32 %v4223, %v4387
      %v4516 = vadd.f32 %v3887, %v4388
      %v4517 = vadd.f32 %v4225, %v4389
      %v4518 = vadd.f32 %v3890, %v4390
      %v4519 = vadd.f32 %v4228, %v4391
      %v4520 = vadd.f32 %v3892, %v4392
      %v4521 = vadd.f32 %v4230, %v4393
      %v4522 = vadd.f32 %v3895, %v4394
      %v4523 = vadd.f32 %v4233, %v4395
      %v4524 = vadd.f32 %v3897, %v4396
      %v4525 = vadd.f32 %v4235, %v4397
      %v4526 = vadd.f32 %v3900, %v4398
      %v4527 = vadd.f32 %v4238, %v4399
      %v4528 = vadd.f32 %v3902, %v4400
      %v4529 = vadd.f32 %v4240, %v4401
      %v4530 = vadd.f32 %v3905, %v4402
      %v4531 = vadd.f32 %v4243, %v4403
      %v4532 = vadd.f32 %v3907, %v4404
      %v4533 = vadd.f32 %v4245, %v4405
      %v4534 = vadd.f32 %v3910, %v4406
      %v4535 = vadd.f32 %v4248, %v4407
      %v4536 = vadd.f32 %v3912, %v4408
      %v4537 = vadd.f32 %v4250, %v4409
      %v4538 = vadd.f32 %v3915, %v4410
      %v4539 = vadd.f32 %v4253, %v4411
      %v4540 = vadd.f32 %v3917, %v4412
      %v4541 = vadd.f32 %v4255, %v4413
      %v4542 = vadd.f32 %v3920, %v4414
      %v4543 = vadd.f32 %v4258, %v4415
      %v4544 = vadd.f32 %v3922, %v4416
      %v4545 = vadd.f32 %v4260, %v4417
      %v4546 = vadd.f32 %v3925, %v4418
      %v4547 = vadd.f32 %v4263, %v4419
      %v4548 = vadd.f32 %v3927, %v4420
      %v4549 = vadd.f32 %v4265, %v4421
      %v4550 = vadd.f32 %v3930, %v4422
      %v4551 = vadd.f32 %v4268, %v4423
      %v4552 = vadd.f32 %v3932, %v4424
      %v4553 = vadd.f32 %v4270, %v4425
      %v4554 = vadd.f32 %v3935, %v4426
      %v4555 = vadd.f32 %v4273, %v4427
      %v4556 = vadd.f32 %v3937, %v4428
      %v4557 = vadd.f32 %v4275, %v4429
      %v4558 = vadd.f32 %v3940, %v4430
      %v4559 = vadd.f32 %v4278, %v4431
      %v4560 = vadd.f32 %v3942, %v4432
      %v4561 = vadd.f32 %v4280, %v4433
      %v4562 = vadd.f32 %v3945, %v4434
      %v4563 = vadd.f32 %v4283, %v4435
      %v4564 = vadd.f32 %v3947, %v4436
      %v4565 = vadd.f32 %v4285, %v4437
      %v4566 = vadd.f32 %v3950, %v4438
      %v4567 = vadd.f32 %v4288, %v4439
      %v4568 = vadd.f32 %v3952, %v4440
      %v4569 = vadd.f32 %v4290, %v4441
      %v4570 = vadd.f32 %v3955, %v4442
      %v4571 = vadd.f32 %v4293, %v4443
      %v4572 = vadd.f32 %v3957, %v4444
      %v4573 = vadd.f32 %v4295, %v4445
      %v4574 = vadd.f32 %v3960, %v4446
      %v4575 = vadd.f32 %v4298, %v4447
      %v4576 = vadd.f32 %v3962, %v4448
      %v4577 = vadd.f32 %v4300, %v4449
      %v4578 = vadd.f32 %v3965, %v4450
      %v4579 = vadd.f32 %v4303, %v4451
      %v4580 = vadd.f32 %v3967, %v4452
      %v4581 = vadd.f32 %v4305, %v4453
      %v4582 = vadd.f32 %v3970, %v4454
      %v4583 = vadd.f32 %v4308, %v4455
      %v4584 = vadd.f32 %v3972, %v4456
      %v4585 = vadd.f32 %v4310, %v4457
      %v4586 = vadd.f32 %v3975, %v4458
      %v4587 = vadd.f32 %v4313, %v4459
      %v4588 = vadd.f32 %v3977, %v4460
      %v4589 = vadd.f32 %v4315, %v4461
      %v4590 = vadd.f32 %v3980, %v4462
      %v4591 = vadd.f32 %v4318, %v4463
      %v4592 = vadd.f32 %v3982, %v4464
      %v4593 = vadd.f32 %v4320, %v4465
      %v4594 = vadd.f32 %v3985, %v4466
      %v4595 = vadd.f32 %v4323, %v4467
      %v4596 = vadd.f32 %v3987, %v4468
      %v4597 = vadd.f32 %v4325, %v4469
      %v4598 = vadd.f32 %v3990, %v4470
      %v4599 = vadd.f32 %v4328, %v4471
      %v4600 = vadd.f32 %v3992, %v4472
      %v4601 = vadd.f32 %v4330, %v4473
      %v4602 = vadd.f32 %v3995, %v4474
      %v4603 = vadd.f32 %v4333, %v4475
      %v4604 = vadd.f32 %v3997, %v4476
      %v4605 = vadd.f32 %v4335, %v4477
      %v4606 = vadd.f32 %v4000, %v4478
      %v4607 = vadd.f32 %v4338, %v4479
      %v4608 = vadd.f32 %v4002, %v4480
      %v4609 = vadd.f32 %v4340, %v4481
      %v4610 = vadd.f32 %v4005, %v4482
      %v4611 = vadd.f32 %v4343, %v4483
      %v4612 = vadd.f32 %v4007, %v4484
      %v4613 = vadd.f32 %v4345, %v4485
      %v4614 = vadd.f32 %v4010, %v4486
      %v4615 = vadd.f32 %v4348, %v4487
      %v4616 = vadd.f32 %v4012, %v4488
      %v4617 = vadd.f32 %v4350, %v4489
      %v4618 = vadd.f32 %v4015, %v4490
      %v4619 = vadd.f32 %v4353, %v4491
      %v4620 = vadd.f32 %v4017, %v4492
      %v4621 = vadd.f32 %v4355, %v4493
      %v4622 = vadd.f32 %v4020, %v4494
      %v4623 = vadd.f32 %v4358, %v4495
      %v4624 = vadd.f32 %v4022, %v4496
      %v4625 = vadd.f32 %v4360, %v4497
      %v4626 = vadd.f32 %v4025, %v4498
      %v4627 = vadd.f32 %v4363, %v4499
      %v4628 = vadd.f32 %v4027, %v4500
      %v4629 = vadd.f32 %v4365, %v4501
      %s4630 = scalar_lea.vmem %s6, 2
      %v4631 = vld [vmem:[%s4630] ss:$4 sm:$0x3]
      %v4633 = vperm.slane %v4631, 0
      %v4634 = vperm.slane %v4631, 1
      %v4637 = vmul.f32 %v1458, %v4633
      %v4638 = vmul.f32 %v1458, %v4634
      %v4639 = vmul.f32 %v1462, %v4633
      %v4640 = vmul.f32 %v1462, %v4634
      %v4641 = vmul.f32 %v1466, %v4633
      %v4642 = vmul.f32 %v1466, %v4634
      %v4643 = vmul.f32 %v1470, %v4633
      %v4644 = vmul.f32 %v1470, %v4634
      %v4645 = vmul.f32 %v1474, %v4633
      %v4646 = vmul.f32 %v1474, %v4634
      %v4647 = vmul.f32 %v1478, %v4633
      %v4648 = vmul.f32 %v1478, %v4634
      %v4649 = vmul.f32 %v1482, %v4633
      %v4650 = vmul.f32 %v1482, %v4634
      %v4651 = vmul.f32 %v1486, %v4633
      %v4652 = vmul.f32 %v1486, %v4634
      %v4653 = vmul.f32 %v1490, %v4633
      %v4654 = vmul.f32 %v1490, %v4634
      %v4655 = vmul.f32 %v1494, %v4633
      %v4656 = vmul.f32 %v1494, %v4634
      %v4657 = vmul.f32 %v1498, %v4633
      %v4658 = vmul.f32 %v1498, %v4634
      %v4659 = vmul.f32 %v1502, %v4633
      %v4660 = vmul.f32 %v1502, %v4634
      %v4661 = vmul.f32 %v1506, %v4633
      %v4662 = vmul.f32 %v1506, %v4634
      %v4663 = vmul.f32 %v1510, %v4633
      %v4664 = vmul.f32 %v1510, %v4634
      %v4665 = vmul.f32 %v1514, %v4633
      %v4666 = vmul.f32 %v1514, %v4634
      %v4667 = vmul.f32 %v1518, %v4633
      %v4668 = vmul.f32 %v1518, %v4634
      %v4669 = vmul.f32 %v1522, %v4633
      %v4670 = vmul.f32 %v1522, %v4634
      %v4671 = vmul.f32 %v1526, %v4633
      %v4672 = vmul.f32 %v1526, %v4634
      %v4673 = vmul.f32 %v1530, %v4633
      %v4674 = vmul.f32 %v1530, %v4634
      %v4675 = vmul.f32 %v1534, %v4633
      %v4676 = vmul.f32 %v1534, %v4634
      %v4677 = vmul.f32 %v1538, %v4633
      %v4678 = vmul.f32 %v1538, %v4634
      %v4679 = vmul.f32 %v1542, %v4633
      %v4680 = vmul.f32 %v1542, %v4634
      %v4681 = vmul.f32 %v1546, %v4633
      %v4682 = vmul.f32 %v1546, %v4634
      %v4683 = vmul.f32 %v1550, %v4633
      %v4684 = vmul.f32 %v1550, %v4634
      %v4685 = vmul.f32 %v1554, %v4633
      %v4686 = vmul.f32 %v1554, %v4634
      %v4687 = vmul.f32 %v1558, %v4633
      %v4688 = vmul.f32 %v1558, %v4634
      %v4689 = vmul.f32 %v1562, %v4633
      %v4690 = vmul.f32 %v1562, %v4634
      %v4691 = vmul.f32 %v1566, %v4633
      %v4692 = vmul.f32 %v1566, %v4634
      %v4693 = vmul.f32 %v1570, %v4633
      %v4694 = vmul.f32 %v1570, %v4634
      %v4695 = vmul.f32 %v1574, %v4633
      %v4696 = vmul.f32 %v1574, %v4634
      %v4697 = vmul.f32 %v1578, %v4633
      %v4698 = vmul.f32 %v1578, %v4634
      %v4699 = vmul.f32 %v1582, %v4633
      %v4700 = vmul.f32 %v1582, %v4634
      %v4701 = vmul.f32 %v1586, %v4633
      %v4702 = vmul.f32 %v1586, %v4634
      %v4703 = vmul.f32 %v1590, %v4633
      %v4704 = vmul.f32 %v1590, %v4634
      %v4705 = vmul.f32 %v1594, %v4633
      %v4706 = vmul.f32 %v1594, %v4634
      %v4707 = vmul.f32 %v1598, %v4633
      %v4708 = vmul.f32 %v1598, %v4634
      %v4709 = vmul.f32 %v1602, %v4633
      %v4710 = vmul.f32 %v1602, %v4634
      %v4711 = vmul.f32 %v1606, %v4633
      %v4712 = vmul.f32 %v1606, %v4634
      %v4713 = vmul.f32 %v1610, %v4633
      %v4714 = vmul.f32 %v1610, %v4634
      %v4715 = vmul.f32 %v1614, %v4633
      %v4716 = vmul.f32 %v1614, %v4634
      %v4717 = vmul.f32 %v1618, %v4633
      %v4718 = vmul.f32 %v1618, %v4634
      %v4719 = vmul.f32 %v1622, %v4633
      %v4720 = vmul.f32 %v1622, %v4634
      %v4721 = vmul.f32 %v1626, %v4633
      %v4722 = vmul.f32 %v1626, %v4634
      %v4723 = vmul.f32 %v1630, %v4633
      %v4724 = vmul.f32 %v1630, %v4634
      %v4725 = vmul.f32 %v1634, %v4633
      %v4726 = vmul.f32 %v1634, %v4634
      %v4727 = vmul.f32 %v1638, %v4633
      %v4728 = vmul.f32 %v1638, %v4634
      %v4729 = vmul.f32 %v1642, %v4633
      %v4730 = vmul.f32 %v1642, %v4634
      %v4731 = vmul.f32 %v1646, %v4633
      %v4732 = vmul.f32 %v1646, %v4634
      %v4733 = vmul.f32 %v1650, %v4633
      %v4734 = vmul.f32 %v1650, %v4634
      %v4735 = vmul.f32 %v1654, %v4633
      %v4736 = vmul.f32 %v1654, %v4634
      %v4737 = vmul.f32 %v1658, %v4633
      %v4738 = vmul.f32 %v1658, %v4634
      %v4739 = vmul.f32 %v1662, %v4633
      %v4740 = vmul.f32 %v1662, %v4634
      %v4741 = vmul.f32 %v1666, %v4633
      %v4742 = vmul.f32 %v1666, %v4634
      %v4743 = vmul.f32 %v1670, %v4633
      %v4744 = vmul.f32 %v1670, %v4634
      %v4745 = vmul.f32 %v1674, %v4633
      %v4746 = vmul.f32 %v1674, %v4634
      %v4747 = vmul.f32 %v1678, %v4633
      %v4748 = vmul.f32 %v1678, %v4634
      %v4749 = vmul.f32 %v1682, %v4633
      %v4750 = vmul.f32 %v1682, %v4634
      %v4751 = vmul.f32 %v1686, %v4633
      %v4752 = vmul.f32 %v1686, %v4634
      %v4753 = vmul.f32 %v1690, %v4633
      %v4754 = vmul.f32 %v1690, %v4634
      %v4755 = vmul.f32 %v1694, %v4633
      %v4756 = vmul.f32 %v1694, %v4634
      %v4757 = vmul.f32 %v1698, %v4633
      %v4758 = vmul.f32 %v1698, %v4634
      %v4759 = vmul.f32 %v1702, %v4633
      %v4760 = vmul.f32 %v1702, %v4634
      %v4761 = vmul.f32 %v1706, %v4633
      %v4762 = vmul.f32 %v1706, %v4634
      %v4763 = vmul.f32 %v1710, %v4633
      %v4764 = vmul.f32 %v1710, %v4634
      %v4765 = vadd.f32 %v4502, %v4637
      %v4766 = vadd.f32 %v4503, %v4638
      %v4767 = vadd.f32 %v4504, %v4639
      %v4768 = vadd.f32 %v4505, %v4640
      %v4769 = vadd.f32 %v4506, %v4641
      %v4770 = vadd.f32 %v4507, %v4642
      %v4771 = vadd.f32 %v4508, %v4643
      %v4772 = vadd.f32 %v4509, %v4644
      %v4773 = vadd.f32 %v4510, %v4645
      %v4774 = vadd.f32 %v4511, %v4646
      %v4775 = vadd.f32 %v4512, %v4647
      %v4776 = vadd.f32 %v4513, %v4648
      %v4777 = vadd.f32 %v4514, %v4649
      %v4778 = vadd.f32 %v4515, %v4650
      %v4779 = vadd.f32 %v4516, %v4651
      %v4780 = vadd.f32 %v4517, %v4652
      %v4781 = vadd.f32 %v4518, %v4653
      %v4782 = vadd.f32 %v4519, %v4654
      %v4783 = vadd.f32 %v4520, %v4655
      %v4784 = vadd.f32 %v4521, %v4656
      %v4785 = vadd.f32 %v4522, %v4657
      %v4786 = vadd.f32 %v4523, %v4658
      %v4787 = vadd.f32 %v4524, %v4659
      %v4788 = vadd.f32 %v4525, %v4660
      %v4789 = vadd.f32 %v4526, %v4661
      %v4790 = vadd.f32 %v4527, %v4662
      %v4791 = vadd.f32 %v4528, %v4663
      %v4792 = vadd.f32 %v4529, %v4664
      %v4793 = vadd.f32 %v4530, %v4665
      %v4794 = vadd.f32 %v4531, %v4666
      %v4795 = vadd.f32 %v4532, %v4667
      %v4796 = vadd.f32 %v4533, %v4668
      %v4797 = vadd.f32 %v4534, %v4669
      %v4798 = vadd.f32 %v4535, %v4670
      %v4799 = vadd.f32 %v4536, %v4671
      %v4800 = vadd.f32 %v4537, %v4672
      %v4801 = vadd.f32 %v4538, %v4673
      %v4802 = vadd.f32 %v4539, %v4674
      %v4803 = vadd.f32 %v4540, %v4675
      %v4804 = vadd.f32 %v4541, %v4676
      %v4805 = vadd.f32 %v4542, %v4677
      %v4806 = vadd.f32 %v4543, %v4678
      %v4807 = vadd.f32 %v4544, %v4679
      %v4808 = vadd.f32 %v4545, %v4680
      %v4809 = vadd.f32 %v4546, %v4681
      %v4810 = vadd.f32 %v4547, %v4682
      %v4811 = vadd.f32 %v4548, %v4683
      %v4812 = vadd.f32 %v4549, %v4684
      %v4813 = vadd.f32 %v4550, %v4685
      %v4814 = vadd.f32 %v4551, %v4686
      %v4815 = vadd.f32 %v4552, %v4687
      %v4816 = vadd.f32 %v4553, %v4688
      %v4817 = vadd.f32 %v4554, %v4689
      %v4818 = vadd.f32 %v4555, %v4690
      %v4819 = vadd.f32 %v4556, %v4691
      %v4820 = vadd.f32 %v4557, %v4692
      %v4821 = vadd.f32 %v4558, %v4693
      %v4822 = vadd.f32 %v4559, %v4694
      %v4823 = vadd.f32 %v4560, %v4695
      %v4824 = vadd.f32 %v4561, %v4696
      %v4825 = vadd.f32 %v4562, %v4697
      %v4826 = vadd.f32 %v4563, %v4698
      %v4827 = vadd.f32 %v4564, %v4699
      %v4828 = vadd.f32 %v4565, %v4700
      %v4829 = vadd.f32 %v4566, %v4701
      %v4830 = vadd.f32 %v4567, %v4702
      %v4831 = vadd.f32 %v4568, %v4703
      %v4832 = vadd.f32 %v4569, %v4704
      %v4833 = vadd.f32 %v4570, %v4705
      %v4834 = vadd.f32 %v4571, %v4706
      %v4835 = vadd.f32 %v4572, %v4707
      %v4836 = vadd.f32 %v4573, %v4708
      %v4837 = vadd.f32 %v4574, %v4709
      %v4838 = vadd.f32 %v4575, %v4710
      %v4839 = vadd.f32 %v4576, %v4711
      %v4840 = vadd.f32 %v4577, %v4712
      %v4841 = vadd.f32 %v4578, %v4713
      %v4842 = vadd.f32 %v4579, %v4714
      %v4843 = vadd.f32 %v4580, %v4715
      %v4844 = vadd.f32 %v4581, %v4716
      %v4845 = vadd.f32 %v4582, %v4717
      %v4846 = vadd.f32 %v4583, %v4718
      %v4847 = vadd.f32 %v4584, %v4719
      %v4848 = vadd.f32 %v4585, %v4720
      %v4849 = vadd.f32 %v4586, %v4721
      %v4850 = vadd.f32 %v4587, %v4722
      %v4851 = vadd.f32 %v4588, %v4723
      %v4852 = vadd.f32 %v4589, %v4724
      %v4853 = vadd.f32 %v4590, %v4725
      %v4854 = vadd.f32 %v4591, %v4726
      %v4855 = vadd.f32 %v4592, %v4727
      %v4856 = vadd.f32 %v4593, %v4728
      %v4857 = vadd.f32 %v4594, %v4729
      %v4858 = vadd.f32 %v4595, %v4730
      %v4859 = vadd.f32 %v4596, %v4731
      %v4860 = vadd.f32 %v4597, %v4732
      %v4861 = vadd.f32 %v4598, %v4733
      %v4862 = vadd.f32 %v4599, %v4734
      %v4863 = vadd.f32 %v4600, %v4735
      %v4864 = vadd.f32 %v4601, %v4736
      %v4865 = vadd.f32 %v4602, %v4737
      %v4866 = vadd.f32 %v4603, %v4738
      %v4867 = vadd.f32 %v4604, %v4739
      %v4868 = vadd.f32 %v4605, %v4740
      %v4869 = vadd.f32 %v4606, %v4741
      %v4870 = vadd.f32 %v4607, %v4742
      %v4871 = vadd.f32 %v4608, %v4743
      %v4872 = vadd.f32 %v4609, %v4744
      %v4873 = vadd.f32 %v4610, %v4745
      %v4874 = vadd.f32 %v4611, %v4746
      %v4875 = vadd.f32 %v4612, %v4747
      %v4876 = vadd.f32 %v4613, %v4748
      %v4877 = vadd.f32 %v4614, %v4749
      %v4878 = vadd.f32 %v4615, %v4750
      %v4879 = vadd.f32 %v4616, %v4751
      %v4880 = vadd.f32 %v4617, %v4752
      %v4881 = vadd.f32 %v4618, %v4753
      %v4882 = vadd.f32 %v4619, %v4754
      %v4883 = vadd.f32 %v4620, %v4755
      %v4884 = vadd.f32 %v4621, %v4756
      %v4885 = vadd.f32 %v4622, %v4757
      %v4886 = vadd.f32 %v4623, %v4758
      %v4887 = vadd.f32 %v4624, %v4759
      %v4888 = vadd.f32 %v4625, %v4760
      %v4889 = vadd.f32 %v4626, %v4761
      %v4890 = vadd.f32 %v4627, %v4762
      %v4891 = vadd.f32 %v4628, %v4763
      %v4892 = vadd.f32 %v4629, %v4764
      %v4893 = vld [vmem:[%s7] sm:$0x3]
      %v4895 = vperm.slane %v4893, 0
      %v4896 = vperm.slane %v4893, 1
      %v4899 = vadd.f32 %v4765, %v4895
      %v4900 = vadd.f32 %v4766, %v4896
      %v4901 = vadd.f32 %v4767, %v4895
      %v4902 = vadd.f32 %v4768, %v4896
      %v4903 = vadd.f32 %v4769, %v4895
      %v4904 = vadd.f32 %v4770, %v4896
      %v4905 = vadd.f32 %v4771, %v4895
      %v4906 = vadd.f32 %v4772, %v4896
      %v4907 = vadd.f32 %v4773, %v4895
      %v4908 = vadd.f32 %v4774, %v4896
      %v4909 = vadd.f32 %v4775, %v4895
      %v4910 = vadd.f32 %v4776, %v4896
      %v4911 = vadd.f32 %v4777, %v4895
      %v4912 = vadd.f32 %v4778, %v4896
      %v4913 = vadd.f32 %v4779, %v4895
      %v4914 = vadd.f32 %v4780, %v4896
      %v4915 = vadd.f32 %v4781, %v4895
      %v4916 = vadd.f32 %v4782, %v4896
      %v4917 = vadd.f32 %v4783, %v4895
      %v4918 = vadd.f32 %v4784, %v4896
      %v4919 = vadd.f32 %v4785, %v4895
      %v4920 = vadd.f32 %v4786, %v4896
      %v4921 = vadd.f32 %v4787, %v4895
      %v4922 = vadd.f32 %v4788, %v4896
      %v4923 = vadd.f32 %v4789, %v4895
      %v4924 = vadd.f32 %v4790, %v4896
      %v4925 = vadd.f32 %v4791, %v4895
      %v4926 = vadd.f32 %v4792, %v4896
      %v4927 = vadd.f32 %v4793, %v4895
      %v4928 = vadd.f32 %v4794, %v4896
      %v4929 = vadd.f32 %v4795, %v4895
      %v4930 = vadd.f32 %v4796, %v4896
      %v4931 = vadd.f32 %v4797, %v4895
      %v4932 = vadd.f32 %v4798, %v4896
      %v4933 = vadd.f32 %v4799, %v4895
      %v4934 = vadd.f32 %v4800, %v4896
      %v4935 = vadd.f32 %v4801, %v4895
      %v4936 = vadd.f32 %v4802, %v4896
      %v4937 = vadd.f32 %v4803, %v4895
      %v4938 = vadd.f32 %v4804, %v4896
      %v4939 = vadd.f32 %v4805, %v4895
      %v4940 = vadd.f32 %v4806, %v4896
      %v4941 = vadd.f32 %v4807, %v4895
      %v4942 = vadd.f32 %v4808, %v4896
      %v4943 = vadd.f32 %v4809, %v4895
      %v4944 = vadd.f32 %v4810, %v4896
      %v4945 = vadd.f32 %v4811, %v4895
      %v4946 = vadd.f32 %v4812, %v4896
      %v4947 = vadd.f32 %v4813, %v4895
      %v4948 = vadd.f32 %v4814, %v4896
      %v4949 = vadd.f32 %v4815, %v4895
      %v4950 = vadd.f32 %v4816, %v4896
      %v4951 = vadd.f32 %v4817, %v4895
      %v4952 = vadd.f32 %v4818, %v4896
      %v4953 = vadd.f32 %v4819, %v4895
      %v4954 = vadd.f32 %v4820, %v4896
      %v4955 = vadd.f32 %v4821, %v4895
      %v4956 = vadd.f32 %v4822, %v4896
      %v4957 = vadd.f32 %v4823, %v4895
      %v4958 = vadd.f32 %v4824, %v4896
      %v4959 = vadd.f32 %v4825, %v4895
      %v4960 = vadd.f32 %v4826, %v4896
      %v4961 = vadd.f32 %v4827, %v4895
      %v4962 = vadd.f32 %v4828, %v4896
      %v4963 = vadd.f32 %v4829, %v4895
      %v4964 = vadd.f32 %v4830, %v4896
      %v4965 = vadd.f32 %v4831, %v4895
      %v4966 = vadd.f32 %v4832, %v4896
      %v4967 = vadd.f32 %v4833, %v4895
      %v4968 = vadd.f32 %v4834, %v4896
      %v4969 = vadd.f32 %v4835, %v4895
      %v4970 = vadd.f32 %v4836, %v4896
      %v4971 = vadd.f32 %v4837, %v4895
      %v4972 = vadd.f32 %v4838, %v4896
      %v4973 = vadd.f32 %v4839, %v4895
      %v4974 = vadd.f32 %v4840, %v4896
      %v4975 = vadd.f32 %v4841, %v4895
      %v4976 = vadd.f32 %v4842, %v4896
      %v4977 = vadd.f32 %v4843, %v4895
      %v4978 = vadd.f32 %v4844, %v4896
      %v4979 = vadd.f32 %v4845, %v4895
      %v4980 = vadd.f32 %v4846, %v4896
      %v4981 = vadd.f32 %v4847, %v4895
      %v4982 = vadd.f32 %v4848, %v4896
      %v4983 = vadd.f32 %v4849, %v4895
      %v4984 = vadd.f32 %v4850, %v4896
      %v4985 = vadd.f32 %v4851, %v4895
      %v4986 = vadd.f32 %v4852, %v4896
      %v4987 = vadd.f32 %v4853, %v4895
      %v4988 = vadd.f32 %v4854, %v4896
      %v4989 = vadd.f32 %v4855, %v4895
      %v4990 = vadd.f32 %v4856, %v4896
      %v4991 = vadd.f32 %v4857, %v4895
      %v4992 = vadd.f32 %v4858, %v4896
      %v4993 = vadd.f32 %v4859, %v4895
      %v4994 = vadd.f32 %v4860, %v4896
      %v4995 = vadd.f32 %v4861, %v4895
      %v4996 = vadd.f32 %v4862, %v4896
      %v4997 = vadd.f32 %v4863, %v4895
      %v4998 = vadd.f32 %v4864, %v4896
      %v4999 = vadd.f32 %v4865, %v4895
      %v5000 = vadd.f32 %v4866, %v4896
      %v5001 = vadd.f32 %v4867, %v4895
      %v5002 = vadd.f32 %v4868, %v4896
      %v5003 = vadd.f32 %v4869, %v4895
      %v5004 = vadd.f32 %v4870, %v4896
      %v5005 = vadd.f32 %v4871, %v4895
      %v5006 = vadd.f32 %v4872, %v4896
      %v5007 = vadd.f32 %v4873, %v4895
      %v5008 = vadd.f32 %v4874, %v4896
      %v5009 = vadd.f32 %v4875, %v4895
      %v5010 = vadd.f32 %v4876, %v4896
      %v5011 = vadd.f32 %v4877, %v4895
      %v5012 = vadd.f32 %v4878, %v4896
      %v5013 = vadd.f32 %v4879, %v4895
      %v5014 = vadd.f32 %v4880, %v4896
      %v5015 = vadd.f32 %v4881, %v4895
      %v5016 = vadd.f32 %v4882, %v4896
      %v5017 = vadd.f32 %v4883, %v4895
      %v5018 = vadd.f32 %v4884, %v4896
      %v5019 = vadd.f32 %v4885, %v4895
      %v5020 = vadd.f32 %v4886, %v4896
      %v5021 = vadd.f32 %v4887, %v4895
      %v5022 = vadd.f32 %v4888, %v4896
      %v5023 = vadd.f32 %v4889, %v4895
      %v5024 = vadd.f32 %v4890, %v4896
      %v5025 = vadd.f32 %v4891, %v4895
      %v5026 = vadd.f32 %v4892, %v4896
      %v5027 = vmax.f32 %v4899, 0.0
      %v5028 = vmax.f32 %v4900, 0.0
      %v5029 = vmax.f32 %v4901, 0.0
      %v5030 = vmax.f32 %v4902, 0.0
      %v5031 = vmax.f32 %v4903, 0.0
      %v5032 = vmax.f32 %v4904, 0.0
      %v5033 = vmax.f32 %v4905, 0.0
      %v5034 = vmax.f32 %v4906, 0.0
      %v5035 = vmax.f32 %v4907, 0.0
      %v5036 = vmax.f32 %v4908, 0.0
      %v5037 = vmax.f32 %v4909, 0.0
      %v5038 = vmax.f32 %v4910, 0.0
      %v5039 = vmax.f32 %v4911, 0.0
      %v5040 = vmax.f32 %v4912, 0.0
      %v5041 = vmax.f32 %v4913, 0.0
      %v5042 = vmax.f32 %v4914, 0.0
      %v5043 = vmax.f32 %v4915, 0.0
      %v5044 = vmax.f32 %v4916, 0.0
      %v5045 = vmax.f32 %v4917, 0.0
      %v5046 = vmax.f32 %v4918, 0.0
      %v5047 = vmax.f32 %v4919, 0.0
      %v5048 = vmax.f32 %v4920, 0.0
      %v5049 = vmax.f32 %v4921, 0.0
      %v5050 = vmax.f32 %v4922, 0.0
      %v5051 = vmax.f32 %v4923, 0.0
      %v5052 = vmax.f32 %v4924, 0.0
      %v5053 = vmax.f32 %v4925, 0.0
      %v5054 = vmax.f32 %v4926, 0.0
      %v5055 = vmax.f32 %v4927, 0.0
      %v5056 = vmax.f32 %v4928, 0.0
      %v5057 = vmax.f32 %v4929, 0.0
      %v5058 = vmax.f32 %v4930, 0.0
      %v5059 = vmax.f32 %v4931, 0.0
      %v5060 = vmax.f32 %v4932, 0.0
      %v5061 = vmax.f32 %v4933, 0.0
      %v5062 = vmax.f32 %v4934, 0.0
      %v5063 = vmax.f32 %v4935, 0.0
      %v5064 = vmax.f32 %v4936, 0.0
      %v5065 = vmax.f32 %v4937, 0.0
      %v5066 = vmax.f32 %v4938, 0.0
      %v5067 = vmax.f32 %v4939, 0.0
      %v5068 = vmax.f32 %v4940, 0.0
      %v5069 = vmax.f32 %v4941, 0.0
      %v5070 = vmax.f32 %v4942, 0.0
      %v5071 = vmax.f32 %v4943, 0.0
      %v5072 = vmax.f32 %v4944, 0.0
      %v5073 = vmax.f32 %v4945, 0.0
      %v5074 = vmax.f32 %v4946, 0.0
      %v5075 = vmax.f32 %v4947, 0.0
      %v5076 = vmax.f32 %v4948, 0.0
      %v5077 = vmax.f32 %v4949, 0.0
      %v5078 = vmax.f32 %v4950, 0.0
      %v5079 = vmax.f32 %v4951, 0.0
      %v5080 = vmax.f32 %v4952, 0.0
      %v5081 = vmax.f32 %v4953, 0.0
      %v5082 = vmax.f32 %v4954, 0.0
      %v5083 = vmax.f32 %v4955, 0.0
      %v5084 = vmax.f32 %v4956, 0.0
      %v5085 = vmax.f32 %v4957, 0.0
      %v5086 = vmax.f32 %v4958, 0.0
      %v5087 = vmax.f32 %v4959, 0.0
      %v5088 = vmax.f32 %v4960, 0.0
      %v5089 = vmax.f32 %v4961, 0.0
      %v5090 = vmax.f32 %v4962, 0.0
      %v5091 = vmax.f32 %v4963, 0.0
      %v5092 = vmax.f32 %v4964, 0.0
      %v5093 = vmax.f32 %v4965, 0.0
      %v5094 = vmax.f32 %v4966, 0.0
      %v5095 = vmax.f32 %v4967, 0.0
      %v5096 = vmax.f32 %v4968, 0.0
      %v5097 = vmax.f32 %v4969, 0.0
      %v5098 = vmax.f32 %v4970, 0.0
      %v5099 = vmax.f32 %v4971, 0.0
      %v5100 = vmax.f32 %v4972, 0.0
      %v5101 = vmax.f32 %v4973, 0.0
      %v5102 = vmax.f32 %v4974, 0.0
      %v5103 = vmax.f32 %v4975, 0.0
      %v5104 = vmax.f32 %v4976, 0.0
      %v5105 = vmax.f32 %v4977, 0.0
      %v5106 = vmax.f32 %v4978, 0.0
      %v5107 = vmax.f32 %v4979, 0.0
      %v5108 = vmax.f32 %v4980, 0.0
      %v5109 = vmax.f32 %v4981, 0.0
      %v5110 = vmax.f32 %v4982, 0.0
      %v5111 = vmax.f32 %v4983, 0.0
      %v5112 = vmax.f32 %v4984, 0.0
      %v5113 = vmax.f32 %v4985, 0.0
      %v5114 = vmax.f32 %v4986, 0.0
      %v5115 = vmax.f32 %v4987, 0.0
      %v5116 = vmax.f32 %v4988, 0.0
      %v5117 = vmax.f32 %v4989, 0.0
      %v5118 = vmax.f32 %v4990, 0.0
      %v5119 = vmax.f32 %v4991, 0.0
      %v5120 = vmax.f32 %v4992, 0.0
      %v5121 = vmax.f32 %v4993, 0.0
      %v5122 = vmax.f32 %v4994, 0.0
      %v5123 = vmax.f32 %v4995, 0.0
      %v5124 = vmax.f32 %v4996, 0.0
      %v5125 = vmax.f32 %v4997, 0.0
      %v5126 = vmax.f32 %v4998, 0.0
      %v5127 = vmax.f32 %v4999, 0.0
      %v5128 = vmax.f32 %v5000, 0.0
      %v5129 = vmax.f32 %v5001, 0.0
      %v5130 = vmax.f32 %v5002, 0.0
      %v5131 = vmax.f32 %v5003, 0.0
      %v5132 = vmax.f32 %v5004, 0.0
      %v5133 = vmax.f32 %v5005, 0.0
      %v5134 = vmax.f32 %v5006, 0.0
      %v5135 = vmax.f32 %v5007, 0.0
      %v5136 = vmax.f32 %v5008, 0.0
      %v5137 = vmax.f32 %v5009, 0.0
      %v5138 = vmax.f32 %v5010, 0.0
      %v5139 = vmax.f32 %v5011, 0.0
      %v5140 = vmax.f32 %v5012, 0.0
      %v5141 = vmax.f32 %v5013, 0.0
      %v5142 = vmax.f32 %v5014, 0.0
      %v5143 = vmax.f32 %v5015, 0.0
      %v5144 = vmax.f32 %v5016, 0.0
      %v5145 = vmax.f32 %v5017, 0.0
      %v5146 = vmax.f32 %v5018, 0.0
      %v5147 = vmax.f32 %v5019, 0.0
      %v5148 = vmax.f32 %v5020, 0.0
      %v5149 = vmax.f32 %v5021, 0.0
      %v5150 = vmax.f32 %v5022, 0.0
      %v5151 = vmax.f32 %v5023, 0.0
      %v5152 = vmax.f32 %v5024, 0.0
      %v5153 = vmax.f32 %v5025, 0.0
      %v5154 = vmax.f32 %v5026, 0.0
      %v5155 = vpack.c.bf16 %v5029, %v5027
      %v5156 = vpack.c.bf16 %v5030, %v5028
      %v5157 = vpack.c.bf16 %v5033, %v5031
      %v5158 = vpack.c.bf16 %v5034, %v5032
      %v5159 = vpack.c.bf16 %v5037, %v5035
      %v5160 = vpack.c.bf16 %v5038, %v5036
      %v5161 = vpack.c.bf16 %v5041, %v5039
      %v5162 = vpack.c.bf16 %v5042, %v5040
      %v5163 = vpack.c.bf16 %v5045, %v5043
      %v5164 = vpack.c.bf16 %v5046, %v5044
      %v5165 = vpack.c.bf16 %v5049, %v5047
      %v5166 = vpack.c.bf16 %v5050, %v5048
      %v5167 = vpack.c.bf16 %v5053, %v5051
      %v5168 = vpack.c.bf16 %v5054, %v5052
      %v5169 = vpack.c.bf16 %v5057, %v5055
      %v5170 = vpack.c.bf16 %v5058, %v5056
      %v5171 = vpack.c.bf16 %v5061, %v5059
      %v5172 = vpack.c.bf16 %v5062, %v5060
      %v5173 = vpack.c.bf16 %v5065, %v5063
      %v5174 = vpack.c.bf16 %v5066, %v5064
      %v5175 = vpack.c.bf16 %v5069, %v5067
      %v5176 = vpack.c.bf16 %v5070, %v5068
      %v5177 = vpack.c.bf16 %v5073, %v5071
      %v5178 = vpack.c.bf16 %v5074, %v5072
      %v5179 = vpack.c.bf16 %v5077, %v5075
      %v5180 = vpack.c.bf16 %v5078, %v5076
      %v5181 = vpack.c.bf16 %v5081, %v5079
      %v5182 = vpack.c.bf16 %v5082, %v5080
      %v5183 = vpack.c.bf16 %v5085, %v5083
      %v5184 = vpack.c.bf16 %v5086, %v5084
      %v5185 = vpack.c.bf16 %v5089, %v5087
      %v5186 = vpack.c.bf16 %v5090, %v5088
      %v5187 = vpack.c.bf16 %v5093, %v5091
      %v5188 = vpack.c.bf16 %v5094, %v5092
      %v5189 = vpack.c.bf16 %v5097, %v5095
      %v5190 = vpack.c.bf16 %v5098, %v5096
      %v5191 = vpack.c.bf16 %v5101, %v5099
      %v5192 = vpack.c.bf16 %v5102, %v5100
      %v5193 = vpack.c.bf16 %v5105, %v5103
      %v5194 = vpack.c.bf16 %v5106, %v5104
      %v5195 = vpack.c.bf16 %v5109, %v5107
      %v5196 = vpack.c.bf16 %v5110, %v5108
      %v5197 = vpack.c.bf16 %v5113, %v5111
      %v5198 = vpack.c.bf16 %v5114, %v5112
      %v5199 = vpack.c.bf16 %v5117, %v5115
      %v5200 = vpack.c.bf16 %v5118, %v5116
      %v5201 = vpack.c.bf16 %v5121, %v5119
      %v5202 = vpack.c.bf16 %v5122, %v5120
      %v5203 = vpack.c.bf16 %v5125, %v5123
      %v5204 = vpack.c.bf16 %v5126, %v5124
      %v5205 = vpack.c.bf16 %v5129, %v5127
      %v5206 = vpack.c.bf16 %v5130, %v5128
      %v5207 = vpack.c.bf16 %v5133, %v5131
      %v5208 = vpack.c.bf16 %v5134, %v5132
      %v5209 = vpack.c.bf16 %v5137, %v5135
      %v5210 = vpack.c.bf16 %v5138, %v5136
      %v5211 = vpack.c.bf16 %v5141, %v5139
      %v5212 = vpack.c.bf16 %v5142, %v5140
      %v5213 = vpack.c.bf16 %v5145, %v5143
      %v5214 = vpack.c.bf16 %v5146, %v5144
      %v5215 = vpack.c.bf16 %v5149, %v5147
      %v5216 = vpack.c.bf16 %v5150, %v5148
      %v5217 = vpack.c.bf16 %v5153, %v5151
      %v5218 = vpack.c.bf16 %v5154, %v5152
      %v5219 = vld [vmem:[%s8] sm:$0xff]
      %v5220 = vld [vmem:[%s8 + $0x8] sm:$0xff]
      %v5221 = vld [vmem:[%s8 + $0x10] sm:$0xff]
      %v5222 = vld [vmem:[%s8 + $0x18] sm:$0xff]
      %v5223 = vld [vmem:[%s8 + $0x20] sm:$0xff]
      %v5224 = vld [vmem:[%s8 + $0x28] sm:$0xff]
      %v5225 = vld [vmem:[%s8 + $0x30] sm:$0xff]
      %v5226 = vld [vmem:[%s8 + $0x38] sm:$0xff]
      %v5227 = vld [vmem:[%s8 + $0x40] sm:$0xff]
      %v5228 = vld [vmem:[%s8 + $0x48] sm:$0xff]
      %v5229 = vld [vmem:[%s8 + $0x50] sm:$0xff]
      %v5230 = vld [vmem:[%s8 + $0x58] sm:$0xff]
      %v5231 = vld [vmem:[%s8 + $0x60] sm:$0xff]
      %v5232 = vld [vmem:[%s8 + $0x68] sm:$0xff]
      %v5233 = vld [vmem:[%s8 + $0x70] sm:$0xff]
      %v5234 = vld [vmem:[%s8 + $0x78] sm:$0xff]
      %v5235 = vld [vmem:[%s8 + $0x80] sm:$0xff]
      %v5236 = vld [vmem:[%s8 + $0x88] sm:$0xff]
      %v5237 = vld [vmem:[%s8 + $0x90] sm:$0xff]
      %v5238 = vld [vmem:[%s8 + $0x98] sm:$0xff]
      %v5239 = vld [vmem:[%s8 + $0xa0] sm:$0xff]
      %v5240 = vld [vmem:[%s8 + $0xa8] sm:$0xff]
      %v5241 = vld [vmem:[%s8 + $0xb0] sm:$0xff]
      %v5242 = vld [vmem:[%s8 + $0xb8] sm:$0xff]
      %v5243 = vld [vmem:[%s8 + $0xc0] sm:$0xff]
      %v5244 = vld [vmem:[%s8 + $0xc8] sm:$0xff]
      %v5245 = vld [vmem:[%s8 + $0xd0] sm:$0xff]
      %v5246 = vld [vmem:[%s8 + $0xd8] sm:$0xff]
      %v5247 = vld [vmem:[%s8 + $0xe0] sm:$0xff]
      %v5248 = vld [vmem:[%s8 + $0xe8] sm:$0xff]
      %v5249 = vld [vmem:[%s8 + $0xf0] sm:$0xff]
      %v5250 = vld [vmem:[%s8 + $0xf8] sm:$0xff]
      %v5251 = vld [vmem:[%s9] sm:$0x3]
      %v5253 = vperm.slane %v5251, 0
      %v5254 = vperm.slane %v5251, 1
      %v5289 = vunpack.c.l.b16 %v5219
      %v5290 = vunpack.c.h.b16 %v5219
      %v5291 = vunpack.c.l.b16 %v5220
      %v5292 = vunpack.c.h.b16 %v5220
      %v5293 = vunpack.c.l.b16 %v5221
      %v5294 = vunpack.c.h.b16 %v5221
      %v5295 = vunpack.c.l.b16 %v5222
      %v5296 = vunpack.c.h.b16 %v5222
      %v5297 = vunpack.c.l.b16 %v5223
      %v5298 = vunpack.c.h.b16 %v5223
      %v5299 = vunpack.c.l.b16 %v5224
      %v5300 = vunpack.c.h.b16 %v5224
      %v5301 = vunpack.c.l.b16 %v5225
      %v5302 = vunpack.c.h.b16 %v5225
      %v5303 = vunpack.c.l.b16 %v5226
      %v5304 = vunpack.c.h.b16 %v5226
      %v5305 = vunpack.c.l.b16 %v5227
      %v5306 = vunpack.c.h.b16 %v5227
      %v5307 = vunpack.c.l.b16 %v5228
      %v5308 = vunpack.c.h.b16 %v5228
      %v5309 = vunpack.c.l.b16 %v5229
      %v5310 = vunpack.c.h.b16 %v5229
      %v5311 = vunpack.c.l.b16 %v5230
      %v5312 = vunpack.c.h.b16 %v5230
      %v5313 = vunpack.c.l.b16 %v5231
      %v5314 = vunpack.c.h.b16 %v5231
      %v5315 = vunpack.c.l.b16 %v5232
      %v5316 = vunpack.c.h.b16 %v5232
      %v5317 = vunpack.c.l.b16 %v5233
      %v5318 = vunpack.c.h.b16 %v5233
      %v5319 = vunpack.c.l.b16 %v5234
      %v5320 = vunpack.c.h.b16 %v5234
      %v5321 = vunpack.c.l.b16 %v5235
      %v5322 = vunpack.c.h.b16 %v5235
      %v5323 = vunpack.c.l.b16 %v5236
      %v5324 = vunpack.c.h.b16 %v5236
      %v5325 = vunpack.c.l.b16 %v5237
      %v5326 = vunpack.c.h.b16 %v5237
      %v5327 = vunpack.c.l.b16 %v5238
      %v5328 = vunpack.c.h.b16 %v5238
      %v5329 = vunpack.c.l.b16 %v5239
      %v5330 = vunpack.c.h.b16 %v5239
      %v5331 = vunpack.c.l.b16 %v5240
      %v5332 = vunpack.c.h.b16 %v5240
      %v5333 = vunpack.c.l.b16 %v5241
      %v5334 = vunpack.c.h.b16 %v5241
      %v5335 = vunpack.c.l.b16 %v5242
      %v5336 = vunpack.c.h.b16 %v5242
      %v5337 = vunpack.c.l.b16 %v5243
      %v5338 = vunpack.c.h.b16 %v5243
      %v5339 = vunpack.c.l.b16 %v5244
      %v5340 = vunpack.c.h.b16 %v5244
      %v5341 = vunpack.c.l.b16 %v5245
      %v5342 = vunpack.c.h.b16 %v5245
      %v5343 = vunpack.c.l.b16 %v5246
      %v5344 = vunpack.c.h.b16 %v5246
      %v5345 = vunpack.c.l.b16 %v5247
      %v5346 = vunpack.c.h.b16 %v5247
      %v5347 = vunpack.c.l.b16 %v5248
      %v5348 = vunpack.c.h.b16 %v5248
      %v5349 = vunpack.c.l.b16 %v5249
      %v5350 = vunpack.c.h.b16 %v5249
      %v5351 = vunpack.c.l.b16 %v5250
      %v5352 = vunpack.c.h.b16 %v5250
      %v5353 = vpack.c.b16 %v5291, %v5289
      %v5354 = vpack.c.b16 %v5292, %v5290
      %v5355 = vpack.c.b16 %v5295, %v5293
      %v5356 = vpack.c.b16 %v5296, %v5294
      %v5357 = vpack.c.b16 %v5299, %v5297
      %v5358 = vpack.c.b16 %v5300, %v5298
      %v5359 = vpack.c.b16 %v5303, %v5301
      %v5360 = vpack.c.b16 %v5304, %v5302
      %v5361 = vpack.c.b16 %v5307, %v5305
      %v5362 = vpack.c.b16 %v5308, %v5306
      %v5363 = vpack.c.b16 %v5311, %v5309
      %v5364 = vpack.c.b16 %v5312, %v5310
      %v5365 = vpack.c.b16 %v5315, %v5313
      %v5366 = vpack.c.b16 %v5316, %v5314
      %v5367 = vpack.c.b16 %v5319, %v5317
      %v5368 = vpack.c.b16 %v5320, %v5318
      %v5369 = vpack.c.b16 %v5323, %v5321
      %v5370 = vpack.c.b16 %v5324, %v5322
      %v5371 = vpack.c.b16 %v5327, %v5325
      %v5372 = vpack.c.b16 %v5328, %v5326
      %v5373 = vpack.c.b16 %v5331, %v5329
      %v5374 = vpack.c.b16 %v5332, %v5330
      %v5375 = vpack.c.b16 %v5335, %v5333
      %v5376 = vpack.c.b16 %v5336, %v5334
      %v5377 = vpack.c.b16 %v5339, %v5337
      %v5378 = vpack.c.b16 %v5340, %v5338
      %v5379 = vpack.c.b16 %v5343, %v5341
      %v5380 = vpack.c.b16 %v5344, %v5342
      %v5381 = vpack.c.b16 %v5347, %v5345
      %v5382 = vpack.c.b16 %v5348, %v5346
      %v5383 = vpack.c.b16 %v5351, %v5349
      %v5384 = vpack.c.b16 %v5352, %v5350
      %5417 = vmatpush.bf16.msra.mxu0 %v5367
      %5418 = vmatpush.bf16.msra.mxu0 %v5365
      %5419 = vmatpush.bf16.msra.mxu0 %v5363
      %5420 = vmatpush.bf16.msra.mxu0 %v5361
      %5421 = vmatpush.bf16.msra.mxu0 %v5359
      %5422 = vmatpush.bf16.msra.mxu0 %v5357
      %5423 = vmatpush.bf16.msra.mxu0 %v5355
      %5424 = vmatpush.bf16.msra.mxu0 %v5353
      %5425 = vmatmul.bf16.gmra.mxu0 %v5155
      %v5426 = vpop.f32.mrf.mxu0
      %v5427 = vadd.f32 %v5253, %v5426
      %v5428 = vpop.f32.mrf.mxu0
      %v5429 = vadd.f32 %v5253, %v5428
      %5430 = vmatmul.bf16.gmra.mxu0 %v5157
      %v5431 = vpop.f32.mrf.mxu0
      %v5432 = vadd.f32 %v5253, %v5431
      %v5433 = vpop.f32.mrf.mxu0
      %v5434 = vadd.f32 %v5253, %v5433
      %5435 = vmatmul.bf16.gmra.mxu0 %v5159
      %v5436 = vpop.f32.mrf.mxu0
      %v5437 = vadd.f32 %v5253, %v5436
      %v5438 = vpop.f32.mrf.mxu0
      %v5439 = vadd.f32 %v5253, %v5438
      %5440 = vmatmul.bf16.gmra.mxu0 %v5161
      %v5441 = vpop.f32.mrf.mxu0
      %v5442 = vadd.f32 %v5253, %v5441
      %v5443 = vpop.f32.mrf.mxu0
      %v5444 = vadd.f32 %v5253, %v5443
      %5445 = vmatmul.bf16.gmra.mxu0 %v5163
      %v5446 = vpop.f32.mrf.mxu0
      %v5447 = vadd.f32 %v5253, %v5446
      %v5448 = vpop.f32.mrf.mxu0
      %v5449 = vadd.f32 %v5253, %v5448
      %5450 = vmatmul.bf16.gmra.mxu0 %v5165
      %v5451 = vpop.f32.mrf.mxu0
      %v5452 = vadd.f32 %v5253, %v5451
      %v5453 = vpop.f32.mrf.mxu0
      %v5454 = vadd.f32 %v5253, %v5453
      %5455 = vmatmul.bf16.gmra.mxu0 %v5167
      %v5456 = vpop.f32.mrf.mxu0
      %v5457 = vadd.f32 %v5253, %v5456
      %v5458 = vpop.f32.mrf.mxu0
      %v5459 = vadd.f32 %v5253, %v5458
      %5460 = vmatmul.bf16.gmra.mxu0 %v5169
      %v5461 = vpop.f32.mrf.mxu0
      %v5462 = vadd.f32 %v5253, %v5461
      %v5463 = vpop.f32.mrf.mxu0
      %v5464 = vadd.f32 %v5253, %v5463
      %5465 = vmatmul.bf16.gmra.mxu0 %v5171
      %v5466 = vpop.f32.mrf.mxu0
      %v5467 = vadd.f32 %v5253, %v5466
      %v5468 = vpop.f32.mrf.mxu0
      %v5469 = vadd.f32 %v5253, %v5468
      %5470 = vmatmul.bf16.gmra.mxu0 %v5173
      %v5471 = vpop.f32.mrf.mxu0
      %v5472 = vadd.f32 %v5253, %v5471
      %v5473 = vpop.f32.mrf.mxu0
      %v5474 = vadd.f32 %v5253, %v5473
      %5475 = vmatmul.bf16.gmra.mxu0 %v5175
      %v5476 = vpop.f32.mrf.mxu0
      %v5477 = vadd.f32 %v5253, %v5476
      %v5478 = vpop.f32.mrf.mxu0
      %v5479 = vadd.f32 %v5253, %v5478
      %5480 = vmatmul.bf16.gmra.mxu0 %v5177
      %v5481 = vpop.f32.mrf.mxu0
      %v5482 = vadd.f32 %v5253, %v5481
      %v5483 = vpop.f32.mrf.mxu0
      %v5484 = vadd.f32 %v5253, %v5483
      %5485 = vmatmul.bf16.gmra.mxu0 %v5179
      %v5486 = vpop.f32.mrf.mxu0
      %v5487 = vadd.f32 %v5253, %v5486
      %v5488 = vpop.f32.mrf.mxu0
      %v5489 = vadd.f32 %v5253, %v5488
      %5490 = vmatmul.bf16.gmra.mxu0 %v5181
      %v5491 = vpop.f32.mrf.mxu0
      %v5492 = vadd.f32 %v5253, %v5491
      %v5493 = vpop.f32.mrf.mxu0
      %v5494 = vadd.f32 %v5253, %v5493
      %5495 = vmatmul.bf16.gmra.mxu0 %v5183
      %v5496 = vpop.f32.mrf.mxu0
      %v5497 = vadd.f32 %v5253, %v5496
      %v5498 = vpop.f32.mrf.mxu0
      %v5499 = vadd.f32 %v5253, %v5498
      %5500 = vmatmul.bf16.gmra.mxu0 %v5185
      %v5501 = vpop.f32.mrf.mxu0
      %v5502 = vadd.f32 %v5253, %v5501
      %v5503 = vpop.f32.mrf.mxu0
      %v5504 = vadd.f32 %v5253, %v5503
      %5505 = vmatmul.bf16.gmra.mxu0 %v5187
      %v5506 = vpop.f32.mrf.mxu0
      %v5507 = vadd.f32 %v5253, %v5506
      %v5508 = vpop.f32.mrf.mxu0
      %v5509 = vadd.f32 %v5253, %v5508
      %5510 = vmatmul.bf16.gmra.mxu0 %v5189
      %v5511 = vpop.f32.mrf.mxu0
      %v5512 = vadd.f32 %v5253, %v5511
      %v5513 = vpop.f32.mrf.mxu0
      %v5514 = vadd.f32 %v5253, %v5513
      %5515 = vmatmul.bf16.gmra.mxu0 %v5191
      %v5516 = vpop.f32.mrf.mxu0
      %v5517 = vadd.f32 %v5253, %v5516
      %v5518 = vpop.f32.mrf.mxu0
      %v5519 = vadd.f32 %v5253, %v5518
      %5520 = vmatmul.bf16.gmra.mxu0 %v5193
      %v5521 = vpop.f32.mrf.mxu0
      %v5522 = vadd.f32 %v5253, %v5521
      %v5523 = vpop.f32.mrf.mxu0
      %v5524 = vadd.f32 %v5253, %v5523
      %5525 = vmatmul.bf16.gmra.mxu0 %v5195
      %v5526 = vpop.f32.mrf.mxu0
      %v5527 = vadd.f32 %v5253, %v5526
      %v5528 = vpop.f32.mrf.mxu0
      %v5529 = vadd.f32 %v5253, %v5528
      %5530 = vmatmul.bf16.gmra.mxu0 %v5197
      %v5531 = vpop.f32.mrf.mxu0
      %v5532 = vadd.f32 %v5253, %v5531
      %v5533 = vpop.f32.mrf.mxu0
      %v5534 = vadd.f32 %v5253, %v5533
      %5535 = vmatmul.bf16.gmra.mxu0 %v5199
      %v5536 = vpop.f32.mrf.mxu0
      %v5537 = vadd.f32 %v5253, %v5536
      %v5538 = vpop.f32.mrf.mxu0
      %v5539 = vadd.f32 %v5253, %v5538
      %5540 = vmatmul.bf16.gmra.mxu0 %v5201
      %v5541 = vpop.f32.mrf.mxu0
      %v5542 = vadd.f32 %v5253, %v5541
      %v5543 = vpop.f32.mrf.mxu0
      %v5544 = vadd.f32 %v5253, %v5543
      %5545 = vmatmul.bf16.gmra.mxu0 %v5203
      %v5546 = vpop.f32.mrf.mxu0
      %v5547 = vadd.f32 %v5253, %v5546
      %v5548 = vpop.f32.mrf.mxu0
      %v5549 = vadd.f32 %v5253, %v5548
      %5550 = vmatmul.bf16.gmra.mxu0 %v5205
      %v5551 = vpop.f32.mrf.mxu0
      %v5552 = vadd.f32 %v5253, %v5551
      %v5553 = vpop.f32.mrf.mxu0
      %v5554 = vadd.f32 %v5253, %v5553
      %5555 = vmatmul.bf16.gmra.mxu0 %v5207
      %v5556 = vpop.f32.mrf.mxu0
      %v5557 = vadd.f32 %v5253, %v5556
      %v5558 = vpop.f32.mrf.mxu0
      %v5559 = vadd.f32 %v5253, %v5558
      %5560 = vmatmul.bf16.gmra.mxu0 %v5209
      %v5561 = vpop.f32.mrf.mxu0
      %v5562 = vadd.f32 %v5253, %v5561
      %v5563 = vpop.f32.mrf.mxu0
      %v5564 = vadd.f32 %v5253, %v5563
      %5565 = vmatmul.bf16.gmra.mxu0 %v5211
      %v5566 = vpop.f32.mrf.mxu0
      %v5567 = vadd.f32 %v5253, %v5566
      %v5568 = vpop.f32.mrf.mxu0
      %v5569 = vadd.f32 %v5253, %v5568
      %5570 = vmatmul.bf16.gmra.mxu0 %v5213
      %v5571 = vpop.f32.mrf.mxu0
      %v5572 = vadd.f32 %v5253, %v5571
      %v5573 = vpop.f32.mrf.mxu0
      %v5574 = vadd.f32 %v5253, %v5573
      %5575 = vmatmul.bf16.gmra.mxu0 %v5215
      %v5576 = vpop.f32.mrf.mxu0
      %v5577 = vadd.f32 %v5253, %v5576
      %v5578 = vpop.f32.mrf.mxu0
      %v5579 = vadd.f32 %v5253, %v5578
      %5580 = vmatmul.bf16.gmra.mxu0 %v5217
      %v5581 = vpop.f32.mrf.mxu0
      %v5582 = vadd.f32 %v5253, %v5581
      %v5583 = vpop.f32.mrf.mxu0
      %v5584 = vadd.f32 %v5253, %v5583
      %5585 = vdwg.mxu0
      %5586 = vmatpush.bf16.msra.mxu0 %v5383
      %5587 = vmatpush.bf16.msra.mxu0 %v5381
      %5588 = vmatpush.bf16.msra.mxu0 %v5379
      %5589 = vmatpush.bf16.msra.mxu0 %v5377
      %5590 = vmatpush.bf16.msra.mxu0 %v5375
      %5591 = vmatpush.bf16.msra.mxu0 %v5373
      %5592 = vmatpush.bf16.msra.mxu0 %v5371
      %5593 = vmatpush.bf16.msra.mxu0 %v5369
      %5594 = vmatmul.bf16.gmra.mxu0 %v5156
      %v5595 = vpop.f32.mrf.mxu0
      %v5596 = vadd.f32 %v5427, %v5595
      %v5597 = vpop.f32.mrf.mxu0
      %v5598 = vadd.f32 %v5429, %v5597
      %5599 = vmatmul.bf16.gmra.mxu0 %v5158
      %v5600 = vpop.f32.mrf.mxu0
      %v5601 = vadd.f32 %v5432, %v5600
      %v5602 = vpop.f32.mrf.mxu0
      %v5603 = vadd.f32 %v5434, %v5602
      %5604 = vmatmul.bf16.gmra.mxu0 %v5160
      %v5605 = vpop.f32.mrf.mxu0
      %v5606 = vadd.f32 %v5437, %v5605
      %v5607 = vpop.f32.mrf.mxu0
      %v5608 = vadd.f32 %v5439, %v5607
      %5609 = vmatmul.bf16.gmra.mxu0 %v5162
      %v5610 = vpop.f32.mrf.mxu0
      %v5611 = vadd.f32 %v5442, %v5610
      %v5612 = vpop.f32.mrf.mxu0
      %v5613 = vadd.f32 %v5444, %v5612
      %5614 = vmatmul.bf16.gmra.mxu0 %v5164
      %v5615 = vpop.f32.mrf.mxu0
      %v5616 = vadd.f32 %v5447, %v5615
      %v5617 = vpop.f32.mrf.mxu0
      %v5618 = vadd.f32 %v5449, %v5617
      %5619 = vmatmul.bf16.gmra.mxu0 %v5166
      %v5620 = vpop.f32.mrf.mxu0
      %v5621 = vadd.f32 %v5452, %v5620
      %v5622 = vpop.f32.mrf.mxu0
      %v5623 = vadd.f32 %v5454, %v5622
      %5624 = vmatmul.bf16.gmra.mxu0 %v5168
      %v5625 = vpop.f32.mrf.mxu0
      %v5626 = vadd.f32 %v5457, %v5625
      %v5627 = vpop.f32.mrf.mxu0
      %v5628 = vadd.f32 %v5459, %v5627
      %5629 = vmatmul.bf16.gmra.mxu0 %v5170
      %v5630 = vpop.f32.mrf.mxu0
      %v5631 = vadd.f32 %v5462, %v5630
      %v5632 = vpop.f32.mrf.mxu0
      %v5633 = vadd.f32 %v5464, %v5632
      %5634 = vmatmul.bf16.gmra.mxu0 %v5172
      %v5635 = vpop.f32.mrf.mxu0
      %v5636 = vadd.f32 %v5467, %v5635
      %v5637 = vpop.f32.mrf.mxu0
      %v5638 = vadd.f32 %v5469, %v5637
      %5639 = vmatmul.bf16.gmra.mxu0 %v5174
      %v5640 = vpop.f32.mrf.mxu0
      %v5641 = vadd.f32 %v5472, %v5640
      %v5642 = vpop.f32.mrf.mxu0
      %v5643 = vadd.f32 %v5474, %v5642
      %5644 = vmatmul.bf16.gmra.mxu0 %v5176
      %v5645 = vpop.f32.mrf.mxu0
      %v5646 = vadd.f32 %v5477, %v5645
      %v5647 = vpop.f32.mrf.mxu0
      %v5648 = vadd.f32 %v5479, %v5647
      %5649 = vmatmul.bf16.gmra.mxu0 %v5178
      %v5650 = vpop.f32.mrf.mxu0
      %v5651 = vadd.f32 %v5482, %v5650
      %v5652 = vpop.f32.mrf.mxu0
      %v5653 = vadd.f32 %v5484, %v5652
      %5654 = vmatmul.bf16.gmra.mxu0 %v5180
      %v5655 = vpop.f32.mrf.mxu0
      %v5656 = vadd.f32 %v5487, %v5655
      %v5657 = vpop.f32.mrf.mxu0
      %v5658 = vadd.f32 %v5489, %v5657
      %5659 = vmatmul.bf16.gmra.mxu0 %v5182
      %v5660 = vpop.f32.mrf.mxu0
      %v5661 = vadd.f32 %v5492, %v5660
      %v5662 = vpop.f32.mrf.mxu0
      %v5663 = vadd.f32 %v5494, %v5662
      %5664 = vmatmul.bf16.gmra.mxu0 %v5184
      %v5665 = vpop.f32.mrf.mxu0
      %v5666 = vadd.f32 %v5497, %v5665
      %v5667 = vpop.f32.mrf.mxu0
      %v5668 = vadd.f32 %v5499, %v5667
      %5669 = vmatmul.bf16.gmra.mxu0 %v5186
      %v5670 = vpop.f32.mrf.mxu0
      %v5671 = vadd.f32 %v5502, %v5670
      %v5672 = vpop.f32.mrf.mxu0
      %v5673 = vadd.f32 %v5504, %v5672
      %5674 = vmatmul.bf16.gmra.mxu0 %v5188
      %v5675 = vpop.f32.mrf.mxu0
      %v5676 = vadd.f32 %v5507, %v5675
      %v5677 = vpop.f32.mrf.mxu0
      %v5678 = vadd.f32 %v5509, %v5677
      %5679 = vmatmul.bf16.gmra.mxu0 %v5190
      %v5680 = vpop.f32.mrf.mxu0
      %v5681 = vadd.f32 %v5512, %v5680
      %v5682 = vpop.f32.mrf.mxu0
      %v5683 = vadd.f32 %v5514, %v5682
      %5684 = vmatmul.bf16.gmra.mxu0 %v5192
      %v5685 = vpop.f32.mrf.mxu0
      %v5686 = vadd.f32 %v5517, %v5685
      %v5687 = vpop.f32.mrf.mxu0
      %v5688 = vadd.f32 %v5519, %v5687
      %5689 = vmatmul.bf16.gmra.mxu0 %v5194
      %v5690 = vpop.f32.mrf.mxu0
      %v5691 = vadd.f32 %v5522, %v5690
      %v5692 = vpop.f32.mrf.mxu0
      %v5693 = vadd.f32 %v5524, %v5692
      %5694 = vmatmul.bf16.gmra.mxu0 %v5196
      %v5695 = vpop.f32.mrf.mxu0
      %v5696 = vadd.f32 %v5527, %v5695
      %v5697 = vpop.f32.mrf.mxu0
      %v5698 = vadd.f32 %v5529, %v5697
      %5699 = vmatmul.bf16.gmra.mxu0 %v5198
      %v5700 = vpop.f32.mrf.mxu0
      %v5701 = vadd.f32 %v5532, %v5700
      %v5702 = vpop.f32.mrf.mxu0
      %v5703 = vadd.f32 %v5534, %v5702
      %5704 = vmatmul.bf16.gmra.mxu0 %v5200
      %v5705 = vpop.f32.mrf.mxu0
      %v5706 = vadd.f32 %v5537, %v5705
      %v5707 = vpop.f32.mrf.mxu0
      %v5708 = vadd.f32 %v5539, %v5707
      %5709 = vmatmul.bf16.gmra.mxu0 %v5202
      %v5710 = vpop.f32.mrf.mxu0
      %v5711 = vadd.f32 %v5542, %v5710
      %v5712 = vpop.f32.mrf.mxu0
      %v5713 = vadd.f32 %v5544, %v5712
      %5714 = vmatmul.bf16.gmra.mxu0 %v5204
      %v5715 = vpop.f32.mrf.mxu0
      %v5716 = vadd.f32 %v5547, %v5715
      %v5717 = vpop.f32.mrf.mxu0
      %v5718 = vadd.f32 %v5549, %v5717
      %5719 = vmatmul.bf16.gmra.mxu0 %v5206
      %v5720 = vpop.f32.mrf.mxu0
      %v5721 = vadd.f32 %v5552, %v5720
      %v5722 = vpop.f32.mrf.mxu0
      %v5723 = vadd.f32 %v5554, %v5722
      %5724 = vmatmul.bf16.gmra.mxu0 %v5208
      %v5725 = vpop.f32.mrf.mxu0
      %v5726 = vadd.f32 %v5557, %v5725
      %v5727 = vpop.f32.mrf.mxu0
      %v5728 = vadd.f32 %v5559, %v5727
      %5729 = vmatmul.bf16.gmra.mxu0 %v5210
      %v5730 = vpop.f32.mrf.mxu0
      %v5731 = vadd.f32 %v5562, %v5730
      %v5732 = vpop.f32.mrf.mxu0
      %v5733 = vadd.f32 %v5564, %v5732
      %5734 = vmatmul.bf16.gmra.mxu0 %v5212
      %v5735 = vpop.f32.mrf.mxu0
      %v5736 = vadd.f32 %v5567, %v5735
      %v5737 = vpop.f32.mrf.mxu0
      %v5738 = vadd.f32 %v5569, %v5737
      %5739 = vmatmul.bf16.gmra.mxu0 %v5214
      %v5740 = vpop.f32.mrf.mxu0
      %v5741 = vadd.f32 %v5572, %v5740
      %v5742 = vpop.f32.mrf.mxu0
      %v5743 = vadd.f32 %v5574, %v5742
      %5744 = vmatmul.bf16.gmra.mxu0 %v5216
      %v5745 = vpop.f32.mrf.mxu0
      %v5746 = vadd.f32 %v5577, %v5745
      %v5747 = vpop.f32.mrf.mxu0
      %v5748 = vadd.f32 %v5579, %v5747
      %5749 = vmatmul.bf16.gmra.mxu0 %v5218
      %v5750 = vpop.f32.mrf.mxu0
      %v5751 = vadd.f32 %v5582, %v5750
      %v5752 = vpop.f32.mrf.mxu0
      %v5753 = vadd.f32 %v5584, %v5752
      %5754 = vdwg.mxu0
      %5755 = vmatpush.bf16.msra.mxu0 %v5368
      %5756 = vmatpush.bf16.msra.mxu0 %v5366
      %5757 = vmatpush.bf16.msra.mxu0 %v5364
      %5758 = vmatpush.bf16.msra.mxu0 %v5362
      %5759 = vmatpush.bf16.msra.mxu0 %v5360
      %5760 = vmatpush.bf16.msra.mxu0 %v5358
      %5761 = vmatpush.bf16.msra.mxu0 %v5356
      %5762 = vmatpush.bf16.msra.mxu0 %v5354
      %5763 = vmatmul.bf16.gmra.mxu0 %v5155
      %v5764 = vpop.f32.mrf.mxu0
      %v5765 = vadd.f32 %v5254, %v5764
      %v5766 = vpop.f32.mrf.mxu0
      %v5767 = vadd.f32 %v5254, %v5766
      %5768 = vmatmul.bf16.gmra.mxu0 %v5157
      %v5769 = vpop.f32.mrf.mxu0
      %v5770 = vadd.f32 %v5254, %v5769
      %v5771 = vpop.f32.mrf.mxu0
      %v5772 = vadd.f32 %v5254, %v5771
      %5773 = vmatmul.bf16.gmra.mxu0 %v5159
      %v5774 = vpop.f32.mrf.mxu0
      %v5775 = vadd.f32 %v5254, %v5774
      %v5776 = vpop.f32.mrf.mxu0
      %v5777 = vadd.f32 %v5254, %v5776
      %5778 = vmatmul.bf16.gmra.mxu0 %v5161
      %v5779 = vpop.f32.mrf.mxu0
      %v5780 = vadd.f32 %v5254, %v5779
      %v5781 = vpop.f32.mrf.mxu0
      %v5782 = vadd.f32 %v5254, %v5781
      %5783 = vmatmul.bf16.gmra.mxu0 %v5163
      %v5784 = vpop.f32.mrf.mxu0
      %v5785 = vadd.f32 %v5254, %v5784
      %v5786 = vpop.f32.mrf.mxu0
      %v5787 = vadd.f32 %v5254, %v5786
      %5788 = vmatmul.bf16.gmra.mxu0 %v5165
      %v5789 = vpop.f32.mrf.mxu0
      %v5790 = vadd.f32 %v5254, %v5789
      %v5791 = vpop.f32.mrf.mxu0
      %v5792 = vadd.f32 %v5254, %v5791
      %5793 = vmatmul.bf16.gmra.mxu0 %v5167
      %v5794 = vpop.f32.mrf.mxu0
      %v5795 = vadd.f32 %v5254, %v5794
      %v5796 = vpop.f32.mrf.mxu0
      %v5797 = vadd.f32 %v5254, %v5796
      %5798 = vmatmul.bf16.gmra.mxu0 %v5169
      %v5799 = vpop.f32.mrf.mxu0
      %v5800 = vadd.f32 %v5254, %v5799
      %v5801 = vpop.f32.mrf.mxu0
      %v5802 = vadd.f32 %v5254, %v5801
      %5803 = vmatmul.bf16.gmra.mxu0 %v5171
      %v5804 = vpop.f32.mrf.mxu0
      %v5805 = vadd.f32 %v5254, %v5804
      %v5806 = vpop.f32.mrf.mxu0
      %v5807 = vadd.f32 %v5254, %v5806
      %5808 = vmatmul.bf16.gmra.mxu0 %v5173
      %v5809 = vpop.f32.mrf.mxu0
      %v5810 = vadd.f32 %v5254, %v5809
      %v5811 = vpop.f32.mrf.mxu0
      %v5812 = vadd.f32 %v5254, %v5811
      %5813 = vmatmul.bf16.gmra.mxu0 %v5175
      %v5814 = vpop.f32.mrf.mxu0
      %v5815 = vadd.f32 %v5254, %v5814
      %v5816 = vpop.f32.mrf.mxu0
      %v5817 = vadd.f32 %v5254, %v5816
      %5818 = vmatmul.bf16.gmra.mxu0 %v5177
      %v5819 = vpop.f32.mrf.mxu0
      %v5820 = vadd.f32 %v5254, %v5819
      %v5821 = vpop.f32.mrf.mxu0
      %v5822 = vadd.f32 %v5254, %v5821
      %5823 = vmatmul.bf16.gmra.mxu0 %v5179
      %v5824 = vpop.f32.mrf.mxu0
      %v5825 = vadd.f32 %v5254, %v5824
      %v5826 = vpop.f32.mrf.mxu0
      %v5827 = vadd.f32 %v5254, %v5826
      %5828 = vmatmul.bf16.gmra.mxu0 %v5181
      %v5829 = vpop.f32.mrf.mxu0
      %v5830 = vadd.f32 %v5254, %v5829
      %v5831 = vpop.f32.mrf.mxu0
      %v5832 = vadd.f32 %v5254, %v5831
      %5833 = vmatmul.bf16.gmra.mxu0 %v5183
      %v5834 = vpop.f32.mrf.mxu0
      %v5835 = vadd.f32 %v5254, %v5834
      %v5836 = vpop.f32.mrf.mxu0
      %v5837 = vadd.f32 %v5254, %v5836
      %5838 = vmatmul.bf16.gmra.mxu0 %v5185
      %v5839 = vpop.f32.mrf.mxu0
      %v5840 = vadd.f32 %v5254, %v5839
      %v5841 = vpop.f32.mrf.mxu0
      %v5842 = vadd.f32 %v5254, %v5841
      %5843 = vmatmul.bf16.gmra.mxu0 %v5187
      %v5844 = vpop.f32.mrf.mxu0
      %v5845 = vadd.f32 %v5254, %v5844
      %v5846 = vpop.f32.mrf.mxu0
      %v5847 = vadd.f32 %v5254, %v5846
      %5848 = vmatmul.bf16.gmra.mxu0 %v5189
      %v5849 = vpop.f32.mrf.mxu0
      %v5850 = vadd.f32 %v5254, %v5849
      %v5851 = vpop.f32.mrf.mxu0
      %v5852 = vadd.f32 %v5254, %v5851
      %5853 = vmatmul.bf16.gmra.mxu0 %v5191
      %v5854 = vpop.f32.mrf.mxu0
      %v5855 = vadd.f32 %v5254, %v5854
      %v5856 = vpop.f32.mrf.mxu0
      %v5857 = vadd.f32 %v5254, %v5856
      %5858 = vmatmul.bf16.gmra.mxu0 %v5193
      %v5859 = vpop.f32.mrf.mxu0
      %v5860 = vadd.f32 %v5254, %v5859
      %v5861 = vpop.f32.mrf.mxu0
      %v5862 = vadd.f32 %v5254, %v5861
      %5863 = vmatmul.bf16.gmra.mxu0 %v5195
      %v5864 = vpop.f32.mrf.mxu0
      %v5865 = vadd.f32 %v5254, %v5864
      %v5866 = vpop.f32.mrf.mxu0
      %v5867 = vadd.f32 %v5254, %v5866
      %5868 = vmatmul.bf16.gmra.mxu0 %v5197
      %v5869 = vpop.f32.mrf.mxu0
      %v5870 = vadd.f32 %v5254, %v5869
      %v5871 = vpop.f32.mrf.mxu0
      %v5872 = vadd.f32 %v5254, %v5871
      %5873 = vmatmul.bf16.gmra.mxu0 %v5199
      %v5874 = vpop.f32.mrf.mxu0
      %v5875 = vadd.f32 %v5254, %v5874
      %v5876 = vpop.f32.mrf.mxu0
      %v5877 = vadd.f32 %v5254, %v5876
      %5878 = vmatmul.bf16.gmra.mxu0 %v5201
      %v5879 = vpop.f32.mrf.mxu0
      %v5880 = vadd.f32 %v5254, %v5879
      %v5881 = vpop.f32.mrf.mxu0
      %v5882 = vadd.f32 %v5254, %v5881
      %5883 = vmatmul.bf16.gmra.mxu0 %v5203
      %v5884 = vpop.f32.mrf.mxu0
      %v5885 = vadd.f32 %v5254, %v5884
      %v5886 = vpop.f32.mrf.mxu0
      %v5887 = vadd.f32 %v5254, %v5886
      %5888 = vmatmul.bf16.gmra.mxu0 %v5205
      %v5889 = vpop.f32.mrf.mxu0
      %v5890 = vadd.f32 %v5254, %v5889
      %v5891 = vpop.f32.mrf.mxu0
      %v5892 = vadd.f32 %v5254, %v5891
      %5893 = vmatmul.bf16.gmra.mxu0 %v5207
      %v5894 = vpop.f32.mrf.mxu0
      %v5895 = vadd.f32 %v5254, %v5894
      %v5896 = vpop.f32.mrf.mxu0
      %v5897 = vadd.f32 %v5254, %v5896
      %5898 = vmatmul.bf16.gmra.mxu0 %v5209
      %v5899 = vpop.f32.mrf.mxu0
      %v5900 = vadd.f32 %v5254, %v5899
      %v5901 = vpop.f32.mrf.mxu0
      %v5902 = vadd.f32 %v5254, %v5901
      %5903 = vmatmul.bf16.gmra.mxu0 %v5211
      %v5904 = vpop.f32.mrf.mxu0
      %v5905 = vadd.f32 %v5254, %v5904
      %v5906 = vpop.f32.mrf.mxu0
      %v5907 = vadd.f32 %v5254, %v5906
      %5908 = vmatmul.bf16.gmra.mxu0 %v5213
      %v5909 = vpop.f32.mrf.mxu0
      %v5910 = vadd.f32 %v5254, %v5909
      %v5911 = vpop.f32.mrf.mxu0
      %v5912 = vadd.f32 %v5254, %v5911
      %5913 = vmatmul.bf16.gmra.mxu0 %v5215
      %v5914 = vpop.f32.mrf.mxu0
      %v5915 = vadd.f32 %v5254, %v5914
      %v5916 = vpop.f32.mrf.mxu0
      %v5917 = vadd.f32 %v5254, %v5916
      %5918 = vmatmul.bf16.gmra.mxu0 %v5217
      %v5919 = vpop.f32.mrf.mxu0
      %v5920 = vadd.f32 %v5254, %v5919
      %v5921 = vpop.f32.mrf.mxu0
      %v5922 = vadd.f32 %v5254, %v5921
      %5923 = vdwg.mxu0
      %5924 = vmatpush.bf16.msra.mxu0 %v5384
      %5925 = vmatpush.bf16.msra.mxu0 %v5382
      %5926 = vmatpush.bf16.msra.mxu0 %v5380
      %5927 = vmatpush.bf16.msra.mxu0 %v5378
      %5928 = vmatpush.bf16.msra.mxu0 %v5376
      %5929 = vmatpush.bf16.msra.mxu0 %v5374
      %5930 = vmatpush.bf16.msra.mxu0 %v5372
      %5931 = vmatpush.bf16.msra.mxu0 %v5370
      %5932 = vmatmul.bf16.gmra.mxu0 %v5156
      %v5933 = vpop.f32.mrf.mxu0
      %v5934 = vadd.f32 %v5765, %v5933
      %v5935 = vpop.f32.mrf.mxu0
      %v5936 = vadd.f32 %v5767, %v5935
      %5937 = vmatmul.bf16.gmra.mxu0 %v5158
      %v5938 = vpop.f32.mrf.mxu0
      %v5939 = vadd.f32 %v5770, %v5938
      %v5940 = vpop.f32.mrf.mxu0
      %v5941 = vadd.f32 %v5772, %v5940
      %5942 = vmatmul.bf16.gmra.mxu0 %v5160
      %v5943 = vpop.f32.mrf.mxu0
      %v5944 = vadd.f32 %v5775, %v5943
      %v5945 = vpop.f32.mrf.mxu0
      %v5946 = vadd.f32 %v5777, %v5945
      %5947 = vmatmul.bf16.gmra.mxu0 %v5162
      %v5948 = vpop.f32.mrf.mxu0
      %v5949 = vadd.f32 %v5780, %v5948
      %v5950 = vpop.f32.mrf.mxu0
      %v5951 = vadd.f32 %v5782, %v5950
      %5952 = vmatmul.bf16.gmra.mxu0 %v5164
      %v5953 = vpop.f32.mrf.mxu0
      %v5954 = vadd.f32 %v5785, %v5953
      %v5955 = vpop.f32.mrf.mxu0
      %v5956 = vadd.f32 %v5787, %v5955
      %5957 = vmatmul.bf16.gmra.mxu0 %v5166
      %v5958 = vpop.f32.mrf.mxu0
      %v5959 = vadd.f32 %v5790, %v5958
      %v5960 = vpop.f32.mrf.mxu0
      %v5961 = vadd.f32 %v5792, %v5960
      %5962 = vmatmul.bf16.gmra.mxu0 %v5168
      %v5963 = vpop.f32.mrf.mxu0
      %v5964 = vadd.f32 %v5795, %v5963
      %v5965 = vpop.f32.mrf.mxu0
      %v5966 = vadd.f32 %v5797, %v5965
      %5967 = vmatmul.bf16.gmra.mxu0 %v5170
      %v5968 = vpop.f32.mrf.mxu0
      %v5969 = vadd.f32 %v5800, %v5968
      %v5970 = vpop.f32.mrf.mxu0
      %v5971 = vadd.f32 %v5802, %v5970
      %5972 = vmatmul.bf16.gmra.mxu0 %v5172
      %v5973 = vpop.f32.mrf.mxu0
      %v5974 = vadd.f32 %v5805, %v5973
      %v5975 = vpop.f32.mrf.mxu0
      %v5976 = vadd.f32 %v5807, %v5975
      %5977 = vmatmul.bf16.gmra.mxu0 %v5174
      %v5978 = vpop.f32.mrf.mxu0
      %v5979 = vadd.f32 %v5810, %v5978
      %v5980 = vpop.f32.mrf.mxu0
      %v5981 = vadd.f32 %v5812, %v5980
      %5982 = vmatmul.bf16.gmra.mxu0 %v5176
      %v5983 = vpop.f32.mrf.mxu0
      %v5984 = vadd.f32 %v5815, %v5983
      %v5985 = vpop.f32.mrf.mxu0
      %v5986 = vadd.f32 %v5817, %v5985
      %5987 = vmatmul.bf16.gmra.mxu0 %v5178
      %v5988 = vpop.f32.mrf.mxu0
      %v5989 = vadd.f32 %v5820, %v5988
      %v5990 = vpop.f32.mrf.mxu0
      %v5991 = vadd.f32 %v5822, %v5990
      %5992 = vmatmul.bf16.gmra.mxu0 %v5180
      %v5993 = vpop.f32.mrf.mxu0
      %v5994 = vadd.f32 %v5825, %v5993
      %v5995 = vpop.f32.mrf.mxu0
      %v5996 = vadd.f32 %v5827, %v5995
      %5997 = vmatmul.bf16.gmra.mxu0 %v5182
      %v5998 = vpop.f32.mrf.mxu0
      %v5999 = vadd.f32 %v5830, %v5998
      %v6000 = vpop.f32.mrf.mxu0
      %v6001 = vadd.f32 %v5832, %v6000
      %6002 = vmatmul.bf16.gmra.mxu0 %v5184
      %v6003 = vpop.f32.mrf.mxu0
      %v6004 = vadd.f32 %v5835, %v6003
      %v6005 = vpop.f32.mrf.mxu0
      %v6006 = vadd.f32 %v5837, %v6005
      %6007 = vmatmul.bf16.gmra.mxu0 %v5186
      %v6008 = vpop.f32.mrf.mxu0
      %v6009 = vadd.f32 %v5840, %v6008
      %v6010 = vpop.f32.mrf.mxu0
      %v6011 = vadd.f32 %v5842, %v6010
      %6012 = vmatmul.bf16.gmra.mxu0 %v5188
      %v6013 = vpop.f32.mrf.mxu0
      %v6014 = vadd.f32 %v5845, %v6013
      %v6015 = vpop.f32.mrf.mxu0
      %v6016 = vadd.f32 %v5847, %v6015
      %6017 = vmatmul.bf16.gmra.mxu0 %v5190
      %v6018 = vpop.f32.mrf.mxu0
      %v6019 = vadd.f32 %v5850, %v6018
      %v6020 = vpop.f32.mrf.mxu0
      %v6021 = vadd.f32 %v5852, %v6020
      %6022 = vmatmul.bf16.gmra.mxu0 %v5192
      %v6023 = vpop.f32.mrf.mxu0
      %v6024 = vadd.f32 %v5855, %v6023
      %v6025 = vpop.f32.mrf.mxu0
      %v6026 = vadd.f32 %v5857, %v6025
      %6027 = vmatmul.bf16.gmra.mxu0 %v5194
      %v6028 = vpop.f32.mrf.mxu0
      %v6029 = vadd.f32 %v5860, %v6028
      %v6030 = vpop.f32.mrf.mxu0
      %v6031 = vadd.f32 %v5862, %v6030
      %6032 = vmatmul.bf16.gmra.mxu0 %v5196
      %v6033 = vpop.f32.mrf.mxu0
      %v6034 = vadd.f32 %v5865, %v6033
      %v6035 = vpop.f32.mrf.mxu0
      %v6036 = vadd.f32 %v5867, %v6035
      %6037 = vmatmul.bf16.gmra.mxu0 %v5198
      %v6038 = vpop.f32.mrf.mxu0
      %v6039 = vadd.f32 %v5870, %v6038
      %v6040 = vpop.f32.mrf.mxu0
      %v6041 = vadd.f32 %v5872, %v6040
      %6042 = vmatmul.bf16.gmra.mxu0 %v5200
      %v6043 = vpop.f32.mrf.mxu0
      %v6044 = vadd.f32 %v5875, %v6043
      %v6045 = vpop.f32.mrf.mxu0
      %v6046 = vadd.f32 %v5877, %v6045
      %6047 = vmatmul.bf16.gmra.mxu0 %v5202
      %v6048 = vpop.f32.mrf.mxu0
      %v6049 = vadd.f32 %v5880, %v6048
      %v6050 = vpop.f32.mrf.mxu0
      %v6051 = vadd.f32 %v5882, %v6050
      %6052 = vmatmul.bf16.gmra.mxu0 %v5204
      %v6053 = vpop.f32.mrf.mxu0
      %v6054 = vadd.f32 %v5885, %v6053
      %v6055 = vpop.f32.mrf.mxu0
      %v6056 = vadd.f32 %v5887, %v6055
      %6057 = vmatmul.bf16.gmra.mxu0 %v5206
      %v6058 = vpop.f32.mrf.mxu0
      %v6059 = vadd.f32 %v5890, %v6058
      %v6060 = vpop.f32.mrf.mxu0
      %v6061 = vadd.f32 %v5892, %v6060
      %6062 = vmatmul.bf16.gmra.mxu0 %v5208
      %v6063 = vpop.f32.mrf.mxu0
      %v6064 = vadd.f32 %v5895, %v6063
      %v6065 = vpop.f32.mrf.mxu0
      %v6066 = vadd.f32 %v5897, %v6065
      %6067 = vmatmul.bf16.gmra.mxu0 %v5210
      %v6068 = vpop.f32.mrf.mxu0
      %v6069 = vadd.f32 %v5900, %v6068
      %v6070 = vpop.f32.mrf.mxu0
      %v6071 = vadd.f32 %v5902, %v6070
      %6072 = vmatmul.bf16.gmra.mxu0 %v5212
      %v6073 = vpop.f32.mrf.mxu0
      %v6074 = vadd.f32 %v5905, %v6073
      %v6075 = vpop.f32.mrf.mxu0
      %v6076 = vadd.f32 %v5907, %v6075
      %6077 = vmatmul.bf16.gmra.mxu0 %v5214
      %v6078 = vpop.f32.mrf.mxu0
      %v6079 = vadd.f32 %v5910, %v6078
      %v6080 = vpop.f32.mrf.mxu0
      %v6081 = vadd.f32 %v5912, %v6080
      %6082 = vmatmul.bf16.gmra.mxu0 %v5216
      %v6083 = vpop.f32.mrf.mxu0
      %v6084 = vadd.f32 %v5915, %v6083
      %v6085 = vpop.f32.mrf.mxu0
      %v6086 = vadd.f32 %v5917, %v6085
      %6087 = vmatmul.bf16.gmra.mxu0 %v5218
      %v6088 = vpop.f32.mrf.mxu0
      %v6089 = vadd.f32 %v5920, %v6088
      %v6090 = vpop.f32.mrf.mxu0
      %v6091 = vadd.f32 %v5922, %v6090
      %6092 = vdwg.mxu0
      %v6093 = vmax.f32 %v5596, 0.0
      %v6094 = vmax.f32 %v5934, 0.0
      %v6095 = vmax.f32 %v5598, 0.0
      %v6096 = vmax.f32 %v5936, 0.0
      %v6097 = vmax.f32 %v5601, 0.0
      %v6098 = vmax.f32 %v5939, 0.0
      %v6099 = vmax.f32 %v5603, 0.0
      %v6100 = vmax.f32 %v5941, 0.0
      %v6101 = vmax.f32 %v5606, 0.0
      %v6102 = vmax.f32 %v5944, 0.0
      %v6103 = vmax.f32 %v5608, 0.0
      %v6104 = vmax.f32 %v5946, 0.0
      %v6105 = vmax.f32 %v5611, 0.0
      %v6106 = vmax.f32 %v5949, 0.0
      %v6107 = vmax.f32 %v5613, 0.0
      %v6108 = vmax.f32 %v5951, 0.0
      %v6109 = vmax.f32 %v5616, 0.0
      %v6110 = vmax.f32 %v5954, 0.0
      %v6111 = vmax.f32 %v5618, 0.0
      %v6112 = vmax.f32 %v5956, 0.0
      %v6113 = vmax.f32 %v5621, 0.0
      %v6114 = vmax.f32 %v5959, 0.0
      %v6115 = vmax.f32 %v5623, 0.0
      %v6116 = vmax.f32 %v5961, 0.0
      %v6117 = vmax.f32 %v5626, 0.0
      %v6118 = vmax.f32 %v5964, 0.0
      %v6119 = vmax.f32 %v5628, 0.0
      %v6120 = vmax.f32 %v5966, 0.0
      %v6121 = vmax.f32 %v5631, 0.0
      %v6122 = vmax.f32 %v5969, 0.0
      %v6123 = vmax.f32 %v5633, 0.0
      %v6124 = vmax.f32 %v5971, 0.0
      %v6125 = vmax.f32 %v5636, 0.0
      %v6126 = vmax.f32 %v5974, 0.0
      %v6127 = vmax.f32 %v5638, 0.0
      %v6128 = vmax.f32 %v5976, 0.0
      %v6129 = vmax.f32 %v5641, 0.0
      %v6130 = vmax.f32 %v5979, 0.0
      %v6131 = vmax.f32 %v5643, 0.0
      %v6132 = vmax.f32 %v5981, 0.0
      %v6133 = vmax.f32 %v5646, 0.0
      %v6134 = vmax.f32 %v5984, 0.0
      %v6135 = vmax.f32 %v5648, 0.0
      %v6136 = vmax.f32 %v5986, 0.0
      %v6137 = vmax.f32 %v5651, 0.0
      %v6138 = vmax.f32 %v5989, 0.0
      %v6139 = vmax.f32 %v5653, 0.0
      %v6140 = vmax.f32 %v5991, 0.0
      %v6141 = vmax.f32 %v5656, 0.0
      %v6142 = vmax.f32 %v5994, 0.0
      %v6143 = vmax.f32 %v5658, 0.0
      %v6144 = vmax.f32 %v5996, 0.0
      %v6145 = vmax.f32 %v5661, 0.0
      %v6146 = vmax.f32 %v5999, 0.0
      %v6147 = vmax.f32 %v5663, 0.0
      %v6148 = vmax.f32 %v6001, 0.0
      %v6149 = vmax.f32 %v5666, 0.0
      %v6150 = vmax.f32 %v6004, 0.0
      %v6151 = vmax.f32 %v5668, 0.0
      %v6152 = vmax.f32 %v6006, 0.0
      %v6153 = vmax.f32 %v5671, 0.0
      %v6154 = vmax.f32 %v6009, 0.0
      %v6155 = vmax.f32 %v5673, 0.0
      %v6156 = vmax.f32 %v6011, 0.0
      %v6157 = vmax.f32 %v5676, 0.0
      %v6158 = vmax.f32 %v6014, 0.0
      %v6159 = vmax.f32 %v5678, 0.0
      %v6160 = vmax.f32 %v6016, 0.0
      %v6161 = vmax.f32 %v5681, 0.0
      %v6162 = vmax.f32 %v6019, 0.0
      %v6163 = vmax.f32 %v5683, 0.0
      %v6164 = vmax.f32 %v6021, 0.0
      %v6165 = vmax.f32 %v5686, 0.0
      %v6166 = vmax.f32 %v6024, 0.0
      %v6167 = vmax.f32 %v5688, 0.0
      %v6168 = vmax.f32 %v6026, 0.0
      %v6169 = vmax.f32 %v5691, 0.0
      %v6170 = vmax.f32 %v6029, 0.0
      %v6171 = vmax.f32 %v5693, 0.0
      %v6172 = vmax.f32 %v6031, 0.0
      %v6173 = vmax.f32 %v5696, 0.0
      %v6174 = vmax.f32 %v6034, 0.0
      %v6175 = vmax.f32 %v5698, 0.0
      %v6176 = vmax.f32 %v6036, 0.0
      %v6177 = vmax.f32 %v5701, 0.0
      %v6178 = vmax.f32 %v6039, 0.0
      %v6179 = vmax.f32 %v5703, 0.0
      %v6180 = vmax.f32 %v6041, 0.0
      %v6181 = vmax.f32 %v5706, 0.0
      %v6182 = vmax.f32 %v6044, 0.0
      %v6183 = vmax.f32 %v5708, 0.0
      %v6184 = vmax.f32 %v6046, 0.0
      %v6185 = vmax.f32 %v5711, 0.0
      %v6186 = vmax.f32 %v6049, 0.0
      %v6187 = vmax.f32 %v5713, 0.0
      %v6188 = vmax.f32 %v6051, 0.0
      %v6189 = vmax.f32 %v5716, 0.0
      %v6190 = vmax.f32 %v6054, 0.0
      %v6191 = vmax.f32 %v5718, 0.0
      %v6192 = vmax.f32 %v6056, 0.0
      %v6193 = vmax.f32 %v5721, 0.0
      %v6194 = vmax.f32 %v6059, 0.0
      %v6195 = vmax.f32 %v5723, 0.0
      %v6196 = vmax.f32 %v6061, 0.0
      %v6197 = vmax.f32 %v5726, 0.0
      %v6198 = vmax.f32 %v6064, 0.0
      %v6199 = vmax.f32 %v5728, 0.0
      %v6200 = vmax.f32 %v6066, 0.0
      %v6201 = vmax.f32 %v5731, 0.0
      %v6202 = vmax.f32 %v6069, 0.0
      %v6203 = vmax.f32 %v5733, 0.0
      %v6204 = vmax.f32 %v6071, 0.0
      %v6205 = vmax.f32 %v5736, 0.0
      %v6206 = vmax.f32 %v6074, 0.0
      %v6207 = vmax.f32 %v5738, 0.0
      %v6208 = vmax.f32 %v6076, 0.0
      %v6209 = vmax.f32 %v5741, 0.0
      %v6210 = vmax.f32 %v6079, 0.0
      %v6211 = vmax.f32 %v5743, 0.0
      %v6212 = vmax.f32 %v6081, 0.0
      %v6213 = vmax.f32 %v5746, 0.0
      %v6214 = vmax.f32 %v6084, 0.0
      %v6215 = vmax.f32 %v5748, 0.0
      %v6216 = vmax.f32 %v6086, 0.0
      %v6217 = vmax.f32 %v5751, 0.0
      %v6218 = vmax.f32 %v6089, 0.0
      %v6219 = vmax.f32 %v5753, 0.0
      %v6220 = vmax.f32 %v6091, 0.0
      %v6221 = vld [vmem:[%s10] ss:$4 sm:$0x3]
      %v6223 = vperm.slane %v6221, 0
      %v6224 = vperm.slane %v6221, 1
      %v6227 = vmul.f32 %v6093, %v6223
      %v6228 = vmul.f32 %v6094, %v6224
      %v6229 = vmul.f32 %v6095, %v6223
      %v6230 = vmul.f32 %v6096, %v6224
      %v6231 = vmul.f32 %v6097, %v6223
      %v6232 = vmul.f32 %v6098, %v6224
      %v6233 = vmul.f32 %v6099, %v6223
      %v6234 = vmul.f32 %v6100, %v6224
      %v6235 = vmul.f32 %v6101, %v6223
      %v6236 = vmul.f32 %v6102, %v6224
      %v6237 = vmul.f32 %v6103, %v6223
      %v6238 = vmul.f32 %v6104, %v6224
      %v6239 = vmul.f32 %v6105, %v6223
      %v6240 = vmul.f32 %v6106, %v6224
      %v6241 = vmul.f32 %v6107, %v6223
      %v6242 = vmul.f32 %v6108, %v6224
      %v6243 = vmul.f32 %v6109, %v6223
      %v6244 = vmul.f32 %v6110, %v6224
      %v6245 = vmul.f32 %v6111, %v6223
      %v6246 = vmul.f32 %v6112, %v6224
      %v6247 = vmul.f32 %v6113, %v6223
      %v6248 = vmul.f32 %v6114, %v6224
      %v6249 = vmul.f32 %v6115, %v6223
      %v6250 = vmul.f32 %v6116, %v6224
      %v6251 = vmul.f32 %v6117, %v6223
      %v6252 = vmul.f32 %v6118, %v6224
      %v6253 = vmul.f32 %v6119, %v6223
      %v6254 = vmul.f32 %v6120, %v6224
      %v6255 = vmul.f32 %v6121, %v6223
      %v6256 = vmul.f32 %v6122, %v6224
      %v6257 = vmul.f32 %v6123, %v6223
      %v6258 = vmul.f32 %v6124, %v6224
      %v6259 = vmul.f32 %v6125, %v6223
      %v6260 = vmul.f32 %v6126, %v6224
      %v6261 = vmul.f32 %v6127, %v6223
      %v6262 = vmul.f32 %v6128, %v6224
      %v6263 = vmul.f32 %v6129, %v6223
      %v6264 = vmul.f32 %v6130, %v6224
      %v6265 = vmul.f32 %v6131, %v6223
      %v6266 = vmul.f32 %v6132, %v6224
      %v6267 = vmul.f32 %v6133, %v6223
      %v6268 = vmul.f32 %v6134, %v6224
      %v6269 = vmul.f32 %v6135, %v6223
      %v6270 = vmul.f32 %v6136, %v6224
      %v6271 = vmul.f32 %v6137, %v6223
      %v6272 = vmul.f32 %v6138, %v6224
      %v6273 = vmul.f32 %v6139, %v6223
      %v6274 = vmul.f32 %v6140, %v6224
      %v6275 = vmul.f32 %v6141, %v6223
      %v6276 = vmul.f32 %v6142, %v6224
      %v6277 = vmul.f32 %v6143, %v6223
      %v6278 = vmul.f32 %v6144, %v6224
      %v6279 = vmul.f32 %v6145, %v6223
      %v6280 = vmul.f32 %v6146, %v6224
      %v6281 = vmul.f32 %v6147, %v6223
      %v6282 = vmul.f32 %v6148, %v6224
      %v6283 = vmul.f32 %v6149, %v6223
      %v6284 = vmul.f32 %v6150, %v6224
      %v6285 = vmul.f32 %v6151, %v6223
      %v6286 = vmul.f32 %v6152, %v6224
      %v6287 = vmul.f32 %v6153, %v6223
      %v6288 = vmul.f32 %v6154, %v6224
      %v6289 = vmul.f32 %v6155, %v6223
      %v6290 = vmul.f32 %v6156, %v6224
      %v6291 = vmul.f32 %v6157, %v6223
      %v6292 = vmul.f32 %v6158, %v6224
      %v6293 = vmul.f32 %v6159, %v6223
      %v6294 = vmul.f32 %v6160, %v6224
      %v6295 = vmul.f32 %v6161, %v6223
      %v6296 = vmul.f32 %v6162, %v6224
      %v6297 = vmul.f32 %v6163, %v6223
      %v6298 = vmul.f32 %v6164, %v6224
      %v6299 = vmul.f32 %v6165, %v6223
      %v6300 = vmul.f32 %v6166, %v6224
      %v6301 = vmul.f32 %v6167, %v6223
      %v6302 = vmul.f32 %v6168, %v6224
      %v6303 = vmul.f32 %v6169, %v6223
      %v6304 = vmul.f32 %v6170, %v6224
      %v6305 = vmul.f32 %v6171, %v6223
      %v6306 = vmul.f32 %v6172, %v6224
      %v6307 = vmul.f32 %v6173, %v6223
      %v6308 = vmul.f32 %v6174, %v6224
      %v6309 = vmul.f32 %v6175, %v6223
      %v6310 = vmul.f32 %v6176, %v6224
      %v6311 = vmul.f32 %v6177, %v6223
      %v6312 = vmul.f32 %v6178, %v6224
      %v6313 = vmul.f32 %v6179, %v6223
      %v6314 = vmul.f32 %v6180, %v6224
      %v6315 = vmul.f32 %v6181, %v6223
      %v6316 = vmul.f32 %v6182, %v6224
      %v6317 = vmul.f32 %v6183, %v6223
      %v6318 = vmul.f32 %v6184, %v6224
      %v6319 = vmul.f32 %v6185, %v6223
      %v6320 = vmul.f32 %v6186, %v6224
      %v6321 = vmul.f32 %v6187, %v6223
      %v6322 = vmul.f32 %v6188, %v6224
      %v6323 = vmul.f32 %v6189, %v6223
      %v6324 = vmul.f32 %v6190, %v6224
      %v6325 = vmul.f32 %v6191, %v6223
      %v6326 = vmul.f32 %v6192, %v6224
      %v6327 = vmul.f32 %v6193, %v6223
      %v6328 = vmul.f32 %v6194, %v6224
      %v6329 = vmul.f32 %v6195, %v6223
      %v6330 = vmul.f32 %v6196, %v6224
      %v6331 = vmul.f32 %v6197, %v6223
      %v6332 = vmul.f32 %v6198, %v6224
      %v6333 = vmul.f32 %v6199, %v6223
      %v6334 = vmul.f32 %v6200, %v6224
      %v6335 = vmul.f32 %v6201, %v6223
      %v6336 = vmul.f32 %v6202, %v6224
      %v6337 = vmul.f32 %v6203, %v6223
      %v6338 = vmul.f32 %v6204, %v6224
      %v6339 = vmul.f32 %v6205, %v6223
      %v6340 = vmul.f32 %v6206, %v6224
      %v6341 = vmul.f32 %v6207, %v6223
      %v6342 = vmul.f32 %v6208, %v6224
      %v6343 = vmul.f32 %v6209, %v6223
      %v6344 = vmul.f32 %v6210, %v6224
      %v6345 = vmul.f32 %v6211, %v6223
      %v6346 = vmul.f32 %v6212, %v6224
      %v6347 = vmul.f32 %v6213, %v6223
      %v6348 = vmul.f32 %v6214, %v6224
      %v6349 = vmul.f32 %v6215, %v6223
      %v6350 = vmul.f32 %v6216, %v6224
      %v6351 = vmul.f32 %v6217, %v6223
      %v6352 = vmul.f32 %v6218, %v6224
      %v6353 = vmul.f32 %v6219, %v6223
      %v6354 = vmul.f32 %v6220, %v6224
      %v6355 = vadd.f32 %v6227, %v6228
      %6356 = vadd.xlane.f32.xlu0 %v6355
      %v6357 = vpop.xlane.xlu0 %6356
      %v6358 = vadd.f32 %v6229, %v6230
      %6359 = vadd.xlane.f32.xlu0 %v6358
      %v6360 = vpop.xlane.xlu0 %6359
      %v6361 = vadd.f32 %v6231, %v6232
      %6362 = vadd.xlane.f32.xlu0 %v6361
      %v6363 = vpop.xlane.xlu0 %6362
      %v6364 = vadd.f32 %v6233, %v6234
      %6365 = vadd.xlane.f32.xlu0 %v6364
      %v6366 = vpop.xlane.xlu0 %6365
      %v6367 = vadd.f32 %v6235, %v6236
      %6368 = vadd.xlane.f32.xlu0 %v6367
      %v6369 = vpop.xlane.xlu0 %6368
      %v6370 = vadd.f32 %v6237, %v6238
      %6371 = vadd.xlane.f32.xlu0 %v6370
      %v6372 = vpop.xlane.xlu0 %6371
      %v6373 = vadd.f32 %v6239, %v6240
      %6374 = vadd.xlane.f32.xlu0 %v6373
      %v6375 = vpop.xlane.xlu0 %6374
      %v6376 = vadd.f32 %v6241, %v6242
      %6377 = vadd.xlane.f32.xlu0 %v6376
      %v6378 = vpop.xlane.xlu0 %6377
      %v6379 = vadd.f32 %v6243, %v6244
      %6380 = vadd.xlane.f32.xlu0 %v6379
      %v6381 = vpop.xlane.xlu0 %6380
      %v6382 = vadd.f32 %v6245, %v6246
      %6383 = vadd.xlane.f32.xlu0 %v6382
      %v6384 = vpop.xlane.xlu0 %6383
      %v6385 = vadd.f32 %v6247, %v6248
      %6386 = vadd.xlane.f32.xlu0 %v6385
      %v6387 = vpop.xlane.xlu0 %6386
      %v6388 = vadd.f32 %v6249, %v6250
      %6389 = vadd.xlane.f32.xlu0 %v6388
      %v6390 = vpop.xlane.xlu0 %6389
      %v6391 = vadd.f32 %v6251, %v6252
      %6392 = vadd.xlane.f32.xlu0 %v6391
      %v6393 = vpop.xlane.xlu0 %6392
      %v6394 = vadd.f32 %v6253, %v6254
      %6395 = vadd.xlane.f32.xlu0 %v6394
      %v6396 = vpop.xlane.xlu0 %6395
      %v6397 = vadd.f32 %v6255, %v6256
      %6398 = vadd.xlane.f32.xlu0 %v6397
      %v6399 = vpop.xlane.xlu0 %6398
      %v6400 = vadd.f32 %v6257, %v6258
      %6401 = vadd.xlane.f32.xlu0 %v6400
      %v6402 = vpop.xlane.xlu0 %6401
      %v6403 = vadd.f32 %v6259, %v6260
      %6404 = vadd.xlane.f32.xlu0 %v6403
      %v6405 = vpop.xlane.xlu0 %6404
      %v6406 = vadd.f32 %v6261, %v6262
      %6407 = vadd.xlane.f32.xlu0 %v6406
      %v6408 = vpop.xlane.xlu0 %6407
      %v6409 = vadd.f32 %v6263, %v6264
      %6410 = vadd.xlane.f32.xlu0 %v6409
      %v6411 = vpop.xlane.xlu0 %6410
      %v6412 = vadd.f32 %v6265, %v6266
      %6413 = vadd.xlane.f32.xlu0 %v6412
      %v6414 = vpop.xlane.xlu0 %6413
      %v6415 = vadd.f32 %v6267, %v6268
      %6416 = vadd.xlane.f32.xlu0 %v6415
      %v6417 = vpop.xlane.xlu0 %6416
      %v6418 = vadd.f32 %v6269, %v6270
      %6419 = vadd.xlane.f32.xlu0 %v6418
      %v6420 = vpop.xlane.xlu0 %6419
      %v6421 = vadd.f32 %v6271, %v6272
      %6422 = vadd.xlane.f32.xlu0 %v6421
      %v6423 = vpop.xlane.xlu0 %6422
      %v6424 = vadd.f32 %v6273, %v6274
      %6425 = vadd.xlane.f32.xlu0 %v6424
      %v6426 = vpop.xlane.xlu0 %6425
      %v6427 = vadd.f32 %v6275, %v6276
      %6428 = vadd.xlane.f32.xlu0 %v6427
      %v6429 = vpop.xlane.xlu0 %6428
      %v6430 = vadd.f32 %v6277, %v6278
      %6431 = vadd.xlane.f32.xlu0 %v6430
      %v6432 = vpop.xlane.xlu0 %6431
      %v6433 = vadd.f32 %v6279, %v6280
      %6434 = vadd.xlane.f32.xlu0 %v6433
      %v6435 = vpop.xlane.xlu0 %6434
      %v6436 = vadd.f32 %v6281, %v6282
      %6437 = vadd.xlane.f32.xlu0 %v6436
      %v6438 = vpop.xlane.xlu0 %6437
      %v6439 = vadd.f32 %v6283, %v6284
      %6440 = vadd.xlane.f32.xlu0 %v6439
      %v6441 = vpop.xlane.xlu0 %6440
      %v6442 = vadd.f32 %v6285, %v6286
      %6443 = vadd.xlane.f32.xlu0 %v6442
      %v6444 = vpop.xlane.xlu0 %6443
      %v6445 = vadd.f32 %v6287, %v6288
      %6446 = vadd.xlane.f32.xlu0 %v6445
      %v6447 = vpop.xlane.xlu0 %6446
      %v6448 = vadd.f32 %v6289, %v6290
      %6449 = vadd.xlane.f32.xlu0 %v6448
      %v6450 = vpop.xlane.xlu0 %6449
      %v6451 = vadd.f32 %v6291, %v6292
      %6452 = vadd.xlane.f32.xlu0 %v6451
      %v6453 = vpop.xlane.xlu0 %6452
      %v6454 = vadd.f32 %v6293, %v6294
      %6455 = vadd.xlane.f32.xlu0 %v6454
      %v6456 = vpop.xlane.xlu0 %6455
      %v6457 = vadd.f32 %v6295, %v6296
      %6458 = vadd.xlane.f32.xlu0 %v6457
      %v6459 = vpop.xlane.xlu0 %6458
      %v6460 = vadd.f32 %v6297, %v6298
      %6461 = vadd.xlane.f32.xlu0 %v6460
      %v6462 = vpop.xlane.xlu0 %6461
      %v6463 = vadd.f32 %v6299, %v6300
      %6464 = vadd.xlane.f32.xlu0 %v6463
      %v6465 = vpop.xlane.xlu0 %6464
      %v6466 = vadd.f32 %v6301, %v6302
      %6467 = vadd.xlane.f32.xlu0 %v6466
      %v6468 = vpop.xlane.xlu0 %6467
      %v6469 = vadd.f32 %v6303, %v6304
      %6470 = vadd.xlane.f32.xlu0 %v6469
      %v6471 = vpop.xlane.xlu0 %6470
      %v6472 = vadd.f32 %v6305, %v6306
      %6473 = vadd.xlane.f32.xlu0 %v6472
      %v6474 = vpop.xlane.xlu0 %6473
      %v6475 = vadd.f32 %v6307, %v6308
      %6476 = vadd.xlane.f32.xlu0 %v6475
      %v6477 = vpop.xlane.xlu0 %6476
      %v6478 = vadd.f32 %v6309, %v6310
      %6479 = vadd.xlane.f32.xlu0 %v6478
      %v6480 = vpop.xlane.xlu0 %6479
      %v6481 = vadd.f32 %v6311, %v6312
      %6482 = vadd.xlane.f32.xlu0 %v6481
      %v6483 = vpop.xlane.xlu0 %6482
      %v6484 = vadd.f32 %v6313, %v6314
      %6485 = vadd.xlane.f32.xlu0 %v6484
      %v6486 = vpop.xlane.xlu0 %6485
      %v6487 = vadd.f32 %v6315, %v6316
      %6488 = vadd.xlane.f32.xlu0 %v6487
      %v6489 = vpop.xlane.xlu0 %6488
      %v6490 = vadd.f32 %v6317, %v6318
      %6491 = vadd.xlane.f32.xlu0 %v6490
      %v6492 = vpop.xlane.xlu0 %6491
      %v6493 = vadd.f32 %v6319, %v6320
      %6494 = vadd.xlane.f32.xlu0 %v6493
      %v6495 = vpop.xlane.xlu0 %6494
      %v6496 = vadd.f32 %v6321, %v6322
      %6497 = vadd.xlane.f32.xlu0 %v6496
      %v6498 = vpop.xlane.xlu0 %6497
      %v6499 = vadd.f32 %v6323, %v6324
      %6500 = vadd.xlane.f32.xlu0 %v6499
      %v6501 = vpop.xlane.xlu0 %6500
      %v6502 = vadd.f32 %v6325, %v6326
      %6503 = vadd.xlane.f32.xlu0 %v6502
      %v6504 = vpop.xlane.xlu0 %6503
      %v6505 = vadd.f32 %v6327, %v6328
      %6506 = vadd.xlane.f32.xlu0 %v6505
      %v6507 = vpop.xlane.xlu0 %6506
      %v6508 = vadd.f32 %v6329, %v6330
      %6509 = vadd.xlane.f32.xlu0 %v6508
      %v6510 = vpop.xlane.xlu0 %6509
      %v6511 = vadd.f32 %v6331, %v6332
      %6512 = vadd.xlane.f32.xlu0 %v6511
      %v6513 = vpop.xlane.xlu0 %6512
      %v6514 = vadd.f32 %v6333, %v6334
      %6515 = vadd.xlane.f32.xlu0 %v6514
      %v6516 = vpop.xlane.xlu0 %6515
      %v6517 = vadd.f32 %v6335, %v6336
      %6518 = vadd.xlane.f32.xlu0 %v6517
      %v6519 = vpop.xlane.xlu0 %6518
      %v6520 = vadd.f32 %v6337, %v6338
      %6521 = vadd.xlane.f32.xlu0 %v6520
      %v6522 = vpop.xlane.xlu0 %6521
      %v6523 = vadd.f32 %v6339, %v6340
      %6524 = vadd.xlane.f32.xlu0 %v6523
      %v6525 = vpop.xlane.xlu0 %6524
      %v6526 = vadd.f32 %v6341, %v6342
      %6527 = vadd.xlane.f32.xlu0 %v6526
      %v6528 = vpop.xlane.xlu0 %6527
      %v6529 = vadd.f32 %v6343, %v6344
      %6530 = vadd.xlane.f32.xlu0 %v6529
      %v6531 = vpop.xlane.xlu0 %6530
      %v6532 = vadd.f32 %v6345, %v6346
      %6533 = vadd.xlane.f32.xlu0 %v6532
      %v6534 = vpop.xlane.xlu0 %6533
      %v6535 = vadd.f32 %v6347, %v6348
      %6536 = vadd.xlane.f32.xlu0 %v6535
      %v6537 = vpop.xlane.xlu0 %6536
      %v6538 = vadd.f32 %v6349, %v6350
      %6539 = vadd.xlane.f32.xlu0 %v6538
      %v6540 = vpop.xlane.xlu0 %6539
      %v6541 = vadd.f32 %v6351, %v6352
      %6542 = vadd.xlane.f32.xlu0 %v6541
      %v6543 = vpop.xlane.xlu0 %6542
      %v6544 = vadd.f32 %v6353, %v6354
      %6545 = vadd.xlane.f32.xlu0 %v6544
      %v6546 = vpop.xlane.xlu0 %6545
      %v6547 = vld [vmem:[%s11] sm:$0x1]
      %v6549 = vperm.slane %v6547, 0
      %v6551 = vadd.f32 %v6357, %v6549
      %v6552 = vadd.f32 %v6360, %v6549
      %v6553 = vadd.f32 %v6363, %v6549
      %v6554 = vadd.f32 %v6366, %v6549
      %v6555 = vadd.f32 %v6369, %v6549
      %v6556 = vadd.f32 %v6372, %v6549
      %v6557 = vadd.f32 %v6375, %v6549
      %v6558 = vadd.f32 %v6378, %v6549
      %v6559 = vadd.f32 %v6381, %v6549
      %v6560 = vadd.f32 %v6384, %v6549
      %v6561 = vadd.f32 %v6387, %v6549
      %v6562 = vadd.f32 %v6390, %v6549
      %v6563 = vadd.f32 %v6393, %v6549
      %v6564 = vadd.f32 %v6396, %v6549
      %v6565 = vadd.f32 %v6399, %v6549
      %v6566 = vadd.f32 %v6402, %v6549
      %v6567 = vadd.f32 %v6405, %v6549
      %v6568 = vadd.f32 %v6408, %v6549
      %v6569 = vadd.f32 %v6411, %v6549
      %v6570 = vadd.f32 %v6414, %v6549
      %v6571 = vadd.f32 %v6417, %v6549
      %v6572 = vadd.f32 %v6420, %v6549
      %v6573 = vadd.f32 %v6423, %v6549
      %v6574 = vadd.f32 %v6426, %v6549
      %v6575 = vadd.f32 %v6429, %v6549
      %v6576 = vadd.f32 %v6432, %v6549
      %v6577 = vadd.f32 %v6435, %v6549
      %v6578 = vadd.f32 %v6438, %v6549
      %v6579 = vadd.f32 %v6441, %v6549
      %v6580 = vadd.f32 %v6444, %v6549
      %v6581 = vadd.f32 %v6447, %v6549
      %v6582 = vadd.f32 %v6450, %v6549
      %v6583 = vadd.f32 %v6453, %v6549
      %v6584 = vadd.f32 %v6456, %v6549
      %v6585 = vadd.f32 %v6459, %v6549
      %v6586 = vadd.f32 %v6462, %v6549
      %v6587 = vadd.f32 %v6465, %v6549
      %v6588 = vadd.f32 %v6468, %v6549
      %v6589 = vadd.f32 %v6471, %v6549
      %v6590 = vadd.f32 %v6474, %v6549
      %v6591 = vadd.f32 %v6477, %v6549
      %v6592 = vadd.f32 %v6480, %v6549
      %v6593 = vadd.f32 %v6483, %v6549
      %v6594 = vadd.f32 %v6486, %v6549
      %v6595 = vadd.f32 %v6489, %v6549
      %v6596 = vadd.f32 %v6492, %v6549
      %v6597 = vadd.f32 %v6495, %v6549
      %v6598 = vadd.f32 %v6498, %v6549
      %v6599 = vadd.f32 %v6501, %v6549
      %v6600 = vadd.f32 %v6504, %v6549
      %v6601 = vadd.f32 %v6507, %v6549
      %v6602 = vadd.f32 %v6510, %v6549
      %v6603 = vadd.f32 %v6513, %v6549
      %v6604 = vadd.f32 %v6516, %v6549
      %v6605 = vadd.f32 %v6519, %v6549
      %v6606 = vadd.f32 %v6522, %v6549
      %v6607 = vadd.f32 %v6525, %v6549
      %v6608 = vadd.f32 %v6528, %v6549
      %v6609 = vadd.f32 %v6531, %v6549
      %v6610 = vadd.f32 %v6534, %v6549
      %v6611 = vadd.f32 %v6537, %v6549
      %v6612 = vadd.f32 %v6540, %v6549
      %v6613 = vadd.f32 %v6543, %v6549
      %v6614 = vadd.f32 %v6546, %v6549
      %vm6615 = vcmask 7168
      %6616 = vst.msk [vmem:[%s415] sm:$0xff] %vm6615, %v6551
      %6617 = vst.msk [vmem:[%s415 + $0x8] sm:$0xff] %vm6615, %v6552
      %6618 = vst.msk [vmem:[%s415 + $0x10] sm:$0xff] %vm6615, %v6553
      %6619 = vst.msk [vmem:[%s415 + $0x18] sm:$0xff] %vm6615, %v6554
      %6620 = vst.msk [vmem:[%s415 + $0x20] sm:$0xff] %vm6615, %v6555
      %6621 = vst.msk [vmem:[%s415 + $0x28] sm:$0xff] %vm6615, %v6556
      %6622 = vst.msk [vmem:[%s415 + $0x30] sm:$0xff] %vm6615, %v6557
      %6623 = vst.msk [vmem:[%s415 + $0x38] sm:$0xff] %vm6615, %v6558
      %6624 = vst.msk [vmem:[%s415 + $0x40] sm:$0xff] %vm6615, %v6559
      %6625 = vst.msk [vmem:[%s415 + $0x48] sm:$0xff] %vm6615, %v6560
      %6626 = vst.msk [vmem:[%s415 + $0x50] sm:$0xff] %vm6615, %v6561
      %6627 = vst.msk [vmem:[%s415 + $0x58] sm:$0xff] %vm6615, %v6562
      %6628 = vst.msk [vmem:[%s415 + $0x60] sm:$0xff] %vm6615, %v6563
      %6629 = vst.msk [vmem:[%s415 + $0x68] sm:$0xff] %vm6615, %v6564
      %6630 = vst.msk [vmem:[%s415 + $0x70] sm:$0xff] %vm6615, %v6565
      %6631 = vst.msk [vmem:[%s415 + $0x78] sm:$0xff] %vm6615, %v6566
      %6632 = vst.msk [vmem:[%s415 + $0x80] sm:$0xff] %vm6615, %v6567
      %6633 = vst.msk [vmem:[%s415 + $0x88] sm:$0xff] %vm6615, %v6568
      %6634 = vst.msk [vmem:[%s415 + $0x90] sm:$0xff] %vm6615, %v6569
      %6635 = vst.msk [vmem:[%s415 + $0x98] sm:$0xff] %vm6615, %v6570
      %6636 = vst.msk [vmem:[%s415 + $0xa0] sm:$0xff] %vm6615, %v6571
      %6637 = vst.msk [vmem:[%s415 + $0xa8] sm:$0xff] %vm6615, %v6572
      %6638 = vst.msk [vmem:[%s415 + $0xb0] sm:$0xff] %vm6615, %v6573
      %6639 = vst.msk [vmem:[%s415 + $0xb8] sm:$0xff] %vm6615, %v6574
      %6640 = vst.msk [vmem:[%s415 + $0xc0] sm:$0xff] %vm6615, %v6575
      %6641 = vst.msk [vmem:[%s415 + $0xc8] sm:$0xff] %vm6615, %v6576
      %6642 = vst.msk [vmem:[%s415 + $0xd0] sm:$0xff] %vm6615, %v6577
      %6643 = vst.msk [vmem:[%s415 + $0xd8] sm:$0xff] %vm6615, %v6578
      %6644 = vst.msk [vmem:[%s415 + $0xe0] sm:$0xff] %vm6615, %v6579
      %6645 = vst.msk [vmem:[%s415 + $0xe8] sm:$0xff] %vm6615, %v6580
      %6646 = vst.msk [vmem:[%s415 + $0xf0] sm:$0xff] %vm6615, %v6581
      %6647 = vst.msk [vmem:[%s415 + $0xf8] sm:$0xff] %vm6615, %v6582
      %6648 = vst.msk [vmem:[%s415 + $0x100] sm:$0xff] %vm6615, %v6583
      %6649 = vst.msk [vmem:[%s415 + $0x108] sm:$0xff] %vm6615, %v6584
      %6650 = vst.msk [vmem:[%s415 + $0x110] sm:$0xff] %vm6615, %v6585
      %6651 = vst.msk [vmem:[%s415 + $0x118] sm:$0xff] %vm6615, %v6586
      %6652 = vst.msk [vmem:[%s415 + $0x120] sm:$0xff] %vm6615, %v6587
      %6653 = vst.msk [vmem:[%s415 + $0x128] sm:$0xff] %vm6615, %v6588
      %6654 = vst.msk [vmem:[%s415 + $0x130] sm:$0xff] %vm6615, %v6589
      %6655 = vst.msk [vmem:[%s415 + $0x138] sm:$0xff] %vm6615, %v6590
      %6656 = vst.msk [vmem:[%s415 + $0x140] sm:$0xff] %vm6615, %v6591
      %6657 = vst.msk [vmem:[%s415 + $0x148] sm:$0xff] %vm6615, %v6592
      %6658 = vst.msk [vmem:[%s415 + $0x150] sm:$0xff] %vm6615, %v6593
      %6659 = vst.msk [vmem:[%s415 + $0x158] sm:$0xff] %vm6615, %v6594
      %6660 = vst.msk [vmem:[%s415 + $0x160] sm:$0xff] %vm6615, %v6595
      %6661 = vst.msk [vmem:[%s415 + $0x168] sm:$0xff] %vm6615, %v6596
      %6662 = vst.msk [vmem:[%s415 + $0x170] sm:$0xff] %vm6615, %v6597
      %6663 = vst.msk [vmem:[%s415 + $0x178] sm:$0xff] %vm6615, %v6598
      %6664 = vst.msk [vmem:[%s415 + $0x180] sm:$0xff] %vm6615, %v6599
      %6665 = vst.msk [vmem:[%s415 + $0x188] sm:$0xff] %vm6615, %v6600
      %6666 = vst.msk [vmem:[%s415 + $0x190] sm:$0xff] %vm6615, %v6601
      %6667 = vst.msk [vmem:[%s415 + $0x198] sm:$0xff] %vm6615, %v6602
      %6668 = vst.msk [vmem:[%s415 + $0x1a0] sm:$0xff] %vm6615, %v6603
      %6669 = vst.msk [vmem:[%s415 + $0x1a8] sm:$0xff] %vm6615, %v6604
      %6670 = vst.msk [vmem:[%s415 + $0x1b0] sm:$0xff] %vm6615, %v6605
      %6671 = vst.msk [vmem:[%s415 + $0x1b8] sm:$0xff] %vm6615, %v6606
      %6672 = vst.msk [vmem:[%s415 + $0x1c0] sm:$0xff] %vm6615, %v6607
      %6673 = vst.msk [vmem:[%s415 + $0x1c8] sm:$0xff] %vm6615, %v6608
      %6674 = vst.msk [vmem:[%s415 + $0x1d0] sm:$0xff] %vm6615, %v6609
      %6675 = vst.msk [vmem:[%s415 + $0x1d8] sm:$0xff] %vm6615, %v6610
      %6676 = vst.msk [vmem:[%s415 + $0x1e0] sm:$0xff] %vm6615, %v6611
      %6677 = vst.msk [vmem:[%s415 + $0x1e8] sm:$0xff] %vm6615, %v6612
      %6678 = vst.msk [vmem:[%s415 + $0x1f0] sm:$0xff] %vm6615, %v6613
      %6679 = vst.msk [vmem:[%s415 + $0x1f8] sm:$0xff] %vm6615, %v6614
      %s6680 = scalar_lea.vmem %s10, 1
      %v6681 = vld [vmem:[%s6680] ss:$4 sm:$0x3]
      %v6683 = vperm.slane %v6681, 0
      %v6684 = vperm.slane %v6681, 1
      %v6687 = vmul.f32 %v6093, %v6683
      %v6688 = vmul.f32 %v6094, %v6684
      %v6689 = vmul.f32 %v6095, %v6683
      %v6690 = vmul.f32 %v6096, %v6684
      %v6691 = vmul.f32 %v6097, %v6683
      %v6692 = vmul.f32 %v6098, %v6684
      %v6693 = vmul.f32 %v6099, %v6683
      %v6694 = vmul.f32 %v6100, %v6684
      %v6695 = vmul.f32 %v6101, %v6683
      %v6696 = vmul.f32 %v6102, %v6684
      %v6697 = vmul.f32 %v6103, %v6683
      %v6698 = vmul.f32 %v6104, %v6684
      %v6699 = vmul.f32 %v6105, %v6683
      %v6700 = vmul.f32 %v6106, %v6684
      %v6701 = vmul.f32 %v6107, %v6683
      %v6702 = vmul.f32 %v6108, %v6684
      %v6703 = vmul.f32 %v6109, %v6683
      %v6704 = vmul.f32 %v6110, %v6684
      %v6705 = vmul.f32 %v6111, %v6683
      %v6706 = vmul.f32 %v6112, %v6684
      %v6707 = vmul.f32 %v6113, %v6683
      %v6708 = vmul.f32 %v6114, %v6684
      %v6709 = vmul.f32 %v6115, %v6683
      %v6710 = vmul.f32 %v6116, %v6684
      %v6711 = vmul.f32 %v6117, %v6683
      %v6712 = vmul.f32 %v6118, %v6684
      %v6713 = vmul.f32 %v6119, %v6683
      %v6714 = vmul.f32 %v6120, %v6684
      %v6715 = vmul.f32 %v6121, %v6683
      %v6716 = vmul.f32 %v6122, %v6684
      %v6717 = vmul.f32 %v6123, %v6683
      %v6718 = vmul.f32 %v6124, %v6684
      %v6719 = vmul.f32 %v6125, %v6683
      %v6720 = vmul.f32 %v6126, %v6684
      %v6721 = vmul.f32 %v6127, %v6683
      %v6722 = vmul.f32 %v6128, %v6684
      %v6723 = vmul.f32 %v6129, %v6683
      %v6724 = vmul.f32 %v6130, %v6684
      %v6725 = vmul.f32 %v6131, %v6683
      %v6726 = vmul.f32 %v6132, %v6684
      %v6727 = vmul.f32 %v6133, %v6683
      %v6728 = vmul.f32 %v6134, %v6684
      %v6729 = vmul.f32 %v6135, %v6683
      %v6730 = vmul.f32 %v6136, %v6684
      %v6731 = vmul.f32 %v6137, %v6683
      %v6732 = vmul.f32 %v6138, %v6684
      %v6733 = vmul.f32 %v6139, %v6683
      %v6734 = vmul.f32 %v6140, %v6684
      %v6735 = vmul.f32 %v6141, %v6683
      %v6736 = vmul.f32 %v6142, %v6684
      %v6737 = vmul.f32 %v6143, %v6683
      %v6738 = vmul.f32 %v6144, %v6684
      %v6739 = vmul.f32 %v6145, %v6683
      %v6740 = vmul.f32 %v6146, %v6684
      %v6741 = vmul.f32 %v6147, %v6683
      %v6742 = vmul.f32 %v6148, %v6684
      %v6743 = vmul.f32 %v6149, %v6683
      %v6744 = vmul.f32 %v6150, %v6684
      %v6745 = vmul.f32 %v6151, %v6683
      %v6746 = vmul.f32 %v6152, %v6684
      %v6747 = vmul.f32 %v6153, %v6683
      %v6748 = vmul.f32 %v6154, %v6684
      %v6749 = vmul.f32 %v6155, %v6683
      %v6750 = vmul.f32 %v6156, %v6684
      %v6751 = vmul.f32 %v6157, %v6683
      %v6752 = vmul.f32 %v6158, %v6684
      %v6753 = vmul.f32 %v6159, %v6683
      %v6754 = vmul.f32 %v6160, %v6684
      %v6755 = vmul.f32 %v6161, %v6683
      %v6756 = vmul.f32 %v6162, %v6684
      %v6757 = vmul.f32 %v6163, %v6683
      %v6758 = vmul.f32 %v6164, %v6684
      %v6759 = vmul.f32 %v6165, %v6683
      %v6760 = vmul.f32 %v6166, %v6684
      %v6761 = vmul.f32 %v6167, %v6683
      %v6762 = vmul.f32 %v6168, %v6684
      %v6763 = vmul.f32 %v6169, %v6683
      %v6764 = vmul.f32 %v6170, %v6684
      %v6765 = vmul.f32 %v6171, %v6683
      %v6766 = vmul.f32 %v6172, %v6684
      %v6767 = vmul.f32 %v6173, %v6683
      %v6768 = vmul.f32 %v6174, %v6684
      %v6769 = vmul.f32 %v6175, %v6683
      %v6770 = vmul.f32 %v6176, %v6684
      %v6771 = vmul.f32 %v6177, %v6683
      %v6772 = vmul.f32 %v6178, %v6684
      %v6773 = vmul.f32 %v6179, %v6683
      %v6774 = vmul.f32 %v6180, %v6684
      %v6775 = vmul.f32 %v6181, %v6683
      %v6776 = vmul.f32 %v6182, %v6684
      %v6777 = vmul.f32 %v6183, %v6683
      %v6778 = vmul.f32 %v6184, %v6684
      %v6779 = vmul.f32 %v6185, %v6683
      %v6780 = vmul.f32 %v6186, %v6684
      %v6781 = vmul.f32 %v6187, %v6683
      %v6782 = vmul.f32 %v6188, %v6684
      %v6783 = vmul.f32 %v6189, %v6683
      %v6784 = vmul.f32 %v6190, %v6684
      %v6785 = vmul.f32 %v6191, %v6683
      %v6786 = vmul.f32 %v6192, %v6684
      %v6787 = vmul.f32 %v6193, %v6683
      %v6788 = vmul.f32 %v6194, %v6684
      %v6789 = vmul.f32 %v6195, %v6683
      %v6790 = vmul.f32 %v6196, %v6684
      %v6791 = vmul.f32 %v6197, %v6683
      %v6792 = vmul.f32 %v6198, %v6684
      %v6793 = vmul.f32 %v6199, %v6683
      %v6794 = vmul.f32 %v6200, %v6684
      %v6795 = vmul.f32 %v6201, %v6683
      %v6796 = vmul.f32 %v6202, %v6684
      %v6797 = vmul.f32 %v6203, %v6683
      %v6798 = vmul.f32 %v6204, %v6684
      %v6799 = vmul.f32 %v6205, %v6683
      %v6800 = vmul.f32 %v6206, %v6684
      %v6801 = vmul.f32 %v6207, %v6683
      %v6802 = vmul.f32 %v6208, %v6684
      %v6803 = vmul.f32 %v6209, %v6683
      %v6804 = vmul.f32 %v6210, %v6684
      %v6805 = vmul.f32 %v6211, %v6683
      %v6806 = vmul.f32 %v6212, %v6684
      %v6807 = vmul.f32 %v6213, %v6683
      %v6808 = vmul.f32 %v6214, %v6684
      %v6809 = vmul.f32 %v6215, %v6683
      %v6810 = vmul.f32 %v6216, %v6684
      %v6811 = vmul.f32 %v6217, %v6683
      %v6812 = vmul.f32 %v6218, %v6684
      %v6813 = vmul.f32 %v6219, %v6683
      %v6814 = vmul.f32 %v6220, %v6684
      %v6815 = vadd.f32 %v6687, %v6688
      %6816 = vadd.xlane.f32.xlu0 %v6815
      %v6817 = vpop.xlane.xlu0 %6816
      %v6818 = vadd.f32 %v6689, %v6690
      %6819 = vadd.xlane.f32.xlu0 %v6818
      %v6820 = vpop.xlane.xlu0 %6819
      %v6821 = vadd.f32 %v6691, %v6692
      %6822 = vadd.xlane.f32.xlu0 %v6821
      %v6823 = vpop.xlane.xlu0 %6822
      %v6824 = vadd.f32 %v6693, %v6694
      %6825 = vadd.xlane.f32.xlu0 %v6824
      %v6826 = vpop.xlane.xlu0 %6825
      %v6827 = vadd.f32 %v6695, %v6696
      %6828 = vadd.xlane.f32.xlu0 %v6827
      %v6829 = vpop.xlane.xlu0 %6828
      %v6830 = vadd.f32 %v6697, %v6698
      %6831 = vadd.xlane.f32.xlu0 %v6830
      %v6832 = vpop.xlane.xlu0 %6831
      %v6833 = vadd.f32 %v6699, %v6700
      %6834 = vadd.xlane.f32.xlu0 %v6833
      %v6835 = vpop.xlane.xlu0 %6834
      %v6836 = vadd.f32 %v6701, %v6702
      %6837 = vadd.xlane.f32.xlu0 %v6836
      %v6838 = vpop.xlane.xlu0 %6837
      %v6839 = vadd.f32 %v6703, %v6704
      %6840 = vadd.xlane.f32.xlu0 %v6839
      %v6841 = vpop.xlane.xlu0 %6840
      %v6842 = vadd.f32 %v6705, %v6706
      %6843 = vadd.xlane.f32.xlu0 %v6842
      %v6844 = vpop.xlane.xlu0 %6843
      %v6845 = vadd.f32 %v6707, %v6708
      %6846 = vadd.xlane.f32.xlu0 %v6845
      %v6847 = vpop.xlane.xlu0 %6846
      %v6848 = vadd.f32 %v6709, %v6710
      %6849 = vadd.xlane.f32.xlu0 %v6848
      %v6850 = vpop.xlane.xlu0 %6849
      %v6851 = vadd.f32 %v6711, %v6712
      %6852 = vadd.xlane.f32.xlu0 %v6851
      %v6853 = vpop.xlane.xlu0 %6852
      %v6854 = vadd.f32 %v6713, %v6714
      %6855 = vadd.xlane.f32.xlu0 %v6854
      %v6856 = vpop.xlane.xlu0 %6855
      %v6857 = vadd.f32 %v6715, %v6716
      %6858 = vadd.xlane.f32.xlu0 %v6857
      %v6859 = vpop.xlane.xlu0 %6858
      %v6860 = vadd.f32 %v6717, %v6718
      %6861 = vadd.xlane.f32.xlu0 %v6860
      %v6862 = vpop.xlane.xlu0 %6861
      %v6863 = vadd.f32 %v6719, %v6720
      %6864 = vadd.xlane.f32.xlu0 %v6863
      %v6865 = vpop.xlane.xlu0 %6864
      %v6866 = vadd.f32 %v6721, %v6722
      %6867 = vadd.xlane.f32.xlu0 %v6866
      %v6868 = vpop.xlane.xlu0 %6867
      %v6869 = vadd.f32 %v6723, %v6724
      %6870 = vadd.xlane.f32.xlu0 %v6869
      %v6871 = vpop.xlane.xlu0 %6870
      %v6872 = vadd.f32 %v6725, %v6726
      %6873 = vadd.xlane.f32.xlu0 %v6872
      %v6874 = vpop.xlane.xlu0 %6873
      %v6875 = vadd.f32 %v6727, %v6728
      %6876 = vadd.xlane.f32.xlu0 %v6875
      %v6877 = vpop.xlane.xlu0 %6876
      %v6878 = vadd.f32 %v6729, %v6730
      %6879 = vadd.xlane.f32.xlu0 %v6878
      %v6880 = vpop.xlane.xlu0 %6879
      %v6881 = vadd.f32 %v6731, %v6732
      %6882 = vadd.xlane.f32.xlu0 %v6881
      %v6883 = vpop.xlane.xlu0 %6882
      %v6884 = vadd.f32 %v6733, %v6734
      %6885 = vadd.xlane.f32.xlu0 %v6884
      %v6886 = vpop.xlane.xlu0 %6885
      %v6887 = vadd.f32 %v6735, %v6736
      %6888 = vadd.xlane.f32.xlu0 %v6887
      %v6889 = vpop.xlane.xlu0 %6888
      %v6890 = vadd.f32 %v6737, %v6738
      %6891 = vadd.xlane.f32.xlu0 %v6890
      %v6892 = vpop.xlane.xlu0 %6891
      %v6893 = vadd.f32 %v6739, %v6740
      %6894 = vadd.xlane.f32.xlu0 %v6893
      %v6895 = vpop.xlane.xlu0 %6894
      %v6896 = vadd.f32 %v6741, %v6742
      %6897 = vadd.xlane.f32.xlu0 %v6896
      %v6898 = vpop.xlane.xlu0 %6897
      %v6899 = vadd.f32 %v6743, %v6744
      %6900 = vadd.xlane.f32.xlu0 %v6899
      %v6901 = vpop.xlane.xlu0 %6900
      %v6902 = vadd.f32 %v6745, %v6746
      %6903 = vadd.xlane.f32.xlu0 %v6902
      %v6904 = vpop.xlane.xlu0 %6903
      %v6905 = vadd.f32 %v6747, %v6748
      %6906 = vadd.xlane.f32.xlu0 %v6905
      %v6907 = vpop.xlane.xlu0 %6906
      %v6908 = vadd.f32 %v6749, %v6750
      %6909 = vadd.xlane.f32.xlu0 %v6908
      %v6910 = vpop.xlane.xlu0 %6909
      %v6911 = vadd.f32 %v6751, %v6752
      %6912 = vadd.xlane.f32.xlu0 %v6911
      %v6913 = vpop.xlane.xlu0 %6912
      %v6914 = vadd.f32 %v6753, %v6754
      %6915 = vadd.xlane.f32.xlu0 %v6914
      %v6916 = vpop.xlane.xlu0 %6915
      %v6917 = vadd.f32 %v6755, %v6756
      %6918 = vadd.xlane.f32.xlu0 %v6917
      %v6919 = vpop.xlane.xlu0 %6918
      %v6920 = vadd.f32 %v6757, %v6758
      %6921 = vadd.xlane.f32.xlu0 %v6920
      %v6922 = vpop.xlane.xlu0 %6921
      %v6923 = vadd.f32 %v6759, %v6760
      %6924 = vadd.xlane.f32.xlu0 %v6923
      %v6925 = vpop.xlane.xlu0 %6924
      %v6926 = vadd.f32 %v6761, %v6762
      %6927 = vadd.xlane.f32.xlu0 %v6926
      %v6928 = vpop.xlane.xlu0 %6927
      %v6929 = vadd.f32 %v6763, %v6764
      %6930 = vadd.xlane.f32.xlu0 %v6929
      %v6931 = vpop.xlane.xlu0 %6930
      %v6932 = vadd.f32 %v6765, %v6766
      %6933 = vadd.xlane.f32.xlu0 %v6932
      %v6934 = vpop.xlane.xlu0 %6933
      %v6935 = vadd.f32 %v6767, %v6768
      %6936 = vadd.xlane.f32.xlu0 %v6935
      %v6937 = vpop.xlane.xlu0 %6936
      %v6938 = vadd.f32 %v6769, %v6770
      %6939 = vadd.xlane.f32.xlu0 %v6938
      %v6940 = vpop.xlane.xlu0 %6939
      %v6941 = vadd.f32 %v6771, %v6772
      %6942 = vadd.xlane.f32.xlu0 %v6941
      %v6943 = vpop.xlane.xlu0 %6942
      %v6944 = vadd.f32 %v6773, %v6774
      %6945 = vadd.xlane.f32.xlu0 %v6944
      %v6946 = vpop.xlane.xlu0 %6945
      %v6947 = vadd.f32 %v6775, %v6776
      %6948 = vadd.xlane.f32.xlu0 %v6947
      %v6949 = vpop.xlane.xlu0 %6948
      %v6950 = vadd.f32 %v6777, %v6778
      %6951 = vadd.xlane.f32.xlu0 %v6950
      %v6952 = vpop.xlane.xlu0 %6951
      %v6953 = vadd.f32 %v6779, %v6780
      %6954 = vadd.xlane.f32.xlu0 %v6953
      %v6955 = vpop.xlane.xlu0 %6954
      %v6956 = vadd.f32 %v6781, %v6782
      %6957 = vadd.xlane.f32.xlu0 %v6956
      %v6958 = vpop.xlane.xlu0 %6957
      %v6959 = vadd.f32 %v6783, %v6784
      %6960 = vadd.xlane.f32.xlu0 %v6959
      %v6961 = vpop.xlane.xlu0 %6960
      %v6962 = vadd.f32 %v6785, %v6786
      %6963 = vadd.xlane.f32.xlu0 %v6962
      %v6964 = vpop.xlane.xlu0 %6963
      %v6965 = vadd.f32 %v6787, %v6788
      %6966 = vadd.xlane.f32.xlu0 %v6965
      %v6967 = vpop.xlane.xlu0 %6966
      %v6968 = vadd.f32 %v6789, %v6790
      %6969 = vadd.xlane.f32.xlu0 %v6968
      %v6970 = vpop.xlane.xlu0 %6969
      %v6971 = vadd.f32 %v6791, %v6792
      %6972 = vadd.xlane.f32.xlu0 %v6971
      %v6973 = vpop.xlane.xlu0 %6972
      %v6974 = vadd.f32 %v6793, %v6794
      %6975 = vadd.xlane.f32.xlu0 %v6974
      %v6976 = vpop.xlane.xlu0 %6975
      %v6977 = vadd.f32 %v6795, %v6796
      %6978 = vadd.xlane.f32.xlu0 %v6977
      %v6979 = vpop.xlane.xlu0 %6978
      %v6980 = vadd.f32 %v6797, %v6798
      %6981 = vadd.xlane.f32.xlu0 %v6980
      %v6982 = vpop.xlane.xlu0 %6981
      %v6983 = vadd.f32 %v6799, %v6800
      %6984 = vadd.xlane.f32.xlu0 %v6983
      %v6985 = vpop.xlane.xlu0 %6984
      %v6986 = vadd.f32 %v6801, %v6802
      %6987 = vadd.xlane.f32.xlu0 %v6986
      %v6988 = vpop.xlane.xlu0 %6987
      %v6989 = vadd.f32 %v6803, %v6804
      %6990 = vadd.xlane.f32.xlu0 %v6989
      %v6991 = vpop.xlane.xlu0 %6990
      %v6992 = vadd.f32 %v6805, %v6806
      %6993 = vadd.xlane.f32.xlu0 %v6992
      %v6994 = vpop.xlane.xlu0 %6993
      %v6995 = vadd.f32 %v6807, %v6808
      %6996 = vadd.xlane.f32.xlu0 %v6995
      %v6997 = vpop.xlane.xlu0 %6996
      %v6998 = vadd.f32 %v6809, %v6810
      %6999 = vadd.xlane.f32.xlu0 %v6998
      %v7000 = vpop.xlane.xlu0 %6999
      %v7001 = vadd.f32 %v6811, %v6812
      %7002 = vadd.xlane.f32.xlu0 %v7001
      %v7003 = vpop.xlane.xlu0 %7002
      %v7004 = vadd.f32 %v6813, %v6814
      %7005 = vadd.xlane.f32.xlu0 %v7004
      %v7006 = vpop.xlane.xlu0 %7005
      %v7007 = vld [vmem:[%s11] sm:$0x1]
      %v7009 = vperm.slane %v7007, 0
      %v7011 = vadd.f32 %v6817, %v7009
      %v7012 = vadd.f32 %v6820, %v7009
      %v7013 = vadd.f32 %v6823, %v7009
      %v7014 = vadd.f32 %v6826, %v7009
      %v7015 = vadd.f32 %v6829, %v7009
      %v7016 = vadd.f32 %v6832, %v7009
      %v7017 = vadd.f32 %v6835, %v7009
      %v7018 = vadd.f32 %v6838, %v7009
      %v7019 = vadd.f32 %v6841, %v7009
      %v7020 = vadd.f32 %v6844, %v7009
      %v7021 = vadd.f32 %v6847, %v7009
      %v7022 = vadd.f32 %v6850, %v7009
      %v7023 = vadd.f32 %v6853, %v7009
      %v7024 = vadd.f32 %v6856, %v7009
      %v7025 = vadd.f32 %v6859, %v7009
      %v7026 = vadd.f32 %v6862, %v7009
      %v7027 = vadd.f32 %v6865, %v7009
      %v7028 = vadd.f32 %v6868, %v7009
      %v7029 = vadd.f32 %v6871, %v7009
      %v7030 = vadd.f32 %v6874, %v7009
      %v7031 = vadd.f32 %v6877, %v7009
      %v7032 = vadd.f32 %v6880, %v7009
      %v7033 = vadd.f32 %v6883, %v7009
      %v7034 = vadd.f32 %v6886, %v7009
      %v7035 = vadd.f32 %v6889, %v7009
      %v7036 = vadd.f32 %v6892, %v7009
      %v7037 = vadd.f32 %v6895, %v7009
      %v7038 = vadd.f32 %v6898, %v7009
      %v7039 = vadd.f32 %v6901, %v7009
      %v7040 = vadd.f32 %v6904, %v7009
      %v7041 = vadd.f32 %v6907, %v7009
      %v7042 = vadd.f32 %v6910, %v7009
      %v7043 = vadd.f32 %v6913, %v7009
      %v7044 = vadd.f32 %v6916, %v7009
      %v7045 = vadd.f32 %v6919, %v7009
      %v7046 = vadd.f32 %v6922, %v7009
      %v7047 = vadd.f32 %v6925, %v7009
      %v7048 = vadd.f32 %v6928, %v7009
      %v7049 = vadd.f32 %v6931, %v7009
      %v7050 = vadd.f32 %v6934, %v7009
      %v7051 = vadd.f32 %v6937, %v7009
      %v7052 = vadd.f32 %v6940, %v7009
      %v7053 = vadd.f32 %v6943, %v7009
      %v7054 = vadd.f32 %v6946, %v7009
      %v7055 = vadd.f32 %v6949, %v7009
      %v7056 = vadd.f32 %v6952, %v7009
      %v7057 = vadd.f32 %v6955, %v7009
      %v7058 = vadd.f32 %v6958, %v7009
      %v7059 = vadd.f32 %v6961, %v7009
      %v7060 = vadd.f32 %v6964, %v7009
      %v7061 = vadd.f32 %v6967, %v7009
      %v7062 = vadd.f32 %v6970, %v7009
      %v7063 = vadd.f32 %v6973, %v7009
      %v7064 = vadd.f32 %v6976, %v7009
      %v7065 = vadd.f32 %v6979, %v7009
      %v7066 = vadd.f32 %v6982, %v7009
      %v7067 = vadd.f32 %v6985, %v7009
      %v7068 = vadd.f32 %v6988, %v7009
      %v7069 = vadd.f32 %v6991, %v7009
      %v7070 = vadd.f32 %v6994, %v7009
      %v7071 = vadd.f32 %v6997, %v7009
      %v7072 = vadd.f32 %v7000, %v7009
      %v7073 = vadd.f32 %v7003, %v7009
      %v7074 = vadd.f32 %v7006, %v7009
      %vm7075 = vcmask 15368
      %7076 = vst.msk [vmem:[%s415] sm:$0xff] %vm7075, %v7011
      %7077 = vst.msk [vmem:[%s415 + $0x8] sm:$0xff] %vm7075, %v7012
      %7078 = vst.msk [vmem:[%s415 + $0x10] sm:$0xff] %vm7075, %v7013
      %7079 = vst.msk [vmem:[%s415 + $0x18] sm:$0xff] %vm7075, %v7014
      %7080 = vst.msk [vmem:[%s415 + $0x20] sm:$0xff] %vm7075, %v7015
      %7081 = vst.msk [vmem:[%s415 + $0x28] sm:$0xff] %vm7075, %v7016
      %7082 = vst.msk [vmem:[%s415 + $0x30] sm:$0xff] %vm7075, %v7017
      %7083 = vst.msk [vmem:[%s415 + $0x38] sm:$0xff] %vm7075, %v7018
      %7084 = vst.msk [vmem:[%s415 + $0x40] sm:$0xff] %vm7075, %v7019
      %7085 = vst.msk [vmem:[%s415 + $0x48] sm:$0xff] %vm7075, %v7020
      %7086 = vst.msk [vmem:[%s415 + $0x50] sm:$0xff] %vm7075, %v7021
      %7087 = vst.msk [vmem:[%s415 + $0x58] sm:$0xff] %vm7075, %v7022
      %7088 = vst.msk [vmem:[%s415 + $0x60] sm:$0xff] %vm7075, %v7023
      %7089 = vst.msk [vmem:[%s415 + $0x68] sm:$0xff] %vm7075, %v7024
      %7090 = vst.msk [vmem:[%s415 + $0x70] sm:$0xff] %vm7075, %v7025
      %7091 = vst.msk [vmem:[%s415 + $0x78] sm:$0xff] %vm7075, %v7026
      %7092 = vst.msk [vmem:[%s415 + $0x80] sm:$0xff] %vm7075, %v7027
      %7093 = vst.msk [vmem:[%s415 + $0x88] sm:$0xff] %vm7075, %v7028
      %7094 = vst.msk [vmem:[%s415 + $0x90] sm:$0xff] %vm7075, %v7029
      %7095 = vst.msk [vmem:[%s415 + $0x98] sm:$0xff] %vm7075, %v7030
      %7096 = vst.msk [vmem:[%s415 + $0xa0] sm:$0xff] %vm7075, %v7031
      %7097 = vst.msk [vmem:[%s415 + $0xa8] sm:$0xff] %vm7075, %v7032
      %7098 = vst.msk [vmem:[%s415 + $0xb0] sm:$0xff] %vm7075, %v7033
      %7099 = vst.msk [vmem:[%s415 + $0xb8] sm:$0xff] %vm7075, %v7034
      %7100 = vst.msk [vmem:[%s415 + $0xc0] sm:$0xff] %vm7075, %v7035
      %7101 = vst.msk [vmem:[%s415 + $0xc8] sm:$0xff] %vm7075, %v7036
      %7102 = vst.msk [vmem:[%s415 + $0xd0] sm:$0xff] %vm7075, %v7037
      %7103 = vst.msk [vmem:[%s415 + $0xd8] sm:$0xff] %vm7075, %v7038
      %7104 = vst.msk [vmem:[%s415 + $0xe0] sm:$0xff] %vm7075, %v7039
      %7105 = vst.msk [vmem:[%s415 + $0xe8] sm:$0xff] %vm7075, %v7040
      %7106 = vst.msk [vmem:[%s415 + $0xf0] sm:$0xff] %vm7075, %v7041
      %7107 = vst.msk [vmem:[%s415 + $0xf8] sm:$0xff] %vm7075, %v7042
      %7108 = vst.msk [vmem:[%s415 + $0x100] sm:$0xff] %vm7075, %v7043
      %7109 = vst.msk [vmem:[%s415 + $0x108] sm:$0xff] %vm7075, %v7044
      %7110 = vst.msk [vmem:[%s415 + $0x110] sm:$0xff] %vm7075, %v7045
      %7111 = vst.msk [vmem:[%s415 + $0x118] sm:$0xff] %vm7075, %v7046
      %7112 = vst.msk [vmem:[%s415 + $0x120] sm:$0xff] %vm7075, %v7047
      %7113 = vst.msk [vmem:[%s415 + $0x128] sm:$0xff] %vm7075, %v7048
      %7114 = vst.msk [vmem:[%s415 + $0x130] sm:$0xff] %vm7075, %v7049
      %7115 = vst.msk [vmem:[%s415 + $0x138] sm:$0xff] %vm7075, %v7050
      %7116 = vst.msk [vmem:[%s415 + $0x140] sm:$0xff] %vm7075, %v7051
      %7117 = vst.msk [vmem:[%s415 + $0x148] sm:$0xff] %vm7075, %v7052
      %7118 = vst.msk [vmem:[%s415 + $0x150] sm:$0xff] %vm7075, %v7053
      %7119 = vst.msk [vmem:[%s415 + $0x158] sm:$0xff] %vm7075, %v7054
      %7120 = vst.msk [vmem:[%s415 + $0x160] sm:$0xff] %vm7075, %v7055
      %7121 = vst.msk [vmem:[%s415 + $0x168] sm:$0xff] %vm7075, %v7056
      %7122 = vst.msk [vmem:[%s415 + $0x170] sm:$0xff] %vm7075, %v7057
      %7123 = vst.msk [vmem:[%s415 + $0x178] sm:$0xff] %vm7075, %v7058
      %7124 = vst.msk [vmem:[%s415 + $0x180] sm:$0xff] %vm7075, %v7059
      %7125 = vst.msk [vmem:[%s415 + $0x188] sm:$0xff] %vm7075, %v7060
      %7126 = vst.msk [vmem:[%s415 + $0x190] sm:$0xff] %vm7075, %v7061
      %7127 = vst.msk [vmem:[%s415 + $0x198] sm:$0xff] %vm7075, %v7062
      %7128 = vst.msk [vmem:[%s415 + $0x1a0] sm:$0xff] %vm7075, %v7063
      %7129 = vst.msk [vmem:[%s415 + $0x1a8] sm:$0xff] %vm7075, %v7064
      %7130 = vst.msk [vmem:[%s415 + $0x1b0] sm:$0xff] %vm7075, %v7065
      %7131 = vst.msk [vmem:[%s415 + $0x1b8] sm:$0xff] %vm7075, %v7066
      %7132 = vst.msk [vmem:[%s415 + $0x1c0] sm:$0xff] %vm7075, %v7067
      %7133 = vst.msk [vmem:[%s415 + $0x1c8] sm:$0xff] %vm7075, %v7068
      %7134 = vst.msk [vmem:[%s415 + $0x1d0] sm:$0xff] %vm7075, %v7069
      %7135 = vst.msk [vmem:[%s415 + $0x1d8] sm:$0xff] %vm7075, %v7070
      %7136 = vst.msk [vmem:[%s415 + $0x1e0] sm:$0xff] %vm7075, %v7071
      %7137 = vst.msk [vmem:[%s415 + $0x1e8] sm:$0xff] %vm7075, %v7072
      %7138 = vst.msk [vmem:[%s415 + $0x1f0] sm:$0xff] %vm7075, %v7073
      %7139 = vst.msk [vmem:[%s415 + $0x1f8] sm:$0xff] %vm7075, %v7074
      %s7140 = scalar_lea.vmem %s10, 2
      %v7141 = vld [vmem:[%s7140] ss:$4 sm:$0x3]
      %v7143 = vperm.slane %v7141, 0
      %v7144 = vperm.slane %v7141, 1
      %v7147 = vmul.f32 %v6093, %v7143
      %v7148 = vmul.f32 %v6094, %v7144
      %v7149 = vmul.f32 %v6095, %v7143
      %v7150 = vmul.f32 %v6096, %v7144
      %v7151 = vmul.f32 %v6097, %v7143
      %v7152 = vmul.f32 %v6098, %v7144
      %v7153 = vmul.f32 %v6099, %v7143
      %v7154 = vmul.f32 %v6100, %v7144
      %v7155 = vmul.f32 %v6101, %v7143
      %v7156 = vmul.f32 %v6102, %v7144
      %v7157 = vmul.f32 %v6103, %v7143
      %v7158 = vmul.f32 %v6104, %v7144
      %v7159 = vmul.f32 %v6105, %v7143
      %v7160 = vmul.f32 %v6106, %v7144
      %v7161 = vmul.f32 %v6107, %v7143
      %v7162 = vmul.f32 %v6108, %v7144
      %v7163 = vmul.f32 %v6109, %v7143
      %v7164 = vmul.f32 %v6110, %v7144
      %v7165 = vmul.f32 %v6111, %v7143
      %v7166 = vmul.f32 %v6112, %v7144
      %v7167 = vmul.f32 %v6113, %v7143
      %v7168 = vmul.f32 %v6114, %v7144
      %v7169 = vmul.f32 %v6115, %v7143
      %v7170 = vmul.f32 %v6116, %v7144
      %v7171 = vmul.f32 %v6117, %v7143
      %v7172 = vmul.f32 %v6118, %v7144
      %v7173 = vmul.f32 %v6119, %v7143
      %v7174 = vmul.f32 %v6120, %v7144
      %v7175 = vmul.f32 %v6121, %v7143
      %v7176 = vmul.f32 %v6122, %v7144
      %v7177 = vmul.f32 %v6123, %v7143
      %v7178 = vmul.f32 %v6124, %v7144
      %v7179 = vmul.f32 %v6125, %v7143
      %v7180 = vmul.f32 %v6126, %v7144
      %v7181 = vmul.f32 %v6127, %v7143
      %v7182 = vmul.f32 %v6128, %v7144
      %v7183 = vmul.f32 %v6129, %v7143
      %v7184 = vmul.f32 %v6130, %v7144
      %v7185 = vmul.f32 %v6131, %v7143
      %v7186 = vmul.f32 %v6132, %v7144
      %v7187 = vmul.f32 %v6133, %v7143
      %v7188 = vmul.f32 %v6134, %v7144
      %v7189 = vmul.f32 %v6135, %v7143
      %v7190 = vmul.f32 %v6136, %v7144
      %v7191 = vmul.f32 %v6137, %v7143
      %v7192 = vmul.f32 %v6138, %v7144
      %v7193 = vmul.f32 %v6139, %v7143
      %v7194 = vmul.f32 %v6140, %v7144
      %v7195 = vmul.f32 %v6141, %v7143
      %v7196 = vmul.f32 %v6142, %v7144
      %v7197 = vmul.f32 %v6143, %v7143
      %v7198 = vmul.f32 %v6144, %v7144
      %v7199 = vmul.f32 %v6145, %v7143
      %v7200 = vmul.f32 %v6146, %v7144
      %v7201 = vmul.f32 %v6147, %v7143
      %v7202 = vmul.f32 %v6148, %v7144
      %v7203 = vmul.f32 %v6149, %v7143
      %v7204 = vmul.f32 %v6150, %v7144
      %v7205 = vmul.f32 %v6151, %v7143
      %v7206 = vmul.f32 %v6152, %v7144
      %v7207 = vmul.f32 %v6153, %v7143
      %v7208 = vmul.f32 %v6154, %v7144
      %v7209 = vmul.f32 %v6155, %v7143
      %v7210 = vmul.f32 %v6156, %v7144
      %v7211 = vmul.f32 %v6157, %v7143
      %v7212 = vmul.f32 %v6158, %v7144
      %v7213 = vmul.f32 %v6159, %v7143
      %v7214 = vmul.f32 %v6160, %v7144
      %v7215 = vmul.f32 %v6161, %v7143
      %v7216 = vmul.f32 %v6162, %v7144
      %v7217 = vmul.f32 %v6163, %v7143
      %v7218 = vmul.f32 %v6164, %v7144
      %v7219 = vmul.f32 %v6165, %v7143
      %v7220 = vmul.f32 %v6166, %v7144
      %v7221 = vmul.f32 %v6167, %v7143
      %v7222 = vmul.f32 %v6168, %v7144
      %v7223 = vmul.f32 %v6169, %v7143
      %v7224 = vmul.f32 %v6170, %v7144
      %v7225 = vmul.f32 %v6171, %v7143
      %v7226 = vmul.f32 %v6172, %v7144
      %v7227 = vmul.f32 %v6173, %v7143
      %v7228 = vmul.f32 %v6174, %v7144
      %v7229 = vmul.f32 %v6175, %v7143
      %v7230 = vmul.f32 %v6176, %v7144
      %v7231 = vmul.f32 %v6177, %v7143
      %v7232 = vmul.f32 %v6178, %v7144
      %v7233 = vmul.f32 %v6179, %v7143
      %v7234 = vmul.f32 %v6180, %v7144
      %v7235 = vmul.f32 %v6181, %v7143
      %v7236 = vmul.f32 %v6182, %v7144
      %v7237 = vmul.f32 %v6183, %v7143
      %v7238 = vmul.f32 %v6184, %v7144
      %v7239 = vmul.f32 %v6185, %v7143
      %v7240 = vmul.f32 %v6186, %v7144
      %v7241 = vmul.f32 %v6187, %v7143
      %v7242 = vmul.f32 %v6188, %v7144
      %v7243 = vmul.f32 %v6189, %v7143
      %v7244 = vmul.f32 %v6190, %v7144
      %v7245 = vmul.f32 %v6191, %v7143
      %v7246 = vmul.f32 %v6192, %v7144
      %v7247 = vmul.f32 %v6193, %v7143
      %v7248 = vmul.f32 %v6194, %v7144
      %v7249 = vmul.f32 %v6195, %v7143
      %v7250 = vmul.f32 %v6196, %v7144
      %v7251 = vmul.f32 %v6197, %v7143
      %v7252 = vmul.f32 %v6198, %v7144
      %v7253 = vmul.f32 %v6199, %v7143
      %v7254 = vmul.f32 %v6200, %v7144
      %v7255 = vmul.f32 %v6201, %v7143
      %v7256 = vmul.f32 %v6202, %v7144
      %v7257 = vmul.f32 %v6203, %v7143
      %v7258 = vmul.f32 %v6204, %v7144
      %v7259 = vmul.f32 %v6205, %v7143
      %v7260 = vmul.f32 %v6206, %v7144
      %v7261 = vmul.f32 %v6207, %v7143
      %v7262 = vmul.f32 %v6208, %v7144
      %v7263 = vmul.f32 %v6209, %v7143
      %v7264 = vmul.f32 %v6210, %v7144
      %v7265 = vmul.f32 %v6211, %v7143
      %v7266 = vmul.f32 %v6212, %v7144
      %v7267 = vmul.f32 %v6213, %v7143
      %v7268 = vmul.f32 %v6214, %v7144
      %v7269 = vmul.f32 %v6215, %v7143
      %v7270 = vmul.f32 %v6216, %v7144
      %v7271 = vmul.f32 %v6217, %v7143
      %v7272 = vmul.f32 %v6218, %v7144
      %v7273 = vmul.f32 %v6219, %v7143
      %v7274 = vmul.f32 %v6220, %v7144
      %v7275 = vadd.f32 %v7147, %v7148
      %7276 = vadd.xlane.f32.xlu0 %v7275
      %v7277 = vpop.xlane.xlu0 %7276
      %v7278 = vadd.f32 %v7149, %v7150
      %7279 = vadd.xlane.f32.xlu0 %v7278
      %v7280 = vpop.xlane.xlu0 %7279
      %v7281 = vadd.f32 %v7151, %v7152
      %7282 = vadd.xlane.f32.xlu0 %v7281
      %v7283 = vpop.xlane.xlu0 %7282
      %v7284 = vadd.f32 %v7153, %v7154
      %7285 = vadd.xlane.f32.xlu0 %v7284
      %v7286 = vpop.xlane.xlu0 %7285
      %v7287 = vadd.f32 %v7155, %v7156
      %7288 = vadd.xlane.f32.xlu0 %v7287
      %v7289 = vpop.xlane.xlu0 %7288
      %v7290 = vadd.f32 %v7157, %v7158
      %7291 = vadd.xlane.f32.xlu0 %v7290
      %v7292 = vpop.xlane.xlu0 %7291
      %v7293 = vadd.f32 %v7159, %v7160
      %7294 = vadd.xlane.f32.xlu0 %v7293
      %v7295 = vpop.xlane.xlu0 %7294
      %v7296 = vadd.f32 %v7161, %v7162
      %7297 = vadd.xlane.f32.xlu0 %v7296
      %v7298 = vpop.xlane.xlu0 %7297
      %v7299 = vadd.f32 %v7163, %v7164
      %7300 = vadd.xlane.f32.xlu0 %v7299
      %v7301 = vpop.xlane.xlu0 %7300
      %v7302 = vadd.f32 %v7165, %v7166
      %7303 = vadd.xlane.f32.xlu0 %v7302
      %v7304 = vpop.xlane.xlu0 %7303
      %v7305 = vadd.f32 %v7167, %v7168
      %7306 = vadd.xlane.f32.xlu0 %v7305
      %v7307 = vpop.xlane.xlu0 %7306
      %v7308 = vadd.f32 %v7169, %v7170
      %7309 = vadd.xlane.f32.xlu0 %v7308
      %v7310 = vpop.xlane.xlu0 %7309
      %v7311 = vadd.f32 %v7171, %v7172
      %7312 = vadd.xlane.f32.xlu0 %v7311
      %v7313 = vpop.xlane.xlu0 %7312
      %v7314 = vadd.f32 %v7173, %v7174
      %7315 = vadd.xlane.f32.xlu0 %v7314
      %v7316 = vpop.xlane.xlu0 %7315
      %v7317 = vadd.f32 %v7175, %v7176
      %7318 = vadd.xlane.f32.xlu0 %v7317
      %v7319 = vpop.xlane.xlu0 %7318
      %v7320 = vadd.f32 %v7177, %v7178
      %7321 = vadd.xlane.f32.xlu0 %v7320
      %v7322 = vpop.xlane.xlu0 %7321
      %v7323 = vadd.f32 %v7179, %v7180
      %7324 = vadd.xlane.f32.xlu0 %v7323
      %v7325 = vpop.xlane.xlu0 %7324
      %v7326 = vadd.f32 %v7181, %v7182
      %7327 = vadd.xlane.f32.xlu0 %v7326
      %v7328 = vpop.xlane.xlu0 %7327
      %v7329 = vadd.f32 %v7183, %v7184
      %7330 = vadd.xlane.f32.xlu0 %v7329
      %v7331 = vpop.xlane.xlu0 %7330
      %v7332 = vadd.f32 %v7185, %v7186
      %7333 = vadd.xlane.f32.xlu0 %v7332
      %v7334 = vpop.xlane.xlu0 %7333
      %v7335 = vadd.f32 %v7187, %v7188
      %7336 = vadd.xlane.f32.xlu0 %v7335
      %v7337 = vpop.xlane.xlu0 %7336
      %v7338 = vadd.f32 %v7189, %v7190
      %7339 = vadd.xlane.f32.xlu0 %v7338
      %v7340 = vpop.xlane.xlu0 %7339
      %v7341 = vadd.f32 %v7191, %v7192
      %7342 = vadd.xlane.f32.xlu0 %v7341
      %v7343 = vpop.xlane.xlu0 %7342
      %v7344 = vadd.f32 %v7193, %v7194
      %7345 = vadd.xlane.f32.xlu0 %v7344
      %v7346 = vpop.xlane.xlu0 %7345
      %v7347 = vadd.f32 %v7195, %v7196
      %7348 = vadd.xlane.f32.xlu0 %v7347
      %v7349 = vpop.xlane.xlu0 %7348
      %v7350 = vadd.f32 %v7197, %v7198
      %7351 = vadd.xlane.f32.xlu0 %v7350
      %v7352 = vpop.xlane.xlu0 %7351
      %v7353 = vadd.f32 %v7199, %v7200
      %7354 = vadd.xlane.f32.xlu0 %v7353
      %v7355 = vpop.xlane.xlu0 %7354
      %v7356 = vadd.f32 %v7201, %v7202
      %7357 = vadd.xlane.f32.xlu0 %v7356
      %v7358 = vpop.xlane.xlu0 %7357
      %v7359 = vadd.f32 %v7203, %v7204
      %7360 = vadd.xlane.f32.xlu0 %v7359
      %v7361 = vpop.xlane.xlu0 %7360
      %v7362 = vadd.f32 %v7205, %v7206
      %7363 = vadd.xlane.f32.xlu0 %v7362
      %v7364 = vpop.xlane.xlu0 %7363
      %v7365 = vadd.f32 %v7207, %v7208
      %7366 = vadd.xlane.f32.xlu0 %v7365
      %v7367 = vpop.xlane.xlu0 %7366
      %v7368 = vadd.f32 %v7209, %v7210
      %7369 = vadd.xlane.f32.xlu0 %v7368
      %v7370 = vpop.xlane.xlu0 %7369
      %v7371 = vadd.f32 %v7211, %v7212
      %7372 = vadd.xlane.f32.xlu0 %v7371
      %v7373 = vpop.xlane.xlu0 %7372
      %v7374 = vadd.f32 %v7213, %v7214
      %7375 = vadd.xlane.f32.xlu0 %v7374
      %v7376 = vpop.xlane.xlu0 %7375
      %v7377 = vadd.f32 %v7215, %v7216
      %7378 = vadd.xlane.f32.xlu0 %v7377
      %v7379 = vpop.xlane.xlu0 %7378
      %v7380 = vadd.f32 %v7217, %v7218
      %7381 = vadd.xlane.f32.xlu0 %v7380
      %v7382 = vpop.xlane.xlu0 %7381
      %v7383 = vadd.f32 %v7219, %v7220
      %7384 = vadd.xlane.f32.xlu0 %v7383
      %v7385 = vpop.xlane.xlu0 %7384
      %v7386 = vadd.f32 %v7221, %v7222
      %7387 = vadd.xlane.f32.xlu0 %v7386
      %v7388 = vpop.xlane.xlu0 %7387
      %v7389 = vadd.f32 %v7223, %v7224
      %7390 = vadd.xlane.f32.xlu0 %v7389
      %v7391 = vpop.xlane.xlu0 %7390
      %v7392 = vadd.f32 %v7225, %v7226
      %7393 = vadd.xlane.f32.xlu0 %v7392
      %v7394 = vpop.xlane.xlu0 %7393
      %v7395 = vadd.f32 %v7227, %v7228
      %7396 = vadd.xlane.f32.xlu0 %v7395
      %v7397 = vpop.xlane.xlu0 %7396
      %v7398 = vadd.f32 %v7229, %v7230
      %7399 = vadd.xlane.f32.xlu0 %v7398
      %v7400 = vpop.xlane.xlu0 %7399
      %v7401 = vadd.f32 %v7231, %v7232
      %7402 = vadd.xlane.f32.xlu0 %v7401
      %v7403 = vpop.xlane.xlu0 %7402
      %v7404 = vadd.f32 %v7233, %v7234
      %7405 = vadd.xlane.f32.xlu0 %v7404
      %v7406 = vpop.xlane.xlu0 %7405
      %v7407 = vadd.f32 %v7235, %v7236
      %7408 = vadd.xlane.f32.xlu0 %v7407
      %v7409 = vpop.xlane.xlu0 %7408
      %v7410 = vadd.f32 %v7237, %v7238
      %7411 = vadd.xlane.f32.xlu0 %v7410
      %v7412 = vpop.xlane.xlu0 %7411
      %v7413 = vadd.f32 %v7239, %v7240
      %7414 = vadd.xlane.f32.xlu0 %v7413
      %v7415 = vpop.xlane.xlu0 %7414
      %v7416 = vadd.f32 %v7241, %v7242
      %7417 = vadd.xlane.f32.xlu0 %v7416
      %v7418 = vpop.xlane.xlu0 %7417
      %v7419 = vadd.f32 %v7243, %v7244
      %7420 = vadd.xlane.f32.xlu0 %v7419
      %v7421 = vpop.xlane.xlu0 %7420
      %v7422 = vadd.f32 %v7245, %v7246
      %7423 = vadd.xlane.f32.xlu0 %v7422
      %v7424 = vpop.xlane.xlu0 %7423
      %v7425 = vadd.f32 %v7247, %v7248
      %7426 = vadd.xlane.f32.xlu0 %v7425
      %v7427 = vpop.xlane.xlu0 %7426
      %v7428 = vadd.f32 %v7249, %v7250
      %7429 = vadd.xlane.f32.xlu0 %v7428
      %v7430 = vpop.xlane.xlu0 %7429
      %v7431 = vadd.f32 %v7251, %v7252
      %7432 = vadd.xlane.f32.xlu0 %v7431
      %v7433 = vpop.xlane.xlu0 %7432
      %v7434 = vadd.f32 %v7253, %v7254
      %7435 = vadd.xlane.f32.xlu0 %v7434
      %v7436 = vpop.xlane.xlu0 %7435
      %v7437 = vadd.f32 %v7255, %v7256
      %7438 = vadd.xlane.f32.xlu0 %v7437
      %v7439 = vpop.xlane.xlu0 %7438
      %v7440 = vadd.f32 %v7257, %v7258
      %7441 = vadd.xlane.f32.xlu0 %v7440
      %v7442 = vpop.xlane.xlu0 %7441
      %v7443 = vadd.f32 %v7259, %v7260
      %7444 = vadd.xlane.f32.xlu0 %v7443
      %v7445 = vpop.xlane.xlu0 %7444
      %v7446 = vadd.f32 %v7261, %v7262
      %7447 = vadd.xlane.f32.xlu0 %v7446
      %v7448 = vpop.xlane.xlu0 %7447
      %v7449 = vadd.f32 %v7263, %v7264
      %7450 = vadd.xlane.f32.xlu0 %v7449
      %v7451 = vpop.xlane.xlu0 %7450
      %v7452 = vadd.f32 %v7265, %v7266
      %7453 = vadd.xlane.f32.xlu0 %v7452
      %v7454 = vpop.xlane.xlu0 %7453
      %v7455 = vadd.f32 %v7267, %v7268
      %7456 = vadd.xlane.f32.xlu0 %v7455
      %v7457 = vpop.xlane.xlu0 %7456
      %v7458 = vadd.f32 %v7269, %v7270
      %7459 = vadd.xlane.f32.xlu0 %v7458
      %v7460 = vpop.xlane.xlu0 %7459
      %v7461 = vadd.f32 %v7271, %v7272
      %7462 = vadd.xlane.f32.xlu0 %v7461
      %v7463 = vpop.xlane.xlu0 %7462
      %v7464 = vadd.f32 %v7273, %v7274
      %7465 = vadd.xlane.f32.xlu0 %v7464
      %v7466 = vpop.xlane.xlu0 %7465
      %v7467 = vld [vmem:[%s11] sm:$0x1]
      %v7469 = vperm.slane %v7467, 0
      %v7471 = vadd.f32 %v7277, %v7469
      %v7472 = vadd.f32 %v7280, %v7469
      %v7473 = vadd.f32 %v7283, %v7469
      %v7474 = vadd.f32 %v7286, %v7469
      %v7475 = vadd.f32 %v7289, %v7469
      %v7476 = vadd.f32 %v7292, %v7469
      %v7477 = vadd.f32 %v7295, %v7469
      %v7478 = vadd.f32 %v7298, %v7469
      %v7479 = vadd.f32 %v7301, %v7469
      %v7480 = vadd.f32 %v7304, %v7469
      %v7481 = vadd.f32 %v7307, %v7469
      %v7482 = vadd.f32 %v7310, %v7469
      %v7483 = vadd.f32 %v7313, %v7469
      %v7484 = vadd.f32 %v7316, %v7469
      %v7485 = vadd.f32 %v7319, %v7469
      %v7486 = vadd.f32 %v7322, %v7469
      %v7487 = vadd.f32 %v7325, %v7469
      %v7488 = vadd.f32 %v7328, %v7469
      %v7489 = vadd.f32 %v7331, %v7469
      %v7490 = vadd.f32 %v7334, %v7469
      %v7491 = vadd.f32 %v7337, %v7469
      %v7492 = vadd.f32 %v7340, %v7469
      %v7493 = vadd.f32 %v7343, %v7469
      %v7494 = vadd.f32 %v7346, %v7469
      %v7495 = vadd.f32 %v7349, %v7469
      %v7496 = vadd.f32 %v7352, %v7469
      %v7497 = vadd.f32 %v7355, %v7469
      %v7498 = vadd.f32 %v7358, %v7469
      %v7499 = vadd.f32 %v7361, %v7469
      %v7500 = vadd.f32 %v7364, %v7469
      %v7501 = vadd.f32 %v7367, %v7469
      %v7502 = vadd.f32 %v7370, %v7469
      %v7503 = vadd.f32 %v7373, %v7469
      %v7504 = vadd.f32 %v7376, %v7469
      %v7505 = vadd.f32 %v7379, %v7469
      %v7506 = vadd.f32 %v7382, %v7469
      %v7507 = vadd.f32 %v7385, %v7469
      %v7508 = vadd.f32 %v7388, %v7469
      %v7509 = vadd.f32 %v7391, %v7469
      %v7510 = vadd.f32 %v7394, %v7469
      %v7511 = vadd.f32 %v7397, %v7469
      %v7512 = vadd.f32 %v7400, %v7469
      %v7513 = vadd.f32 %v7403, %v7469
      %v7514 = vadd.f32 %v7406, %v7469
      %v7515 = vadd.f32 %v7409, %v7469
      %v7516 = vadd.f32 %v7412, %v7469
      %v7517 = vadd.f32 %v7415, %v7469
      %v7518 = vadd.f32 %v7418, %v7469
      %v7519 = vadd.f32 %v7421, %v7469
      %v7520 = vadd.f32 %v7424, %v7469
      %v7521 = vadd.f32 %v7427, %v7469
      %v7522 = vadd.f32 %v7430, %v7469
      %v7523 = vadd.f32 %v7433, %v7469
      %v7524 = vadd.f32 %v7436, %v7469
      %v7525 = vadd.f32 %v7439, %v7469
      %v7526 = vadd.f32 %v7442, %v7469
      %v7527 = vadd.f32 %v7445, %v7469
      %v7528 = vadd.f32 %v7448, %v7469
      %v7529 = vadd.f32 %v7451, %v7469
      %v7530 = vadd.f32 %v7454, %v7469
      %v7531 = vadd.f32 %v7457, %v7469
      %v7532 = vadd.f32 %v7460, %v7469
      %v7533 = vadd.f32 %v7463, %v7469
      %v7534 = vadd.f32 %v7466, %v7469
      %vm7535 = vcmask 23568
      %7536 = vst.msk [vmem:[%s415] sm:$0xff] %vm7535, %v7471
      %7537 = vst.msk [vmem:[%s415 + $0x8] sm:$0xff] %vm7535, %v7472
      %7538 = vst.msk [vmem:[%s415 + $0x10] sm:$0xff] %vm7535, %v7473
      %7539 = vst.msk [vmem:[%s415 + $0x18] sm:$0xff] %vm7535, %v7474
      %7540 = vst.msk [vmem:[%s415 + $0x20] sm:$0xff] %vm7535, %v7475
      %7541 = vst.msk [vmem:[%s415 + $0x28] sm:$0xff] %vm7535, %v7476
      %7542 = vst.msk [vmem:[%s415 + $0x30] sm:$0xff] %vm7535, %v7477
      %7543 = vst.msk [vmem:[%s415 + $0x38] sm:$0xff] %vm7535, %v7478
      %7544 = vst.msk [vmem:[%s415 + $0x40] sm:$0xff] %vm7535, %v7479
      %7545 = vst.msk [vmem:[%s415 + $0x48] sm:$0xff] %vm7535, %v7480
      %7546 = vst.msk [vmem:[%s415 + $0x50] sm:$0xff] %vm7535, %v7481
      %7547 = vst.msk [vmem:[%s415 + $0x58] sm:$0xff] %vm7535, %v7482
      %7548 = vst.msk [vmem:[%s415 + $0x60] sm:$0xff] %vm7535, %v7483
      %7549 = vst.msk [vmem:[%s415 + $0x68] sm:$0xff] %vm7535, %v7484
      %7550 = vst.msk [vmem:[%s415 + $0x70] sm:$0xff] %vm7535, %v7485
      %7551 = vst.msk [vmem:[%s415 + $0x78] sm:$0xff] %vm7535, %v7486
      %7552 = vst.msk [vmem:[%s415 + $0x80] sm:$0xff] %vm7535, %v7487
      %7553 = vst.msk [vmem:[%s415 + $0x88] sm:$0xff] %vm7535, %v7488
      %7554 = vst.msk [vmem:[%s415 + $0x90] sm:$0xff] %vm7535, %v7489
      %7555 = vst.msk [vmem:[%s415 + $0x98] sm:$0xff] %vm7535, %v7490
      %7556 = vst.msk [vmem:[%s415 + $0xa0] sm:$0xff] %vm7535, %v7491
      %7557 = vst.msk [vmem:[%s415 + $0xa8] sm:$0xff] %vm7535, %v7492
      %7558 = vst.msk [vmem:[%s415 + $0xb0] sm:$0xff] %vm7535, %v7493
      %7559 = vst.msk [vmem:[%s415 + $0xb8] sm:$0xff] %vm7535, %v7494
      %7560 = vst.msk [vmem:[%s415 + $0xc0] sm:$0xff] %vm7535, %v7495
      %7561 = vst.msk [vmem:[%s415 + $0xc8] sm:$0xff] %vm7535, %v7496
      %7562 = vst.msk [vmem:[%s415 + $0xd0] sm:$0xff] %vm7535, %v7497
      %7563 = vst.msk [vmem:[%s415 + $0xd8] sm:$0xff] %vm7535, %v7498
      %7564 = vst.msk [vmem:[%s415 + $0xe0] sm:$0xff] %vm7535, %v7499
      %7565 = vst.msk [vmem:[%s415 + $0xe8] sm:$0xff] %vm7535, %v7500
      %7566 = vst.msk [vmem:[%s415 + $0xf0] sm:$0xff] %vm7535, %v7501
      %7567 = vst.msk [vmem:[%s415 + $0xf8] sm:$0xff] %vm7535, %v7502
      %7568 = vst.msk [vmem:[%s415 + $0x100] sm:$0xff] %vm7535, %v7503
      %7569 = vst.msk [vmem:[%s415 + $0x108] sm:$0xff] %vm7535, %v7504
      %7570 = vst.msk [vmem:[%s415 + $0x110] sm:$0xff] %vm7535, %v7505
      %7571 = vst.msk [vmem:[%s415 + $0x118] sm:$0xff] %vm7535, %v7506
      %7572 = vst.msk [vmem:[%s415 + $0x120] sm:$0xff] %vm7535, %v7507
      %7573 = vst.msk [vmem:[%s415 + $0x128] sm:$0xff] %vm7535, %v7508
      %7574 = vst.msk [vmem:[%s415 + $0x130] sm:$0xff] %vm7535, %v7509
      %7575 = vst.msk [vmem:[%s415 + $0x138] sm:$0xff] %vm7535, %v7510
      %7576 = vst.msk [vmem:[%s415 + $0x140] sm:$0xff] %vm7535, %v7511
      %7577 = vst.msk [vmem:[%s415 + $0x148] sm:$0xff] %vm7535, %v7512
      %7578 = vst.msk [vmem:[%s415 + $0x150] sm:$0xff] %vm7535, %v7513
      %7579 = vst.msk [vmem:[%s415 + $0x158] sm:$0xff] %vm7535, %v7514
      %7580 = vst.msk [vmem:[%s415 + $0x160] sm:$0xff] %vm7535, %v7515
      %7581 = vst.msk [vmem:[%s415 + $0x168] sm:$0xff] %vm7535, %v7516
      %7582 = vst.msk [vmem:[%s415 + $0x170] sm:$0xff] %vm7535, %v7517
      %7583 = vst.msk [vmem:[%s415 + $0x178] sm:$0xff] %vm7535, %v7518
      %7584 = vst.msk [vmem:[%s415 + $0x180] sm:$0xff] %vm7535, %v7519
      %7585 = vst.msk [vmem:[%s415 + $0x188] sm:$0xff] %vm7535, %v7520
      %7586 = vst.msk [vmem:[%s415 + $0x190] sm:$0xff] %vm7535, %v7521
      %7587 = vst.msk [vmem:[%s415 + $0x198] sm:$0xff] %vm7535, %v7522
      %7588 = vst.msk [vmem:[%s415 + $0x1a0] sm:$0xff] %vm7535, %v7523
      %7589 = vst.msk [vmem:[%s415 + $0x1a8] sm:$0xff] %vm7535, %v7524
      %7590 = vst.msk [vmem:[%s415 + $0x1b0] sm:$0xff] %vm7535, %v7525
      %7591 = vst.msk [vmem:[%s415 + $0x1b8] sm:$0xff] %vm7535, %v7526
      %7592 = vst.msk [vmem:[%s415 + $0x1c0] sm:$0xff] %vm7535, %v7527
      %7593 = vst.msk [vmem:[%s415 + $0x1c8] sm:$0xff] %vm7535, %v7528
      %7594 = vst.msk [vmem:[%s415 + $0x1d0] sm:$0xff] %vm7535, %v7529
      %7595 = vst.msk [vmem:[%s415 + $0x1d8] sm:$0xff] %vm7535, %v7530
      %7596 = vst.msk [vmem:[%s415 + $0x1e0] sm:$0xff] %vm7535, %v7531
      %7597 = vst.msk [vmem:[%s415 + $0x1e8] sm:$0xff] %vm7535, %v7532
      %7598 = vst.msk [vmem:[%s415 + $0x1f0] sm:$0xff] %vm7535, %v7533
      %7599 = vst.msk [vmem:[%s415 + $0x1f8] sm:$0xff] %vm7535, %v7534
      %s7600 = scalar_lea.vmem %s10, 3
      %v7601 = vld [vmem:[%s7600] ss:$4 sm:$0x3]
      %v7603 = vperm.slane %v7601, 0
      %v7604 = vperm.slane %v7601, 1
      %v7607 = vmul.f32 %v6093, %v7603
      %v7608 = vmul.f32 %v6094, %v7604
      %v7609 = vmul.f32 %v6095, %v7603
      %v7610 = vmul.f32 %v6096, %v7604
      %v7611 = vmul.f32 %v6097, %v7603
      %v7612 = vmul.f32 %v6098, %v7604
      %v7613 = vmul.f32 %v6099, %v7603
      %v7614 = vmul.f32 %v6100, %v7604
      %v7615 = vmul.f32 %v6101, %v7603
      %v7616 = vmul.f32 %v6102, %v7604
      %v7617 = vmul.f32 %v6103, %v7603
      %v7618 = vmul.f32 %v6104, %v7604
      %v7619 = vmul.f32 %v6105, %v7603
      %v7620 = vmul.f32 %v6106, %v7604
      %v7621 = vmul.f32 %v6107, %v7603
      %v7622 = vmul.f32 %v6108, %v7604
      %v7623 = vmul.f32 %v6109, %v7603
      %v7624 = vmul.f32 %v6110, %v7604
      %v7625 = vmul.f32 %v6111, %v7603
      %v7626 = vmul.f32 %v6112, %v7604
      %v7627 = vmul.f32 %v6113, %v7603
      %v7628 = vmul.f32 %v6114, %v7604
      %v7629 = vmul.f32 %v6115, %v7603
      %v7630 = vmul.f32 %v6116, %v7604
      %v7631 = vmul.f32 %v6117, %v7603
      %v7632 = vmul.f32 %v6118, %v7604
      %v7633 = vmul.f32 %v6119, %v7603
      %v7634 = vmul.f32 %v6120, %v7604
      %v7635 = vmul.f32 %v6121, %v7603
      %v7636 = vmul.f32 %v6122, %v7604
      %v7637 = vmul.f32 %v6123, %v7603
      %v7638 = vmul.f32 %v6124, %v7604
      %v7639 = vmul.f32 %v6125, %v7603
      %v7640 = vmul.f32 %v6126, %v7604
      %v7641 = vmul.f32 %v6127, %v7603
      %v7642 = vmul.f32 %v6128, %v7604
      %v7643 = vmul.f32 %v6129, %v7603
      %v7644 = vmul.f32 %v6130, %v7604
      %v7645 = vmul.f32 %v6131, %v7603
      %v7646 = vmul.f32 %v6132, %v7604
      %v7647 = vmul.f32 %v6133, %v7603
      %v7648 = vmul.f32 %v6134, %v7604
      %v7649 = vmul.f32 %v6135, %v7603
      %v7650 = vmul.f32 %v6136, %v7604
      %v7651 = vmul.f32 %v6137, %v7603
      %v7652 = vmul.f32 %v6138, %v7604
      %v7653 = vmul.f32 %v6139, %v7603
      %v7654 = vmul.f32 %v6140, %v7604
      %v7655 = vmul.f32 %v6141, %v7603
      %v7656 = vmul.f32 %v6142, %v7604
      %v7657 = vmul.f32 %v6143, %v7603
      %v7658 = vmul.f32 %v6144, %v7604
      %v7659 = vmul.f32 %v6145, %v7603
      %v7660 = vmul.f32 %v6146, %v7604
      %v7661 = vmul.f32 %v6147, %v7603
      %v7662 = vmul.f32 %v6148, %v7604
      %v7663 = vmul.f32 %v6149, %v7603
      %v7664 = vmul.f32 %v6150, %v7604
      %v7665 = vmul.f32 %v6151, %v7603
      %v7666 = vmul.f32 %v6152, %v7604
      %v7667 = vmul.f32 %v6153, %v7603
      %v7668 = vmul.f32 %v6154, %v7604
      %v7669 = vmul.f32 %v6155, %v7603
      %v7670 = vmul.f32 %v6156, %v7604
      %v7671 = vmul.f32 %v6157, %v7603
      %v7672 = vmul.f32 %v6158, %v7604
      %v7673 = vmul.f32 %v6159, %v7603
      %v7674 = vmul.f32 %v6160, %v7604
      %v7675 = vmul.f32 %v6161, %v7603
      %v7676 = vmul.f32 %v6162, %v7604
      %v7677 = vmul.f32 %v6163, %v7603
      %v7678 = vmul.f32 %v6164, %v7604
      %v7679 = vmul.f32 %v6165, %v7603
      %v7680 = vmul.f32 %v6166, %v7604
      %v7681 = vmul.f32 %v6167, %v7603
      %v7682 = vmul.f32 %v6168, %v7604
      %v7683 = vmul.f32 %v6169, %v7603
      %v7684 = vmul.f32 %v6170, %v7604
      %v7685 = vmul.f32 %v6171, %v7603
      %v7686 = vmul.f32 %v6172, %v7604
      %v7687 = vmul.f32 %v6173, %v7603
      %v7688 = vmul.f32 %v6174, %v7604
      %v7689 = vmul.f32 %v6175, %v7603
      %v7690 = vmul.f32 %v6176, %v7604
      %v7691 = vmul.f32 %v6177, %v7603
      %v7692 = vmul.f32 %v6178, %v7604
      %v7693 = vmul.f32 %v6179, %v7603
      %v7694 = vmul.f32 %v6180, %v7604
      %v7695 = vmul.f32 %v6181, %v7603
      %v7696 = vmul.f32 %v6182, %v7604
      %v7697 = vmul.f32 %v6183, %v7603
      %v7698 = vmul.f32 %v6184, %v7604
      %v7699 = vmul.f32 %v6185, %v7603
      %v7700 = vmul.f32 %v6186, %v7604
      %v7701 = vmul.f32 %v6187, %v7603
      %v7702 = vmul.f32 %v6188, %v7604
      %v7703 = vmul.f32 %v6189, %v7603
      %v7704 = vmul.f32 %v6190, %v7604
      %v7705 = vmul.f32 %v6191, %v7603
      %v7706 = vmul.f32 %v6192, %v7604
      %v7707 = vmul.f32 %v6193, %v7603
      %v7708 = vmul.f32 %v6194, %v7604
      %v7709 = vmul.f32 %v6195, %v7603
      %v7710 = vmul.f32 %v6196, %v7604
      %v7711 = vmul.f32 %v6197, %v7603
      %v7712 = vmul.f32 %v6198, %v7604
      %v7713 = vmul.f32 %v6199, %v7603
      %v7714 = vmul.f32 %v6200, %v7604
      %v7715 = vmul.f32 %v6201, %v7603
      %v7716 = vmul.f32 %v6202, %v7604
      %v7717 = vmul.f32 %v6203, %v7603
      %v7718 = vmul.f32 %v6204, %v7604
      %v7719 = vmul.f32 %v6205, %v7603
      %v7720 = vmul.f32 %v6206, %v7604
      %v7721 = vmul.f32 %v6207, %v7603
      %v7722 = vmul.f32 %v6208, %v7604
      %v7723 = vmul.f32 %v6209, %v7603
      %v7724 = vmul.f32 %v6210, %v7604
      %v7725 = vmul.f32 %v6211, %v7603
      %v7726 = vmul.f32 %v6212, %v7604
      %v7727 = vmul.f32 %v6213, %v7603
      %v7728 = vmul.f32 %v6214, %v7604
      %v7729 = vmul.f32 %v6215, %v7603
      %v7730 = vmul.f32 %v6216, %v7604
      %v7731 = vmul.f32 %v6217, %v7603
      %v7732 = vmul.f32 %v6218, %v7604
      %v7733 = vmul.f32 %v6219, %v7603
      %v7734 = vmul.f32 %v6220, %v7604
      %v7735 = vadd.f32 %v7607, %v7608
      %7736 = vadd.xlane.f32.xlu0 %v7735
      %v7737 = vpop.xlane.xlu0 %7736
      %v7738 = vadd.f32 %v7609, %v7610
      %7739 = vadd.xlane.f32.xlu0 %v7738
      %v7740 = vpop.xlane.xlu0 %7739
      %v7741 = vadd.f32 %v7611, %v7612
      %7742 = vadd.xlane.f32.xlu0 %v7741
      %v7743 = vpop.xlane.xlu0 %7742
      %v7744 = vadd.f32 %v7613, %v7614
      %7745 = vadd.xlane.f32.xlu0 %v7744
      %v7746 = vpop.xlane.xlu0 %7745
      %v7747 = vadd.f32 %v7615, %v7616
      %7748 = vadd.xlane.f32.xlu0 %v7747
      %v7749 = vpop.xlane.xlu0 %7748
      %v7750 = vadd.f32 %v7617, %v7618
      %7751 = vadd.xlane.f32.xlu0 %v7750
      %v7752 = vpop.xlane.xlu0 %7751
      %v7753 = vadd.f32 %v7619, %v7620
      %7754 = vadd.xlane.f32.xlu0 %v7753
      %v7755 = vpop.xlane.xlu0 %7754
      %v7756 = vadd.f32 %v7621, %v7622
      %7757 = vadd.xlane.f32.xlu0 %v7756
      %v7758 = vpop.xlane.xlu0 %7757
      %v7759 = vadd.f32 %v7623, %v7624
      %7760 = vadd.xlane.f32.xlu0 %v7759
      %v7761 = vpop.xlane.xlu0 %7760
      %v7762 = vadd.f32 %v7625, %v7626
      %7763 = vadd.xlane.f32.xlu0 %v7762
      %v7764 = vpop.xlane.xlu0 %7763
      %v7765 = vadd.f32 %v7627, %v7628
      %7766 = vadd.xlane.f32.xlu0 %v7765
      %v7767 = vpop.xlane.xlu0 %7766
      %v7768 = vadd.f32 %v7629, %v7630
      %7769 = vadd.xlane.f32.xlu0 %v7768
      %v7770 = vpop.xlane.xlu0 %7769
      %v7771 = vadd.f32 %v7631, %v7632
      %7772 = vadd.xlane.f32.xlu0 %v7771
      %v7773 = vpop.xlane.xlu0 %7772
      %v7774 = vadd.f32 %v7633, %v7634
      %7775 = vadd.xlane.f32.xlu0 %v7774
      %v7776 = vpop.xlane.xlu0 %7775
      %v7777 = vadd.f32 %v7635, %v7636
      %7778 = vadd.xlane.f32.xlu0 %v7777
      %v7779 = vpop.xlane.xlu0 %7778
      %v7780 = vadd.f32 %v7637, %v7638
      %7781 = vadd.xlane.f32.xlu0 %v7780
      %v7782 = vpop.xlane.xlu0 %7781
      %v7783 = vadd.f32 %v7639, %v7640
      %7784 = vadd.xlane.f32.xlu0 %v7783
      %v7785 = vpop.xlane.xlu0 %7784
      %v7786 = vadd.f32 %v7641, %v7642
      %7787 = vadd.xlane.f32.xlu0 %v7786
      %v7788 = vpop.xlane.xlu0 %7787
      %v7789 = vadd.f32 %v7643, %v7644
      %7790 = vadd.xlane.f32.xlu0 %v7789
      %v7791 = vpop.xlane.xlu0 %7790
      %v7792 = vadd.f32 %v7645, %v7646
      %7793 = vadd.xlane.f32.xlu0 %v7792
      %v7794 = vpop.xlane.xlu0 %7793
      %v7795 = vadd.f32 %v7647, %v7648
      %7796 = vadd.xlane.f32.xlu0 %v7795
      %v7797 = vpop.xlane.xlu0 %7796
      %v7798 = vadd.f32 %v7649, %v7650
      %7799 = vadd.xlane.f32.xlu0 %v7798
      %v7800 = vpop.xlane.xlu0 %7799
      %v7801 = vadd.f32 %v7651, %v7652
      %7802 = vadd.xlane.f32.xlu0 %v7801
      %v7803 = vpop.xlane.xlu0 %7802
      %v7804 = vadd.f32 %v7653, %v7654
      %7805 = vadd.xlane.f32.xlu0 %v7804
      %v7806 = vpop.xlane.xlu0 %7805
      %v7807 = vadd.f32 %v7655, %v7656
      %7808 = vadd.xlane.f32.xlu0 %v7807
      %v7809 = vpop.xlane.xlu0 %7808
      %v7810 = vadd.f32 %v7657, %v7658
      %7811 = vadd.xlane.f32.xlu0 %v7810
      %v7812 = vpop.xlane.xlu0 %7811
      %v7813 = vadd.f32 %v7659, %v7660
      %7814 = vadd.xlane.f32.xlu0 %v7813
      %v7815 = vpop.xlane.xlu0 %7814
      %v7816 = vadd.f32 %v7661, %v7662
      %7817 = vadd.xlane.f32.xlu0 %v7816
      %v7818 = vpop.xlane.xlu0 %7817
      %v7819 = vadd.f32 %v7663, %v7664
      %7820 = vadd.xlane.f32.xlu0 %v7819
      %v7821 = vpop.xlane.xlu0 %7820
      %v7822 = vadd.f32 %v7665, %v7666
      %7823 = vadd.xlane.f32.xlu0 %v7822
      %v7824 = vpop.xlane.xlu0 %7823
      %v7825 = vadd.f32 %v7667, %v7668
      %7826 = vadd.xlane.f32.xlu0 %v7825
      %v7827 = vpop.xlane.xlu0 %7826
      %v7828 = vadd.f32 %v7669, %v7670
      %7829 = vadd.xlane.f32.xlu0 %v7828
      %v7830 = vpop.xlane.xlu0 %7829
      %v7831 = vadd.f32 %v7671, %v7672
      %7832 = vadd.xlane.f32.xlu0 %v7831
      %v7833 = vpop.xlane.xlu0 %7832
      %v7834 = vadd.f32 %v7673, %v7674
      %7835 = vadd.xlane.f32.xlu0 %v7834
      %v7836 = vpop.xlane.xlu0 %7835
      %v7837 = vadd.f32 %v7675, %v7676
      %7838 = vadd.xlane.f32.xlu0 %v7837
      %v7839 = vpop.xlane.xlu0 %7838
      %v7840 = vadd.f32 %v7677, %v7678
      %7841 = vadd.xlane.f32.xlu0 %v7840
      %v7842 = vpop.xlane.xlu0 %7841
      %v7843 = vadd.f32 %v7679, %v7680
      %7844 = vadd.xlane.f32.xlu0 %v7843
      %v7845 = vpop.xlane.xlu0 %7844
      %v7846 = vadd.f32 %v7681, %v7682
      %7847 = vadd.xlane.f32.xlu0 %v7846
      %v7848 = vpop.xlane.xlu0 %7847
      %v7849 = vadd.f32 %v7683, %v7684
      %7850 = vadd.xlane.f32.xlu0 %v7849
      %v7851 = vpop.xlane.xlu0 %7850
      %v7852 = vadd.f32 %v7685, %v7686
      %7853 = vadd.xlane.f32.xlu0 %v7852
      %v7854 = vpop.xlane.xlu0 %7853
      %v7855 = vadd.f32 %v7687, %v7688
      %7856 = vadd.xlane.f32.xlu0 %v7855
      %v7857 = vpop.xlane.xlu0 %7856
      %v7858 = vadd.f32 %v7689, %v7690
      %7859 = vadd.xlane.f32.xlu0 %v7858
      %v7860 = vpop.xlane.xlu0 %7859
      %v7861 = vadd.f32 %v7691, %v7692
      %7862 = vadd.xlane.f32.xlu0 %v7861
      %v7863 = vpop.xlane.xlu0 %7862
      %v7864 = vadd.f32 %v7693, %v7694
      %7865 = vadd.xlane.f32.xlu0 %v7864
      %v7866 = vpop.xlane.xlu0 %7865
      %v7867 = vadd.f32 %v7695, %v7696
      %7868 = vadd.xlane.f32.xlu0 %v7867
      %v7869 = vpop.xlane.xlu0 %7868
      %v7870 = vadd.f32 %v7697, %v7698
      %7871 = vadd.xlane.f32.xlu0 %v7870
      %v7872 = vpop.xlane.xlu0 %7871
      %v7873 = vadd.f32 %v7699, %v7700
      %7874 = vadd.xlane.f32.xlu0 %v7873
      %v7875 = vpop.xlane.xlu0 %7874
      %v7876 = vadd.f32 %v7701, %v7702
      %7877 = vadd.xlane.f32.xlu0 %v7876
      %v7878 = vpop.xlane.xlu0 %7877
      %v7879 = vadd.f32 %v7703, %v7704
      %7880 = vadd.xlane.f32.xlu0 %v7879
      %v7881 = vpop.xlane.xlu0 %7880
      %v7882 = vadd.f32 %v7705, %v7706
      %7883 = vadd.xlane.f32.xlu0 %v7882
      %v7884 = vpop.xlane.xlu0 %7883
      %v7885 = vadd.f32 %v7707, %v7708
      %7886 = vadd.xlane.f32.xlu0 %v7885
      %v7887 = vpop.xlane.xlu0 %7886
      %v7888 = vadd.f32 %v7709, %v7710
      %7889 = vadd.xlane.f32.xlu0 %v7888
      %v7890 = vpop.xlane.xlu0 %7889
      %v7891 = vadd.f32 %v7711, %v7712
      %7892 = vadd.xlane.f32.xlu0 %v7891
      %v7893 = vpop.xlane.xlu0 %7892
      %v7894 = vadd.f32 %v7713, %v7714
      %7895 = vadd.xlane.f32.xlu0 %v7894
      %v7896 = vpop.xlane.xlu0 %7895
      %v7897 = vadd.f32 %v7715, %v7716
      %7898 = vadd.xlane.f32.xlu0 %v7897
      %v7899 = vpop.xlane.xlu0 %7898
      %v7900 = vadd.f32 %v7717, %v7718
      %7901 = vadd.xlane.f32.xlu0 %v7900
      %v7902 = vpop.xlane.xlu0 %7901
      %v7903 = vadd.f32 %v7719, %v7720
      %7904 = vadd.xlane.f32.xlu0 %v7903
      %v7905 = vpop.xlane.xlu0 %7904
      %v7906 = vadd.f32 %v7721, %v7722
      %7907 = vadd.xlane.f32.xlu0 %v7906
      %v7908 = vpop.xlane.xlu0 %7907
      %v7909 = vadd.f32 %v7723, %v7724
      %7910 = vadd.xlane.f32.xlu0 %v7909
      %v7911 = vpop.xlane.xlu0 %7910
      %v7912 = vadd.f32 %v7725, %v7726
      %7913 = vadd.xlane.f32.xlu0 %v7912
      %v7914 = vpop.xlane.xlu0 %7913
      %v7915 = vadd.f32 %v7727, %v7728
      %7916 = vadd.xlane.f32.xlu0 %v7915
      %v7917 = vpop.xlane.xlu0 %7916
      %v7918 = vadd.f32 %v7729, %v7730
      %7919 = vadd.xlane.f32.xlu0 %v7918
      %v7920 = vpop.xlane.xlu0 %7919
      %v7921 = vadd.f32 %v7731, %v7732
      %7922 = vadd.xlane.f32.xlu0 %v7921
      %v7923 = vpop.xlane.xlu0 %7922
      %v7924 = vadd.f32 %v7733, %v7734
      %7925 = vadd.xlane.f32.xlu0 %v7924
      %v7926 = vpop.xlane.xlu0 %7925
      %v7927 = vld [vmem:[%s11] sm:$0x1]
      %v7929 = vperm.slane %v7927, 0
      %v7931 = vadd.f32 %v7737, %v7929
      %v7932 = vadd.f32 %v7740, %v7929
      %v7933 = vadd.f32 %v7743, %v7929
      %v7934 = vadd.f32 %v7746, %v7929
      %v7935 = vadd.f32 %v7749, %v7929
      %v7936 = vadd.f32 %v7752, %v7929
      %v7937 = vadd.f32 %v7755, %v7929
      %v7938 = vadd.f32 %v7758, %v7929
      %v7939 = vadd.f32 %v7761, %v7929
      %v7940 = vadd.f32 %v7764, %v7929
      %v7941 = vadd.f32 %v7767, %v7929
      %v7942 = vadd.f32 %v7770, %v7929
      %v7943 = vadd.f32 %v7773, %v7929
      %v7944 = vadd.f32 %v7776, %v7929
      %v7945 = vadd.f32 %v7779, %v7929
      %v7946 = vadd.f32 %v7782, %v7929
      %v7947 = vadd.f32 %v7785, %v7929
      %v7948 = vadd.f32 %v7788, %v7929
      %v7949 = vadd.f32 %v7791, %v7929
      %v7950 = vadd.f32 %v7794, %v7929
      %v7951 = vadd.f32 %v7797, %v7929
      %v7952 = vadd.f32 %v7800, %v7929
      %v7953 = vadd.f32 %v7803, %v7929
      %v7954 = vadd.f32 %v7806, %v7929
      %v7955 = vadd.f32 %v7809, %v7929
      %v7956 = vadd.f32 %v7812, %v7929
      %v7957 = vadd.f32 %v7815, %v7929
      %v7958 = vadd.f32 %v7818, %v7929
      %v7959 = vadd.f32 %v7821, %v7929
      %v7960 = vadd.f32 %v7824, %v7929
      %v7961 = vadd.f32 %v7827, %v7929
      %v7962 = vadd.f32 %v7830, %v7929
      %v7963 = vadd.f32 %v7833, %v7929
      %v7964 = vadd.f32 %v7836, %v7929
      %v7965 = vadd.f32 %v7839, %v7929
      %v7966 = vadd.f32 %v7842, %v7929
      %v7967 = vadd.f32 %v7845, %v7929
      %v7968 = vadd.f32 %v7848, %v7929
      %v7969 = vadd.f32 %v7851, %v7929
      %v7970 = vadd.f32 %v7854, %v7929
      %v7971 = vadd.f32 %v7857, %v7929
      %v7972 = vadd.f32 %v7860, %v7929
      %v7973 = vadd.f32 %v7863, %v7929
      %v7974 = vadd.f32 %v7866, %v7929
      %v7975 = vadd.f32 %v7869, %v7929
      %v7976 = vadd.f32 %v7872, %v7929
      %v7977 = vadd.f32 %v7875, %v7929
      %v7978 = vadd.f32 %v7878, %v7929
      %v7979 = vadd.f32 %v7881, %v7929
      %v7980 = vadd.f32 %v7884, %v7929
      %v7981 = vadd.f32 %v7887, %v7929
      %v7982 = vadd.f32 %v7890, %v7929
      %v7983 = vadd.f32 %v7893, %v7929
      %v7984 = vadd.f32 %v7896, %v7929
      %v7985 = vadd.f32 %v7899, %v7929
      %v7986 = vadd.f32 %v7902, %v7929
      %v7987 = vadd.f32 %v7905, %v7929
      %v7988 = vadd.f32 %v7908, %v7929
      %v7989 = vadd.f32 %v7911, %v7929
      %v7990 = vadd.f32 %v7914, %v7929
      %v7991 = vadd.f32 %v7917, %v7929
      %v7992 = vadd.f32 %v7920, %v7929
      %v7993 = vadd.f32 %v7923, %v7929
      %v7994 = vadd.f32 %v7926, %v7929
      %vm7995 = vcmask 31768
      %7996 = vst.msk [vmem:[%s415] sm:$0xff] %vm7995, %v7931
      %7997 = vst.msk [vmem:[%s415 + $0x8] sm:$0xff] %vm7995, %v7932
      %7998 = vst.msk [vmem:[%s415 + $0x10] sm:$0xff] %vm7995, %v7933
      %7999 = vst.msk [vmem:[%s415 + $0x18] sm:$0xff] %vm7995, %v7934
      %8000 = vst.msk [vmem:[%s415 + $0x20] sm:$0xff] %vm7995, %v7935
      %8001 = vst.msk [vmem:[%s415 + $0x28] sm:$0xff] %vm7995, %v7936
      %8002 = vst.msk [vmem:[%s415 + $0x30] sm:$0xff] %vm7995, %v7937
      %8003 = vst.msk [vmem:[%s415 + $0x38] sm:$0xff] %vm7995, %v7938
      %8004 = vst.msk [vmem:[%s415 + $0x40] sm:$0xff] %vm7995, %v7939
      %8005 = vst.msk [vmem:[%s415 + $0x48] sm:$0xff] %vm7995, %v7940
      %8006 = vst.msk [vmem:[%s415 + $0x50] sm:$0xff] %vm7995, %v7941
      %8007 = vst.msk [vmem:[%s415 + $0x58] sm:$0xff] %vm7995, %v7942
      %8008 = vst.msk [vmem:[%s415 + $0x60] sm:$0xff] %vm7995, %v7943
      %8009 = vst.msk [vmem:[%s415 + $0x68] sm:$0xff] %vm7995, %v7944
      %8010 = vst.msk [vmem:[%s415 + $0x70] sm:$0xff] %vm7995, %v7945
      %8011 = vst.msk [vmem:[%s415 + $0x78] sm:$0xff] %vm7995, %v7946
      %8012 = vst.msk [vmem:[%s415 + $0x80] sm:$0xff] %vm7995, %v7947
      %8013 = vst.msk [vmem:[%s415 + $0x88] sm:$0xff] %vm7995, %v7948
      %8014 = vst.msk [vmem:[%s415 + $0x90] sm:$0xff] %vm7995, %v7949
      %8015 = vst.msk [vmem:[%s415 + $0x98] sm:$0xff] %vm7995, %v7950
      %8016 = vst.msk [vmem:[%s415 + $0xa0] sm:$0xff] %vm7995, %v7951
      %8017 = vst.msk [vmem:[%s415 + $0xa8] sm:$0xff] %vm7995, %v7952
      %8018 = vst.msk [vmem:[%s415 + $0xb0] sm:$0xff] %vm7995, %v7953
      %8019 = vst.msk [vmem:[%s415 + $0xb8] sm:$0xff] %vm7995, %v7954
      %8020 = vst.msk [vmem:[%s415 + $0xc0] sm:$0xff] %vm7995, %v7955
      %8021 = vst.msk [vmem:[%s415 + $0xc8] sm:$0xff] %vm7995, %v7956
      %8022 = vst.msk [vmem:[%s415 + $0xd0] sm:$0xff] %vm7995, %v7957
      %8023 = vst.msk [vmem:[%s415 + $0xd8] sm:$0xff] %vm7995, %v7958
      %8024 = vst.msk [vmem:[%s415 + $0xe0] sm:$0xff] %vm7995, %v7959
      %8025 = vst.msk [vmem:[%s415 + $0xe8] sm:$0xff] %vm7995, %v7960
      %8026 = vst.msk [vmem:[%s415 + $0xf0] sm:$0xff] %vm7995, %v7961
      %8027 = vst.msk [vmem:[%s415 + $0xf8] sm:$0xff] %vm7995, %v7962
      %8028 = vst.msk [vmem:[%s415 + $0x100] sm:$0xff] %vm7995, %v7963
      %8029 = vst.msk [vmem:[%s415 + $0x108] sm:$0xff] %vm7995, %v7964
      %8030 = vst.msk [vmem:[%s415 + $0x110] sm:$0xff] %vm7995, %v7965
      %8031 = vst.msk [vmem:[%s415 + $0x118] sm:$0xff] %vm7995, %v7966
      %8032 = vst.msk [vmem:[%s415 + $0x120] sm:$0xff] %vm7995, %v7967
      %8033 = vst.msk [vmem:[%s415 + $0x128] sm:$0xff] %vm7995, %v7968
      %8034 = vst.msk [vmem:[%s415 + $0x130] sm:$0xff] %vm7995, %v7969
      %8035 = vst.msk [vmem:[%s415 + $0x138] sm:$0xff] %vm7995, %v7970
      %8036 = vst.msk [vmem:[%s415 + $0x140] sm:$0xff] %vm7995, %v7971
      %8037 = vst.msk [vmem:[%s415 + $0x148] sm:$0xff] %vm7995, %v7972
      %8038 = vst.msk [vmem:[%s415 + $0x150] sm:$0xff] %vm7995, %v7973
      %8039 = vst.msk [vmem:[%s415 + $0x158] sm:$0xff] %vm7995, %v7974
      %8040 = vst.msk [vmem:[%s415 + $0x160] sm:$0xff] %vm7995, %v7975
      %8041 = vst.msk [vmem:[%s415 + $0x168] sm:$0xff] %vm7995, %v7976
      %8042 = vst.msk [vmem:[%s415 + $0x170] sm:$0xff] %vm7995, %v7977
      %8043 = vst.msk [vmem:[%s415 + $0x178] sm:$0xff] %vm7995, %v7978
      %8044 = vst.msk [vmem:[%s415 + $0x180] sm:$0xff] %vm7995, %v7979
      %8045 = vst.msk [vmem:[%s415 + $0x188] sm:$0xff] %vm7995, %v7980
      %8046 = vst.msk [vmem:[%s415 + $0x190] sm:$0xff] %vm7995, %v7981
      %8047 = vst.msk [vmem:[%s415 + $0x198] sm:$0xff] %vm7995, %v7982
      %8048 = vst.msk [vmem:[%s415 + $0x1a0] sm:$0xff] %vm7995, %v7983
      %8049 = vst.msk [vmem:[%s415 + $0x1a8] sm:$0xff] %vm7995, %v7984
      %8050 = vst.msk [vmem:[%s415 + $0x1b0] sm:$0xff] %vm7995, %v7985
      %8051 = vst.msk [vmem:[%s415 + $0x1b8] sm:$0xff] %vm7995, %v7986
      %8052 = vst.msk [vmem:[%s415 + $0x1c0] sm:$0xff] %vm7995, %v7987
      %8053 = vst.msk [vmem:[%s415 + $0x1c8] sm:$0xff] %vm7995, %v7988
      %8054 = vst.msk [vmem:[%s415 + $0x1d0] sm:$0xff] %vm7995, %v7989
      %8055 = vst.msk [vmem:[%s415 + $0x1d8] sm:$0xff] %vm7995, %v7990
      %8056 = vst.msk [vmem:[%s415 + $0x1e0] sm:$0xff] %vm7995, %v7991
      %8057 = vst.msk [vmem:[%s415 + $0x1e8] sm:$0xff] %vm7995, %v7992
      %8058 = vst.msk [vmem:[%s415 + $0x1f0] sm:$0xff] %vm7995, %v7993
      %8059 = vst.msk [vmem:[%s415 + $0x1f8] sm:$0xff] %vm7995, %v7994
      %s8060 = smul.u32 64, %s23
      %p8061 = scmp.lt.s32.totalorder %s8060, 127
      %s8062 = scalar_select %p8061, %s8060, 127
      %s8063 = smul.addr %s8062, 8
      %s8064 = scalar_lea.vmem %s12, %s8063
      // Predicated region
      $region69: #{mlp_pallas.1} parent=67 // pred_check
        %p8065 = pneg %p298
      $region70: #{mlp_pallas.1} parent=67 // pred_check_branch
        %8067 = sbr.rel (%p8065) target = $region72
      $region71: #{mlp_pallas.1} parent=67 // pred_region
        %s8068 = smul.u32 64, %s23
      $region72: #{mlp_pallas.1} parent=67 // pred_fallthru
        _
    $region68: #{mlp_pallas.1} parent=5 // pred_fallthru
      _
    %p8069 = scmp.le.s32.totalorder 2, %s18
    // Predicated region
    $region73: #{mlp_pallas.1} parent=5 // pred_check
      %p8070 = pneg %p8069
    $region74: #{mlp_pallas.1} parent=5 // pred_check_branch
      %8072 = sbr.rel (%p8070) target = $region76
    $region75: #{mlp_pallas.1} parent=5 // pred_region
      %s8073 = ssub.s32 %s18, 2
      // Predicated region
      $region77: #{mlp_pallas.1} parent=75 // pred_check
        %p8074 = pneg %p304
      $region78: #{mlp_pallas.1} parent=75 // pred_check_branch
        %8076 = sbr.rel (%p8074) target = $region80
      $region79: #{mlp_pallas.1} parent=75 // pred_region
        %s8077 = smul.u32 64, %s24
        %p8078 = scmp.lt.s32.totalorder %s8077, 127
        %s8079 = scalar_select %p8078, %s8077, 127
        %s8080 = smul.addr %s8079, 8
        %s8081 = scalar_lea.vmem %s12, %s8080
      $region80: #{mlp_pallas.1} parent=75 // pred_fallthru
        _
    $region76: #{mlp_pallas.1} parent=5 // pred_fallthru
      _
  $region6: #{mlp_pallas.1} parent=0 // loop_footer
    %s22 = sadd.s32 1, %s18
  $region7: #{mlp_pallas.1} parent=0 // loop_footer_branch
    %17 = sbr.rel target = $region3
  $region8: #{mlp_pallas.1} parent=0 // loop_exit
    _

</llo_original>
